<compile_context>
chip_gen: v7x
topology: tpu7x:2x2x1
jax: 0.10.0
libtpu: 0.0.40
codegen_flags: <defaults>
</compile_context>

<pallas_src>
import functools

import jax
import jax.numpy as jnp
from jax import lax
from jax.experimental import pallas as pl
from jax.experimental.pallas import tpu as pltpu

L0, L1, L2, NCLS = 1024, 512, 256, 4   # size_dict['small'] = [1024, 512, 256], n_classes=4
MASK_VALUE = -1e30                      # finite "-inf" (avoids inf-inf NaN)


def porpoise_amil_kernel(n_ref,                         # scalar prefetch: valid bag length
                         x_ref, w1_ref, b1_ref, wab_ref, bab_ref, wc_ref, bc_ref,
                         m_out_ref, l_out_ref, acc_out_ref,
                         m_sc, l_sc, acc_sc,
                         *, tiles_per_seg):
    seg = pl.program_id(0)          # "parallel" segment axis (megacore on v7x)
    t = pl.program_id(1)            # "arbitrary" tile axis within the segment
    tile_n = x_ref.shape[0]

    @pl.when(t == 0)
    def _init():
        m_sc[...] = jnp.full_like(m_sc, MASK_VALUE)
        l_sc[...] = jnp.zeros_like(l_sc)
        acc_sc[...] = jnp.zeros_like(acc_sc)

    # Logical tile index (may exceed the real tile count for the clamped
    # overhang tiles of the last segment -> all rows masked below).
    blk = seg * tiles_per_seg + t
    row = blk * tile_n + lax.broadcasted_iota(jnp.int32, (tile_n, 1), 0)
    valid = row < n_ref[0]                                            # (tile_n, 1)

    # fc: Linear(1024, 512) + ReLU (+ Dropout(0.25) == identity at inference)
    x = x_ref[...].astype(jnp.bfloat16)                               # stream f32, cast on VPU
    h = jnp.dot(x, w1_ref[...], preferred_element_type=jnp.float32) + b1_ref[...]
    h = jnp.maximum(h, 0.0)                                           # (tile_n, 512) f32
    # Zero padded / garbage rows with a select (NaN/Inf-safe), so the p^T @ h
    # contraction below can never be poisoned by the OOB remainder of a tile.
    h = jnp.where(valid, h, 0.0)

    # Attn_Net_Gated, fused: one (512, 512) matmul, split at lane-aligned 256.
    y = (jnp.dot(h.astype(jnp.bfloat16), wab_ref[...],
                 preferred_element_type=jnp.float32) + bab_ref[...])  # (tile_n, 512)
    g = jnp.tanh(y[:, :L2]) * jax.nn.sigmoid(y[:, L2:])               # (tile_n, 256)

    # attention_c: Linear(256, 1) as broadcast-mul + lane reduction.
    att = jnp.sum(g * wc_ref[...], axis=1, keepdims=True) + bc_ref[...]   # (tile_n, 1)
    att = jnp.where(valid, att, MASK_VALUE)

    # Online softmax over the bag axis, fused with M-partial = sum_i A_i * h_i.
    m_prev = m_sc[...]                                                # (1, 1)
    m_new = jnp.maximum(m_prev, jnp.max(att, axis=0, keepdims=True))  # (1, 1)
    scale = jnp.exp(m_prev - m_new)
    p = jnp.where(valid, jnp.exp(att - m_new), 0.0)                   # (tile_n, 1)
    l_sc[...] = scale * l_sc[...] + jnp.sum(p, axis=0, keepdims=True)
    # p^T @ h on the MXU (vex slot) instead of a (tile_n, 512) VPU temp.
    acc_sc[...] = scale * acc_sc[...] + lax.dot_general(
        p, h, dimension_numbers=(((0,), (0,)), ((), ())),
        preferred_element_type=jnp.float32)                           # (1, 512)
    m_sc[...] = m_new

    @pl.when(t == pl.num_programs(1) - 1)
    def _finalize():
        m_out_ref[...] = m_sc[...].reshape(1, 1, 1)
        l_out_ref[...] = l_sc[...].reshape(1, 1, 1)
        acc_out_ref[...] = acc_sc[...].reshape(1, 1, L1)


@functools.partial(jax.jit, static_argnames=("tile_n", "num_segments"))
def porpoise_amil_forward(x_path, kparams, *, tile_n=1024, num_segments=2):
    """x_path: (N, 1024) float32 bag of patch features. Returns (hazards, S, Y_hat)."""
    w1, b1, wab, bab, wc, bc, wcls, bcls = kparams
    n, d = x_path.shape
    assert d == L0 and n >= 1, "expect a non-empty (N, 1024) bag"

    num_tiles = pl.cdiv(n, tile_n)
    num_segments = max(1, min(num_segments, num_tiles))     # static Python ints
    tiles_per_seg = pl.cdiv(num_tiles, num_segments)

    def x_index_map(s, t, n_smem):
        # Clamp overhang tiles (segment split remainder) onto the last real
        # tile so no block is ever fully out of bounds; the kernel masks them.
        return (jnp.minimum(s * tiles_per_seg + t, num_tiles - 1), 0)

    # VMEM budget derived from actual buffers (x double buffer + bf16 weight
    # double buffers + f32 intermediates) + headroom; capped for v7x (64 MiB).
    est = (2 * tile_n * L0 * 4
           + 2 * (L0 * L1 + L1 * 2 * L2) * 2
           + tile_n * (L1 + 2 * L2 + L2 + 8) * 4
           + (8 << 20))
    vmem_limit = int(min(max(est, 16 << 20), 48 << 20))

    n_valid = jnp.full((1,), n, dtype=jnp.int32)

    m_part, l_part, acc_part = pl.pallas_call(
        functools.partial(porpoise_amil_kernel, tiles_per_seg=tiles_per_seg),
        out_shape=(
            jax.ShapeDtypeStruct((num_segments, 1, 1), jnp.float32),    # partial m
            jax.ShapeDtypeStruct((num_segments, 1, 1), jnp.float32),    # partial l
            jax.ShapeDtypeStruct((num_segments, 1, L1), jnp.float32),   # partial sum A_i h_i
        ),
        grid_spec=pltpu.PrefetchScalarGridSpec(
            num_scalar_prefetch=1,
            grid=(num_segments, tiles_per_seg),
            in_specs=[
                pl.BlockSpec((tile_n, L0), x_index_map),                 # x tile (pipelined)
                pl.BlockSpec((L0, L1), lambda s, t, n: (0, 0)),          # W1    (resident)
                pl.BlockSpec((1, L1), lambda s, t, n: (0, 0)),           # b1
                pl.BlockSpec((L1, 2 * L2), lambda s, t, n: (0, 0)),      # Wa|Wb (resident)
                pl.BlockSpec((1, 2 * L2), lambda s, t, n: (0, 0)),       # ba|bb
                pl.BlockSpec((1, L2), lambda s, t, n: (0, 0)),           # Wc (row form)
                pl.BlockSpec((1, 1), lambda s, t, n: (0, 0)),            # bc
            ],
            out_specs=[
                pl.BlockSpec((1, 1, 1), lambda s, t, n: (s, 0, 0)),
                pl.BlockSpec((1, 1, 1), lambda s, t, n: (s, 0, 0)),
                pl.BlockSpec((1, 1, L1), lambda s, t, n: (s, 0, 0)),
            ],
            scratch_shapes=[
                pltpu.VMEM((1, 1), jnp.float32),     # running softmax max m
                pltpu.VMEM((1, 1), jnp.float32),     # running softmax denom l
                pltpu.VMEM((1, L1), jnp.float32),    # running sum_i A_i * h_i
            ],
        ),
        compiler_params=pltpu.CompilerParams(
            dimension_semantics=("parallel", "arbitrary"),
            vmem_limit_bytes=vmem_limit,
        ),
    )(n_valid, x_path, w1, b1, wab, bab, wc, bc)

    # Cross-segment merge (tiny) + classifier + survival epilogue, same jit.
    m_part = m_part.reshape(num_segments, 1)
    l_part = l_part.reshape(num_segments, 1)
    acc_part = acc_part.reshape(num_segments, L1)
    m_g = jnp.max(m_part, axis=0, keepdims=True)                      # (1, 1)
    w_seg = jnp.exp(m_part - m_g)                                     # (S, 1); 0 for empty segs
    l_tot = jnp.sum(l_part * w_seg, axis=0, keepdims=True)            # (1, 1)
    acc_tot = jnp.sum(acc_part * w_seg, axis=0, keepdims=True)        # (1, 512)
    M = acc_tot / l_tot                                               # softmax-weighted bag mean

    logits = M @ wcls + bcls                                          # (1, 4)
    hazards = jax.nn.sigmoid(logits)
    S = jnp.cumprod(1.0 - hazards, axis=1)
    Y_hat = jnp.argmax(logits, axis=1)[:, None].astype(jnp.int32)
    return hazards, S, Y_hat


def init_params(key):
    """float32 'master' params matching the PyTorch module's layer shapes."""
    ks = jax.random.split(key, 10)
    s = 0.02
    w1 = jax.random.normal(ks[0], (L0, L1), jnp.float32) * s
    b1 = jax.random.normal(ks[1], (1, L1), jnp.float32) * s
    wa = jax.random.normal(ks[2], (L1, L2), jnp.float32) * s
    ba = jax.random.normal(ks[3], (1, L2), jnp.float32) * s
    wb = jax.random.normal(ks[4], (L1, L2), jnp.float32) * s
    bb = jax.random.normal(ks[5], (1, L2), jnp.float32) * s
    wc = jax.random.normal(ks[6], (1, L2), jnp.float32) * s    # Linear(256, 1) weight, row form
    bc = jax.random.normal(ks[7], (1, 1), jnp.float32) * s
    wcls = jax.random.normal(ks[8], (L1, NCLS), jnp.float32) * s
    bcls = jax.random.normal(ks[9], (1, NCLS), jnp.float32) * s
    return (w1, b1, wa, ba, wb, bb, wc, bc, wcls, bcls)


def pack_kernel_params(fparams):
    """Fuse Wa|Wb and cast the big weights to bf16 for the kernel."""
    w1, b1, wa, ba, wb, bb, wc, bc, wcls, bcls = fparams
    wab = jnp.concatenate([wa, wb], axis=1).astype(jnp.bfloat16)   # (512, 512)
    bab = jnp.concatenate([ba, bb], axis=1)                        # (1, 512) f32
    return (w1.astype(jnp.bfloat16), b1, wab, bab, wc, bc, wcls, bcls)


def porpoise_amil_reference(x, fparams):
    """Pure-JAX f32 reference of the PyTorch forward (eval mode)."""
    w1, b1, wa, ba, wb, bb, wc, bc, wcls, bcls = fparams
    h = jax.nn.relu(x @ w1 + b1)
    a = jnp.tanh(h @ wa + ba)
    b = jax.nn.sigmoid(h @ wb + bb)
    A = (a * b) @ wc.T + bc
    A = jax.nn.softmax(A, axis=0)
    M = A.T @ h
    logits = M @ wcls + bcls
    hazards = jax.nn.sigmoid(logits)
    S = jnp.cumprod(1.0 - hazards, axis=1)
    Y_hat = jnp.argmax(logits, axis=1)[:, None].astype(jnp.int32)
    return hazards, S, Y_hat


if __name__ == "__main__":
    key = jax.random.PRNGKey(0)
    k_x, k_p = jax.random.split(key)

    N = 600                                     # small bag; exercises partial-tile masking
    x_path = jax.random.normal(k_x, (N, L0), jnp.float32)
    fparams = init_params(k_p)
    kparams = pack_kernel_params(fparams)

    # Config 1: small tiles + 2 segments -> multi-tile masking, clamped overhang
    # tile and the cross-segment merge path all get exercised.
    out_small = jax.block_until_ready(
        porpoise_amil_forward(x_path, kparams, tile_n=256, num_segments=2))
    # Config 2: production-style large tile (whole bag in a single partial tile).
    out_big = jax.block_until_ready(
        porpoise_amil_forward(x_path, kparams, tile_n=1024, num_segments=2))

    h_ref, S_ref, _ = porpoise_amil_reference(x_path, fparams)
    for hazards, S, Y_hat in (out_small, out_big):
        assert hazards.shape == (1, NCLS)
        assert S.shape == (1, NCLS)
        assert Y_hat.shape == (1, 1)
        # bf16 weights / activations -> small numeric drift vs the f32 reference.
        assert float(jnp.max(jnp.abs(hazards - h_ref))) < 2e-2
        assert float(jnp.max(jnp.abs(S - S_ref))) < 2e-2

    print("KERNEL_OK")
</pallas_src>

<mosaic_0001>
module attributes {stable_mosaic.version = 11 : i64} {
  func.func @porpoise_amil_kernel(%arg0: i32, %arg1: i32, %arg2: memref<1xi32, #tpu.memory_space<smem>>, %arg3: memref<256x1024xf32, #tpu.memory_space<vmem>>, %arg4: memref<1024x512xbf16, #tpu.memory_space<vmem>>, %arg5: memref<1x512xf32, #tpu.memory_space<vmem>>, %arg6: memref<512x512xbf16, #tpu.memory_space<vmem>>, %arg7: memref<1x512xf32, #tpu.memory_space<vmem>>, %arg8: memref<1x256xf32, #tpu.memory_space<vmem>>, %arg9: memref<1x1xf32, #tpu.memory_space<vmem>>, %arg10: memref<1x1x1xf32, #tpu.memory_space<vmem>>, %arg11: memref<1x1x1xf32, #tpu.memory_space<vmem>>, %arg12: memref<1x1x512xf32, #tpu.memory_space<vmem>>, %arg13: memref<1x1xf32, #tpu.memory_space<vmem>>, %arg14: memref<1x1xf32, #tpu.memory_space<vmem>>, %arg15: memref<1x512xf32, #tpu.memory_space<vmem>>) attributes {dimension_semantics = [#tpu.dimension_semantics<parallel>, #tpu.dimension_semantics<arbitrary>], iteration_bounds = array<i64: 2, 2>, scalar_prefetch = 1 : i64, scratch_operands = 3 : i64, tpu.core_type = #tpu.core_type<tc>, window_params = [{transform_indices = @transform_0, window_bounds = array<i64: 256, 1024>}, {pipeline_mode = #tpu.pipeline_mode<synchronous>, transform_indices = @transform_1, window_bounds = array<i64: 1024, 512>}, {pipeline_mode = #tpu.pipeline_mode<synchronous>, transform_indices = @transform_2, window_bounds = array<i64: 1, 512>}, {pipeline_mode = #tpu.pipeline_mode<synchronous>, transform_indices = @transform_3, window_bounds = array<i64: 512, 512>}, {pipeline_mode = #tpu.pipeline_mode<synchronous>, transform_indices = @transform_4, window_bounds = array<i64: 1, 512>}, {pipeline_mode = #tpu.pipeline_mode<synchronous>, transform_indices = @transform_5, window_bounds = array<i64: 1, 256>}, {pipeline_mode = #tpu.pipeline_mode<synchronous>, transform_indices = @transform_6, window_bounds = array<i64: 1, 1>}, {transform_indices = @transform_7, window_bounds = array<i64: 1, 1, 1>}, {transform_indices = @transform_8, window_bounds = array<i64: 1, 1, 1>}, {transform_indices = @transform_9, window_bounds = array<i64: 1, 1, 512>}]} {
    %c0_i32 = arith.constant 0 : i32
    %0 = arith.cmpi eq, %arg1, %c0_i32 : i32
    %1 = arith.extui %0 : i1 to i32
    %c0_i32_0 = arith.constant 0 : i32
    %2 = arith.cmpi ne, %1, %c0_i32_0 : i32
    scf.if %2 {
      %cst_38 = arith.constant -1.000000e+30 : f32
      %77 = vector.broadcast %cst_38 : f32 to vector<1x1xf32>
      %c0_39 = arith.constant 0 : index
      %c0_40 = arith.constant 0 : index
      %78 = vector.load %arg13[%c0_39, %c0_40] : memref<1x1xf32, #tpu.memory_space<vmem>>, vector<1x1xf32>
      tpu.vector_store %arg13[%c0_39, %c0_40], %77 {strides = array<i32>} : memref<1x1xf32, #tpu.memory_space<vmem>>, vector<1x1xf32>,
      %cst_41 = arith.constant 0.000000e+00 : f32
      %79 = vector.broadcast %cst_41 : f32 to vector<1x1xf32>
      %c0_42 = arith.constant 0 : index
      %c0_43 = arith.constant 0 : index
      %80 = vector.load %arg14[%c0_42, %c0_43] : memref<1x1xf32, #tpu.memory_space<vmem>>, vector<1x1xf32>
      tpu.vector_store %arg14[%c0_42, %c0_43], %79 {strides = array<i32>} : memref<1x1xf32, #tpu.memory_space<vmem>>, vector<1x1xf32>,
      %cst_44 = arith.constant 0.000000e+00 : f32
      %81 = vector.broadcast %cst_44 : f32 to vector<1x512xf32>
      %c0_45 = arith.constant 0 : index
      %c0_46 = arith.constant 0 : index
      %82 = vector.load %arg15[%c0_45, %c0_46] : memref<1x512xf32, #tpu.memory_space<vmem>>, vector<1x512xf32>
      tpu.vector_store %arg15[%c0_45, %c0_46], %81 {strides = array<i32>} : memref<1x512xf32, #tpu.memory_space<vmem>>, vector<1x512xf32>,
    } else {
    }
    %c2_i32 = arith.constant 2 : i32
    %3 = arith.muli %arg0, %c2_i32 : i32
    %4 = arith.addi %3, %arg1 : i32
    %c256_i32 = arith.constant 256 : i32
    %5 = arith.muli %4, %c256_i32 : i32
    %6 = tpu.iota {dimensions = array<i32: 0>} : vector<256x1xi32>
    %7 = vector.broadcast %5 : i32 to vector<256x1xi32>
    %8 = arith.addi %7, %6 : vector<256x1xi32>
    %c0 = arith.constant 0 : index
    %9 = memref.load %arg2[%c0] : memref<1xi32, #tpu.memory_space<smem>>
    %10 = vector.broadcast %9 : i32 to vector<256x1xi32>
    %11 = arith.cmpi slt, %8, %10 : vector<256x1xi32>
    %c0_1 = arith.constant 0 : index
    %c0_2 = arith.constant 0 : index
    %12 = vector.load %arg3[%c0_1, %c0_2] : memref<256x1024xf32, #tpu.memory_space<vmem>>, vector<256x1024xf32>
    %13 = arith.truncf %12 : vector<256x1024xf32> to vector<256x1024xbf16>
    %c0_3 = arith.constant 0 : index
    %c0_4 = arith.constant 0 : index
    %14 = vector.load %arg4[%c0_3, %c0_4] : memref<1024x512xbf16, #tpu.memory_space<vmem>>, vector<1024x512xbf16>
    %cst = arith.constant dense<0.000000e+00> : vector<256x512xf32>
    %15 = tpu.matmul %13, %14, %cst {dimension_numbers = #tpu.dot_dimension_numbers<[1], [0], [0], [1], [0, 0, 1, 1], [], []>} : vector<256x1024xbf16>, vector<1024x512xbf16>, vector<256x512xf32> -> vector<256x512xf32>
    %c0_5 = arith.constant 0 : index
    %c0_6 = arith.constant 0 : index
    %16 = vector.load %arg5[%c0_5, %c0_6] : memref<1x512xf32, #tpu.memory_space<vmem>>, vector<1x512xf32>
    %17 = vector.broadcast %16 : vector<1x512xf32> to vector<256x512xf32>
    %18 = arith.addf %15, %17 : vector<256x512xf32>
    %cst_7 = arith.constant 0.000000e+00 : f32
    %19 = vector.broadcast %cst_7 : f32 to vector<256x512xf32>
    %20 = arith.maximumf %18, %19 : vector<256x512xf32>
    %cst_8 = arith.constant 0.000000e+00 : f32
    %21 = vector.shape_cast %11 : vector<256x1xi1> to vector<256x1xi1>
    %22 = vector.broadcast %21 : vector<256x1xi1> to vector<256x512xi1>
    %23 = vector.broadcast %cst_8 : f32 to vector<256x512xf32>
    %24 = arith.select %22, %20, %23 : vector<256x512xi1>, vector<256x512xf32>
    %25 = arith.truncf %24 : vector<256x512xf32> to vector<256x512xbf16>
    %c0_9 = arith.constant 0 : index
    %c0_10 = arith.constant 0 : index
    %26 = vector.load %arg6[%c0_9, %c0_10] : memref<512x512xbf16, #tpu.memory_space<vmem>>, vector<512x512xbf16>
    %cst_11 = arith.constant dense<0.000000e+00> : vector<256x512xf32>
    %27 = tpu.matmul %25, %26, %cst_11 {dimension_numbers = #tpu.dot_dimension_numbers<[1], [0], [0], [1], [0, 0, 1, 1], [], []>} : vector<256x512xbf16>, vector<512x512xbf16>, vector<256x512xf32> -> vector<256x512xf32>
    %c0_12 = arith.constant 0 : index
    %c0_13 = arith.constant 0 : index
    %28 = vector.load %arg7[%c0_12, %c0_13] : memref<1x512xf32, #tpu.memory_space<vmem>>, vector<1x512xf32>
    %29 = vector.broadcast %28 : vector<1x512xf32> to vector<256x512xf32>
    %30 = arith.addf %27, %29 : vector<256x512xf32>
    %31 = vector.extract_strided_slice %30 {offsets = [0, 0], sizes = [256, 256], strides = [1, 1]} : vector<256x512xf32> to vector<256x256xf32>
    %32 = math.tanh %31 : vector<256x256xf32>
    %33 = vector.extract_strided_slice %30 {offsets = [0, 256], sizes = [256, 256], strides = [1, 1]} : vector<256x512xf32> to vector<256x256xf32>
    %34 = arith.negf %33 : vector<256x256xf32>
    %35 = math.exp %34 : vector<256x256xf32>
    %cst_14 = arith.constant 1.000000e+00 : f32
    %36 = vector.broadcast %cst_14 : f32 to vector<256x256xf32>
    %37 = arith.addf %36, %35 : vector<256x256xf32>
    %38 = arith.divf %36, %37 : vector<256x256xf32>
    %39 = arith.mulf %32, %38 : vector<256x256xf32>
    %c0_15 = arith.constant 0 : index
    %c0_16 = arith.constant 0 : index
    %40 = vector.load %arg8[%c0_15, %c0_16] : memref<1x256xf32, #tpu.memory_space<vmem>>, vector<1x256xf32>
    %41 = vector.broadcast %40 : vector<1x256xf32> to vector<256x256xf32>
    %42 = arith.mulf %39, %41 : vector<256x256xf32>
    %cst_17 = arith.constant dense<0.000000e+00> : vector<256xf32>
    %43 = vector.multi_reduction <add>, %42, %cst_17 [1] : vector<256x256xf32> to vector<256xf32>
    %44 = vector.shape_cast %43 : vector<256xf32> to vector<256x1xf32>
    %c0_18 = arith.constant 0 : index
    %c0_19 = arith.constant 0 : index
    %45 = vector.load %arg9[%c0_18, %c0_19] : memref<1x1xf32, #tpu.memory_space<vmem>>, vector<1x1xf32>
    %46 = vector.broadcast %45 : vector<1x1xf32> to vector<256x1xf32>
    %47 = arith.addf %44, %46 : vector<256x1xf32>
    %cst_20 = arith.constant -1.000000e+30 : f32
    %48 = vector.broadcast %cst_20 : f32 to vector<256x1xf32>
    %49 = arith.select %11, %47, %48 : vector<256x1xi1>, vector<256x1xf32>
    %c0_21 = arith.constant 0 : index
    %c0_22 = arith.constant 0 : index
    %50 = vector.load %arg13[%c0_21, %c0_22] : memref<1x1xf32, #tpu.memory_space<vmem>>, vector<1x1xf32>
    %cst_23 = arith.constant dense<0xFF800000> : vector<1xf32>
    %51 = vector.multi_reduction <maximumf>, %49, %cst_23 [0] : vector<256x1xf32> to vector<1xf32>
    %52 = vector.shape_cast %51 : vector<1xf32> to vector<1x1xf32>
    %53 = arith.maximumf %50, %52 : vector<1x1xf32>
    %54 = arith.subf %50, %53 : vector<1x1xf32>
    %55 = math.exp %54 : vector<1x1xf32>
    %56 = vector.broadcast %53 : vector<1x1xf32> to vector<256x1xf32>
    %57 = arith.subf %49, %56 : vector<256x1xf32>
    %58 = math.exp %57 : vector<256x1xf32>
    %cst_24 = arith.constant 0.000000e+00 : f32
    %59 = vector.broadcast %cst_24 : f32 to vector<256x1xf32>
    %60 = arith.select %11, %58, %59 : vector<256x1xi1>, vector<256x1xf32>
    %c0_25 = arith.constant 0 : index
    %c0_26 = arith.constant 0 : index
    %61 = vector.load %arg14[%c0_25, %c0_26] : memref<1x1xf32, #tpu.memory_space<vmem>>, vector<1x1xf32>
    %62 = arith.mulf %55, %61 : vector<1x1xf32>
    %cst_27 = arith.constant dense<0.000000e+00> : vector<1xf32>
    %63 = vector.multi_reduction <add>, %60, %cst_27 [0] : vector<256x1xf32> to vector<1xf32>
    %64 = vector.shape_cast %63 : vector<1xf32> to vector<1x1xf32>
    %65 = arith.addf %62, %64 : vector<1x1xf32>
    %c0_28 = arith.constant 0 : index
    %c0_29 = arith.constant 0 : index
    %66 = vector.load %arg14[%c0_28, %c0_29] : memref<1x1xf32, #tpu.memory_space<vmem>>, vector<1x1xf32>
    tpu.vector_store %arg14[%c0_28, %c0_29], %65 {strides = array<i32>} : memref<1x1xf32, #tpu.memory_space<vmem>>, vector<1x1xf32>,
    %c0_30 = arith.constant 0 : index
    %c0_31 = arith.constant 0 : index
    %67 = vector.load %arg15[%c0_30, %c0_31] : memref<1x512xf32, #tpu.memory_space<vmem>>, vector<1x512xf32>
    %68 = vector.broadcast %55 : vector<1x1xf32> to vector<1x512xf32>
    %69 = arith.mulf %68, %67 : vector<1x512xf32>
    %cst_32 = arith.constant dense<0.000000e+00> : vector<1x512xf32>
    %70 = tpu.matmul %60, %24, %cst_32 {dimension_numbers = #tpu.dot_dimension_numbers<[0], [0], [1], [1], [0, 1, 1, 1], [], []>} : vector<256x1xf32>, vector<256x512xf32>, vector<1x512xf32> -> vector<1x512xf32>
    %71 = arith.addf %69, %70 : vector<1x512xf32>
    %c0_33 = arith.constant 0 : index
    %c0_34 = arith.constant 0 : index
    %72 = vector.load %arg15[%c0_33, %c0_34] : memref<1x512xf32, #tpu.memory_space<vmem>>, vector<1x512xf32>
    tpu.vector_store %arg15[%c0_33, %c0_34], %71 {strides = array<i32>} : memref<1x512xf32, #tpu.memory_space<vmem>>, vector<1x512xf32>,
    %c0_35 = arith.constant 0 : index
    %c0_36 = arith.constant 0 : index
    %73 = vector.load %arg13[%c0_35, %c0_36] : memref<1x1xf32, #tpu.memory_space<vmem>>, vector<1x1xf32>
    tpu.vector_store %arg13[%c0_35, %c0_36], %53 {strides = array<i32>} : memref<1x1xf32, #tpu.memory_space<vmem>>, vector<1x1xf32>,
    %c1_i32 = arith.constant 1 : i32
    %74 = arith.cmpi eq, %arg1, %c1_i32 : i32
    %75 = arith.extui %74 : i1 to i32
    %c0_i32_37 = arith.constant 0 : i32
    %76 = arith.cmpi ne, %75, %c0_i32_37 : i32
    scf.if %76 {
      %c0_38 = arith.constant 0 : index
      %c0_39 = arith.constant 0 : index
      %77 = vector.load %arg13[%c0_38, %c0_39] : memref<1x1xf32, #tpu.memory_space<vmem>>, vector<1x1xf32>
      %78 = vector.shape_cast %77 : vector<1x1xf32> to vector<1x1x1xf32>
      %c0_40 = arith.constant 0 : index
      %c0_41 = arith.constant 0 : index
      %c0_42 = arith.constant 0 : index
      %79 = vector.load %arg10[%c0_40, %c0_41, %c0_42] : memref<1x1x1xf32, #tpu.memory_space<vmem>>, vector<1x1x1xf32>
      tpu.vector_store %arg10[%c0_40, %c0_41, %c0_42], %78 {strides = array<i32>} : memref<1x1x1xf32, #tpu.memory_space<vmem>>, vector<1x1x1xf32>,
      %c0_43 = arith.constant 0 : index
      %c0_44 = arith.constant 0 : index
      %80 = vector.load %arg14[%c0_43, %c0_44] : memref<1x1xf32, #tpu.memory_space<vmem>>, vector<1x1xf32>
      %81 = vector.shape_cast %80 : vector<1x1xf32> to vector<1x1x1xf32>
      %c0_45 = arith.constant 0 : index
      %c0_46 = arith.constant 0 : index
      %c0_47 = arith.constant 0 : index
      %82 = vector.load %arg11[%c0_45, %c0_46, %c0_47] : memref<1x1x1xf32, #tpu.memory_space<vmem>>, vector<1x1x1xf32>
      tpu.vector_store %arg11[%c0_45, %c0_46, %c0_47], %81 {strides = array<i32>} : memref<1x1x1xf32, #tpu.memory_space<vmem>>, vector<1x1x1xf32>,
      %c0_48 = arith.constant 0 : index
      %c0_49 = arith.constant 0 : index
      %83 = vector.load %arg15[%c0_48, %c0_49] : memref<1x512xf32, #tpu.memory_space<vmem>>, vector<1x512xf32>
      %84 = vector.shape_cast %83 : vector<1x512xf32> to vector<1x1x512xf32>
      %c0_50 = arith.constant 0 : index
      %c0_51 = arith.constant 0 : index
      %c0_52 = arith.constant 0 : index
      %85 = vector.load %arg12[%c0_50, %c0_51, %c0_52] : memref<1x1x512xf32, #tpu.memory_space<vmem>>, vector<1x1x512xf32>
      tpu.vector_store %arg12[%c0_50, %c0_51, %c0_52], %84 {strides = array<i32>} : memref<1x1x512xf32, #tpu.memory_space<vmem>>, vector<1x1x512xf32>,
    } else {
    }
    return
  }
  func.func @transform_0(%arg0: i32, %arg1: i32, %arg2: memref<1xi32, #tpu.memory_space<smem>>) -> (i32, i32) {
    %c2_i32 = arith.constant 2 : i32
    %0 = arith.muli %arg0, %c2_i32 : i32
    %1 = arith.addi %0, %arg1 : i32
    %c2_i32_0 = arith.constant 2 : i32
    %2 = arith.minsi %1, %c2_i32_0 : i32
    %c0_i32 = arith.constant 0 : i32
    %c0_i32_1 = arith.constant 0 : i32
    return %2, %c0_i32 : i32, i32
  }
  func.func @transform_1(%arg0: i32, %arg1: i32, %arg2: memref<1xi32, #tpu.memory_space<smem>>) -> (i32, i32) {
    %c0_i32 = arith.constant 0 : i32
    %c0_i32_0 = arith.constant 0 : i32
    %c0_i32_1 = arith.constant 0 : i32
    return %c0_i32, %c0_i32_0 : i32, i32
  }
  func.func @transform_2(%arg0: i32, %arg1: i32, %arg2: memref<1xi32, #tpu.memory_space<smem>>) -> (i32, i32) {
    %c0_i32 = arith.constant 0 : i32
    %c0_i32_0 = arith.constant 0 : i32
    %c0_i32_1 = arith.constant 0 : i32
    return %c0_i32, %c0_i32_0 : i32, i32
  }
  func.func @transform_3(%arg0: i32, %arg1: i32, %arg2: memref<1xi32, #tpu.memory_space<smem>>) -> (i32, i32) {
    %c0_i32 = arith.constant 0 : i32
    %c0_i32_0 = arith.constant 0 : i32
    %c0_i32_1 = arith.constant 0 : i32
    return %c0_i32, %c0_i32_0 : i32, i32
  }
  func.func @transform_4(%arg0: i32, %arg1: i32, %arg2: memref<1xi32, #tpu.memory_space<smem>>) -> (i32, i32) {
    %c0_i32 = arith.constant 0 : i32
    %c0_i32_0 = arith.constant 0 : i32
    %c0_i32_1 = arith.constant 0 : i32
    return %c0_i32, %c0_i32_0 : i32, i32
  }
  func.func @transform_5(%arg0: i32, %arg1: i32, %arg2: memref<1xi32, #tpu.memory_space<smem>>) -> (i32, i32) {
    %c0_i32 = arith.constant 0 : i32
    %c0_i32_0 = arith.constant 0 : i32
    %c0_i32_1 = arith.constant 0 : i32
    return %c0_i32, %c0_i32_0 : i32, i32
  }
  func.func @transform_6(%arg0: i32, %arg1: i32, %arg2: memref<1xi32, #tpu.memory_space<smem>>) -> (i32, i32) {
    %c0_i32 = arith.constant 0 : i32
    %c0_i32_0 = arith.constant 0 : i32
    %c0_i32_1 = arith.constant 0 : i32
    return %c0_i32, %c0_i32_0 : i32, i32
  }
  func.func @transform_7(%arg0: i32, %arg1: i32, %arg2: memref<1xi32, #tpu.memory_space<smem>>) -> (i32, i32, i32) {
    %c0_i32 = arith.constant 0 : i32
    %c0_i32_0 = arith.constant 0 : i32
    %c0_i32_1 = arith.constant 0 : i32
    return %arg0, %c0_i32, %c0_i32_0 : i32, i32, i32
  }
  func.func @transform_8(%arg0: i32, %arg1: i32, %arg2: memref<1xi32, #tpu.memory_space<smem>>) -> (i32, i32, i32) {
    %c0_i32 = arith.constant 0 : i32
    %c0_i32_0 = arith.constant 0 : i32
    %c0_i32_1 = arith.constant 0 : i32
    return %arg0, %c0_i32, %c0_i32_0 : i32, i32, i32
  }
  func.func @transform_9(%arg0: i32, %arg1: i32, %arg2: memref<1xi32, #tpu.memory_space<smem>>) -> (i32, i32, i32) {
    %c0_i32 = arith.constant 0 : i32
    %c0_i32_0 = arith.constant 0 : i32
    %c0_i32_1 = arith.constant 0 : i32
    return %arg0, %c0_i32, %c0_i32_0 : i32, i32, i32
  }
}

</mosaic_0001>

<llo_original>
// kernel: porpoise_amil_forward.1
$region0: #{porpoise_amil_forward.1}
  #allocation0 [shape = 'u32[]', space=smem, size = 0x4, offset = 0x4, fixed_abs, tag = 'smem constant byte address 0x4 - core index']
  #allocation1 [shape = 'u32[144,128]{1,0:T(1,128)}', space=vmem, size = 0x12000, scoped, tag = 'internal scratch']
  #allocation2 [shape = 'f32[1,1]{1,0:T(1,128)}', space=vmem, size = 0x200, scoped, tag = 'scratch operand']
  #allocation3 [shape = 'f32[1,1]{1,0:T(1,128)}', space=vmem, size = 0x200, scoped, tag = 'scratch operand']
  #allocation4 [shape = 'f32[1,512]{1,0:T(1,128)}', space=vmem, size = 0x800, scoped, tag = 'scratch operand']
  #allocation5 [shape = 's32[1]{0}', space=sflag, size = 0x4, scoped, tag = 'scoped memory for porpoise_amil_forward.1']
  #allocation6 [shape = 's32[1]{0:T(128)S(6)}', space=smem, size = 0x200, scoped, tag = 'prefetched SMEM operand 0']
  #allocation7 [shape = 'f32[1,1]{1,0:T(1,128)S(1)}', space=vmem, size = 0x200, scoped, tag = 'scoped memory for porpoise_amil_forward.1']
  %s0 = inlined_call_operand.<no memory space> [shape: s32[1], index: 0, kind: input, shape index: {}]
  %s1 = inlined_call_operand.hbm [shape: f32[600,1024], index: 1, kind: input, shape index: {}]
  %s2 = inlined_call_operand.hbm [shape: bf16[1024,512], index: 2, kind: input, shape index: {}]
  %s3 = inlined_call_operand.hbm [shape: f32[1,512], index: 3, kind: input, shape index: {}]
  %s4 = inlined_call_operand.hbm [shape: bf16[512,512], index: 4, kind: input, shape index: {}]
  %s5 = inlined_call_operand.hbm [shape: f32[1,512], index: 5, kind: input, shape index: {}]
  %s6 = inlined_call_operand.hbm [shape: f32[1,256], index: 6, kind: input, shape index: {}]
  %s7 = inlined_call_operand.<no memory space> [shape: f32[1,1], index: 7, kind: input, shape index: {}]
  %s8 = inlined_call_operand.vmem [shape: f32[2,1,1], index: 8, kind: output, shape index: {0}]
  %s9 = inlined_call_operand.vmem [shape: f32[2,1,1], index: 9, kind: output, shape index: {1}]
  %s10 = inlined_call_operand.vmem [shape: f32[2,1,512], index: 10, kind: output, shape index: {2}]
  %11 = xla_tuple %s8, %s9, %s10
  %s12 = sld [smem:[#allocation0]]
  $region109: #{porpoise_amil_forward.1} parent=0
    _
  %s14 = ssub.s32 1, %s12
  %s15 = scalar_select 0, %s14, %s12
  %16 = sst [smem:[#allocation6]] %s0
  %v17 = vstv %s7
  %18 = vst [vmem:[#allocation7] sm:$0x1] %v17
  $region1: #{porpoise_amil_forward.1} parent=0
    #allocation8 [shape = 'u8[2097152]{0}', space=vmem, size = 0x200000, scoped, tag = 'input window, operand 1']
    #allocation9 [shape = 's32[2]{0}', space=sflag, size = 0x8, scoped, tag = 'scoped memory for porpoise_amil_forward.1']
    #allocation10 [shape = 'u8[1048576]{0}', space=vmem, size = 0x100000, scoped, tag = 'input window, operand 2, single buffered']
    #allocation11 [shape = 's32[1]{0}', space=sflag, size = 0x4, scoped, tag = 'scoped memory for porpoise_amil_forward.1']
    #allocation12 [shape = 'u8[2048]{0}', space=vmem, size = 0x800, scoped, tag = 'input window, operand 3, single buffered']
    #allocation13 [shape = 'u8[524288]{0}', space=vmem, size = 0x80000, scoped, tag = 'input window, operand 4, single buffered']
    #allocation14 [shape = 's32[1]{0}', space=sflag, size = 0x4, scoped, tag = 'scoped memory for porpoise_amil_forward.1']
    #allocation15 [shape = 'u8[2048]{0}', space=vmem, size = 0x800, scoped, tag = 'input window, operand 5, single buffered']
    #allocation16 [shape = 'u8[1024]{0}', space=vmem, size = 0x400, scoped, tag = 'input window, operand 6, single buffered']
    #allocation17 [shape = 's32[1]{0}', space=sflag, size = 0x4, scoped, tag = 'scoped memory for porpoise_amil_forward.1']
    %19 = vsyncpa [#allocation9], 0
    %s20 = scalar_lea.sflag [#allocation9], 1
    %21 = vsyncpa %s20, 0
    %22 = vsyncpa [#allocation11], 0
    %23 = vsyncpa [#allocation14], 0
    %24 = vsyncpa [#allocation17], 0
    loop: start=0, step=1, limit=6
    $region2: #{porpoise_amil_forward.1} parent=1 // loop_pre_header
      _
    $region3: #{porpoise_amil_forward.1} parent=1 // loop_header
      %s26 = sphi 0, %s30
      %p27 = scmp.ge.s32.totalorder %s26, 6
      %s33 = sphi 0, %s45
      %s34 = sphi 0, %s41
      %s35 = sphi 0, %s33
      %s36 = sphi 0, %s34
      %s37 = sphi 0, %s35
      %s38 = sphi 0, %s36
      %s56 = sphi 0, %s58
      %s59 = sphi 0, %s56
      %s60 = sphi 0, %s59
      %s76 = sphi 0, %s60
      %s80 = sphi 0, %s80
      %s82 = sphi 0, %s80
      %s83 = sphi 0, %s82
      %s97 = sphi 0, %s83
      %s101 = sphi 0, %s101
      %s103 = sphi 0, %s101
      %s104 = sphi 0, %s103
      %s118 = sphi 0, %s104
      %s122 = sphi 0, %s122
      %s124 = sphi 0, %s122
      %s125 = sphi 0, %s124
      %s139 = sphi 0, %s125
      %s143 = sphi 0, %s143
      %s145 = sphi 0, %s143
      %s146 = sphi 0, %s145
      %s160 = sphi 0, %s146
      %s164 = sphi 0, %s164
      %s166 = sphi 0, %s164
      %s167 = sphi 0, %s166
      %s181 = sphi 0, %s167
      %s185 = sphi 0, %s185
      %s187 = sphi 0, %s185
      %s188 = sphi 0, %s187
      %s202 = sphi 0, %s188
      %s208 = sphi 0, %s210
      %s211 = sphi 0, %s208
      %s212 = sphi 0, %s211
      %s228 = sphi 0, %s212
      %s234 = sphi 0, %s236
      %s237 = sphi 0, %s234
      %s238 = sphi 0, %s237
      %s254 = sphi 0, %s238
      %s260 = sphi 0, %s262
      %s263 = sphi 0, %s260
      %s264 = sphi 0, %s263
      %s280 = sphi 0, %s264
    $region4: #{porpoise_amil_forward.1} parent=1 // loop_header_branch
      %29 = sbr.rel (%p27) target = $region8
    $region5: #{porpoise_amil_forward.1} parent=1 // loop_body
      %s31 = ssub.s32 %s26, 1
      %s32 = ssub.s32 %s26, 2
      %s39 = sadd.s32 1, %s34
      %p40 = scmp.ge.s32.totalorder %s39, 2
      %s41 = scalar_select %p40, 0, %s39
      %s42 = sadd.s32 1, %s33
      %s43 = scalar_select %p40, %s42, %s33
      %p44 = scmp.ge.s32.totalorder %s43, 2
      %s45 = scalar_select %p44, 0, %s43
      %s46 = smul.u32 %s33, 2
      %s47 = sadd.s32 %s46, %s34
      %p48 = scmp.lt.s32.totalorder %s47, 2
      %s49 = scalar_select %p48, %s47, 2
      %s50 = smul.u32 %s45, 2
      %s51 = sadd.s32 %s50, %s41
      %p52 = scmp.lt.s32.totalorder %s51, 2
      %s53 = scalar_select %p52, %s51, 2
      %s54 = ssub.s32 %s49, %s53
      %p55 = scmp.eq.s32.totalorder %s54, 0
      %s57 = sadd.s32 %s56, 1
      %s58 = scalar_select %p55, %s56, %s57
      %p61 = pneg %p55
      %p62 = scmp.eq.s32.totalorder %s26, 3
      %p63 = por %p61, %p62
      %p64 = scmp.ne.s32.totalorder %s56, %s59
      %p65 = scmp.eq.s32.totalorder %s26, 0
      %p66 = por %p64, %p65
      %p67 = scmp.ne.s32.totalorder %s56, %s59
      %p68 = scmp.eq.s32.totalorder %s31, 3
      %p69 = por %p67, %p68
      %p70 = scmp.ne.s32.totalorder %s59, %s60
      %p71 = scmp.eq.s32.totalorder %s31, 0
      %p72 = por %p70, %p71
      %p73 = scmp.ne.s32.totalorder %s59, %s60
      %p74 = scmp.eq.s32.totalorder %s32, 3
      %p75 = por %p73, %p74
      %p77 = scmp.ne.s32.totalorder %s60, %s76
      %p78 = scmp.eq.s32.totalorder %s32, 0
      %p79 = por %p77, %p78
      %s81 = sadd.s32 %s80, 1
      %p84 = scmp.eq.s32.totalorder %s26, 3
      %p85 = scmp.ne.s32.totalorder %s80, %s82
      %p86 = scmp.eq.s32.totalorder %s26, 0
      %p87 = por %p85, %p86
      %p88 = scmp.ne.s32.totalorder %s80, %s82
      %p89 = scmp.eq.s32.totalorder %s31, 3
      %p90 = por %p88, %p89
      %p91 = scmp.ne.s32.totalorder %s82, %s83
      %p92 = scmp.eq.s32.totalorder %s31, 0
      %p93 = por %p91, %p92
      %p94 = scmp.ne.s32.totalorder %s82, %s83
      %p95 = scmp.eq.s32.totalorder %s32, 3
      %p96 = por %p94, %p95
      %p98 = scmp.ne.s32.totalorder %s83, %s97
      %p99 = scmp.eq.s32.totalorder %s32, 0
      %p100 = por %p98, %p99
      %s102 = sadd.s32 %s101, 1
      %p105 = scmp.eq.s32.totalorder %s26, 3
      %p106 = scmp.ne.s32.totalorder %s101, %s103
      %p107 = scmp.eq.s32.totalorder %s26, 0
      %p108 = por %p106, %p107
      %p109 = scmp.ne.s32.totalorder %s101, %s103
      %p110 = scmp.eq.s32.totalorder %s31, 3
      %p111 = por %p109, %p110
      %p112 = scmp.ne.s32.totalorder %s103, %s104
      %p113 = scmp.eq.s32.totalorder %s31, 0
      %p114 = por %p112, %p113
      %p115 = scmp.ne.s32.totalorder %s103, %s104
      %p116 = scmp.eq.s32.totalorder %s32, 3
      %p117 = por %p115, %p116
      %p119 = scmp.ne.s32.totalorder %s104, %s118
      %p120 = scmp.eq.s32.totalorder %s32, 0
      %p121 = por %p119, %p120
      %s123 = sadd.s32 %s122, 1
      %p126 = scmp.eq.s32.totalorder %s26, 3
      %p127 = scmp.ne.s32.totalorder %s122, %s124
      %p128 = scmp.eq.s32.totalorder %s26, 0
      %p129 = por %p127, %p128
      %p130 = scmp.ne.s32.totalorder %s122, %s124
      %p131 = scmp.eq.s32.totalorder %s31, 3
      %p132 = por %p130, %p131
      %p133 = scmp.ne.s32.totalorder %s124, %s125
      %p134 = scmp.eq.s32.totalorder %s31, 0
      %p135 = por %p133, %p134
      %p136 = scmp.ne.s32.totalorder %s124, %s125
      %p137 = scmp.eq.s32.totalorder %s32, 3
      %p138 = por %p136, %p137
      %p140 = scmp.ne.s32.totalorder %s125, %s139
      %p141 = scmp.eq.s32.totalorder %s32, 0
      %p142 = por %p140, %p141
      %s144 = sadd.s32 %s143, 1
      %p147 = scmp.eq.s32.totalorder %s26, 3
      %p148 = scmp.ne.s32.totalorder %s143, %s145
      %p149 = scmp.eq.s32.totalorder %s26, 0
      %p150 = por %p148, %p149
      %p151 = scmp.ne.s32.totalorder %s143, %s145
      %p152 = scmp.eq.s32.totalorder %s31, 3
      %p153 = por %p151, %p152
      %p154 = scmp.ne.s32.totalorder %s145, %s146
      %p155 = scmp.eq.s32.totalorder %s31, 0
      %p156 = por %p154, %p155
      %p157 = scmp.ne.s32.totalorder %s145, %s146
      %p158 = scmp.eq.s32.totalorder %s32, 3
      %p159 = por %p157, %p158
      %p161 = scmp.ne.s32.totalorder %s146, %s160
      %p162 = scmp.eq.s32.totalorder %s32, 0
      %p163 = por %p161, %p162
      %s165 = sadd.s32 %s164, 1
      %p168 = scmp.eq.s32.totalorder %s26, 3
      %p169 = scmp.ne.s32.totalorder %s164, %s166
      %p170 = scmp.eq.s32.totalorder %s26, 0
      %p171 = por %p169, %p170
      %p172 = scmp.ne.s32.totalorder %s164, %s166
      %p173 = scmp.eq.s32.totalorder %s31, 3
      %p174 = por %p172, %p173
      %p175 = scmp.ne.s32.totalorder %s166, %s167
      %p176 = scmp.eq.s32.totalorder %s31, 0
      %p177 = por %p175, %p176
      %p178 = scmp.ne.s32.totalorder %s166, %s167
      %p179 = scmp.eq.s32.totalorder %s32, 3
      %p180 = por %p178, %p179
      %p182 = scmp.ne.s32.totalorder %s167, %s181
      %p183 = scmp.eq.s32.totalorder %s32, 0
      %p184 = por %p182, %p183
      %s186 = sadd.s32 %s185, 1
      %p189 = scmp.eq.s32.totalorder %s26, 3
      %p190 = scmp.ne.s32.totalorder %s185, %s187
      %p191 = scmp.eq.s32.totalorder %s26, 0
      %p192 = por %p190, %p191
      %p193 = scmp.ne.s32.totalorder %s185, %s187
      %p194 = scmp.eq.s32.totalorder %s31, 3
      %p195 = por %p193, %p194
      %p196 = scmp.ne.s32.totalorder %s187, %s188
      %p197 = scmp.eq.s32.totalorder %s31, 0
      %p198 = por %p196, %p197
      %p199 = scmp.ne.s32.totalorder %s187, %s188
      %p200 = scmp.eq.s32.totalorder %s32, 3
      %p201 = por %p199, %p200
      %p203 = scmp.ne.s32.totalorder %s188, %s202
      %p204 = scmp.eq.s32.totalorder %s32, 0
      %p205 = por %p203, %p204
      %s206 = ssub.s32 %s33, %s45
      %p207 = scmp.eq.s32.totalorder %s206, 0
      %s209 = sadd.s32 %s208, 1
      %s210 = scalar_select %p207, %s208, %s209
      %p213 = pneg %p207
      %p214 = scmp.eq.s32.totalorder %s26, 3
      %p215 = por %p213, %p214
      %p216 = scmp.ne.s32.totalorder %s208, %s211
      %p217 = scmp.eq.s32.totalorder %s26, 0
      %p218 = por %p216, %p217
      %p219 = scmp.ne.s32.totalorder %s208, %s211
      %p220 = scmp.eq.s32.totalorder %s31, 3
      %p221 = por %p219, %p220
      %p222 = scmp.ne.s32.totalorder %s211, %s212
      %p223 = scmp.eq.s32.totalorder %s31, 0
      %p224 = por %p222, %p223
      %p225 = scmp.ne.s32.totalorder %s211, %s212
      %p226 = scmp.eq.s32.totalorder %s32, 3
      %p227 = por %p225, %p226
      %p229 = scmp.ne.s32.totalorder %s212, %s228
      %p230 = scmp.eq.s32.totalorder %s32, 0
      %p231 = por %p229, %p230
      %s232 = ssub.s32 %s33, %s45
      %p233 = scmp.eq.s32.totalorder %s232, 0
      %s235 = sadd.s32 %s234, 1
      %s236 = scalar_select %p233, %s234, %s235
      %p239 = pneg %p233
      %p240 = scmp.eq.s32.totalorder %s26, 3
      %p241 = por %p239, %p240
      %p242 = scmp.ne.s32.totalorder %s234, %s237
      %p243 = scmp.eq.s32.totalorder %s26, 0
      %p244 = por %p242, %p243
      %p245 = scmp.ne.s32.totalorder %s234, %s237
      %p246 = scmp.eq.s32.totalorder %s31, 3
      %p247 = por %p245, %p246
      %p248 = scmp.ne.s32.totalorder %s237, %s238
      %p249 = scmp.eq.s32.totalorder %s31, 0
      %p250 = por %p248, %p249
      %p251 = scmp.ne.s32.totalorder %s237, %s238
      %p252 = scmp.eq.s32.totalorder %s32, 3
      %p253 = por %p251, %p252
      %p255 = scmp.ne.s32.totalorder %s238, %s254
      %p256 = scmp.eq.s32.totalorder %s32, 0
      %p257 = por %p255, %p256
      %s258 = ssub.s32 %s33, %s45
      %p259 = scmp.eq.s32.totalorder %s258, 0
      %s261 = sadd.s32 %s260, 1
      %s262 = scalar_select %p259, %s260, %s261
      %p265 = pneg %p259
      %p266 = scmp.eq.s32.totalorder %s26, 3
      %p267 = por %p265, %p266
      %p268 = scmp.ne.s32.totalorder %s260, %s263
      %p269 = scmp.eq.s32.totalorder %s26, 0
      %p270 = por %p268, %p269
      %p271 = scmp.ne.s32.totalorder %s260, %s263
      %p272 = scmp.eq.s32.totalorder %s31, 3
      %p273 = por %p271, %p272
      %p274 = scmp.ne.s32.totalorder %s263, %s264
      %p275 = scmp.eq.s32.totalorder %s31, 0
      %p276 = por %p274, %p275
      %p277 = scmp.ne.s32.totalorder %s263, %s264
      %p278 = scmp.eq.s32.totalorder %s32, 3
      %p279 = por %p277, %p278
      %p281 = scmp.ne.s32.totalorder %s264, %s280
      %p282 = scmp.eq.s32.totalorder %s32, 0
      %p283 = por %p281, %p282
      %p284 = scmp.le.s32.totalorder 1, %s26
      %p285 = scmp.lt.s32.totalorder %s26, 5
      %p286 = pnand %p284, %p285
      %p287 = pneg %p286
      // Predicated region
      $region9: #{porpoise_amil_forward.1} parent=5 // pred_check
        _
      $region10: #{porpoise_amil_forward.1} parent=5 // pred_check_branch
        %289 = sbr.rel (%p286) target = $region12
      $region11: #{porpoise_amil_forward.1} parent=5 // pred_region
        %s290 = ssub.s32 %s26, 1
        // Predicated region
        $region13: #{porpoise_amil_forward.1} parent=11 // pred_check
          %p291 = pneg %p93
        $region14: #{porpoise_amil_forward.1} parent=11 // pred_check_branch
          %293 = sbr.rel (%p291) target = $region16
        $region15: #{porpoise_amil_forward.1} parent=11 // pred_region
          %s295 = ssub.s32 32768, 32768
          %296 = vsyncadd [#allocation11], %s295
          %s297 = sshll.u32 [#allocation10], 4
          %s298 = int_to_ptr.vmem [resolvable:$true] %s297
          %303 = dma.hbm_to_vmem [thread:$0]  %s2, 32768, %s298, [#allocation11], 256, 256, 16
        $region16: #{porpoise_amil_forward.1} parent=11 // pred_fallthru
          _
        // Predicated region
        $region17: #{porpoise_amil_forward.1} parent=11 // pred_check
          %p304 = pneg %p114
        $region18: #{porpoise_amil_forward.1} parent=11 // pred_check_branch
          %306 = sbr.rel (%p304) target = $region20
        $region19: #{porpoise_amil_forward.1} parent=11 // pred_region
          %s308 = ssub.s32 64, 64
          %309 = vsyncadd [#allocation11], %s308
          %s311 = sshll.u32 [#allocation12], 4
          %s312 = int_to_ptr.vmem [resolvable:$true] %s311
          %314 = dma.hbm_to_vmem [thread:$0]  %s3, 64, %s312, [#allocation11]
        $region20: #{porpoise_amil_forward.1} parent=11 // pred_fallthru
          _
        // Predicated region
        $region21: #{porpoise_amil_forward.1} parent=11 // pred_check
          %p315 = pneg %p135
        $region22: #{porpoise_amil_forward.1} parent=11 // pred_check_branch
          %317 = sbr.rel (%p315) target = $region24
        $region23: #{porpoise_amil_forward.1} parent=11 // pred_region
          %s319 = ssub.s32 16384, 16384
          %320 = vsyncadd [#allocation14], %s319
          %s321 = sshll.u32 [#allocation13], 4
          %s322 = int_to_ptr.vmem [resolvable:$true] %s321
          %327 = dma.hbm_to_vmem [thread:$0]  %s4, 16384, %s322, [#allocation14], 256, 256, 16
        $region24: #{porpoise_amil_forward.1} parent=11 // pred_fallthru
          _
        // Predicated region
        $region25: #{porpoise_amil_forward.1} parent=11 // pred_check
          %p328 = pneg %p156
        $region26: #{porpoise_amil_forward.1} parent=11 // pred_check_branch
          %330 = sbr.rel (%p328) target = $region28
        $region27: #{porpoise_amil_forward.1} parent=11 // pred_region
          %s332 = ssub.s32 64, 64
          %333 = vsyncadd [#allocation14], %s332
          %s335 = sshll.u32 [#allocation15], 4
          %s336 = int_to_ptr.vmem [resolvable:$true] %s335
          %338 = dma.hbm_to_vmem [thread:$0]  %s5, 64, %s336, [#allocation14]
        $region28: #{porpoise_amil_forward.1} parent=11 // pred_fallthru
          _
        // Predicated region
        $region29: #{porpoise_amil_forward.1} parent=11 // pred_check
          %p339 = pneg %p177
        $region30: #{porpoise_amil_forward.1} parent=11 // pred_check_branch
          %341 = sbr.rel (%p339) target = $region32
        $region31: #{porpoise_amil_forward.1} parent=11 // pred_region
          %s343 = ssub.s32 32, 32
          %344 = vsyncadd [#allocation17], %s343
          %s346 = sshll.u32 [#allocation16], 4
          %s347 = int_to_ptr.vmem [resolvable:$true] %s346
          %349 = dma.hbm_to_vmem [thread:$0]  %s6, 32, %s347, [#allocation17]
        $region32: #{porpoise_amil_forward.1} parent=11 // pred_fallthru
          _
        // Predicated region
        $region33: #{porpoise_amil_forward.1} parent=11 // pred_check
          %p350 = pneg %p198
        $region34: #{porpoise_amil_forward.1} parent=11 // pred_check_branch
          %352 = sbr.rel (%p350) target = $region36
        $region35: #{porpoise_amil_forward.1} parent=11 // pred_region
          _
        $region36: #{porpoise_amil_forward.1} parent=11 // pred_fallthru
          _
      $region12: #{porpoise_amil_forward.1} parent=5 // pred_fallthru
        _
      %p353 = scmp.lt.s32.totalorder %s26, 4
      // Predicated region
      $region37: #{porpoise_amil_forward.1} parent=5 // pred_check
        %p354 = pneg %p353
      $region38: #{porpoise_amil_forward.1} parent=5 // pred_check_branch
        %356 = sbr.rel (%p354) target = $region40
      $region39: #{porpoise_amil_forward.1} parent=5 // pred_region
        // Predicated region
        $region41: #{porpoise_amil_forward.1} parent=39 // pred_check
          %p357 = pneg %p66
        $region42: #{porpoise_amil_forward.1} parent=39 // pred_check_branch
          %359 = sbr.rel (%p357) target = $region44
        $region43: #{porpoise_amil_forward.1} parent=39 // pred_region
          %s360 = sand.u32 %s56, 1
          %s361 = scalar_lea.sflag [#allocation9], %s360
          %s362 = sand.u32 %s56, 1
          %s363 = smul.addr %s362, 2048
          %s364 = scalar_lea.vmem [#allocation8], %s363
          %s365 = smul.u32 %s33, 2
          %s366 = sadd.s32 %s365, %s34
          %p367 = scmp.lt.s32.totalorder %s366, 2
          %s368 = scalar_select %p367, %s366, 2
          %s369 = smul.u32 32, %s368
          %s370 = ssub.s32 75, %s369
          %p371 = scmp.lt.s32.totalorder %s370, 32
          %s372 = scalar_select %p371, %s370, 32
          %s373 = smul.u32 128, %s372
          %s374 = smul.u32 %s373, 8
          %s376 = ssub.s32 32768, %s374
          %377 = vsyncadd %s361, %s376
          %p378 = scmp.ne.s32.totalorder 0, %s374
          %s379 = smul.addr %s369, 8
          %s380 = smul.addr %s379, 128
          %s381 = scalar_lea.hbm %s1, %s380
          %s382 = smul.u32 64, %s372
          %s383 = sshll.u32 %s364, 4
          %s384 = int_to_ptr.vmem [resolvable:$true] %s383
          %s385 = sshll.u32 %s382, 4
          %389 = dma.hbm_to_vmem [thread:$0]  (%p378), %s381, %s385, %s384, %s361, 1024, 1024, 64
        $region44: #{porpoise_amil_forward.1} parent=39 // pred_fallthru
          _
      $region40: #{porpoise_amil_forward.1} parent=5 // pred_fallthru
        _
      %p390 = scmp.le.s32.totalorder 1, %s26
      %p391 = scmp.lt.s32.totalorder %s26, 5
      %p392 = pnand %p390, %p391
      %p393 = pneg %p392
      // Predicated region
      $region45: #{porpoise_amil_forward.1} parent=5 // pred_check
        _
      $region46: #{porpoise_amil_forward.1} parent=5 // pred_check_branch
        %395 = sbr.rel (%p392) target = $region48
      $region47: #{porpoise_amil_forward.1} parent=5 // pred_region
        %s396 = ssub.s32 %s26, 1
        %s397 = sand.u32 %s59, 1
        %s398 = scalar_lea.sflag [#allocation9], %s397
        %s399 = sand.u32 %s59, 1
        %s400 = smul.addr %s399, 2048
        %s401 = scalar_lea.vmem [#allocation8], %s400
        // Predicated region
        $region49: #{porpoise_amil_forward.1} parent=47 // pred_check
          %p402 = pneg %p72
        $region50: #{porpoise_amil_forward.1} parent=47 // pred_check_branch
          %404 = sbr.rel (%p402) target = $region52
        $region51: #{porpoise_amil_forward.1} parent=47 // pred_region
          %405 = dma.done %s398, 32768
        $region52: #{porpoise_amil_forward.1} parent=47 // pred_fallthru
          _
        // Predicated region
        $region53: #{porpoise_amil_forward.1} parent=47 // pred_check
          %p406 = pneg %p93
        $region54: #{porpoise_amil_forward.1} parent=47 // pred_check_branch
          %408 = sbr.rel (%p406) target = $region56
        $region55: #{porpoise_amil_forward.1} parent=47 // pred_region
          %409 = dma.done [#allocation11], 32768
        $region56: #{porpoise_amil_forward.1} parent=47 // pred_fallthru
          _
        // Predicated region
        $region57: #{porpoise_amil_forward.1} parent=47 // pred_check
          %p410 = pneg %p114
        $region58: #{porpoise_amil_forward.1} parent=47 // pred_check_branch
          %412 = sbr.rel (%p410) target = $region60
        $region59: #{porpoise_amil_forward.1} parent=47 // pred_region
          %413 = dma.done [#allocation11], 64
        $region60: #{porpoise_amil_forward.1} parent=47 // pred_fallthru
          _
        // Predicated region
        $region61: #{porpoise_amil_forward.1} parent=47 // pred_check
          %p414 = pneg %p135
        $region62: #{porpoise_amil_forward.1} parent=47 // pred_check_branch
          %416 = sbr.rel (%p414) target = $region64
        $region63: #{porpoise_amil_forward.1} parent=47 // pred_region
          %417 = dma.done [#allocation14], 16384
        $region64: #{porpoise_amil_forward.1} parent=47 // pred_fallthru
          _
        // Predicated region
        $region65: #{porpoise_amil_forward.1} parent=47 // pred_check
          %p418 = pneg %p156
        $region66: #{porpoise_amil_forward.1} parent=47 // pred_check_branch
          %420 = sbr.rel (%p418) target = $region68
        $region67: #{porpoise_amil_forward.1} parent=47 // pred_region
          %421 = dma.done [#allocation14], 64
        $region68: #{porpoise_amil_forward.1} parent=47 // pred_fallthru
          _
        // Predicated region
        $region69: #{porpoise_amil_forward.1} parent=47 // pred_check
          %p422 = pneg %p177
        $region70: #{porpoise_amil_forward.1} parent=47 // pred_check_branch
          %424 = sbr.rel (%p422) target = $region72
        $region71: #{porpoise_amil_forward.1} parent=47 // pred_region
          %425 = dma.done [#allocation17], 32
        $region72: #{porpoise_amil_forward.1} parent=47 // pred_fallthru
          _
        %s426 = sand.u32 %s59, 1
        %s427 = scalar_lea.sflag [#allocation9], %s426
        %s428 = sand.u32 %s59, 1
        %s429 = smul.addr %s428, 2048
        %s430 = scalar_lea.vmem [#allocation8], %s429
        %p431 = pneg %p72
        %p432 = pneg %p69
        %p433 = pneg %p93
        %p434 = pneg %p90
        %p435 = pneg %p114
        %p436 = pneg %p111
        %p437 = pneg %p135
        %p438 = pneg %p132
        %p439 = pneg %p156
        %p440 = pneg %p153
        %p441 = pneg %p177
        %p442 = pneg %p174
        %p443 = pneg %p198
        %p444 = pneg %p195
        %p445 = pneg %p224
        %p446 = pneg %p221
        %p447 = scmp.lt.s32.totalorder %s35, 1
        %s448 = scalar_select %p447, %s35, 1
        %s449 = scalar_lea.vmem %s8, %s448
        %p450 = pneg %p250
        %p451 = pneg %p247
        %p452 = scmp.lt.s32.totalorder %s35, 1
        %s453 = scalar_select %p452, %s35, 1
        %s454 = scalar_lea.vmem %s9, %s453
        %p455 = pneg %p276
        %p456 = pneg %p273
        %p457 = scmp.lt.s32.totalorder %s35, 1
        %s458 = scalar_select %p457, %s35, 1
        %s459 = smul.addr %s458, 4
        %s460 = scalar_lea.vmem %s10, %s459
        %s461 = smul.u32 %s35, 2
        %s462 = sadd.s32 %s461, %s36
        %p463 = scmp.lt.s32.totalorder %s462, 2
        %s464 = scalar_select %p463, %s462, 2
        %s465 = smul.u32 32, %s464
        %s466 = ssub.s32 75, %s465
        %p467 = scmp.lt.s32.totalorder %s466, 32
        %s468 = scalar_select %p467, %s466, 32
        %s469 = smul.u32 128, %s468
        %s470 = smul.u32 %s469, 8
        %p471 = scmp.lt.s32.totalorder %s35, 1
        %s472 = scalar_select %p471, %s35, 1
        %s473 = scalar_lea.vmem %s8, %s472
        %p474 = scmp.lt.s32.totalorder %s35, 1
        %s475 = scalar_select %p474, %s35, 1
        %s476 = scalar_lea.vmem %s9, %s475
        %p477 = scmp.lt.s32.totalorder %s35, 1
        %s478 = scalar_select %p477, %s35, 1
        %s479 = smul.addr %s478, 4
        %s480 = scalar_lea.vmem %s10, %s479
        %p481 = scmp.eq.s32.totalorder %s36, 0
        // Predicated region
        $region73: #{porpoise_amil_forward.1} parent=47 // pred_check
          %p482 = pneg %p481
        $region74: #{porpoise_amil_forward.1} parent=47 // pred_check_branch
          %484 = sbr.rel (%p482) target = $region76
        $region75: #{porpoise_amil_forward.1} parent=47 // pred_region
          %vm485 = vcmask 0
          %486 = vst.msk [vmem:[#allocation2] sm:$0x1] %vm485, -1e+30
          %487 = vst.msk [vmem:[#allocation3] sm:$0x1] %vm485, 0.0
          %v488 = vlaneseq
          %vm489 = vcmp.ge.s32.totalorder %v488, 0
          %vm490 = vcmp.lt.s32.totalorder %v488, 512
          %vm491 = vmand %vm489, %vm490
          %492 = vst.msk [vmem:[#allocation4] sm:$0xf] %vm491, 0.0
        $region76: #{porpoise_amil_forward.1} parent=47 // pred_fallthru
          _
        %s493 = smul.u32 %s35, 2
        %s494 = sadd.s32 %s493, %s36
        %s495 = smul.u32 %s494, 256
        %v496 = vlaneseq
        %v497 = vshrl.u32 %v496, 7
        %v498 = vadd.s32 %v497, 8
        %v499 = vadd.s32 %v497, 16
        %v500 = vadd.s32 %v497, 24
        %v501 = vadd.s32 %v497, 32
        %v502 = vadd.s32 %v497, 40
        %v503 = vadd.s32 %v497, 48
        %v504 = vadd.s32 %v497, 56
        %v505 = vadd.s32 %v497, 64
        %v506 = vadd.s32 %v497, 72
        %v507 = vadd.s32 %v497, 80
        %v508 = vadd.s32 %v497, 88
        %v509 = vadd.s32 %v497, 96
        %v510 = vadd.s32 %v497, 104
        %v511 = vadd.s32 %v497, 112
        %v512 = vadd.s32 %v497, 120
        %v513 = vadd.s32 %v497, 128
        %v514 = vadd.s32 %v497, 136
        %v515 = vadd.s32 %v497, 144
        %v516 = vadd.s32 %v497, 152
        %v517 = vadd.s32 %v497, 160
        %v518 = vadd.s32 %v497, 168
        %v519 = vadd.s32 %v497, 176
        %v520 = vadd.s32 %v497, 184
        %v521 = vadd.s32 %v497, 192
        %v522 = vadd.s32 %v497, 200
        %v523 = vadd.s32 %v497, 208
        %v524 = vadd.s32 %v497, 216
        %v525 = vadd.s32 %v497, 224
        %v526 = vadd.s32 %v497, 232
        %v527 = vadd.s32 %v497, 240
        %v528 = vadd.s32 %v497, 248
        %v529 = vstv %s495
        %v530 = vadd.s32 %v529, %v497
        %v531 = vadd.s32 %v529, %v498
        %v532 = vadd.s32 %v529, %v499
        %v533 = vadd.s32 %v529, %v500
        %v534 = vadd.s32 %v529, %v501
        %v535 = vadd.s32 %v529, %v502
        %v536 = vadd.s32 %v529, %v503
        %v537 = vadd.s32 %v529, %v504
        %v538 = vadd.s32 %v529, %v505
        %v539 = vadd.s32 %v529, %v506
        %v540 = vadd.s32 %v529, %v507
        %v541 = vadd.s32 %v529, %v508
        %v542 = vadd.s32 %v529, %v509
        %v543 = vadd.s32 %v529, %v510
        %v544 = vadd.s32 %v529, %v511
        %v545 = vadd.s32 %v529, %v512
        %v546 = vadd.s32 %v529, %v513
        %v547 = vadd.s32 %v529, %v514
        %v548 = vadd.s32 %v529, %v515
        %v549 = vadd.s32 %v529, %v516
        %v550 = vadd.s32 %v529, %v517
        %v551 = vadd.s32 %v529, %v518
        %v552 = vadd.s32 %v529, %v519
        %v553 = vadd.s32 %v529, %v520
        %v554 = vadd.s32 %v529, %v521
        %v555 = vadd.s32 %v529, %v522
        %v556 = vadd.s32 %v529, %v523
        %v557 = vadd.s32 %v529, %v524
        %v558 = vadd.s32 %v529, %v525
        %v559 = vadd.s32 %v529, %v526
        %v560 = vadd.s32 %v529, %v527
        %v561 = vadd.s32 %v529, %v528
        %s562 = sld [smem:[#allocation6]]
        %v563 = vstv %s562
        %vm564 = vcmp.lt.s32.totalorder %v530, %v563
        %vm565 = vcmp.lt.s32.totalorder %v531, %v563
        %vm566 = vcmp.lt.s32.totalorder %v532, %v563
        %vm567 = vcmp.lt.s32.totalorder %v533, %v563
        %vm568 = vcmp.lt.s32.totalorder %v534, %v563
        %vm569 = vcmp.lt.s32.totalorder %v535, %v563
        %vm570 = vcmp.lt.s32.totalorder %v536, %v563
        %vm571 = vcmp.lt.s32.totalorder %v537, %v563
        %vm572 = vcmp.lt.s32.totalorder %v538, %v563
        %vm573 = vcmp.lt.s32.totalorder %v539, %v563
        %vm574 = vcmp.lt.s32.totalorder %v540, %v563
        %vm575 = vcmp.lt.s32.totalorder %v541, %v563
        %vm576 = vcmp.lt.s32.totalorder %v542, %v563
        %vm577 = vcmp.lt.s32.totalorder %v543, %v563
        %vm578 = vcmp.lt.s32.totalorder %v544, %v563
        %vm579 = vcmp.lt.s32.totalorder %v545, %v563
        %vm580 = vcmp.lt.s32.totalorder %v546, %v563
        %vm581 = vcmp.lt.s32.totalorder %v547, %v563
        %vm582 = vcmp.lt.s32.totalorder %v548, %v563
        %vm583 = vcmp.lt.s32.totalorder %v549, %v563
        %vm584 = vcmp.lt.s32.totalorder %v550, %v563
        %vm585 = vcmp.lt.s32.totalorder %v551, %v563
        %vm586 = vcmp.lt.s32.totalorder %v552, %v563
        %vm587 = vcmp.lt.s32.totalorder %v553, %v563
        %vm588 = vcmp.lt.s32.totalorder %v554, %v563
        %vm589 = vcmp.lt.s32.totalorder %v555, %v563
        %vm590 = vcmp.lt.s32.totalorder %v556, %v563
        %vm591 = vcmp.lt.s32.totalorder %v557, %v563
        %vm592 = vcmp.lt.s32.totalorder %v558, %v563
        %vm593 = vcmp.lt.s32.totalorder %v559, %v563
        %vm594 = vcmp.lt.s32.totalorder %v560, %v563
        %vm595 = vcmp.lt.s32.totalorder %v561, %v563
        %v596 = vld [vmem:[%s401] sm:$0xff]
        %v597 = vld [vmem:[%s401 + $0x8] sm:$0xff]
        %v598 = vld [vmem:[%s401 + $0x10] sm:$0xff]
        %v599 = vld [vmem:[%s401 + $0x18] sm:$0xff]
        %v600 = vld [vmem:[%s401 + $0x20] sm:$0xff]
        %v601 = vld [vmem:[%s401 + $0x28] sm:$0xff]
        %v602 = vld [vmem:[%s401 + $0x30] sm:$0xff]
        %v603 = vld [vmem:[%s401 + $0x38] sm:$0xff]
        %v604 = vld [vmem:[%s401 + $0x40] sm:$0xff]
        %v605 = vld [vmem:[%s401 + $0x48] sm:$0xff]
        %v606 = vld [vmem:[%s401 + $0x50] sm:$0xff]
        %v607 = vld [vmem:[%s401 + $0x58] sm:$0xff]
        %v608 = vld [vmem:[%s401 + $0x60] sm:$0xff]
        %v609 = vld [vmem:[%s401 + $0x68] sm:$0xff]
        %v610 = vld [vmem:[%s401 + $0x70] sm:$0xff]
        %v611 = vld [vmem:[%s401 + $0x78] sm:$0xff]
        %v612 = vld [vmem:[%s401 + $0x80] sm:$0xff]
        %v613 = vld [vmem:[%s401 + $0x88] sm:$0xff]
        %v614 = vld [vmem:[%s401 + $0x90] sm:$0xff]
        %v615 = vld [vmem:[%s401 + $0x98] sm:$0xff]
        %v616 = vld [vmem:[%s401 + $0xa0] sm:$0xff]
        %v617 = vld [vmem:[%s401 + $0xa8] sm:$0xff]
        %v618 = vld [vmem:[%s401 + $0xb0] sm:$0xff]
        %v619 = vld [vmem:[%s401 + $0xb8] sm:$0xff]
        %v620 = vld [vmem:[%s401 + $0xc0] sm:$0xff]
        %v621 = vld [vmem:[%s401 + $0xc8] sm:$0xff]
        %v622 = vld [vmem:[%s401 + $0xd0] sm:$0xff]
        %v623 = vld [vmem:[%s401 + $0xd8] sm:$0xff]
        %v624 = vld [vmem:[%s401 + $0xe0] sm:$0xff]
        %v625 = vld [vmem:[%s401 + $0xe8] sm:$0xff]
        %v626 = vld [vmem:[%s401 + $0xf0] sm:$0xff]
        %v627 = vld [vmem:[%s401 + $0xf8] sm:$0xff]
        %v628 = vld [vmem:[%s401 + $0x100] sm:$0xff]
        %v629 = vld [vmem:[%s401 + $0x108] sm:$0xff]
        %v630 = vld [vmem:[%s401 + $0x110] sm:$0xff]
        %v631 = vld [vmem:[%s401 + $0x118] sm:$0xff]
        %v632 = vld [vmem:[%s401 + $0x120] sm:$0xff]
        %v633 = vld [vmem:[%s401 + $0x128] sm:$0xff]
        %v634 = vld [vmem:[%s401 + $0x130] sm:$0xff]
        %v635 = vld [vmem:[%s401 + $0x138] sm:$0xff]
        %v636 = vld [vmem:[%s401 + $0x140] sm:$0xff]
        %v637 = vld [vmem:[%s401 + $0x148] sm:$0xff]
        %v638 = vld [vmem:[%s401 + $0x150] sm:$0xff]
        %v639 = vld [vmem:[%s401 + $0x158] sm:$0xff]
        %v640 = vld [vmem:[%s401 + $0x160] sm:$0xff]
        %v641 = vld [vmem:[%s401 + $0x168] sm:$0xff]
        %v642 = vld [vmem:[%s401 + $0x170] sm:$0xff]
        %v643 = vld [vmem:[%s401 + $0x178] sm:$0xff]
        %v644 = vld [vmem:[%s401 + $0x180] sm:$0xff]
        %v645 = vld [vmem:[%s401 + $0x188] sm:$0xff]
        %v646 = vld [vmem:[%s401 + $0x190] sm:$0xff]
        %v647 = vld [vmem:[%s401 + $0x198] sm:$0xff]
        %v648 = vld [vmem:[%s401 + $0x1a0] sm:$0xff]
        %v649 = vld [vmem:[%s401 + $0x1a8] sm:$0xff]
        %v650 = vld [vmem:[%s401 + $0x1b0] sm:$0xff]
        %v651 = vld [vmem:[%s401 + $0x1b8] sm:$0xff]
        %v652 = vld [vmem:[%s401 + $0x1c0] sm:$0xff]
        %v653 = vld [vmem:[%s401 + $0x1c8] sm:$0xff]
        %v654 = vld [vmem:[%s401 + $0x1d0] sm:$0xff]
        %v655 = vld [vmem:[%s401 + $0x1d8] sm:$0xff]
        %v656 = vld [vmem:[%s401 + $0x1e0] sm:$0xff]
        %v657 = vld [vmem:[%s401 + $0x1e8] sm:$0xff]
        %v658 = vld [vmem:[%s401 + $0x1f0] sm:$0xff]
        %v659 = vld [vmem:[%s401 + $0x1f8] sm:$0xff]
        %v660 = vld [vmem:[%s401 + $0x200] sm:$0xff]
        %v661 = vld [vmem:[%s401 + $0x208] sm:$0xff]
        %v662 = vld [vmem:[%s401 + $0x210] sm:$0xff]
        %v663 = vld [vmem:[%s401 + $0x218] sm:$0xff]
        %v664 = vld [vmem:[%s401 + $0x220] sm:$0xff]
        %v665 = vld [vmem:[%s401 + $0x228] sm:$0xff]
        %v666 = vld [vmem:[%s401 + $0x230] sm:$0xff]
        %v667 = vld [vmem:[%s401 + $0x238] sm:$0xff]
        %v668 = vld [vmem:[%s401 + $0x240] sm:$0xff]
        %v669 = vld [vmem:[%s401 + $0x248] sm:$0xff]
        %v670 = vld [vmem:[%s401 + $0x250] sm:$0xff]
        %v671 = vld [vmem:[%s401 + $0x258] sm:$0xff]
        %v672 = vld [vmem:[%s401 + $0x260] sm:$0xff]
        %v673 = vld [vmem:[%s401 + $0x268] sm:$0xff]
        %v674 = vld [vmem:[%s401 + $0x270] sm:$0xff]
        %v675 = vld [vmem:[%s401 + $0x278] sm:$0xff]
        %v676 = vld [vmem:[%s401 + $0x280] sm:$0xff]
        %v677 = vld [vmem:[%s401 + $0x288] sm:$0xff]
        %v678 = vld [vmem:[%s401 + $0x290] sm:$0xff]
        %v679 = vld [vmem:[%s401 + $0x298] sm:$0xff]
        %v680 = vld [vmem:[%s401 + $0x2a0] sm:$0xff]
        %v681 = vld [vmem:[%s401 + $0x2a8] sm:$0xff]
        %v682 = vld [vmem:[%s401 + $0x2b0] sm:$0xff]
        %v683 = vld [vmem:[%s401 + $0x2b8] sm:$0xff]
        %v684 = vld [vmem:[%s401 + $0x2c0] sm:$0xff]
        %v685 = vld [vmem:[%s401 + $0x2c8] sm:$0xff]
        %v686 = vld [vmem:[%s401 + $0x2d0] sm:$0xff]
        %v687 = vld [vmem:[%s401 + $0x2d8] sm:$0xff]
        %v688 = vld [vmem:[%s401 + $0x2e0] sm:$0xff]
        %v689 = vld [vmem:[%s401 + $0x2e8] sm:$0xff]
        %v690 = vld [vmem:[%s401 + $0x2f0] sm:$0xff]
        %v691 = vld [vmem:[%s401 + $0x2f8] sm:$0xff]
        %v692 = vld [vmem:[%s401 + $0x300] sm:$0xff]
        %v693 = vld [vmem:[%s401 + $0x308] sm:$0xff]
        %v694 = vld [vmem:[%s401 + $0x310] sm:$0xff]
        %v695 = vld [vmem:[%s401 + $0x318] sm:$0xff]
        %v696 = vld [vmem:[%s401 + $0x320] sm:$0xff]
        %v697 = vld [vmem:[%s401 + $0x328] sm:$0xff]
        %v698 = vld [vmem:[%s401 + $0x330] sm:$0xff]
        %v699 = vld [vmem:[%s401 + $0x338] sm:$0xff]
        %v700 = vld [vmem:[%s401 + $0x340] sm:$0xff]
        %v701 = vld [vmem:[%s401 + $0x348] sm:$0xff]
        %v702 = vld [vmem:[%s401 + $0x350] sm:$0xff]
        %v703 = vld [vmem:[%s401 + $0x358] sm:$0xff]
        %v704 = vld [vmem:[%s401 + $0x360] sm:$0xff]
        %v705 = vld [vmem:[%s401 + $0x368] sm:$0xff]
        %v706 = vld [vmem:[%s401 + $0x370] sm:$0xff]
        %v707 = vld [vmem:[%s401 + $0x378] sm:$0xff]
        %v708 = vld [vmem:[%s401 + $0x380] sm:$0xff]
        %v709 = vld [vmem:[%s401 + $0x388] sm:$0xff]
        %v710 = vld [vmem:[%s401 + $0x390] sm:$0xff]
        %v711 = vld [vmem:[%s401 + $0x398] sm:$0xff]
        %v712 = vld [vmem:[%s401 + $0x3a0] sm:$0xff]
        %v713 = vld [vmem:[%s401 + $0x3a8] sm:$0xff]
        %v714 = vld [vmem:[%s401 + $0x3b0] sm:$0xff]
        %v715 = vld [vmem:[%s401 + $0x3b8] sm:$0xff]
        %v716 = vld [vmem:[%s401 + $0x3c0] sm:$0xff]
        %v717 = vld [vmem:[%s401 + $0x3c8] sm:$0xff]
        %v718 = vld [vmem:[%s401 + $0x3d0] sm:$0xff]
        %v719 = vld [vmem:[%s401 + $0x3d8] sm:$0xff]
        %v720 = vld [vmem:[%s401 + $0x3e0] sm:$0xff]
        %v721 = vld [vmem:[%s401 + $0x3e8] sm:$0xff]
        %v722 = vld [vmem:[%s401 + $0x3f0] sm:$0xff]
        %v723 = vld [vmem:[%s401 + $0x3f8] sm:$0xff]
        %v724 = vld [vmem:[%s401 + $0x400] sm:$0xff]
        %v725 = vld [vmem:[%s401 + $0x408] sm:$0xff]
        %v726 = vld [vmem:[%s401 + $0x410] sm:$0xff]
        %v727 = vld [vmem:[%s401 + $0x418] sm:$0xff]
        %v728 = vld [vmem:[%s401 + $0x420] sm:$0xff]
        %v729 = vld [vmem:[%s401 + $0x428] sm:$0xff]
        %v730 = vld [vmem:[%s401 + $0x430] sm:$0xff]
        %v731 = vld [vmem:[%s401 + $0x438] sm:$0xff]
        %v732 = vld [vmem:[%s401 + $0x440] sm:$0xff]
        %v733 = vld [vmem:[%s401 + $0x448] sm:$0xff]
        %v734 = vld [vmem:[%s401 + $0x450] sm:$0xff]
        %v735 = vld [vmem:[%s401 + $0x458] sm:$0xff]
        %v736 = vld [vmem:[%s401 + $0x460] sm:$0xff]
        %v737 = vld [vmem:[%s401 + $0x468] sm:$0xff]
        %v738 = vld [vmem:[%s401 + $0x470] sm:$0xff]
        %v739 = vld [vmem:[%s401 + $0x478] sm:$0xff]
        %v740 = vld [vmem:[%s401 + $0x480] sm:$0xff]
        %v741 = vld [vmem:[%s401 + $0x488] sm:$0xff]
        %v742 = vld [vmem:[%s401 + $0x490] sm:$0xff]
        %v743 = vld [vmem:[%s401 + $0x498] sm:$0xff]
        %v744 = vld [vmem:[%s401 + $0x4a0] sm:$0xff]
        %v745 = vld [vmem:[%s401 + $0x4a8] sm:$0xff]
        %v746 = vld [vmem:[%s401 + $0x4b0] sm:$0xff]
        %v747 = vld [vmem:[%s401 + $0x4b8] sm:$0xff]
        %v748 = vld [vmem:[%s401 + $0x4c0] sm:$0xff]
        %v749 = vld [vmem:[%s401 + $0x4c8] sm:$0xff]
        %v750 = vld [vmem:[%s401 + $0x4d0] sm:$0xff]
        %v751 = vld [vmem:[%s401 + $0x4d8] sm:$0xff]
        %v752 = vld [vmem:[%s401 + $0x4e0] sm:$0xff]
        %v753 = vld [vmem:[%s401 + $0x4e8] sm:$0xff]
        %v754 = vld [vmem:[%s401 + $0x4f0] sm:$0xff]
        %v755 = vld [vmem:[%s401 + $0x4f8] sm:$0xff]
        %v756 = vld [vmem:[%s401 + $0x500] sm:$0xff]
        %v757 = vld [vmem:[%s401 + $0x508] sm:$0xff]
        %v758 = vld [vmem:[%s401 + $0x510] sm:$0xff]
        %v759 = vld [vmem:[%s401 + $0x518] sm:$0xff]
        %v760 = vld [vmem:[%s401 + $0x520] sm:$0xff]
        %v761 = vld [vmem:[%s401 + $0x528] sm:$0xff]
        %v762 = vld [vmem:[%s401 + $0x530] sm:$0xff]
        %v763 = vld [vmem:[%s401 + $0x538] sm:$0xff]
        %v764 = vld [vmem:[%s401 + $0x540] sm:$0xff]
        %v765 = vld [vmem:[%s401 + $0x548] sm:$0xff]
        %v766 = vld [vmem:[%s401 + $0x550] sm:$0xff]
        %v767 = vld [vmem:[%s401 + $0x558] sm:$0xff]
        %v768 = vld [vmem:[%s401 + $0x560] sm:$0xff]
        %v769 = vld [vmem:[%s401 + $0x568] sm:$0xff]
        %v770 = vld [vmem:[%s401 + $0x570] sm:$0xff]
        %v771 = vld [vmem:[%s401 + $0x578] sm:$0xff]
        %v772 = vld [vmem:[%s401 + $0x580] sm:$0xff]
        %v773 = vld [vmem:[%s401 + $0x588] sm:$0xff]
        %v774 = vld [vmem:[%s401 + $0x590] sm:$0xff]
        %v775 = vld [vmem:[%s401 + $0x598] sm:$0xff]
        %v776 = vld [vmem:[%s401 + $0x5a0] sm:$0xff]
        %v777 = vld [vmem:[%s401 + $0x5a8] sm:$0xff]
        %v778 = vld [vmem:[%s401 + $0x5b0] sm:$0xff]
        %v779 = vld [vmem:[%s401 + $0x5b8] sm:$0xff]
        %v780 = vld [vmem:[%s401 + $0x5c0] sm:$0xff]
        %v781 = vld [vmem:[%s401 + $0x5c8] sm:$0xff]
        %v782 = vld [vmem:[%s401 + $0x5d0] sm:$0xff]
        %v783 = vld [vmem:[%s401 + $0x5d8] sm:$0xff]
        %v784 = vld [vmem:[%s401 + $0x5e0] sm:$0xff]
        %v785 = vld [vmem:[%s401 + $0x5e8] sm:$0xff]
        %v786 = vld [vmem:[%s401 + $0x5f0] sm:$0xff]
        %v787 = vld [vmem:[%s401 + $0x5f8] sm:$0xff]
        %v788 = vld [vmem:[%s401 + $0x600] sm:$0xff]
        %v789 = vld [vmem:[%s401 + $0x608] sm:$0xff]
        %v790 = vld [vmem:[%s401 + $0x610] sm:$0xff]
        %v791 = vld [vmem:[%s401 + $0x618] sm:$0xff]
        %v792 = vld [vmem:[%s401 + $0x620] sm:$0xff]
        %v793 = vld [vmem:[%s401 + $0x628] sm:$0xff]
        %v794 = vld [vmem:[%s401 + $0x630] sm:$0xff]
        %v795 = vld [vmem:[%s401 + $0x638] sm:$0xff]
        %v796 = vld [vmem:[%s401 + $0x640] sm:$0xff]
        %v797 = vld [vmem:[%s401 + $0x648] sm:$0xff]
        %v798 = vld [vmem:[%s401 + $0x650] sm:$0xff]
        %v799 = vld [vmem:[%s401 + $0x658] sm:$0xff]
        %v800 = vld [vmem:[%s401 + $0x660] sm:$0xff]
        %v801 = vld [vmem:[%s401 + $0x668] sm:$0xff]
        %v802 = vld [vmem:[%s401 + $0x670] sm:$0xff]
        %v803 = vld [vmem:[%s401 + $0x678] sm:$0xff]
        %v804 = vld [vmem:[%s401 + $0x680] sm:$0xff]
        %v805 = vld [vmem:[%s401 + $0x688] sm:$0xff]
        %v806 = vld [vmem:[%s401 + $0x690] sm:$0xff]
        %v807 = vld [vmem:[%s401 + $0x698] sm:$0xff]
        %v808 = vld [vmem:[%s401 + $0x6a0] sm:$0xff]
        %v809 = vld [vmem:[%s401 + $0x6a8] sm:$0xff]
        %v810 = vld [vmem:[%s401 + $0x6b0] sm:$0xff]
        %v811 = vld [vmem:[%s401 + $0x6b8] sm:$0xff]
        %v812 = vld [vmem:[%s401 + $0x6c0] sm:$0xff]
        %v813 = vld [vmem:[%s401 + $0x6c8] sm:$0xff]
        %v814 = vld [vmem:[%s401 + $0x6d0] sm:$0xff]
        %v815 = vld [vmem:[%s401 + $0x6d8] sm:$0xff]
        %v816 = vld [vmem:[%s401 + $0x6e0] sm:$0xff]
        %v817 = vld [vmem:[%s401 + $0x6e8] sm:$0xff]
        %v818 = vld [vmem:[%s401 + $0x6f0] sm:$0xff]
        %v819 = vld [vmem:[%s401 + $0x6f8] sm:$0xff]
        %v820 = vld [vmem:[%s401 + $0x700] sm:$0xff]
        %v821 = vld [vmem:[%s401 + $0x708] sm:$0xff]
        %v822 = vld [vmem:[%s401 + $0x710] sm:$0xff]
        %v823 = vld [vmem:[%s401 + $0x718] sm:$0xff]
        %v824 = vld [vmem:[%s401 + $0x720] sm:$0xff]
        %v825 = vld [vmem:[%s401 + $0x728] sm:$0xff]
        %v826 = vld [vmem:[%s401 + $0x730] sm:$0xff]
        %v827 = vld [vmem:[%s401 + $0x738] sm:$0xff]
        %v828 = vld [vmem:[%s401 + $0x740] sm:$0xff]
        %v829 = vld [vmem:[%s401 + $0x748] sm:$0xff]
        %v830 = vld [vmem:[%s401 + $0x750] sm:$0xff]
        %v831 = vld [vmem:[%s401 + $0x758] sm:$0xff]
        %v832 = vld [vmem:[%s401 + $0x760] sm:$0xff]
        %v833 = vld [vmem:[%s401 + $0x768] sm:$0xff]
        %v834 = vld [vmem:[%s401 + $0x770] sm:$0xff]
        %v835 = vld [vmem:[%s401 + $0x778] sm:$0xff]
        %v836 = vld [vmem:[%s401 + $0x780] sm:$0xff]
        %v837 = vld [vmem:[%s401 + $0x788] sm:$0xff]
        %v838 = vld [vmem:[%s401 + $0x790] sm:$0xff]
        %v839 = vld [vmem:[%s401 + $0x798] sm:$0xff]
        %v840 = vld [vmem:[%s401 + $0x7a0] sm:$0xff]
        %v841 = vld [vmem:[%s401 + $0x7a8] sm:$0xff]
        %v842 = vld [vmem:[%s401 + $0x7b0] sm:$0xff]
        %v843 = vld [vmem:[%s401 + $0x7b8] sm:$0xff]
        %v844 = vld [vmem:[%s401 + $0x7c0] sm:$0xff]
        %v845 = vld [vmem:[%s401 + $0x7c8] sm:$0xff]
        %v846 = vld [vmem:[%s401 + $0x7d0] sm:$0xff]
        %v847 = vld [vmem:[%s401 + $0x7d8] sm:$0xff]
        %v848 = vld [vmem:[%s401 + $0x7e0] sm:$0xff]
        %v849 = vld [vmem:[%s401 + $0x7e8] sm:$0xff]
        %v850 = vld [vmem:[%s401 + $0x7f0] sm:$0xff]
        %v851 = vld [vmem:[%s401 + $0x7f8] sm:$0xff]
        %v852 = vpack.c.bf16 %v604, %v596
        %v853 = vpack.c.bf16 %v605, %v597
        %v854 = vpack.c.bf16 %v606, %v598
        %v855 = vpack.c.bf16 %v607, %v599
        %v856 = vpack.c.bf16 %v608, %v600
        %v857 = vpack.c.bf16 %v609, %v601
        %v858 = vpack.c.bf16 %v610, %v602
        %v859 = vpack.c.bf16 %v611, %v603
        %v860 = vpack.c.bf16 %v620, %v612
        %v861 = vpack.c.bf16 %v621, %v613
        %v862 = vpack.c.bf16 %v622, %v614
        %v863 = vpack.c.bf16 %v623, %v615
        %v864 = vpack.c.bf16 %v624, %v616
        %v865 = vpack.c.bf16 %v625, %v617
        %v866 = vpack.c.bf16 %v626, %v618
        %v867 = vpack.c.bf16 %v627, %v619
        %v868 = vpack.c.bf16 %v636, %v628
        %v869 = vpack.c.bf16 %v637, %v629
        %v870 = vpack.c.bf16 %v638, %v630
        %v871 = vpack.c.bf16 %v639, %v631
        %v872 = vpack.c.bf16 %v640, %v632
        %v873 = vpack.c.bf16 %v641, %v633
        %v874 = vpack.c.bf16 %v642, %v634
        %v875 = vpack.c.bf16 %v643, %v635
        %v876 = vpack.c.bf16 %v652, %v644
        %v877 = vpack.c.bf16 %v653, %v645
        %v878 = vpack.c.bf16 %v654, %v646
        %v879 = vpack.c.bf16 %v655, %v647
        %v880 = vpack.c.bf16 %v656, %v648
        %v881 = vpack.c.bf16 %v657, %v649
        %v882 = vpack.c.bf16 %v658, %v650
        %v883 = vpack.c.bf16 %v659, %v651
        %v884 = vpack.c.bf16 %v668, %v660
        %v885 = vpack.c.bf16 %v669, %v661
        %v886 = vpack.c.bf16 %v670, %v662
        %v887 = vpack.c.bf16 %v671, %v663
        %v888 = vpack.c.bf16 %v672, %v664
        %v889 = vpack.c.bf16 %v673, %v665
        %v890 = vpack.c.bf16 %v674, %v666
        %v891 = vpack.c.bf16 %v675, %v667
        %v892 = vpack.c.bf16 %v684, %v676
        %v893 = vpack.c.bf16 %v685, %v677
        %v894 = vpack.c.bf16 %v686, %v678
        %v895 = vpack.c.bf16 %v687, %v679
        %v896 = vpack.c.bf16 %v688, %v680
        %v897 = vpack.c.bf16 %v689, %v681
        %v898 = vpack.c.bf16 %v690, %v682
        %v899 = vpack.c.bf16 %v691, %v683
        %v900 = vpack.c.bf16 %v700, %v692
        %v901 = vpack.c.bf16 %v701, %v693
        %v902 = vpack.c.bf16 %v702, %v694
        %v903 = vpack.c.bf16 %v703, %v695
        %v904 = vpack.c.bf16 %v704, %v696
        %v905 = vpack.c.bf16 %v705, %v697
        %v906 = vpack.c.bf16 %v706, %v698
        %v907 = vpack.c.bf16 %v707, %v699
        %v908 = vpack.c.bf16 %v716, %v708
        %v909 = vpack.c.bf16 %v717, %v709
        %v910 = vpack.c.bf16 %v718, %v710
        %v911 = vpack.c.bf16 %v719, %v711
        %v912 = vpack.c.bf16 %v720, %v712
        %v913 = vpack.c.bf16 %v721, %v713
        %v914 = vpack.c.bf16 %v722, %v714
        %v915 = vpack.c.bf16 %v723, %v715
        %v916 = vpack.c.bf16 %v732, %v724
        %v917 = vpack.c.bf16 %v733, %v725
        %v918 = vpack.c.bf16 %v734, %v726
        %v919 = vpack.c.bf16 %v735, %v727
        %v920 = vpack.c.bf16 %v736, %v728
        %v921 = vpack.c.bf16 %v737, %v729
        %v922 = vpack.c.bf16 %v738, %v730
        %v923 = vpack.c.bf16 %v739, %v731
        %v924 = vpack.c.bf16 %v748, %v740
        %v925 = vpack.c.bf16 %v749, %v741
        %v926 = vpack.c.bf16 %v750, %v742
        %v927 = vpack.c.bf16 %v751, %v743
        %v928 = vpack.c.bf16 %v752, %v744
        %v929 = vpack.c.bf16 %v753, %v745
        %v930 = vpack.c.bf16 %v754, %v746
        %v931 = vpack.c.bf16 %v755, %v747
        %v932 = vpack.c.bf16 %v764, %v756
        %v933 = vpack.c.bf16 %v765, %v757
        %v934 = vpack.c.bf16 %v766, %v758
        %v935 = vpack.c.bf16 %v767, %v759
        %v936 = vpack.c.bf16 %v768, %v760
        %v937 = vpack.c.bf16 %v769, %v761
        %v938 = vpack.c.bf16 %v770, %v762
        %v939 = vpack.c.bf16 %v771, %v763
        %v940 = vpack.c.bf16 %v780, %v772
        %v941 = vpack.c.bf16 %v781, %v773
        %v942 = vpack.c.bf16 %v782, %v774
        %v943 = vpack.c.bf16 %v783, %v775
        %v944 = vpack.c.bf16 %v784, %v776
        %v945 = vpack.c.bf16 %v785, %v777
        %v946 = vpack.c.bf16 %v786, %v778
        %v947 = vpack.c.bf16 %v787, %v779
        %v948 = vpack.c.bf16 %v796, %v788
        %v949 = vpack.c.bf16 %v797, %v789
        %v950 = vpack.c.bf16 %v798, %v790
        %v951 = vpack.c.bf16 %v799, %v791
        %v952 = vpack.c.bf16 %v800, %v792
        %v953 = vpack.c.bf16 %v801, %v793
        %v954 = vpack.c.bf16 %v802, %v794
        %v955 = vpack.c.bf16 %v803, %v795
        %v956 = vpack.c.bf16 %v812, %v804
        %v957 = vpack.c.bf16 %v813, %v805
        %v958 = vpack.c.bf16 %v814, %v806
        %v959 = vpack.c.bf16 %v815, %v807
        %v960 = vpack.c.bf16 %v816, %v808
        %v961 = vpack.c.bf16 %v817, %v809
        %v962 = vpack.c.bf16 %v818, %v810
        %v963 = vpack.c.bf16 %v819, %v811
        %v964 = vpack.c.bf16 %v828, %v820
        %v965 = vpack.c.bf16 %v829, %v821
        %v966 = vpack.c.bf16 %v830, %v822
        %v967 = vpack.c.bf16 %v831, %v823
        %v968 = vpack.c.bf16 %v832, %v824
        %v969 = vpack.c.bf16 %v833, %v825
        %v970 = vpack.c.bf16 %v834, %v826
        %v971 = vpack.c.bf16 %v835, %v827
        %v972 = vpack.c.bf16 %v844, %v836
        %v973 = vpack.c.bf16 %v845, %v837
        %v974 = vpack.c.bf16 %v846, %v838
        %v975 = vpack.c.bf16 %v847, %v839
        %v976 = vpack.c.bf16 %v848, %v840
        %v977 = vpack.c.bf16 %v849, %v841
        %v978 = vpack.c.bf16 %v850, %v842
        %v979 = vpack.c.bf16 %v851, %v843
        %v980 = vld [vmem:[#allocation10] sm:$0xff]
        %v981 = vld [vmem:[#allocation10 + $0x8] sm:$0xff]
        %v982 = vld [vmem:[#allocation10 + $0x10] sm:$0xff]
        %v983 = vld [vmem:[#allocation10 + $0x18] sm:$0xff]
        %v984 = vld [vmem:[#allocation10 + $0x20] sm:$0xff]
        %v985 = vld [vmem:[#allocation10 + $0x28] sm:$0xff]
        %v986 = vld [vmem:[#allocation10 + $0x30] sm:$0xff]
        %v987 = vld [vmem:[#allocation10 + $0x38] sm:$0xff]
        %v988 = vld [vmem:[#allocation10 + $0x40] sm:$0xff]
        %v989 = vld [vmem:[#allocation10 + $0x48] sm:$0xff]
        %v990 = vld [vmem:[#allocation10 + $0x50] sm:$0xff]
        %v991 = vld [vmem:[#allocation10 + $0x58] sm:$0xff]
        %v992 = vld [vmem:[#allocation10 + $0x60] sm:$0xff]
        %v993 = vld [vmem:[#allocation10 + $0x68] sm:$0xff]
        %v994 = vld [vmem:[#allocation10 + $0x70] sm:$0xff]
        %v995 = vld [vmem:[#allocation10 + $0x78] sm:$0xff]
        %v996 = vld [vmem:[#allocation10 + $0x80] sm:$0xff]
        %v997 = vld [vmem:[#allocation10 + $0x88] sm:$0xff]
        %v998 = vld [vmem:[#allocation10 + $0x90] sm:$0xff]
        %v999 = vld [vmem:[#allocation10 + $0x98] sm:$0xff]
        %v1000 = vld [vmem:[#allocation10 + $0xa0] sm:$0xff]
        %v1001 = vld [vmem:[#allocation10 + $0xa8] sm:$0xff]
        %v1002 = vld [vmem:[#allocation10 + $0xb0] sm:$0xff]
        %v1003 = vld [vmem:[#allocation10 + $0xb8] sm:$0xff]
        %v1004 = vld [vmem:[#allocation10 + $0xc0] sm:$0xff]
        %v1005 = vld [vmem:[#allocation10 + $0xc8] sm:$0xff]
        %v1006 = vld [vmem:[#allocation10 + $0xd0] sm:$0xff]
        %v1007 = vld [vmem:[#allocation10 + $0xd8] sm:$0xff]
        %v1008 = vld [vmem:[#allocation10 + $0xe0] sm:$0xff]
        %v1009 = vld [vmem:[#allocation10 + $0xe8] sm:$0xff]
        %v1010 = vld [vmem:[#allocation10 + $0xf0] sm:$0xff]
        %v1011 = vld [vmem:[#allocation10 + $0xf8] sm:$0xff]
        %v1012 = vld [vmem:[#allocation10 + $0x100] sm:$0xff]
        %v1013 = vld [vmem:[#allocation10 + $0x108] sm:$0xff]
        %v1014 = vld [vmem:[#allocation10 + $0x110] sm:$0xff]
        %v1015 = vld [vmem:[#allocation10 + $0x118] sm:$0xff]
        %v1016 = vld [vmem:[#allocation10 + $0x120] sm:$0xff]
        %v1017 = vld [vmem:[#allocation10 + $0x128] sm:$0xff]
        %v1018 = vld [vmem:[#allocation10 + $0x130] sm:$0xff]
        %v1019 = vld [vmem:[#allocation10 + $0x138] sm:$0xff]
        %v1020 = vld [vmem:[#allocation10 + $0x140] sm:$0xff]
        %v1021 = vld [vmem:[#allocation10 + $0x148] sm:$0xff]
        %v1022 = vld [vmem:[#allocation10 + $0x150] sm:$0xff]
        %v1023 = vld [vmem:[#allocation10 + $0x158] sm:$0xff]
        %v1024 = vld [vmem:[#allocation10 + $0x160] sm:$0xff]
        %v1025 = vld [vmem:[#allocation10 + $0x168] sm:$0xff]
        %v1026 = vld [vmem:[#allocation10 + $0x170] sm:$0xff]
        %v1027 = vld [vmem:[#allocation10 + $0x178] sm:$0xff]
        %v1028 = vld [vmem:[#allocation10 + $0x180] sm:$0xff]
        %v1029 = vld [vmem:[#allocation10 + $0x188] sm:$0xff]
        %v1030 = vld [vmem:[#allocation10 + $0x190] sm:$0xff]
        %v1031 = vld [vmem:[#allocation10 + $0x198] sm:$0xff]
        %v1032 = vld [vmem:[#allocation10 + $0x1a0] sm:$0xff]
        %v1033 = vld [vmem:[#allocation10 + $0x1a8] sm:$0xff]
        %v1034 = vld [vmem:[#allocation10 + $0x1b0] sm:$0xff]
        %v1035 = vld [vmem:[#allocation10 + $0x1b8] sm:$0xff]
        %v1036 = vld [vmem:[#allocation10 + $0x1c0] sm:$0xff]
        %v1037 = vld [vmem:[#allocation10 + $0x1c8] sm:$0xff]
        %v1038 = vld [vmem:[#allocation10 + $0x1d0] sm:$0xff]
        %v1039 = vld [vmem:[#allocation10 + $0x1d8] sm:$0xff]
        %v1040 = vld [vmem:[#allocation10 + $0x1e0] sm:$0xff]
        %v1041 = vld [vmem:[#allocation10 + $0x1e8] sm:$0xff]
        %v1042 = vld [vmem:[#allocation10 + $0x1f0] sm:$0xff]
        %v1043 = vld [vmem:[#allocation10 + $0x1f8] sm:$0xff]
        %v1044 = vld [vmem:[#allocation10 + $0x200] sm:$0xff]
        %v1045 = vld [vmem:[#allocation10 + $0x208] sm:$0xff]
        %v1046 = vld [vmem:[#allocation10 + $0x210] sm:$0xff]
        %v1047 = vld [vmem:[#allocation10 + $0x218] sm:$0xff]
        %v1048 = vld [vmem:[#allocation10 + $0x220] sm:$0xff]
        %v1049 = vld [vmem:[#allocation10 + $0x228] sm:$0xff]
        %v1050 = vld [vmem:[#allocation10 + $0x230] sm:$0xff]
        %v1051 = vld [vmem:[#allocation10 + $0x238] sm:$0xff]
        %v1052 = vld [vmem:[#allocation10 + $0x240] sm:$0xff]
        %v1053 = vld [vmem:[#allocation10 + $0x248] sm:$0xff]
        %v1054 = vld [vmem:[#allocation10 + $0x250] sm:$0xff]
        %v1055 = vld [vmem:[#allocation10 + $0x258] sm:$0xff]
        %v1056 = vld [vmem:[#allocation10 + $0x260] sm:$0xff]
        %v1057 = vld [vmem:[#allocation10 + $0x268] sm:$0xff]
        %v1058 = vld [vmem:[#allocation10 + $0x270] sm:$0xff]
        %v1059 = vld [vmem:[#allocation10 + $0x278] sm:$0xff]
        %v1060 = vld [vmem:[#allocation10 + $0x280] sm:$0xff]
        %v1061 = vld [vmem:[#allocation10 + $0x288] sm:$0xff]
        %v1062 = vld [vmem:[#allocation10 + $0x290] sm:$0xff]
        %v1063 = vld [vmem:[#allocation10 + $0x298] sm:$0xff]
        %v1064 = vld [vmem:[#allocation10 + $0x2a0] sm:$0xff]
        %v1065 = vld [vmem:[#allocation10 + $0x2a8] sm:$0xff]
        %v1066 = vld [vmem:[#allocation10 + $0x2b0] sm:$0xff]
        %v1067 = vld [vmem:[#allocation10 + $0x2b8] sm:$0xff]
        %v1068 = vld [vmem:[#allocation10 + $0x2c0] sm:$0xff]
        %v1069 = vld [vmem:[#allocation10 + $0x2c8] sm:$0xff]
        %v1070 = vld [vmem:[#allocation10 + $0x2d0] sm:$0xff]
        %v1071 = vld [vmem:[#allocation10 + $0x2d8] sm:$0xff]
        %v1072 = vld [vmem:[#allocation10 + $0x2e0] sm:$0xff]
        %v1073 = vld [vmem:[#allocation10 + $0x2e8] sm:$0xff]
        %v1074 = vld [vmem:[#allocation10 + $0x2f0] sm:$0xff]
        %v1075 = vld [vmem:[#allocation10 + $0x2f8] sm:$0xff]
        %v1076 = vld [vmem:[#allocation10 + $0x300] sm:$0xff]
        %v1077 = vld [vmem:[#allocation10 + $0x308] sm:$0xff]
        %v1078 = vld [vmem:[#allocation10 + $0x310] sm:$0xff]
        %v1079 = vld [vmem:[#allocation10 + $0x318] sm:$0xff]
        %v1080 = vld [vmem:[#allocation10 + $0x320] sm:$0xff]
        %v1081 = vld [vmem:[#allocation10 + $0x328] sm:$0xff]
        %v1082 = vld [vmem:[#allocation10 + $0x330] sm:$0xff]
        %v1083 = vld [vmem:[#allocation10 + $0x338] sm:$0xff]
        %v1084 = vld [vmem:[#allocation10 + $0x340] sm:$0xff]
        %v1085 = vld [vmem:[#allocation10 + $0x348] sm:$0xff]
        %v1086 = vld [vmem:[#allocation10 + $0x350] sm:$0xff]
        %v1087 = vld [vmem:[#allocation10 + $0x358] sm:$0xff]
        %v1088 = vld [vmem:[#allocation10 + $0x360] sm:$0xff]
        %v1089 = vld [vmem:[#allocation10 + $0x368] sm:$0xff]
        %v1090 = vld [vmem:[#allocation10 + $0x370] sm:$0xff]
        %v1091 = vld [vmem:[#allocation10 + $0x378] sm:$0xff]
        %v1092 = vld [vmem:[#allocation10 + $0x380] sm:$0xff]
        %v1093 = vld [vmem:[#allocation10 + $0x388] sm:$0xff]
        %v1094 = vld [vmem:[#allocation10 + $0x390] sm:$0xff]
        %v1095 = vld [vmem:[#allocation10 + $0x398] sm:$0xff]
        %v1096 = vld [vmem:[#allocation10 + $0x3a0] sm:$0xff]
        %v1097 = vld [vmem:[#allocation10 + $0x3a8] sm:$0xff]
        %v1098 = vld [vmem:[#allocation10 + $0x3b0] sm:$0xff]
        %v1099 = vld [vmem:[#allocation10 + $0x3b8] sm:$0xff]
        %v1100 = vld [vmem:[#allocation10 + $0x3c0] sm:$0xff]
        %v1101 = vld [vmem:[#allocation10 + $0x3c8] sm:$0xff]
        %v1102 = vld [vmem:[#allocation10 + $0x3d0] sm:$0xff]
        %v1103 = vld [vmem:[#allocation10 + $0x3d8] sm:$0xff]
        %v1104 = vld [vmem:[#allocation10 + $0x3e0] sm:$0xff]
        %v1105 = vld [vmem:[#allocation10 + $0x3e8] sm:$0xff]
        %v1106 = vld [vmem:[#allocation10 + $0x3f0] sm:$0xff]
        %v1107 = vld [vmem:[#allocation10 + $0x3f8] sm:$0xff]
        %v1108 = vld [vmem:[#allocation10 + $0x400] sm:$0xff]
        %v1109 = vld [vmem:[#allocation10 + $0x408] sm:$0xff]
        %v1110 = vld [vmem:[#allocation10 + $0x410] sm:$0xff]
        %v1111 = vld [vmem:[#allocation10 + $0x418] sm:$0xff]
        %v1112 = vld [vmem:[#allocation10 + $0x420] sm:$0xff]
        %v1113 = vld [vmem:[#allocation10 + $0x428] sm:$0xff]
        %v1114 = vld [vmem:[#allocation10 + $0x430] sm:$0xff]
        %v1115 = vld [vmem:[#allocation10 + $0x438] sm:$0xff]
        %v1116 = vld [vmem:[#allocation10 + $0x440] sm:$0xff]
        %v1117 = vld [vmem:[#allocation10 + $0x448] sm:$0xff]
        %v1118 = vld [vmem:[#allocation10 + $0x450] sm:$0xff]
        %v1119 = vld [vmem:[#allocation10 + $0x458] sm:$0xff]
        %v1120 = vld [vmem:[#allocation10 + $0x460] sm:$0xff]
        %v1121 = vld [vmem:[#allocation10 + $0x468] sm:$0xff]
        %v1122 = vld [vmem:[#allocation10 + $0x470] sm:$0xff]
        %v1123 = vld [vmem:[#allocation10 + $0x478] sm:$0xff]
        %v1124 = vld [vmem:[#allocation10 + $0x480] sm:$0xff]
        %v1125 = vld [vmem:[#allocation10 + $0x488] sm:$0xff]
        %v1126 = vld [vmem:[#allocation10 + $0x490] sm:$0xff]
        %v1127 = vld [vmem:[#allocation10 + $0x498] sm:$0xff]
        %v1128 = vld [vmem:[#allocation10 + $0x4a0] sm:$0xff]
        %v1129 = vld [vmem:[#allocation10 + $0x4a8] sm:$0xff]
        %v1130 = vld [vmem:[#allocation10 + $0x4b0] sm:$0xff]
        %v1131 = vld [vmem:[#allocation10 + $0x4b8] sm:$0xff]
        %v1132 = vld [vmem:[#allocation10 + $0x4c0] sm:$0xff]
        %v1133 = vld [vmem:[#allocation10 + $0x4c8] sm:$0xff]
        %v1134 = vld [vmem:[#allocation10 + $0x4d0] sm:$0xff]
        %v1135 = vld [vmem:[#allocation10 + $0x4d8] sm:$0xff]
        %v1136 = vld [vmem:[#allocation10 + $0x4e0] sm:$0xff]
        %v1137 = vld [vmem:[#allocation10 + $0x4e8] sm:$0xff]
        %v1138 = vld [vmem:[#allocation10 + $0x4f0] sm:$0xff]
        %v1139 = vld [vmem:[#allocation10 + $0x4f8] sm:$0xff]
        %v1140 = vld [vmem:[#allocation10 + $0x500] sm:$0xff]
        %v1141 = vld [vmem:[#allocation10 + $0x508] sm:$0xff]
        %v1142 = vld [vmem:[#allocation10 + $0x510] sm:$0xff]
        %v1143 = vld [vmem:[#allocation10 + $0x518] sm:$0xff]
        %v1144 = vld [vmem:[#allocation10 + $0x520] sm:$0xff]
        %v1145 = vld [vmem:[#allocation10 + $0x528] sm:$0xff]
        %v1146 = vld [vmem:[#allocation10 + $0x530] sm:$0xff]
        %v1147 = vld [vmem:[#allocation10 + $0x538] sm:$0xff]
        %v1148 = vld [vmem:[#allocation10 + $0x540] sm:$0xff]
        %v1149 = vld [vmem:[#allocation10 + $0x548] sm:$0xff]
        %v1150 = vld [vmem:[#allocation10 + $0x550] sm:$0xff]
        %v1151 = vld [vmem:[#allocation10 + $0x558] sm:$0xff]
        %v1152 = vld [vmem:[#allocation10 + $0x560] sm:$0xff]
        %v1153 = vld [vmem:[#allocation10 + $0x568] sm:$0xff]
        %v1154 = vld [vmem:[#allocation10 + $0x570] sm:$0xff]
        %v1155 = vld [vmem:[#allocation10 + $0x578] sm:$0xff]
        %v1156 = vld [vmem:[#allocation10 + $0x580] sm:$0xff]
        %v1157 = vld [vmem:[#allocation10 + $0x588] sm:$0xff]
        %v1158 = vld [vmem:[#allocation10 + $0x590] sm:$0xff]
        %v1159 = vld [vmem:[#allocation10 + $0x598] sm:$0xff]
        %v1160 = vld [vmem:[#allocation10 + $0x5a0] sm:$0xff]
        %v1161 = vld [vmem:[#allocation10 + $0x5a8] sm:$0xff]
        %v1162 = vld [vmem:[#allocation10 + $0x5b0] sm:$0xff]
        %v1163 = vld [vmem:[#allocation10 + $0x5b8] sm:$0xff]
        %v1164 = vld [vmem:[#allocation10 + $0x5c0] sm:$0xff]
        %v1165 = vld [vmem:[#allocation10 + $0x5c8] sm:$0xff]
        %v1166 = vld [vmem:[#allocation10 + $0x5d0] sm:$0xff]
        %v1167 = vld [vmem:[#allocation10 + $0x5d8] sm:$0xff]
        %v1168 = vld [vmem:[#allocation10 + $0x5e0] sm:$0xff]
        %v1169 = vld [vmem:[#allocation10 + $0x5e8] sm:$0xff]
        %v1170 = vld [vmem:[#allocation10 + $0x5f0] sm:$0xff]
        %v1171 = vld [vmem:[#allocation10 + $0x5f8] sm:$0xff]
        %v1172 = vld [vmem:[#allocation10 + $0x600] sm:$0xff]
        %v1173 = vld [vmem:[#allocation10 + $0x608] sm:$0xff]
        %v1174 = vld [vmem:[#allocation10 + $0x610] sm:$0xff]
        %v1175 = vld [vmem:[#allocation10 + $0x618] sm:$0xff]
        %v1176 = vld [vmem:[#allocation10 + $0x620] sm:$0xff]
        %v1177 = vld [vmem:[#allocation10 + $0x628] sm:$0xff]
        %v1178 = vld [vmem:[#allocation10 + $0x630] sm:$0xff]
        %v1179 = vld [vmem:[#allocation10 + $0x638] sm:$0xff]
        %v1180 = vld [vmem:[#allocation10 + $0x640] sm:$0xff]
        %v1181 = vld [vmem:[#allocation10 + $0x648] sm:$0xff]
        %v1182 = vld [vmem:[#allocation10 + $0x650] sm:$0xff]
        %v1183 = vld [vmem:[#allocation10 + $0x658] sm:$0xff]
        %v1184 = vld [vmem:[#allocation10 + $0x660] sm:$0xff]
        %v1185 = vld [vmem:[#allocation10 + $0x668] sm:$0xff]
        %v1186 = vld [vmem:[#allocation10 + $0x670] sm:$0xff]
        %v1187 = vld [vmem:[#allocation10 + $0x678] sm:$0xff]
        %v1188 = vld [vmem:[#allocation10 + $0x680] sm:$0xff]
        %v1189 = vld [vmem:[#allocation10 + $0x688] sm:$0xff]
        %v1190 = vld [vmem:[#allocation10 + $0x690] sm:$0xff]
        %v1191 = vld [vmem:[#allocation10 + $0x698] sm:$0xff]
        %v1192 = vld [vmem:[#allocation10 + $0x6a0] sm:$0xff]
        %v1193 = vld [vmem:[#allocation10 + $0x6a8] sm:$0xff]
        %v1194 = vld [vmem:[#allocation10 + $0x6b0] sm:$0xff]
        %v1195 = vld [vmem:[#allocation10 + $0x6b8] sm:$0xff]
        %v1196 = vld [vmem:[#allocation10 + $0x6c0] sm:$0xff]
        %v1197 = vld [vmem:[#allocation10 + $0x6c8] sm:$0xff]
        %v1198 = vld [vmem:[#allocation10 + $0x6d0] sm:$0xff]
        %v1199 = vld [vmem:[#allocation10 + $0x6d8] sm:$0xff]
        %v1200 = vld [vmem:[#allocation10 + $0x6e0] sm:$0xff]
        %v1201 = vld [vmem:[#allocation10 + $0x6e8] sm:$0xff]
        %v1202 = vld [vmem:[#allocation10 + $0x6f0] sm:$0xff]
        %v1203 = vld [vmem:[#allocation10 + $0x6f8] sm:$0xff]
        %v1204 = vld [vmem:[#allocation10 + $0x700] sm:$0xff]
        %v1205 = vld [vmem:[#allocation10 + $0x708] sm:$0xff]
        %v1206 = vld [vmem:[#allocation10 + $0x710] sm:$0xff]
        %v1207 = vld [vmem:[#allocation10 + $0x718] sm:$0xff]
        %v1208 = vld [vmem:[#allocation10 + $0x720] sm:$0xff]
        %v1209 = vld [vmem:[#allocation10 + $0x728] sm:$0xff]
        %v1210 = vld [vmem:[#allocation10 + $0x730] sm:$0xff]
        %v1211 = vld [vmem:[#allocation10 + $0x738] sm:$0xff]
        %v1212 = vld [vmem:[#allocation10 + $0x740] sm:$0xff]
        %v1213 = vld [vmem:[#allocation10 + $0x748] sm:$0xff]
        %v1214 = vld [vmem:[#allocation10 + $0x750] sm:$0xff]
        %v1215 = vld [vmem:[#allocation10 + $0x758] sm:$0xff]
        %v1216 = vld [vmem:[#allocation10 + $0x760] sm:$0xff]
        %v1217 = vld [vmem:[#allocation10 + $0x768] sm:$0xff]
        %v1218 = vld [vmem:[#allocation10 + $0x770] sm:$0xff]
        %v1219 = vld [vmem:[#allocation10 + $0x778] sm:$0xff]
        %v1220 = vld [vmem:[#allocation10 + $0x780] sm:$0xff]
        %v1221 = vld [vmem:[#allocation10 + $0x788] sm:$0xff]
        %v1222 = vld [vmem:[#allocation10 + $0x790] sm:$0xff]
        %v1223 = vld [vmem:[#allocation10 + $0x798] sm:$0xff]
        %v1224 = vld [vmem:[#allocation10 + $0x7a0] sm:$0xff]
        %v1225 = vld [vmem:[#allocation10 + $0x7a8] sm:$0xff]
        %v1226 = vld [vmem:[#allocation10 + $0x7b0] sm:$0xff]
        %v1227 = vld [vmem:[#allocation10 + $0x7b8] sm:$0xff]
        %v1228 = vld [vmem:[#allocation10 + $0x7c0] sm:$0xff]
        %v1229 = vld [vmem:[#allocation10 + $0x7c8] sm:$0xff]
        %v1230 = vld [vmem:[#allocation10 + $0x7d0] sm:$0xff]
        %v1231 = vld [vmem:[#allocation10 + $0x7d8] sm:$0xff]
        %v1232 = vld [vmem:[#allocation10 + $0x7e0] sm:$0xff]
        %v1233 = vld [vmem:[#allocation10 + $0x7e8] sm:$0xff]
        %v1234 = vld [vmem:[#allocation10 + $0x7f0] sm:$0xff]
        %v1235 = vld [vmem:[#allocation10 + $0x7f8] sm:$0xff]
        %v1236 = vld [vmem:[#allocation12] sm:$0xf]
        %v1238 = vlaneseq
        %v1239 = vshrl.u32 %v1238, 7
        %v1240 = vsub.s32 0, %v1239
        %v1241 = vrot.slane %v1236, %v1240
        %v1242 = vlaneseq
        %v1243 = vshrl.u32 %v1242, 7
        %v1244 = vsub.s32 1, %v1243
        %v1245 = vrot.slane %v1236, %v1244
        %v1246 = vlaneseq
        %v1247 = vshrl.u32 %v1246, 7
        %v1248 = vsub.s32 2, %v1247
        %v1249 = vrot.slane %v1236, %v1248
        %v1250 = vlaneseq
        %v1251 = vshrl.u32 %v1250, 7
        %v1252 = vsub.s32 3, %v1251
        %v1253 = vrot.slane %v1236, %v1252
        %v1514 = vunpack.c.l.b16 %v980
        %v1515 = vunpack.c.h.b16 %v980
        %v1516 = vunpack.c.l.b16 %v981
        %v1517 = vunpack.c.h.b16 %v981
        %v1518 = vunpack.c.l.b16 %v982
        %v1519 = vunpack.c.h.b16 %v982
        %v1520 = vunpack.c.l.b16 %v983
        %v1521 = vunpack.c.h.b16 %v983
        %v1522 = vunpack.c.l.b16 %v984
        %v1523 = vunpack.c.h.b16 %v984
        %v1524 = vunpack.c.l.b16 %v985
        %v1525 = vunpack.c.h.b16 %v985
        %v1526 = vunpack.c.l.b16 %v986
        %v1527 = vunpack.c.h.b16 %v986
        %v1528 = vunpack.c.l.b16 %v987
        %v1529 = vunpack.c.h.b16 %v987
        %v1530 = vunpack.c.l.b16 %v988
        %v1531 = vunpack.c.h.b16 %v988
        %v1532 = vunpack.c.l.b16 %v989
        %v1533 = vunpack.c.h.b16 %v989
        %v1534 = vunpack.c.l.b16 %v990
        %v1535 = vunpack.c.h.b16 %v990
        %v1536 = vunpack.c.l.b16 %v991
        %v1537 = vunpack.c.h.b16 %v991
        %v1538 = vunpack.c.l.b16 %v992
        %v1539 = vunpack.c.h.b16 %v992
        %v1540 = vunpack.c.l.b16 %v993
        %v1541 = vunpack.c.h.b16 %v993
        %v1542 = vunpack.c.l.b16 %v994
        %v1543 = vunpack.c.h.b16 %v994
        %v1544 = vunpack.c.l.b16 %v995
        %v1545 = vunpack.c.h.b16 %v995
        %v1546 = vunpack.c.l.b16 %v996
        %v1547 = vunpack.c.h.b16 %v996
        %v1548 = vunpack.c.l.b16 %v997
        %v1549 = vunpack.c.h.b16 %v997
        %v1550 = vunpack.c.l.b16 %v998
        %v1551 = vunpack.c.h.b16 %v998
        %v1552 = vunpack.c.l.b16 %v999
        %v1553 = vunpack.c.h.b16 %v999
        %v1554 = vunpack.c.l.b16 %v1000
        %v1555 = vunpack.c.h.b16 %v1000
        %v1556 = vunpack.c.l.b16 %v1001
        %v1557 = vunpack.c.h.b16 %v1001
        %v1558 = vunpack.c.l.b16 %v1002
        %v1559 = vunpack.c.h.b16 %v1002
        %v1560 = vunpack.c.l.b16 %v1003
        %v1561 = vunpack.c.h.b16 %v1003
        %v1562 = vunpack.c.l.b16 %v1004
        %v1563 = vunpack.c.h.b16 %v1004
        %v1564 = vunpack.c.l.b16 %v1005
        %v1565 = vunpack.c.h.b16 %v1005
        %v1566 = vunpack.c.l.b16 %v1006
        %v1567 = vunpack.c.h.b16 %v1006
        %v1568 = vunpack.c.l.b16 %v1007
        %v1569 = vunpack.c.h.b16 %v1007
        %v1570 = vunpack.c.l.b16 %v1008
        %v1571 = vunpack.c.h.b16 %v1008
        %v1572 = vunpack.c.l.b16 %v1009
        %v1573 = vunpack.c.h.b16 %v1009
        %v1574 = vunpack.c.l.b16 %v1010
        %v1575 = vunpack.c.h.b16 %v1010
        %v1576 = vunpack.c.l.b16 %v1011
        %v1577 = vunpack.c.h.b16 %v1011
        %v1578 = vunpack.c.l.b16 %v1012
        %v1579 = vunpack.c.h.b16 %v1012
        %v1580 = vunpack.c.l.b16 %v1013
        %v1581 = vunpack.c.h.b16 %v1013
        %v1582 = vunpack.c.l.b16 %v1014
        %v1583 = vunpack.c.h.b16 %v1014
        %v1584 = vunpack.c.l.b16 %v1015
        %v1585 = vunpack.c.h.b16 %v1015
        %v1586 = vunpack.c.l.b16 %v1016
        %v1587 = vunpack.c.h.b16 %v1016
        %v1588 = vunpack.c.l.b16 %v1017
        %v1589 = vunpack.c.h.b16 %v1017
        %v1590 = vunpack.c.l.b16 %v1018
        %v1591 = vunpack.c.h.b16 %v1018
        %v1592 = vunpack.c.l.b16 %v1019
        %v1593 = vunpack.c.h.b16 %v1019
        %v1594 = vunpack.c.l.b16 %v1020
        %v1595 = vunpack.c.h.b16 %v1020
        %v1596 = vunpack.c.l.b16 %v1021
        %v1597 = vunpack.c.h.b16 %v1021
        %v1598 = vunpack.c.l.b16 %v1022
        %v1599 = vunpack.c.h.b16 %v1022
        %v1600 = vunpack.c.l.b16 %v1023
        %v1601 = vunpack.c.h.b16 %v1023
        %v1602 = vunpack.c.l.b16 %v1024
        %v1603 = vunpack.c.h.b16 %v1024
        %v1604 = vunpack.c.l.b16 %v1025
        %v1605 = vunpack.c.h.b16 %v1025
        %v1606 = vunpack.c.l.b16 %v1026
        %v1607 = vunpack.c.h.b16 %v1026
        %v1608 = vunpack.c.l.b16 %v1027
        %v1609 = vunpack.c.h.b16 %v1027
        %v1610 = vunpack.c.l.b16 %v1028
        %v1611 = vunpack.c.h.b16 %v1028
        %v1612 = vunpack.c.l.b16 %v1029
        %v1613 = vunpack.c.h.b16 %v1029
        %v1614 = vunpack.c.l.b16 %v1030
        %v1615 = vunpack.c.h.b16 %v1030
        %v1616 = vunpack.c.l.b16 %v1031
        %v1617 = vunpack.c.h.b16 %v1031
        %v1618 = vunpack.c.l.b16 %v1032
        %v1619 = vunpack.c.h.b16 %v1032
        %v1620 = vunpack.c.l.b16 %v1033
        %v1621 = vunpack.c.h.b16 %v1033
        %v1622 = vunpack.c.l.b16 %v1034
        %v1623 = vunpack.c.h.b16 %v1034
        %v1624 = vunpack.c.l.b16 %v1035
        %v1625 = vunpack.c.h.b16 %v1035
        %v1626 = vunpack.c.l.b16 %v1036
        %v1627 = vunpack.c.h.b16 %v1036
        %v1628 = vunpack.c.l.b16 %v1037
        %v1629 = vunpack.c.h.b16 %v1037
        %v1630 = vunpack.c.l.b16 %v1038
        %v1631 = vunpack.c.h.b16 %v1038
        %v1632 = vunpack.c.l.b16 %v1039
        %v1633 = vunpack.c.h.b16 %v1039
        %v1634 = vunpack.c.l.b16 %v1040
        %v1635 = vunpack.c.h.b16 %v1040
        %v1636 = vunpack.c.l.b16 %v1041
        %v1637 = vunpack.c.h.b16 %v1041
        %v1638 = vunpack.c.l.b16 %v1042
        %v1639 = vunpack.c.h.b16 %v1042
        %v1640 = vunpack.c.l.b16 %v1043
        %v1641 = vunpack.c.h.b16 %v1043
        %v1642 = vunpack.c.l.b16 %v1044
        %v1643 = vunpack.c.h.b16 %v1044
        %v1644 = vunpack.c.l.b16 %v1045
        %v1645 = vunpack.c.h.b16 %v1045
        %v1646 = vunpack.c.l.b16 %v1046
        %v1647 = vunpack.c.h.b16 %v1046
        %v1648 = vunpack.c.l.b16 %v1047
        %v1649 = vunpack.c.h.b16 %v1047
        %v1650 = vunpack.c.l.b16 %v1048
        %v1651 = vunpack.c.h.b16 %v1048
        %v1652 = vunpack.c.l.b16 %v1049
        %v1653 = vunpack.c.h.b16 %v1049
        %v1654 = vunpack.c.l.b16 %v1050
        %v1655 = vunpack.c.h.b16 %v1050
        %v1656 = vunpack.c.l.b16 %v1051
        %v1657 = vunpack.c.h.b16 %v1051
        %v1658 = vunpack.c.l.b16 %v1052
        %v1659 = vunpack.c.h.b16 %v1052
        %v1660 = vunpack.c.l.b16 %v1053
        %v1661 = vunpack.c.h.b16 %v1053
        %v1662 = vunpack.c.l.b16 %v1054
        %v1663 = vunpack.c.h.b16 %v1054
        %v1664 = vunpack.c.l.b16 %v1055
        %v1665 = vunpack.c.h.b16 %v1055
        %v1666 = vunpack.c.l.b16 %v1056
        %v1667 = vunpack.c.h.b16 %v1056
        %v1668 = vunpack.c.l.b16 %v1057
        %v1669 = vunpack.c.h.b16 %v1057
        %v1670 = vunpack.c.l.b16 %v1058
        %v1671 = vunpack.c.h.b16 %v1058
        %v1672 = vunpack.c.l.b16 %v1059
        %v1673 = vunpack.c.h.b16 %v1059
        %v1674 = vunpack.c.l.b16 %v1060
        %v1675 = vunpack.c.h.b16 %v1060
        %v1676 = vunpack.c.l.b16 %v1061
        %v1677 = vunpack.c.h.b16 %v1061
        %v1678 = vunpack.c.l.b16 %v1062
        %v1679 = vunpack.c.h.b16 %v1062
        %v1680 = vunpack.c.l.b16 %v1063
        %v1681 = vunpack.c.h.b16 %v1063
        %v1682 = vunpack.c.l.b16 %v1064
        %v1683 = vunpack.c.h.b16 %v1064
        %v1684 = vunpack.c.l.b16 %v1065
        %v1685 = vunpack.c.h.b16 %v1065
        %v1686 = vunpack.c.l.b16 %v1066
        %v1687 = vunpack.c.h.b16 %v1066
        %v1688 = vunpack.c.l.b16 %v1067
        %v1689 = vunpack.c.h.b16 %v1067
        %v1690 = vunpack.c.l.b16 %v1068
        %v1691 = vunpack.c.h.b16 %v1068
        %v1692 = vunpack.c.l.b16 %v1069
        %v1693 = vunpack.c.h.b16 %v1069
        %v1694 = vunpack.c.l.b16 %v1070
        %v1695 = vunpack.c.h.b16 %v1070
        %v1696 = vunpack.c.l.b16 %v1071
        %v1697 = vunpack.c.h.b16 %v1071
        %v1698 = vunpack.c.l.b16 %v1072
        %v1699 = vunpack.c.h.b16 %v1072
        %v1700 = vunpack.c.l.b16 %v1073
        %v1701 = vunpack.c.h.b16 %v1073
        %v1702 = vunpack.c.l.b16 %v1074
        %v1703 = vunpack.c.h.b16 %v1074
        %v1704 = vunpack.c.l.b16 %v1075
        %v1705 = vunpack.c.h.b16 %v1075
        %v1706 = vunpack.c.l.b16 %v1076
        %v1707 = vunpack.c.h.b16 %v1076
        %v1708 = vunpack.c.l.b16 %v1077
        %v1709 = vunpack.c.h.b16 %v1077
        %v1710 = vunpack.c.l.b16 %v1078
        %v1711 = vunpack.c.h.b16 %v1078
        %v1712 = vunpack.c.l.b16 %v1079
        %v1713 = vunpack.c.h.b16 %v1079
        %v1714 = vunpack.c.l.b16 %v1080
        %v1715 = vunpack.c.h.b16 %v1080
        %v1716 = vunpack.c.l.b16 %v1081
        %v1717 = vunpack.c.h.b16 %v1081
        %v1718 = vunpack.c.l.b16 %v1082
        %v1719 = vunpack.c.h.b16 %v1082
        %v1720 = vunpack.c.l.b16 %v1083
        %v1721 = vunpack.c.h.b16 %v1083
        %v1722 = vunpack.c.l.b16 %v1084
        %v1723 = vunpack.c.h.b16 %v1084
        %v1724 = vunpack.c.l.b16 %v1085
        %v1725 = vunpack.c.h.b16 %v1085
        %v1726 = vunpack.c.l.b16 %v1086
        %v1727 = vunpack.c.h.b16 %v1086
        %v1728 = vunpack.c.l.b16 %v1087
        %v1729 = vunpack.c.h.b16 %v1087
        %v1730 = vunpack.c.l.b16 %v1088
        %v1731 = vunpack.c.h.b16 %v1088
        %v1732 = vunpack.c.l.b16 %v1089
        %v1733 = vunpack.c.h.b16 %v1089
        %v1734 = vunpack.c.l.b16 %v1090
        %v1735 = vunpack.c.h.b16 %v1090
        %v1736 = vunpack.c.l.b16 %v1091
        %v1737 = vunpack.c.h.b16 %v1091
        %v1738 = vunpack.c.l.b16 %v1092
        %v1739 = vunpack.c.h.b16 %v1092
        %v1740 = vunpack.c.l.b16 %v1093
        %v1741 = vunpack.c.h.b16 %v1093
        %v1742 = vunpack.c.l.b16 %v1094
        %v1743 = vunpack.c.h.b16 %v1094
        %v1744 = vunpack.c.l.b16 %v1095
        %v1745 = vunpack.c.h.b16 %v1095
        %v1746 = vunpack.c.l.b16 %v1096
        %v1747 = vunpack.c.h.b16 %v1096
        %v1748 = vunpack.c.l.b16 %v1097
        %v1749 = vunpack.c.h.b16 %v1097
        %v1750 = vunpack.c.l.b16 %v1098
        %v1751 = vunpack.c.h.b16 %v1098
        %v1752 = vunpack.c.l.b16 %v1099
        %v1753 = vunpack.c.h.b16 %v1099
        %v1754 = vunpack.c.l.b16 %v1100
        %v1755 = vunpack.c.h.b16 %v1100
        %v1756 = vunpack.c.l.b16 %v1101
        %v1757 = vunpack.c.h.b16 %v1101
        %v1758 = vunpack.c.l.b16 %v1102
        %v1759 = vunpack.c.h.b16 %v1102
        %v1760 = vunpack.c.l.b16 %v1103
        %v1761 = vunpack.c.h.b16 %v1103
        %v1762 = vunpack.c.l.b16 %v1104
        %v1763 = vunpack.c.h.b16 %v1104
        %v1764 = vunpack.c.l.b16 %v1105
        %v1765 = vunpack.c.h.b16 %v1105
        %v1766 = vunpack.c.l.b16 %v1106
        %v1767 = vunpack.c.h.b16 %v1106
        %v1768 = vunpack.c.l.b16 %v1107
        %v1769 = vunpack.c.h.b16 %v1107
        %v1770 = vunpack.c.l.b16 %v1108
        %v1771 = vunpack.c.h.b16 %v1108
        %v1772 = vunpack.c.l.b16 %v1109
        %v1773 = vunpack.c.h.b16 %v1109
        %v1774 = vunpack.c.l.b16 %v1110
        %v1775 = vunpack.c.h.b16 %v1110
        %v1776 = vunpack.c.l.b16 %v1111
        %v1777 = vunpack.c.h.b16 %v1111
        %v1778 = vunpack.c.l.b16 %v1112
        %v1779 = vunpack.c.h.b16 %v1112
        %v1780 = vunpack.c.l.b16 %v1113
        %v1781 = vunpack.c.h.b16 %v1113
        %v1782 = vunpack.c.l.b16 %v1114
        %v1783 = vunpack.c.h.b16 %v1114
        %v1784 = vunpack.c.l.b16 %v1115
        %v1785 = vunpack.c.h.b16 %v1115
        %v1786 = vunpack.c.l.b16 %v1116
        %v1787 = vunpack.c.h.b16 %v1116
        %v1788 = vunpack.c.l.b16 %v1117
        %v1789 = vunpack.c.h.b16 %v1117
        %v1790 = vunpack.c.l.b16 %v1118
        %v1791 = vunpack.c.h.b16 %v1118
        %v1792 = vunpack.c.l.b16 %v1119
        %v1793 = vunpack.c.h.b16 %v1119
        %v1794 = vunpack.c.l.b16 %v1120
        %v1795 = vunpack.c.h.b16 %v1120
        %v1796 = vunpack.c.l.b16 %v1121
        %v1797 = vunpack.c.h.b16 %v1121
        %v1798 = vunpack.c.l.b16 %v1122
        %v1799 = vunpack.c.h.b16 %v1122
        %v1800 = vunpack.c.l.b16 %v1123
        %v1801 = vunpack.c.h.b16 %v1123
        %v1802 = vunpack.c.l.b16 %v1124
        %v1803 = vunpack.c.h.b16 %v1124
        %v1804 = vunpack.c.l.b16 %v1125
        %v1805 = vunpack.c.h.b16 %v1125
        %v1806 = vunpack.c.l.b16 %v1126
        %v1807 = vunpack.c.h.b16 %v1126
        %v1808 = vunpack.c.l.b16 %v1127
        %v1809 = vunpack.c.h.b16 %v1127
        %v1810 = vunpack.c.l.b16 %v1128
        %v1811 = vunpack.c.h.b16 %v1128
        %v1812 = vunpack.c.l.b16 %v1129
        %v1813 = vunpack.c.h.b16 %v1129
        %v1814 = vunpack.c.l.b16 %v1130
        %v1815 = vunpack.c.h.b16 %v1130
        %v1816 = vunpack.c.l.b16 %v1131
        %v1817 = vunpack.c.h.b16 %v1131
        %v1818 = vunpack.c.l.b16 %v1132
        %v1819 = vunpack.c.h.b16 %v1132
        %v1820 = vunpack.c.l.b16 %v1133
        %v1821 = vunpack.c.h.b16 %v1133
        %v1822 = vunpack.c.l.b16 %v1134
        %v1823 = vunpack.c.h.b16 %v1134
        %v1824 = vunpack.c.l.b16 %v1135
        %v1825 = vunpack.c.h.b16 %v1135
        %v1826 = vunpack.c.l.b16 %v1136
        %v1827 = vunpack.c.h.b16 %v1136
        %v1828 = vunpack.c.l.b16 %v1137
        %v1829 = vunpack.c.h.b16 %v1137
        %v1830 = vunpack.c.l.b16 %v1138
        %v1831 = vunpack.c.h.b16 %v1138
        %v1832 = vunpack.c.l.b16 %v1139
        %v1833 = vunpack.c.h.b16 %v1139
        %v1834 = vunpack.c.l.b16 %v1140
        %v1835 = vunpack.c.h.b16 %v1140
        %v1836 = vunpack.c.l.b16 %v1141
        %v1837 = vunpack.c.h.b16 %v1141
        %v1838 = vunpack.c.l.b16 %v1142
        %v1839 = vunpack.c.h.b16 %v1142
        %v1840 = vunpack.c.l.b16 %v1143
        %v1841 = vunpack.c.h.b16 %v1143
        %v1842 = vunpack.c.l.b16 %v1144
        %v1843 = vunpack.c.h.b16 %v1144
        %v1844 = vunpack.c.l.b16 %v1145
        %v1845 = vunpack.c.h.b16 %v1145
        %v1846 = vunpack.c.l.b16 %v1146
        %v1847 = vunpack.c.h.b16 %v1146
        %v1848 = vunpack.c.l.b16 %v1147
        %v1849 = vunpack.c.h.b16 %v1147
        %v1850 = vunpack.c.l.b16 %v1148
        %v1851 = vunpack.c.h.b16 %v1148
        %v1852 = vunpack.c.l.b16 %v1149
        %v1853 = vunpack.c.h.b16 %v1149
        %v1854 = vunpack.c.l.b16 %v1150
        %v1855 = vunpack.c.h.b16 %v1150
        %v1856 = vunpack.c.l.b16 %v1151
        %v1857 = vunpack.c.h.b16 %v1151
        %v1858 = vunpack.c.l.b16 %v1152
        %v1859 = vunpack.c.h.b16 %v1152
        %v1860 = vunpack.c.l.b16 %v1153
        %v1861 = vunpack.c.h.b16 %v1153
        %v1862 = vunpack.c.l.b16 %v1154
        %v1863 = vunpack.c.h.b16 %v1154
        %v1864 = vunpack.c.l.b16 %v1155
        %v1865 = vunpack.c.h.b16 %v1155
        %v1866 = vunpack.c.l.b16 %v1156
        %v1867 = vunpack.c.h.b16 %v1156
        %v1868 = vunpack.c.l.b16 %v1157
        %v1869 = vunpack.c.h.b16 %v1157
        %v1870 = vunpack.c.l.b16 %v1158
        %v1871 = vunpack.c.h.b16 %v1158
        %v1872 = vunpack.c.l.b16 %v1159
        %v1873 = vunpack.c.h.b16 %v1159
        %v1874 = vunpack.c.l.b16 %v1160
        %v1875 = vunpack.c.h.b16 %v1160
        %v1876 = vunpack.c.l.b16 %v1161
        %v1877 = vunpack.c.h.b16 %v1161
        %v1878 = vunpack.c.l.b16 %v1162
        %v1879 = vunpack.c.h.b16 %v1162
        %v1880 = vunpack.c.l.b16 %v1163
        %v1881 = vunpack.c.h.b16 %v1163
        %v1882 = vunpack.c.l.b16 %v1164
        %v1883 = vunpack.c.h.b16 %v1164
        %v1884 = vunpack.c.l.b16 %v1165
        %v1885 = vunpack.c.h.b16 %v1165
        %v1886 = vunpack.c.l.b16 %v1166
        %v1887 = vunpack.c.h.b16 %v1166
        %v1888 = vunpack.c.l.b16 %v1167
        %v1889 = vunpack.c.h.b16 %v1167
        %v1890 = vunpack.c.l.b16 %v1168
        %v1891 = vunpack.c.h.b16 %v1168
        %v1892 = vunpack.c.l.b16 %v1169
        %v1893 = vunpack.c.h.b16 %v1169
        %v1894 = vunpack.c.l.b16 %v1170
        %v1895 = vunpack.c.h.b16 %v1170
        %v1896 = vunpack.c.l.b16 %v1171
        %v1897 = vunpack.c.h.b16 %v1171
        %v1898 = vunpack.c.l.b16 %v1172
        %v1899 = vunpack.c.h.b16 %v1172
        %v1900 = vunpack.c.l.b16 %v1173
        %v1901 = vunpack.c.h.b16 %v1173
        %v1902 = vunpack.c.l.b16 %v1174
        %v1903 = vunpack.c.h.b16 %v1174
        %v1904 = vunpack.c.l.b16 %v1175
        %v1905 = vunpack.c.h.b16 %v1175
        %v1906 = vunpack.c.l.b16 %v1176
        %v1907 = vunpack.c.h.b16 %v1176
        %v1908 = vunpack.c.l.b16 %v1177
        %v1909 = vunpack.c.h.b16 %v1177
        %v1910 = vunpack.c.l.b16 %v1178
        %v1911 = vunpack.c.h.b16 %v1178
        %v1912 = vunpack.c.l.b16 %v1179
        %v1913 = vunpack.c.h.b16 %v1179
        %v1914 = vunpack.c.l.b16 %v1180
        %v1915 = vunpack.c.h.b16 %v1180
        %v1916 = vunpack.c.l.b16 %v1181
        %v1917 = vunpack.c.h.b16 %v1181
        %v1918 = vunpack.c.l.b16 %v1182
        %v1919 = vunpack.c.h.b16 %v1182
        %v1920 = vunpack.c.l.b16 %v1183
        %v1921 = vunpack.c.h.b16 %v1183
        %v1922 = vunpack.c.l.b16 %v1184
        %v1923 = vunpack.c.h.b16 %v1184
        %v1924 = vunpack.c.l.b16 %v1185
        %v1925 = vunpack.c.h.b16 %v1185
        %v1926 = vunpack.c.l.b16 %v1186
        %v1927 = vunpack.c.h.b16 %v1186
        %v1928 = vunpack.c.l.b16 %v1187
        %v1929 = vunpack.c.h.b16 %v1187
        %v1930 = vunpack.c.l.b16 %v1188
        %v1931 = vunpack.c.h.b16 %v1188
        %v1932 = vunpack.c.l.b16 %v1189
        %v1933 = vunpack.c.h.b16 %v1189
        %v1934 = vunpack.c.l.b16 %v1190
        %v1935 = vunpack.c.h.b16 %v1190
        %v1936 = vunpack.c.l.b16 %v1191
        %v1937 = vunpack.c.h.b16 %v1191
        %v1938 = vunpack.c.l.b16 %v1192
        %v1939 = vunpack.c.h.b16 %v1192
        %v1940 = vunpack.c.l.b16 %v1193
        %v1941 = vunpack.c.h.b16 %v1193
        %v1942 = vunpack.c.l.b16 %v1194
        %v1943 = vunpack.c.h.b16 %v1194
        %v1944 = vunpack.c.l.b16 %v1195
        %v1945 = vunpack.c.h.b16 %v1195
        %v1946 = vunpack.c.l.b16 %v1196
        %v1947 = vunpack.c.h.b16 %v1196
        %v1948 = vunpack.c.l.b16 %v1197
        %v1949 = vunpack.c.h.b16 %v1197
        %v1950 = vunpack.c.l.b16 %v1198
        %v1951 = vunpack.c.h.b16 %v1198
        %v1952 = vunpack.c.l.b16 %v1199
        %v1953 = vunpack.c.h.b16 %v1199
        %v1954 = vunpack.c.l.b16 %v1200
        %v1955 = vunpack.c.h.b16 %v1200
        %v1956 = vunpack.c.l.b16 %v1201
        %v1957 = vunpack.c.h.b16 %v1201
        %v1958 = vunpack.c.l.b16 %v1202
        %v1959 = vunpack.c.h.b16 %v1202
        %v1960 = vunpack.c.l.b16 %v1203
        %v1961 = vunpack.c.h.b16 %v1203
        %v1962 = vunpack.c.l.b16 %v1204
        %v1963 = vunpack.c.h.b16 %v1204
        %v1964 = vunpack.c.l.b16 %v1205
        %v1965 = vunpack.c.h.b16 %v1205
        %v1966 = vunpack.c.l.b16 %v1206
        %v1967 = vunpack.c.h.b16 %v1206
        %v1968 = vunpack.c.l.b16 %v1207
        %v1969 = vunpack.c.h.b16 %v1207
        %v1970 = vunpack.c.l.b16 %v1208
        %v1971 = vunpack.c.h.b16 %v1208
        %v1972 = vunpack.c.l.b16 %v1209
        %v1973 = vunpack.c.h.b16 %v1209
        %v1974 = vunpack.c.l.b16 %v1210
        %v1975 = vunpack.c.h.b16 %v1210
        %v1976 = vunpack.c.l.b16 %v1211
        %v1977 = vunpack.c.h.b16 %v1211
        %v1978 = vunpack.c.l.b16 %v1212
        %v1979 = vunpack.c.h.b16 %v1212
        %v1980 = vunpack.c.l.b16 %v1213
        %v1981 = vunpack.c.h.b16 %v1213
        %v1982 = vunpack.c.l.b16 %v1214
        %v1983 = vunpack.c.h.b16 %v1214
        %v1984 = vunpack.c.l.b16 %v1215
        %v1985 = vunpack.c.h.b16 %v1215
        %v1986 = vunpack.c.l.b16 %v1216
        %v1987 = vunpack.c.h.b16 %v1216
        %v1988 = vunpack.c.l.b16 %v1217
        %v1989 = vunpack.c.h.b16 %v1217
        %v1990 = vunpack.c.l.b16 %v1218
        %v1991 = vunpack.c.h.b16 %v1218
        %v1992 = vunpack.c.l.b16 %v1219
        %v1993 = vunpack.c.h.b16 %v1219
        %v1994 = vunpack.c.l.b16 %v1220
        %v1995 = vunpack.c.h.b16 %v1220
        %v1996 = vunpack.c.l.b16 %v1221
        %v1997 = vunpack.c.h.b16 %v1221
        %v1998 = vunpack.c.l.b16 %v1222
        %v1999 = vunpack.c.h.b16 %v1222
        %v2000 = vunpack.c.l.b16 %v1223
        %v2001 = vunpack.c.h.b16 %v1223
        %v2002 = vunpack.c.l.b16 %v1224
        %v2003 = vunpack.c.h.b16 %v1224
        %v2004 = vunpack.c.l.b16 %v1225
        %v2005 = vunpack.c.h.b16 %v1225
        %v2006 = vunpack.c.l.b16 %v1226
        %v2007 = vunpack.c.h.b16 %v1226
        %v2008 = vunpack.c.l.b16 %v1227
        %v2009 = vunpack.c.h.b16 %v1227
        %v2010 = vunpack.c.l.b16 %v1228
        %v2011 = vunpack.c.h.b16 %v1228
        %v2012 = vunpack.c.l.b16 %v1229
        %v2013 = vunpack.c.h.b16 %v1229
        %v2014 = vunpack.c.l.b16 %v1230
        %v2015 = vunpack.c.h.b16 %v1230
        %v2016 = vunpack.c.l.b16 %v1231
        %v2017 = vunpack.c.h.b16 %v1231
        %v2018 = vunpack.c.l.b16 %v1232
        %v2019 = vunpack.c.h.b16 %v1232
        %v2020 = vunpack.c.l.b16 %v1233
        %v2021 = vunpack.c.h.b16 %v1233
        %v2022 = vunpack.c.l.b16 %v1234
        %v2023 = vunpack.c.h.b16 %v1234
        %v2024 = vunpack.c.l.b16 %v1235
        %v2025 = vunpack.c.h.b16 %v1235
        %v2026 = vpack.c.b16 %v1518, %v1514
        %v2027 = vpack.c.b16 %v1519, %v1515
        %v2028 = vpack.c.b16 %v1520, %v1516
        %v2029 = vpack.c.b16 %v1521, %v1517
        %v2030 = vpack.c.b16 %v1526, %v1522
        %v2031 = vpack.c.b16 %v1527, %v1523
        %v2032 = vpack.c.b16 %v1528, %v1524
        %v2033 = vpack.c.b16 %v1529, %v1525
        %v2034 = vpack.c.b16 %v1534, %v1530
        %v2035 = vpack.c.b16 %v1535, %v1531
        %v2036 = vpack.c.b16 %v1536, %v1532
        %v2037 = vpack.c.b16 %v1537, %v1533
        %v2038 = vpack.c.b16 %v1542, %v1538
        %v2039 = vpack.c.b16 %v1543, %v1539
        %v2040 = vpack.c.b16 %v1544, %v1540
        %v2041 = vpack.c.b16 %v1545, %v1541
        %v2042 = vpack.c.b16 %v1550, %v1546
        %v2043 = vpack.c.b16 %v1551, %v1547
        %v2044 = vpack.c.b16 %v1552, %v1548
        %v2045 = vpack.c.b16 %v1553, %v1549
        %v2046 = vpack.c.b16 %v1558, %v1554
        %v2047 = vpack.c.b16 %v1559, %v1555
        %v2048 = vpack.c.b16 %v1560, %v1556
        %v2049 = vpack.c.b16 %v1561, %v1557
        %v2050 = vpack.c.b16 %v1566, %v1562
        %v2051 = vpack.c.b16 %v1567, %v1563
        %v2052 = vpack.c.b16 %v1568, %v1564
        %v2053 = vpack.c.b16 %v1569, %v1565
        %v2054 = vpack.c.b16 %v1574, %v1570
        %v2055 = vpack.c.b16 %v1575, %v1571
        %v2056 = vpack.c.b16 %v1576, %v1572
        %v2057 = vpack.c.b16 %v1577, %v1573
        %v2058 = vpack.c.b16 %v1582, %v1578
        %v2059 = vpack.c.b16 %v1583, %v1579
        %v2060 = vpack.c.b16 %v1584, %v1580
        %v2061 = vpack.c.b16 %v1585, %v1581
        %v2062 = vpack.c.b16 %v1590, %v1586
        %v2063 = vpack.c.b16 %v1591, %v1587
        %v2064 = vpack.c.b16 %v1592, %v1588
        %v2065 = vpack.c.b16 %v1593, %v1589
        %v2066 = vpack.c.b16 %v1598, %v1594
        %v2067 = vpack.c.b16 %v1599, %v1595
        %v2068 = vpack.c.b16 %v1600, %v1596
        %v2069 = vpack.c.b16 %v1601, %v1597
        %v2070 = vpack.c.b16 %v1606, %v1602
        %v2071 = vpack.c.b16 %v1607, %v1603
        %v2072 = vpack.c.b16 %v1608, %v1604
        %v2073 = vpack.c.b16 %v1609, %v1605
        %v2074 = vpack.c.b16 %v1614, %v1610
        %v2075 = vpack.c.b16 %v1615, %v1611
        %v2076 = vpack.c.b16 %v1616, %v1612
        %v2077 = vpack.c.b16 %v1617, %v1613
        %v2078 = vpack.c.b16 %v1622, %v1618
        %v2079 = vpack.c.b16 %v1623, %v1619
        %v2080 = vpack.c.b16 %v1624, %v1620
        %v2081 = vpack.c.b16 %v1625, %v1621
        %v2082 = vpack.c.b16 %v1630, %v1626
        %v2083 = vpack.c.b16 %v1631, %v1627
        %v2084 = vpack.c.b16 %v1632, %v1628
        %v2085 = vpack.c.b16 %v1633, %v1629
        %v2086 = vpack.c.b16 %v1638, %v1634
        %v2087 = vpack.c.b16 %v1639, %v1635
        %v2088 = vpack.c.b16 %v1640, %v1636
        %v2089 = vpack.c.b16 %v1641, %v1637
        %v2090 = vpack.c.b16 %v1646, %v1642
        %v2091 = vpack.c.b16 %v1647, %v1643
        %v2092 = vpack.c.b16 %v1648, %v1644
        %v2093 = vpack.c.b16 %v1649, %v1645
        %v2094 = vpack.c.b16 %v1654, %v1650
        %v2095 = vpack.c.b16 %v1655, %v1651
        %v2096 = vpack.c.b16 %v1656, %v1652
        %v2097 = vpack.c.b16 %v1657, %v1653
        %v2098 = vpack.c.b16 %v1662, %v1658
        %v2099 = vpack.c.b16 %v1663, %v1659
        %v2100 = vpack.c.b16 %v1664, %v1660
        %v2101 = vpack.c.b16 %v1665, %v1661
        %v2102 = vpack.c.b16 %v1670, %v1666
        %v2103 = vpack.c.b16 %v1671, %v1667
        %v2104 = vpack.c.b16 %v1672, %v1668
        %v2105 = vpack.c.b16 %v1673, %v1669
        %v2106 = vpack.c.b16 %v1678, %v1674
        %v2107 = vpack.c.b16 %v1679, %v1675
        %v2108 = vpack.c.b16 %v1680, %v1676
        %v2109 = vpack.c.b16 %v1681, %v1677
        %v2110 = vpack.c.b16 %v1686, %v1682
        %v2111 = vpack.c.b16 %v1687, %v1683
        %v2112 = vpack.c.b16 %v1688, %v1684
        %v2113 = vpack.c.b16 %v1689, %v1685
        %v2114 = vpack.c.b16 %v1694, %v1690
        %v2115 = vpack.c.b16 %v1695, %v1691
        %v2116 = vpack.c.b16 %v1696, %v1692
        %v2117 = vpack.c.b16 %v1697, %v1693
        %v2118 = vpack.c.b16 %v1702, %v1698
        %v2119 = vpack.c.b16 %v1703, %v1699
        %v2120 = vpack.c.b16 %v1704, %v1700
        %v2121 = vpack.c.b16 %v1705, %v1701
        %v2122 = vpack.c.b16 %v1710, %v1706
        %v2123 = vpack.c.b16 %v1711, %v1707
        %v2124 = vpack.c.b16 %v1712, %v1708
        %v2125 = vpack.c.b16 %v1713, %v1709
        %v2126 = vpack.c.b16 %v1718, %v1714
        %v2127 = vpack.c.b16 %v1719, %v1715
        %v2128 = vpack.c.b16 %v1720, %v1716
        %v2129 = vpack.c.b16 %v1721, %v1717
        %v2130 = vpack.c.b16 %v1726, %v1722
        %v2131 = vpack.c.b16 %v1727, %v1723
        %v2132 = vpack.c.b16 %v1728, %v1724
        %v2133 = vpack.c.b16 %v1729, %v1725
        %v2134 = vpack.c.b16 %v1734, %v1730
        %v2135 = vpack.c.b16 %v1735, %v1731
        %v2136 = vpack.c.b16 %v1736, %v1732
        %v2137 = vpack.c.b16 %v1737, %v1733
        %v2138 = vpack.c.b16 %v1742, %v1738
        %v2139 = vpack.c.b16 %v1743, %v1739
        %v2140 = vpack.c.b16 %v1744, %v1740
        %v2141 = vpack.c.b16 %v1745, %v1741
        %v2142 = vpack.c.b16 %v1750, %v1746
        %v2143 = vpack.c.b16 %v1751, %v1747
        %v2144 = vpack.c.b16 %v1752, %v1748
        %v2145 = vpack.c.b16 %v1753, %v1749
        %v2146 = vpack.c.b16 %v1758, %v1754
        %v2147 = vpack.c.b16 %v1759, %v1755
        %v2148 = vpack.c.b16 %v1760, %v1756
        %v2149 = vpack.c.b16 %v1761, %v1757
        %v2150 = vpack.c.b16 %v1766, %v1762
        %v2151 = vpack.c.b16 %v1767, %v1763
        %v2152 = vpack.c.b16 %v1768, %v1764
        %v2153 = vpack.c.b16 %v1769, %v1765
        %v2154 = vpack.c.b16 %v1774, %v1770
        %v2155 = vpack.c.b16 %v1775, %v1771
        %v2156 = vpack.c.b16 %v1776, %v1772
        %v2157 = vpack.c.b16 %v1777, %v1773
        %v2158 = vpack.c.b16 %v1782, %v1778
        %v2159 = vpack.c.b16 %v1783, %v1779
        %v2160 = vpack.c.b16 %v1784, %v1780
        %v2161 = vpack.c.b16 %v1785, %v1781
        %v2162 = vpack.c.b16 %v1790, %v1786
        %v2163 = vpack.c.b16 %v1791, %v1787
        %v2164 = vpack.c.b16 %v1792, %v1788
        %v2165 = vpack.c.b16 %v1793, %v1789
        %v2166 = vpack.c.b16 %v1798, %v1794
        %v2167 = vpack.c.b16 %v1799, %v1795
        %v2168 = vpack.c.b16 %v1800, %v1796
        %v2169 = vpack.c.b16 %v1801, %v1797
        %v2170 = vpack.c.b16 %v1806, %v1802
        %v2171 = vpack.c.b16 %v1807, %v1803
        %v2172 = vpack.c.b16 %v1808, %v1804
        %v2173 = vpack.c.b16 %v1809, %v1805
        %v2174 = vpack.c.b16 %v1814, %v1810
        %v2175 = vpack.c.b16 %v1815, %v1811
        %v2176 = vpack.c.b16 %v1816, %v1812
        %v2177 = vpack.c.b16 %v1817, %v1813
        %v2178 = vpack.c.b16 %v1822, %v1818
        %v2179 = vpack.c.b16 %v1823, %v1819
        %v2180 = vpack.c.b16 %v1824, %v1820
        %v2181 = vpack.c.b16 %v1825, %v1821
        %v2182 = vpack.c.b16 %v1830, %v1826
        %v2183 = vpack.c.b16 %v1831, %v1827
        %v2184 = vpack.c.b16 %v1832, %v1828
        %v2185 = vpack.c.b16 %v1833, %v1829
        %v2186 = vpack.c.b16 %v1838, %v1834
        %v2187 = vpack.c.b16 %v1839, %v1835
        %v2188 = vpack.c.b16 %v1840, %v1836
        %v2189 = vpack.c.b16 %v1841, %v1837
        %v2190 = vpack.c.b16 %v1846, %v1842
        %v2191 = vpack.c.b16 %v1847, %v1843
        %v2192 = vpack.c.b16 %v1848, %v1844
        %v2193 = vpack.c.b16 %v1849, %v1845
        %v2194 = vpack.c.b16 %v1854, %v1850
        %v2195 = vpack.c.b16 %v1855, %v1851
        %v2196 = vpack.c.b16 %v1856, %v1852
        %v2197 = vpack.c.b16 %v1857, %v1853
        %v2198 = vpack.c.b16 %v1862, %v1858
        %v2199 = vpack.c.b16 %v1863, %v1859
        %v2200 = vpack.c.b16 %v1864, %v1860
        %v2201 = vpack.c.b16 %v1865, %v1861
        %v2202 = vpack.c.b16 %v1870, %v1866
        %v2203 = vpack.c.b16 %v1871, %v1867
        %v2204 = vpack.c.b16 %v1872, %v1868
        %v2205 = vpack.c.b16 %v1873, %v1869
        %v2206 = vpack.c.b16 %v1878, %v1874
        %v2207 = vpack.c.b16 %v1879, %v1875
        %v2208 = vpack.c.b16 %v1880, %v1876
        %v2209 = vpack.c.b16 %v1881, %v1877
        %v2210 = vpack.c.b16 %v1886, %v1882
        %v2211 = vpack.c.b16 %v1887, %v1883
        %v2212 = vpack.c.b16 %v1888, %v1884
        %v2213 = vpack.c.b16 %v1889, %v1885
        %v2214 = vpack.c.b16 %v1894, %v1890
        %v2215 = vpack.c.b16 %v1895, %v1891
        %v2216 = vpack.c.b16 %v1896, %v1892
        %v2217 = vpack.c.b16 %v1897, %v1893
        %v2218 = vpack.c.b16 %v1902, %v1898
        %v2219 = vpack.c.b16 %v1903, %v1899
        %v2220 = vpack.c.b16 %v1904, %v1900
        %v2221 = vpack.c.b16 %v1905, %v1901
        %v2222 = vpack.c.b16 %v1910, %v1906
        %v2223 = vpack.c.b16 %v1911, %v1907
        %v2224 = vpack.c.b16 %v1912, %v1908
        %v2225 = vpack.c.b16 %v1913, %v1909
        %v2226 = vpack.c.b16 %v1918, %v1914
        %v2227 = vpack.c.b16 %v1919, %v1915
        %v2228 = vpack.c.b16 %v1920, %v1916
        %v2229 = vpack.c.b16 %v1921, %v1917
        %v2230 = vpack.c.b16 %v1926, %v1922
        %v2231 = vpack.c.b16 %v1927, %v1923
        %v2232 = vpack.c.b16 %v1928, %v1924
        %v2233 = vpack.c.b16 %v1929, %v1925
        %v2234 = vpack.c.b16 %v1934, %v1930
        %v2235 = vpack.c.b16 %v1935, %v1931
        %v2236 = vpack.c.b16 %v1936, %v1932
        %v2237 = vpack.c.b16 %v1937, %v1933
        %v2238 = vpack.c.b16 %v1942, %v1938
        %v2239 = vpack.c.b16 %v1943, %v1939
        %v2240 = vpack.c.b16 %v1944, %v1940
        %v2241 = vpack.c.b16 %v1945, %v1941
        %v2242 = vpack.c.b16 %v1950, %v1946
        %v2243 = vpack.c.b16 %v1951, %v1947
        %v2244 = vpack.c.b16 %v1952, %v1948
        %v2245 = vpack.c.b16 %v1953, %v1949
        %v2246 = vpack.c.b16 %v1958, %v1954
        %v2247 = vpack.c.b16 %v1959, %v1955
        %v2248 = vpack.c.b16 %v1960, %v1956
        %v2249 = vpack.c.b16 %v1961, %v1957
        %v2250 = vpack.c.b16 %v1966, %v1962
        %v2251 = vpack.c.b16 %v1967, %v1963
        %v2252 = vpack.c.b16 %v1968, %v1964
        %v2253 = vpack.c.b16 %v1969, %v1965
        %v2254 = vpack.c.b16 %v1974, %v1970
        %v2255 = vpack.c.b16 %v1975, %v1971
        %v2256 = vpack.c.b16 %v1976, %v1972
        %v2257 = vpack.c.b16 %v1977, %v1973
        %v2258 = vpack.c.b16 %v1982, %v1978
        %v2259 = vpack.c.b16 %v1983, %v1979
        %v2260 = vpack.c.b16 %v1984, %v1980
        %v2261 = vpack.c.b16 %v1985, %v1981
        %v2262 = vpack.c.b16 %v1990, %v1986
        %v2263 = vpack.c.b16 %v1991, %v1987
        %v2264 = vpack.c.b16 %v1992, %v1988
        %v2265 = vpack.c.b16 %v1993, %v1989
        %v2266 = vpack.c.b16 %v1998, %v1994
        %v2267 = vpack.c.b16 %v1999, %v1995
        %v2268 = vpack.c.b16 %v2000, %v1996
        %v2269 = vpack.c.b16 %v2001, %v1997
        %v2270 = vpack.c.b16 %v2006, %v2002
        %v2271 = vpack.c.b16 %v2007, %v2003
        %v2272 = vpack.c.b16 %v2008, %v2004
        %v2273 = vpack.c.b16 %v2009, %v2005
        %v2274 = vpack.c.b16 %v2014, %v2010
        %v2275 = vpack.c.b16 %v2015, %v2011
        %v2276 = vpack.c.b16 %v2016, %v2012
        %v2277 = vpack.c.b16 %v2017, %v2013
        %v2278 = vpack.c.b16 %v2022, %v2018
        %v2279 = vpack.c.b16 %v2023, %v2019
        %v2280 = vpack.c.b16 %v2024, %v2020
        %v2281 = vpack.c.b16 %v2025, %v2021
        %2538 = vmatprep.subr.bf16.mxu0 %v2027
        %2539 = vmatpush1.bf16.msra.mxu0 %v2026
        %2540 = vmatprep.subr.bf16.mxu0 %v2031
        %2541 = vmatpush1.bf16.msra.mxu0 %v2030
        %2542 = vmatprep.subr.bf16.mxu0 %v2035
        %2543 = vmatpush1.bf16.msra.mxu0 %v2034
        %2544 = vmatprep.subr.bf16.mxu0 %v2039
        %2545 = vmatpush1.bf16.msra.mxu0 %v2038
        %2546 = vmatprep.subr.bf16.mxu0 %v2043
        %2547 = vmatpush1.bf16.msra.mxu0 %v2042
        %2548 = vmatprep.subr.bf16.mxu0 %v2047
        %2549 = vmatpush1.bf16.msra.mxu0 %v2046
        %2550 = vmatprep.subr.bf16.mxu0 %v2051
        %2551 = vmatpush1.bf16.msra.mxu0 %v2050
        %2552 = vmatprep.subr.bf16.mxu0 %v2055
        %2553 = vmatpush1.bf16.msra.mxu0 %v2054
        %2554 = vmatprep.subr.bf16.mxu0 %v2059
        %2555 = vmatpush1.bf16.msra.mxu0 %v2058
        %2556 = vmatprep.subr.bf16.mxu0 %v2063
        %2557 = vmatpush1.bf16.msra.mxu0 %v2062
        %2558 = vmatprep.subr.bf16.mxu0 %v2067
        %2559 = vmatpush1.bf16.msra.mxu0 %v2066
        %2560 = vmatprep.subr.bf16.mxu0 %v2071
        %2561 = vmatpush1.bf16.msra.mxu0 %v2070
        %2562 = vmatprep.subr.bf16.mxu0 %v2075
        %2563 = vmatpush1.bf16.msra.mxu0 %v2074
        %2564 = vmatprep.subr.bf16.mxu0 %v2079
        %2565 = vmatpush1.bf16.msra.mxu0 %v2078
        %2566 = vmatprep.subr.bf16.mxu0 %v2083
        %2567 = vmatpush1.bf16.msra.mxu0 %v2082
        %2568 = vmatprep.subr.bf16.mxu0 %v2087
        %2569 = vmatpush1.bf16.msra.mxu0 %v2086
        %2570 = vmatprep.mubr.bf16.mxu0 %v853
        %2571 = vmatmul.mubr.bf16.gmra.mrb[0].mxu0 %v852
        %v2572 = vpop.f32.mrb[0].mxu0
        %v2573 = vadd.f32 %v1241, %v2572
        %v2574 = vpop.f32.mrb[0].mxu0
        %v2575 = vadd.f32 %v1245, %v2574
        %v2576 = vpop.f32.mrb[0].mxu0
        %v2577 = vadd.f32 %v1241, %v2576
        %v2578 = vpop.f32.mrb[0].mxu0
        %v2579 = vadd.f32 %v1245, %v2578
        %2580 = vmatprep.mubr.bf16.mxu0 %v861
        %2581 = vmatmul.mubr.bf16.gmra.mrb[0].mxu0 %v860
        %v2582 = vpop.f32.mrb[0].mxu0
        %v2583 = vadd.f32 %v1241, %v2582
        %v2584 = vpop.f32.mrb[0].mxu0
        %v2585 = vadd.f32 %v1245, %v2584
        %v2586 = vpop.f32.mrb[0].mxu0
        %v2587 = vadd.f32 %v1241, %v2586
        %v2588 = vpop.f32.mrb[0].mxu0
        %v2589 = vadd.f32 %v1245, %v2588
        %2590 = vmatprep.mubr.bf16.mxu0 %v869
        %2591 = vmatmul.mubr.bf16.gmra.mrb[0].mxu0 %v868
        %v2592 = vpop.f32.mrb[0].mxu0
        %v2593 = vadd.f32 %v1241, %v2592
        %v2594 = vpop.f32.mrb[0].mxu0
        %v2595 = vadd.f32 %v1245, %v2594
        %v2596 = vpop.f32.mrb[0].mxu0
        %v2597 = vadd.f32 %v1241, %v2596
        %v2598 = vpop.f32.mrb[0].mxu0
        %v2599 = vadd.f32 %v1245, %v2598
        %2600 = vmatprep.mubr.bf16.mxu0 %v877
        %2601 = vmatmul.mubr.bf16.gmra.mrb[0].mxu0 %v876
        %v2602 = vpop.f32.mrb[0].mxu0
        %v2603 = vadd.f32 %v1241, %v2602
        %v2604 = vpop.f32.mrb[0].mxu0
        %v2605 = vadd.f32 %v1245, %v2604
        %v2606 = vpop.f32.mrb[0].mxu0
        %v2607 = vadd.f32 %v1241, %v2606
        %v2608 = vpop.f32.mrb[0].mxu0
        %v2609 = vadd.f32 %v1245, %v2608
        %2610 = vmatprep.mubr.bf16.mxu0 %v885
        %2611 = vmatmul.mubr.bf16.gmra.mrb[0].mxu0 %v884
        %v2612 = vpop.f32.mrb[0].mxu0
        %v2613 = vadd.f32 %v1241, %v2612
        %v2614 = vpop.f32.mrb[0].mxu0
        %v2615 = vadd.f32 %v1245, %v2614
        %v2616 = vpop.f32.mrb[0].mxu0
        %v2617 = vadd.f32 %v1241, %v2616
        %v2618 = vpop.f32.mrb[0].mxu0
        %v2619 = vadd.f32 %v1245, %v2618
        %2620 = vmatprep.mubr.bf16.mxu0 %v893
        %2621 = vmatmul.mubr.bf16.gmra.mrb[0].mxu0 %v892
        %v2622 = vpop.f32.mrb[0].mxu0
        %v2623 = vadd.f32 %v1241, %v2622
        %v2624 = vpop.f32.mrb[0].mxu0
        %v2625 = vadd.f32 %v1245, %v2624
        %v2626 = vpop.f32.mrb[0].mxu0
        %v2627 = vadd.f32 %v1241, %v2626
        %v2628 = vpop.f32.mrb[0].mxu0
        %v2629 = vadd.f32 %v1245, %v2628
        %2630 = vmatprep.mubr.bf16.mxu0 %v901
        %2631 = vmatmul.mubr.bf16.gmra.mrb[0].mxu0 %v900
        %v2632 = vpop.f32.mrb[0].mxu0
        %v2633 = vadd.f32 %v1241, %v2632
        %v2634 = vpop.f32.mrb[0].mxu0
        %v2635 = vadd.f32 %v1245, %v2634
        %v2636 = vpop.f32.mrb[0].mxu0
        %v2637 = vadd.f32 %v1241, %v2636
        %v2638 = vpop.f32.mrb[0].mxu0
        %v2639 = vadd.f32 %v1245, %v2638
        %2640 = vmatprep.mubr.bf16.mxu0 %v909
        %2641 = vmatmul.mubr.bf16.gmra.mrb[0].mxu0 %v908
        %v2642 = vpop.f32.mrb[0].mxu0
        %v2643 = vadd.f32 %v1241, %v2642
        %v2644 = vpop.f32.mrb[0].mxu0
        %v2645 = vadd.f32 %v1245, %v2644
        %v2646 = vpop.f32.mrb[0].mxu0
        %v2647 = vadd.f32 %v1241, %v2646
        %v2648 = vpop.f32.mrb[0].mxu0
        %v2649 = vadd.f32 %v1245, %v2648
        %2650 = vmatprep.mubr.bf16.mxu0 %v917
        %2651 = vmatmul.mubr.bf16.gmra.mrb[0].mxu0 %v916
        %v2652 = vpop.f32.mrb[0].mxu0
        %v2653 = vadd.f32 %v1241, %v2652
        %v2654 = vpop.f32.mrb[0].mxu0
        %v2655 = vadd.f32 %v1245, %v2654
        %v2656 = vpop.f32.mrb[0].mxu0
        %v2657 = vadd.f32 %v1241, %v2656
        %v2658 = vpop.f32.mrb[0].mxu0
        %v2659 = vadd.f32 %v1245, %v2658
        %2660 = vmatprep.mubr.bf16.mxu0 %v925
        %2661 = vmatmul.mubr.bf16.gmra.mrb[0].mxu0 %v924
        %v2662 = vpop.f32.mrb[0].mxu0
        %v2663 = vadd.f32 %v1241, %v2662
        %v2664 = vpop.f32.mrb[0].mxu0
        %v2665 = vadd.f32 %v1245, %v2664
        %v2666 = vpop.f32.mrb[0].mxu0
        %v2667 = vadd.f32 %v1241, %v2666
        %v2668 = vpop.f32.mrb[0].mxu0
        %v2669 = vadd.f32 %v1245, %v2668
        %2670 = vmatprep.mubr.bf16.mxu0 %v933
        %2671 = vmatmul.mubr.bf16.gmra.mrb[0].mxu0 %v932
        %v2672 = vpop.f32.mrb[0].mxu0
        %v2673 = vadd.f32 %v1241, %v2672
        %v2674 = vpop.f32.mrb[0].mxu0
        %v2675 = vadd.f32 %v1245, %v2674
        %v2676 = vpop.f32.mrb[0].mxu0
        %v2677 = vadd.f32 %v1241, %v2676
        %v2678 = vpop.f32.mrb[0].mxu0
        %v2679 = vadd.f32 %v1245, %v2678
        %2680 = vmatprep.mubr.bf16.mxu0 %v941
        %2681 = vmatmul.mubr.bf16.gmra.mrb[0].mxu0 %v940
        %v2682 = vpop.f32.mrb[0].mxu0
        %v2683 = vadd.f32 %v1241, %v2682
        %v2684 = vpop.f32.mrb[0].mxu0
        %v2685 = vadd.f32 %v1245, %v2684
        %v2686 = vpop.f32.mrb[0].mxu0
        %v2687 = vadd.f32 %v1241, %v2686
        %v2688 = vpop.f32.mrb[0].mxu0
        %v2689 = vadd.f32 %v1245, %v2688
        %2690 = vmatprep.mubr.bf16.mxu0 %v949
        %2691 = vmatmul.mubr.bf16.gmra.mrb[0].mxu0 %v948
        %v2692 = vpop.f32.mrb[0].mxu0
        %v2693 = vadd.f32 %v1241, %v2692
        %v2694 = vpop.f32.mrb[0].mxu0
        %v2695 = vadd.f32 %v1245, %v2694
        %v2696 = vpop.f32.mrb[0].mxu0
        %v2697 = vadd.f32 %v1241, %v2696
        %v2698 = vpop.f32.mrb[0].mxu0
        %v2699 = vadd.f32 %v1245, %v2698
        %2700 = vmatprep.mubr.bf16.mxu0 %v957
        %2701 = vmatmul.mubr.bf16.gmra.mrb[0].mxu0 %v956
        %v2702 = vpop.f32.mrb[0].mxu0
        %v2703 = vadd.f32 %v1241, %v2702
        %v2704 = vpop.f32.mrb[0].mxu0
        %v2705 = vadd.f32 %v1245, %v2704
        %v2706 = vpop.f32.mrb[0].mxu0
        %v2707 = vadd.f32 %v1241, %v2706
        %v2708 = vpop.f32.mrb[0].mxu0
        %v2709 = vadd.f32 %v1245, %v2708
        %2710 = vmatprep.mubr.bf16.mxu0 %v965
        %2711 = vmatmul.mubr.bf16.gmra.mrb[0].mxu0 %v964
        %v2712 = vpop.f32.mrb[0].mxu0
        %v2713 = vadd.f32 %v1241, %v2712
        %v2714 = vpop.f32.mrb[0].mxu0
        %v2715 = vadd.f32 %v1245, %v2714
        %v2716 = vpop.f32.mrb[0].mxu0
        %v2717 = vadd.f32 %v1241, %v2716
        %v2718 = vpop.f32.mrb[0].mxu0
        %v2719 = vadd.f32 %v1245, %v2718
        %2720 = vmatprep.mubr.bf16.mxu0 %v973
        %2721 = vmatmul.mubr.bf16.gmra.mrb[0].mxu0 %v972
        %v2722 = vpop.f32.mrb[0].mxu0
        %v2723 = vadd.f32 %v1241, %v2722
        %v2724 = vpop.f32.mrb[0].mxu0
        %v2725 = vadd.f32 %v1245, %v2724
        %v2726 = vpop.f32.mrb[0].mxu0
        %v2727 = vadd.f32 %v1241, %v2726
        %v2728 = vpop.f32.mrb[0].mxu0
        %v2729 = vadd.f32 %v1245, %v2728
        %2730 = vdwg.mxu0
        %2731 = vmatprep.subr.bf16.mxu0 %v2091
        %2732 = vmatpush1.bf16.msra.mxu0 %v2090
        %2733 = vmatprep.subr.bf16.mxu0 %v2095
        %2734 = vmatpush1.bf16.msra.mxu0 %v2094
        %2735 = vmatprep.subr.bf16.mxu0 %v2099
        %2736 = vmatpush1.bf16.msra.mxu0 %v2098
        %2737 = vmatprep.subr.bf16.mxu0 %v2103
        %2738 = vmatpush1.bf16.msra.mxu0 %v2102
        %2739 = vmatprep.subr.bf16.mxu0 %v2107
        %2740 = vmatpush1.bf16.msra.mxu0 %v2106
        %2741 = vmatprep.subr.bf16.mxu0 %v2111
        %2742 = vmatpush1.bf16.msra.mxu0 %v2110
        %2743 = vmatprep.subr.bf16.mxu0 %v2115
        %2744 = vmatpush1.bf16.msra.mxu0 %v2114
        %2745 = vmatprep.subr.bf16.mxu0 %v2119
        %2746 = vmatpush1.bf16.msra.mxu0 %v2118
        %2747 = vmatprep.subr.bf16.mxu0 %v2123
        %2748 = vmatpush1.bf16.msra.mxu0 %v2122
        %2749 = vmatprep.subr.bf16.mxu0 %v2127
        %2750 = vmatpush1.bf16.msra.mxu0 %v2126
        %2751 = vmatprep.subr.bf16.mxu0 %v2131
        %2752 = vmatpush1.bf16.msra.mxu0 %v2130
        %2753 = vmatprep.subr.bf16.mxu0 %v2135
        %2754 = vmatpush1.bf16.msra.mxu0 %v2134
        %2755 = vmatprep.subr.bf16.mxu0 %v2139
        %2756 = vmatpush1.bf16.msra.mxu0 %v2138
        %2757 = vmatprep.subr.bf16.mxu0 %v2143
        %2758 = vmatpush1.bf16.msra.mxu0 %v2142
        %2759 = vmatprep.subr.bf16.mxu0 %v2147
        %2760 = vmatpush1.bf16.msra.mxu0 %v2146
        %2761 = vmatprep.subr.bf16.mxu0 %v2151
        %2762 = vmatpush1.bf16.msra.mxu0 %v2150
        %2763 = vmatprep.mubr.bf16.mxu0 %v855
        %2764 = vmatmul.mubr.bf16.gmra.mrb[0].mxu0 %v854
        %v2765 = vpop.f32.mrb[0].mxu0
        %v2766 = vadd.f32 %v2573, %v2765
        %v2767 = vpop.f32.mrb[0].mxu0
        %v2768 = vadd.f32 %v2575, %v2767
        %v2769 = vpop.f32.mrb[0].mxu0
        %v2770 = vadd.f32 %v2577, %v2769
        %v2771 = vpop.f32.mrb[0].mxu0
        %v2772 = vadd.f32 %v2579, %v2771
        %2773 = vmatprep.mubr.bf16.mxu0 %v863
        %2774 = vmatmul.mubr.bf16.gmra.mrb[0].mxu0 %v862
        %v2775 = vpop.f32.mrb[0].mxu0
        %v2776 = vadd.f32 %v2583, %v2775
        %v2777 = vpop.f32.mrb[0].mxu0
        %v2778 = vadd.f32 %v2585, %v2777
        %v2779 = vpop.f32.mrb[0].mxu0
        %v2780 = vadd.f32 %v2587, %v2779
        %v2781 = vpop.f32.mrb[0].mxu0
        %v2782 = vadd.f32 %v2589, %v2781
        %2783 = vmatprep.mubr.bf16.mxu0 %v871
        %2784 = vmatmul.mubr.bf16.gmra.mrb[0].mxu0 %v870
        %v2785 = vpop.f32.mrb[0].mxu0
        %v2786 = vadd.f32 %v2593, %v2785
        %v2787 = vpop.f32.mrb[0].mxu0
        %v2788 = vadd.f32 %v2595, %v2787
        %v2789 = vpop.f32.mrb[0].mxu0
        %v2790 = vadd.f32 %v2597, %v2789
        %v2791 = vpop.f32.mrb[0].mxu0
        %v2792 = vadd.f32 %v2599, %v2791
        %2793 = vmatprep.mubr.bf16.mxu0 %v879
        %2794 = vmatmul.mubr.bf16.gmra.mrb[0].mxu0 %v878
        %v2795 = vpop.f32.mrb[0].mxu0
        %v2796 = vadd.f32 %v2603, %v2795
        %v2797 = vpop.f32.mrb[0].mxu0
        %v2798 = vadd.f32 %v2605, %v2797
        %v2799 = vpop.f32.mrb[0].mxu0
        %v2800 = vadd.f32 %v2607, %v2799
        %v2801 = vpop.f32.mrb[0].mxu0
        %v2802 = vadd.f32 %v2609, %v2801
        %2803 = vmatprep.mubr.bf16.mxu0 %v887
        %2804 = vmatmul.mubr.bf16.gmra.mrb[0].mxu0 %v886
        %v2805 = vpop.f32.mrb[0].mxu0
        %v2806 = vadd.f32 %v2613, %v2805
        %v2807 = vpop.f32.mrb[0].mxu0
        %v2808 = vadd.f32 %v2615, %v2807
        %v2809 = vpop.f32.mrb[0].mxu0
        %v2810 = vadd.f32 %v2617, %v2809
        %v2811 = vpop.f32.mrb[0].mxu0
        %v2812 = vadd.f32 %v2619, %v2811
        %2813 = vmatprep.mubr.bf16.mxu0 %v895
        %2814 = vmatmul.mubr.bf16.gmra.mrb[0].mxu0 %v894
        %v2815 = vpop.f32.mrb[0].mxu0
        %v2816 = vadd.f32 %v2623, %v2815
        %v2817 = vpop.f32.mrb[0].mxu0
        %v2818 = vadd.f32 %v2625, %v2817
        %v2819 = vpop.f32.mrb[0].mxu0
        %v2820 = vadd.f32 %v2627, %v2819
        %v2821 = vpop.f32.mrb[0].mxu0
        %v2822 = vadd.f32 %v2629, %v2821
        %2823 = vmatprep.mubr.bf16.mxu0 %v903
        %2824 = vmatmul.mubr.bf16.gmra.mrb[0].mxu0 %v902
        %v2825 = vpop.f32.mrb[0].mxu0
        %v2826 = vadd.f32 %v2633, %v2825
        %v2827 = vpop.f32.mrb[0].mxu0
        %v2828 = vadd.f32 %v2635, %v2827
        %v2829 = vpop.f32.mrb[0].mxu0
        %v2830 = vadd.f32 %v2637, %v2829
        %v2831 = vpop.f32.mrb[0].mxu0
        %v2832 = vadd.f32 %v2639, %v2831
        %2833 = vmatprep.mubr.bf16.mxu0 %v911
        %2834 = vmatmul.mubr.bf16.gmra.mrb[0].mxu0 %v910
        %v2835 = vpop.f32.mrb[0].mxu0
        %v2836 = vadd.f32 %v2643, %v2835
        %v2837 = vpop.f32.mrb[0].mxu0
        %v2838 = vadd.f32 %v2645, %v2837
        %v2839 = vpop.f32.mrb[0].mxu0
        %v2840 = vadd.f32 %v2647, %v2839
        %v2841 = vpop.f32.mrb[0].mxu0
        %v2842 = vadd.f32 %v2649, %v2841
        %2843 = vmatprep.mubr.bf16.mxu0 %v919
        %2844 = vmatmul.mubr.bf16.gmra.mrb[0].mxu0 %v918
        %v2845 = vpop.f32.mrb[0].mxu0
        %v2846 = vadd.f32 %v2653, %v2845
        %v2847 = vpop.f32.mrb[0].mxu0
        %v2848 = vadd.f32 %v2655, %v2847
        %v2849 = vpop.f32.mrb[0].mxu0
        %v2850 = vadd.f32 %v2657, %v2849
        %v2851 = vpop.f32.mrb[0].mxu0
        %v2852 = vadd.f32 %v2659, %v2851
        %2853 = vmatprep.mubr.bf16.mxu0 %v927
        %2854 = vmatmul.mubr.bf16.gmra.mrb[0].mxu0 %v926
        %v2855 = vpop.f32.mrb[0].mxu0
        %v2856 = vadd.f32 %v2663, %v2855
        %v2857 = vpop.f32.mrb[0].mxu0
        %v2858 = vadd.f32 %v2665, %v2857
        %v2859 = vpop.f32.mrb[0].mxu0
        %v2860 = vadd.f32 %v2667, %v2859
        %v2861 = vpop.f32.mrb[0].mxu0
        %v2862 = vadd.f32 %v2669, %v2861
        %2863 = vmatprep.mubr.bf16.mxu0 %v935
        %2864 = vmatmul.mubr.bf16.gmra.mrb[0].mxu0 %v934
        %v2865 = vpop.f32.mrb[0].mxu0
        %v2866 = vadd.f32 %v2673, %v2865
        %v2867 = vpop.f32.mrb[0].mxu0
        %v2868 = vadd.f32 %v2675, %v2867
        %v2869 = vpop.f32.mrb[0].mxu0
        %v2870 = vadd.f32 %v2677, %v2869
        %v2871 = vpop.f32.mrb[0].mxu0
        %v2872 = vadd.f32 %v2679, %v2871
        %2873 = vmatprep.mubr.bf16.mxu0 %v943
        %2874 = vmatmul.mubr.bf16.gmra.mrb[0].mxu0 %v942
        %v2875 = vpop.f32.mrb[0].mxu0
        %v2876 = vadd.f32 %v2683, %v2875
        %v2877 = vpop.f32.mrb[0].mxu0
        %v2878 = vadd.f32 %v2685, %v2877
        %v2879 = vpop.f32.mrb[0].mxu0
        %v2880 = vadd.f32 %v2687, %v2879
        %v2881 = vpop.f32.mrb[0].mxu0
        %v2882 = vadd.f32 %v2689, %v2881
        %2883 = vmatprep.mubr.bf16.mxu0 %v951
        %2884 = vmatmul.mubr.bf16.gmra.mrb[0].mxu0 %v950
        %v2885 = vpop.f32.mrb[0].mxu0
        %v2886 = vadd.f32 %v2693, %v2885
        %v2887 = vpop.f32.mrb[0].mxu0
        %v2888 = vadd.f32 %v2695, %v2887
        %v2889 = vpop.f32.mrb[0].mxu0
        %v2890 = vadd.f32 %v2697, %v2889
        %v2891 = vpop.f32.mrb[0].mxu0
        %v2892 = vadd.f32 %v2699, %v2891
        %2893 = vmatprep.mubr.bf16.mxu0 %v959
        %2894 = vmatmul.mubr.bf16.gmra.mrb[0].mxu0 %v958
        %v2895 = vpop.f32.mrb[0].mxu0
        %v2896 = vadd.f32 %v2703, %v2895
        %v2897 = vpop.f32.mrb[0].mxu0
        %v2898 = vadd.f32 %v2705, %v2897
        %v2899 = vpop.f32.mrb[0].mxu0
        %v2900 = vadd.f32 %v2707, %v2899
        %v2901 = vpop.f32.mrb[0].mxu0
        %v2902 = vadd.f32 %v2709, %v2901
        %2903 = vmatprep.mubr.bf16.mxu0 %v967
        %2904 = vmatmul.mubr.bf16.gmra.mrb[0].mxu0 %v966
        %v2905 = vpop.f32.mrb[0].mxu0
        %v2906 = vadd.f32 %v2713, %v2905
        %v2907 = vpop.f32.mrb[0].mxu0
        %v2908 = vadd.f32 %v2715, %v2907
        %v2909 = vpop.f32.mrb[0].mxu0
        %v2910 = vadd.f32 %v2717, %v2909
        %v2911 = vpop.f32.mrb[0].mxu0
        %v2912 = vadd.f32 %v2719, %v2911
        %2913 = vmatprep.mubr.bf16.mxu0 %v975
        %2914 = vmatmul.mubr.bf16.gmra.mrb[0].mxu0 %v974
        %v2915 = vpop.f32.mrb[0].mxu0
        %v2916 = vadd.f32 %v2723, %v2915
        %v2917 = vpop.f32.mrb[0].mxu0
        %v2918 = vadd.f32 %v2725, %v2917
        %v2919 = vpop.f32.mrb[0].mxu0
        %v2920 = vadd.f32 %v2727, %v2919
        %v2921 = vpop.f32.mrb[0].mxu0
        %v2922 = vadd.f32 %v2729, %v2921
        %2923 = vdwg.mxu0
        %2924 = vmatprep.subr.bf16.mxu0 %v2155
        %2925 = vmatpush1.bf16.msra.mxu0 %v2154
        %2926 = vmatprep.subr.bf16.mxu0 %v2159
        %2927 = vmatpush1.bf16.msra.mxu0 %v2158
        %2928 = vmatprep.subr.bf16.mxu0 %v2163
        %2929 = vmatpush1.bf16.msra.mxu0 %v2162
        %2930 = vmatprep.subr.bf16.mxu0 %v2167
        %2931 = vmatpush1.bf16.msra.mxu0 %v2166
        %2932 = vmatprep.subr.bf16.mxu0 %v2171
        %2933 = vmatpush1.bf16.msra.mxu0 %v2170
        %2934 = vmatprep.subr.bf16.mxu0 %v2175
        %2935 = vmatpush1.bf16.msra.mxu0 %v2174
        %2936 = vmatprep.subr.bf16.mxu0 %v2179
        %2937 = vmatpush1.bf16.msra.mxu0 %v2178
        %2938 = vmatprep.subr.bf16.mxu0 %v2183
        %2939 = vmatpush1.bf16.msra.mxu0 %v2182
        %2940 = vmatprep.subr.bf16.mxu0 %v2187
        %2941 = vmatpush1.bf16.msra.mxu0 %v2186
        %2942 = vmatprep.subr.bf16.mxu0 %v2191
        %2943 = vmatpush1.bf16.msra.mxu0 %v2190
        %2944 = vmatprep.subr.bf16.mxu0 %v2195
        %2945 = vmatpush1.bf16.msra.mxu0 %v2194
        %2946 = vmatprep.subr.bf16.mxu0 %v2199
        %2947 = vmatpush1.bf16.msra.mxu0 %v2198
        %2948 = vmatprep.subr.bf16.mxu0 %v2203
        %2949 = vmatpush1.bf16.msra.mxu0 %v2202
        %2950 = vmatprep.subr.bf16.mxu0 %v2207
        %2951 = vmatpush1.bf16.msra.mxu0 %v2206
        %2952 = vmatprep.subr.bf16.mxu0 %v2211
        %2953 = vmatpush1.bf16.msra.mxu0 %v2210
        %2954 = vmatprep.subr.bf16.mxu0 %v2215
        %2955 = vmatpush1.bf16.msra.mxu0 %v2214
        %2956 = vmatprep.mubr.bf16.mxu0 %v857
        %2957 = vmatmul.mubr.bf16.gmra.mrb[0].mxu0 %v856
        %v2958 = vpop.f32.mrb[0].mxu0
        %v2959 = vadd.f32 %v2766, %v2958
        %v2960 = vpop.f32.mrb[0].mxu0
        %v2961 = vadd.f32 %v2768, %v2960
        %v2962 = vpop.f32.mrb[0].mxu0
        %v2963 = vadd.f32 %v2770, %v2962
        %v2964 = vpop.f32.mrb[0].mxu0
        %v2965 = vadd.f32 %v2772, %v2964
        %2966 = vmatprep.mubr.bf16.mxu0 %v865
        %2967 = vmatmul.mubr.bf16.gmra.mrb[0].mxu0 %v864
        %v2968 = vpop.f32.mrb[0].mxu0
        %v2969 = vadd.f32 %v2776, %v2968
        %v2970 = vpop.f32.mrb[0].mxu0
        %v2971 = vadd.f32 %v2778, %v2970
        %v2972 = vpop.f32.mrb[0].mxu0
        %v2973 = vadd.f32 %v2780, %v2972
        %v2974 = vpop.f32.mrb[0].mxu0
        %v2975 = vadd.f32 %v2782, %v2974
        %2976 = vmatprep.mubr.bf16.mxu0 %v873
        %2977 = vmatmul.mubr.bf16.gmra.mrb[0].mxu0 %v872
        %v2978 = vpop.f32.mrb[0].mxu0
        %v2979 = vadd.f32 %v2786, %v2978
        %v2980 = vpop.f32.mrb[0].mxu0
        %v2981 = vadd.f32 %v2788, %v2980
        %v2982 = vpop.f32.mrb[0].mxu0
        %v2983 = vadd.f32 %v2790, %v2982
        %v2984 = vpop.f32.mrb[0].mxu0
        %v2985 = vadd.f32 %v2792, %v2984
        %2986 = vmatprep.mubr.bf16.mxu0 %v881
        %2987 = vmatmul.mubr.bf16.gmra.mrb[0].mxu0 %v880
        %v2988 = vpop.f32.mrb[0].mxu0
        %v2989 = vadd.f32 %v2796, %v2988
        %v2990 = vpop.f32.mrb[0].mxu0
        %v2991 = vadd.f32 %v2798, %v2990
        %v2992 = vpop.f32.mrb[0].mxu0
        %v2993 = vadd.f32 %v2800, %v2992
        %v2994 = vpop.f32.mrb[0].mxu0
        %v2995 = vadd.f32 %v2802, %v2994
        %2996 = vmatprep.mubr.bf16.mxu0 %v889
        %2997 = vmatmul.mubr.bf16.gmra.mrb[0].mxu0 %v888
        %v2998 = vpop.f32.mrb[0].mxu0
        %v2999 = vadd.f32 %v2806, %v2998
        %v3000 = vpop.f32.mrb[0].mxu0
        %v3001 = vadd.f32 %v2808, %v3000
        %v3002 = vpop.f32.mrb[0].mxu0
        %v3003 = vadd.f32 %v2810, %v3002
        %v3004 = vpop.f32.mrb[0].mxu0
        %v3005 = vadd.f32 %v2812, %v3004
        %3006 = vmatprep.mubr.bf16.mxu0 %v897
        %3007 = vmatmul.mubr.bf16.gmra.mrb[0].mxu0 %v896
        %v3008 = vpop.f32.mrb[0].mxu0
        %v3009 = vadd.f32 %v2816, %v3008
        %v3010 = vpop.f32.mrb[0].mxu0
        %v3011 = vadd.f32 %v2818, %v3010
        %v3012 = vpop.f32.mrb[0].mxu0
        %v3013 = vadd.f32 %v2820, %v3012
        %v3014 = vpop.f32.mrb[0].mxu0
        %v3015 = vadd.f32 %v2822, %v3014
        %3016 = vmatprep.mubr.bf16.mxu0 %v905
        %3017 = vmatmul.mubr.bf16.gmra.mrb[0].mxu0 %v904
        %v3018 = vpop.f32.mrb[0].mxu0
        %v3019 = vadd.f32 %v2826, %v3018
        %v3020 = vpop.f32.mrb[0].mxu0
        %v3021 = vadd.f32 %v2828, %v3020
        %v3022 = vpop.f32.mrb[0].mxu0
        %v3023 = vadd.f32 %v2830, %v3022
        %v3024 = vpop.f32.mrb[0].mxu0
        %v3025 = vadd.f32 %v2832, %v3024
        %3026 = vmatprep.mubr.bf16.mxu0 %v913
        %3027 = vmatmul.mubr.bf16.gmra.mrb[0].mxu0 %v912
        %v3028 = vpop.f32.mrb[0].mxu0
        %v3029 = vadd.f32 %v2836, %v3028
        %v3030 = vpop.f32.mrb[0].mxu0
        %v3031 = vadd.f32 %v2838, %v3030
        %v3032 = vpop.f32.mrb[0].mxu0
        %v3033 = vadd.f32 %v2840, %v3032
        %v3034 = vpop.f32.mrb[0].mxu0
        %v3035 = vadd.f32 %v2842, %v3034
        %3036 = vmatprep.mubr.bf16.mxu0 %v921
        %3037 = vmatmul.mubr.bf16.gmra.mrb[0].mxu0 %v920
        %v3038 = vpop.f32.mrb[0].mxu0
        %v3039 = vadd.f32 %v2846, %v3038
        %v3040 = vpop.f32.mrb[0].mxu0
        %v3041 = vadd.f32 %v2848, %v3040
        %v3042 = vpop.f32.mrb[0].mxu0
        %v3043 = vadd.f32 %v2850, %v3042
        %v3044 = vpop.f32.mrb[0].mxu0
        %v3045 = vadd.f32 %v2852, %v3044
        %3046 = vmatprep.mubr.bf16.mxu0 %v929
        %3047 = vmatmul.mubr.bf16.gmra.mrb[0].mxu0 %v928
        %v3048 = vpop.f32.mrb[0].mxu0
        %v3049 = vadd.f32 %v2856, %v3048
        %v3050 = vpop.f32.mrb[0].mxu0
        %v3051 = vadd.f32 %v2858, %v3050
        %v3052 = vpop.f32.mrb[0].mxu0
        %v3053 = vadd.f32 %v2860, %v3052
        %v3054 = vpop.f32.mrb[0].mxu0
        %v3055 = vadd.f32 %v2862, %v3054
        %3056 = vmatprep.mubr.bf16.mxu0 %v937
        %3057 = vmatmul.mubr.bf16.gmra.mrb[0].mxu0 %v936
        %v3058 = vpop.f32.mrb[0].mxu0
        %v3059 = vadd.f32 %v2866, %v3058
        %v3060 = vpop.f32.mrb[0].mxu0
        %v3061 = vadd.f32 %v2868, %v3060
        %v3062 = vpop.f32.mrb[0].mxu0
        %v3063 = vadd.f32 %v2870, %v3062
        %v3064 = vpop.f32.mrb[0].mxu0
        %v3065 = vadd.f32 %v2872, %v3064
        %3066 = vmatprep.mubr.bf16.mxu0 %v945
        %3067 = vmatmul.mubr.bf16.gmra.mrb[0].mxu0 %v944
        %v3068 = vpop.f32.mrb[0].mxu0
        %v3069 = vadd.f32 %v2876, %v3068
        %v3070 = vpop.f32.mrb[0].mxu0
        %v3071 = vadd.f32 %v2878, %v3070
        %v3072 = vpop.f32.mrb[0].mxu0
        %v3073 = vadd.f32 %v2880, %v3072
        %v3074 = vpop.f32.mrb[0].mxu0
        %v3075 = vadd.f32 %v2882, %v3074
        %3076 = vmatprep.mubr.bf16.mxu0 %v953
        %3077 = vmatmul.mubr.bf16.gmra.mrb[0].mxu0 %v952
        %v3078 = vpop.f32.mrb[0].mxu0
        %v3079 = vadd.f32 %v2886, %v3078
        %v3080 = vpop.f32.mrb[0].mxu0
        %v3081 = vadd.f32 %v2888, %v3080
        %v3082 = vpop.f32.mrb[0].mxu0
        %v3083 = vadd.f32 %v2890, %v3082
        %v3084 = vpop.f32.mrb[0].mxu0
        %v3085 = vadd.f32 %v2892, %v3084
        %3086 = vmatprep.mubr.bf16.mxu0 %v961
        %3087 = vmatmul.mubr.bf16.gmra.mrb[0].mxu0 %v960
        %v3088 = vpop.f32.mrb[0].mxu0
        %v3089 = vadd.f32 %v2896, %v3088
        %v3090 = vpop.f32.mrb[0].mxu0
        %v3091 = vadd.f32 %v2898, %v3090
        %v3092 = vpop.f32.mrb[0].mxu0
        %v3093 = vadd.f32 %v2900, %v3092
        %v3094 = vpop.f32.mrb[0].mxu0
        %v3095 = vadd.f32 %v2902, %v3094
        %3096 = vmatprep.mubr.bf16.mxu0 %v969
        %3097 = vmatmul.mubr.bf16.gmra.mrb[0].mxu0 %v968
        %v3098 = vpop.f32.mrb[0].mxu0
        %v3099 = vadd.f32 %v2906, %v3098
        %v3100 = vpop.f32.mrb[0].mxu0
        %v3101 = vadd.f32 %v2908, %v3100
        %v3102 = vpop.f32.mrb[0].mxu0
        %v3103 = vadd.f32 %v2910, %v3102
        %v3104 = vpop.f32.mrb[0].mxu0
        %v3105 = vadd.f32 %v2912, %v3104
        %3106 = vmatprep.mubr.bf16.mxu0 %v977
        %3107 = vmatmul.mubr.bf16.gmra.mrb[0].mxu0 %v976
        %v3108 = vpop.f32.mrb[0].mxu0
        %v3109 = vadd.f32 %v2916, %v3108
        %v3110 = vpop.f32.mrb[0].mxu0
        %v3111 = vadd.f32 %v2918, %v3110
        %v3112 = vpop.f32.mrb[0].mxu0
        %v3113 = vadd.f32 %v2920, %v3112
        %v3114 = vpop.f32.mrb[0].mxu0
        %v3115 = vadd.f32 %v2922, %v3114
        %3116 = vdwg.mxu0
        %3117 = vmatprep.subr.bf16.mxu0 %v2219
        %3118 = vmatpush1.bf16.msra.mxu0 %v2218
        %3119 = vmatprep.subr.bf16.mxu0 %v2223
        %3120 = vmatpush1.bf16.msra.mxu0 %v2222
        %3121 = vmatprep.subr.bf16.mxu0 %v2227
        %3122 = vmatpush1.bf16.msra.mxu0 %v2226
        %3123 = vmatprep.subr.bf16.mxu0 %v2231
        %3124 = vmatpush1.bf16.msra.mxu0 %v2230
        %3125 = vmatprep.subr.bf16.mxu0 %v2235
        %3126 = vmatpush1.bf16.msra.mxu0 %v2234
        %3127 = vmatprep.subr.bf16.mxu0 %v2239
        %3128 = vmatpush1.bf16.msra.mxu0 %v2238
        %3129 = vmatprep.subr.bf16.mxu0 %v2243
        %3130 = vmatpush1.bf16.msra.mxu0 %v2242
        %3131 = vmatprep.subr.bf16.mxu0 %v2247
        %3132 = vmatpush1.bf16.msra.mxu0 %v2246
        %3133 = vmatprep.subr.bf16.mxu0 %v2251
        %3134 = vmatpush1.bf16.msra.mxu0 %v2250
        %3135 = vmatprep.subr.bf16.mxu0 %v2255
        %3136 = vmatpush1.bf16.msra.mxu0 %v2254
        %3137 = vmatprep.subr.bf16.mxu0 %v2259
        %3138 = vmatpush1.bf16.msra.mxu0 %v2258
        %3139 = vmatprep.subr.bf16.mxu0 %v2263
        %3140 = vmatpush1.bf16.msra.mxu0 %v2262
        %3141 = vmatprep.subr.bf16.mxu0 %v2267
        %3142 = vmatpush1.bf16.msra.mxu0 %v2266
        %3143 = vmatprep.subr.bf16.mxu0 %v2271
        %3144 = vmatpush1.bf16.msra.mxu0 %v2270
        %3145 = vmatprep.subr.bf16.mxu0 %v2275
        %3146 = vmatpush1.bf16.msra.mxu0 %v2274
        %3147 = vmatprep.subr.bf16.mxu0 %v2279
        %3148 = vmatpush1.bf16.msra.mxu0 %v2278
        %3149 = vmatprep.mubr.bf16.mxu0 %v859
        %3150 = vmatmul.mubr.bf16.gmra.mrb[0].mxu0 %v858
        %v3151 = vpop.f32.mrb[0].mxu0
        %v3152 = vadd.f32 %v2959, %v3151
        %v3153 = vpop.f32.mrb[0].mxu0
        %v3154 = vadd.f32 %v2961, %v3153
        %v3155 = vpop.f32.mrb[0].mxu0
        %v3156 = vadd.f32 %v2963, %v3155
        %v3157 = vpop.f32.mrb[0].mxu0
        %v3158 = vadd.f32 %v2965, %v3157
        %3159 = vmatprep.mubr.bf16.mxu0 %v867
        %3160 = vmatmul.mubr.bf16.gmra.mrb[0].mxu0 %v866
        %v3161 = vpop.f32.mrb[0].mxu0
        %v3162 = vadd.f32 %v2969, %v3161
        %v3163 = vpop.f32.mrb[0].mxu0
        %v3164 = vadd.f32 %v2971, %v3163
        %v3165 = vpop.f32.mrb[0].mxu0
        %v3166 = vadd.f32 %v2973, %v3165
        %v3167 = vpop.f32.mrb[0].mxu0
        %v3168 = vadd.f32 %v2975, %v3167
        %3169 = vmatprep.mubr.bf16.mxu0 %v875
        %3170 = vmatmul.mubr.bf16.gmra.mrb[0].mxu0 %v874
        %v3171 = vpop.f32.mrb[0].mxu0
        %v3172 = vadd.f32 %v2979, %v3171
        %v3173 = vpop.f32.mrb[0].mxu0
        %v3174 = vadd.f32 %v2981, %v3173
        %v3175 = vpop.f32.mrb[0].mxu0
        %v3176 = vadd.f32 %v2983, %v3175
        %v3177 = vpop.f32.mrb[0].mxu0
        %v3178 = vadd.f32 %v2985, %v3177
        %3179 = vmatprep.mubr.bf16.mxu0 %v883
        %3180 = vmatmul.mubr.bf16.gmra.mrb[0].mxu0 %v882
        %v3181 = vpop.f32.mrb[0].mxu0
        %v3182 = vadd.f32 %v2989, %v3181
        %v3183 = vpop.f32.mrb[0].mxu0
        %v3184 = vadd.f32 %v2991, %v3183
        %v3185 = vpop.f32.mrb[0].mxu0
        %v3186 = vadd.f32 %v2993, %v3185
        %v3187 = vpop.f32.mrb[0].mxu0
        %v3188 = vadd.f32 %v2995, %v3187
        %3189 = vmatprep.mubr.bf16.mxu0 %v891
        %3190 = vmatmul.mubr.bf16.gmra.mrb[0].mxu0 %v890
        %v3191 = vpop.f32.mrb[0].mxu0
        %v3192 = vadd.f32 %v2999, %v3191
        %v3193 = vpop.f32.mrb[0].mxu0
        %v3194 = vadd.f32 %v3001, %v3193
        %v3195 = vpop.f32.mrb[0].mxu0
        %v3196 = vadd.f32 %v3003, %v3195
        %v3197 = vpop.f32.mrb[0].mxu0
        %v3198 = vadd.f32 %v3005, %v3197
        %3199 = vmatprep.mubr.bf16.mxu0 %v899
        %3200 = vmatmul.mubr.bf16.gmra.mrb[0].mxu0 %v898
        %v3201 = vpop.f32.mrb[0].mxu0
        %v3202 = vadd.f32 %v3009, %v3201
        %v3203 = vpop.f32.mrb[0].mxu0
        %v3204 = vadd.f32 %v3011, %v3203
        %v3205 = vpop.f32.mrb[0].mxu0
        %v3206 = vadd.f32 %v3013, %v3205
        %v3207 = vpop.f32.mrb[0].mxu0
        %v3208 = vadd.f32 %v3015, %v3207
        %3209 = vmatprep.mubr.bf16.mxu0 %v907
        %3210 = vmatmul.mubr.bf16.gmra.mrb[0].mxu0 %v906
        %v3211 = vpop.f32.mrb[0].mxu0
        %v3212 = vadd.f32 %v3019, %v3211
        %v3213 = vpop.f32.mrb[0].mxu0
        %v3214 = vadd.f32 %v3021, %v3213
        %v3215 = vpop.f32.mrb[0].mxu0
        %v3216 = vadd.f32 %v3023, %v3215
        %v3217 = vpop.f32.mrb[0].mxu0
        %v3218 = vadd.f32 %v3025, %v3217
        %3219 = vmatprep.mubr.bf16.mxu0 %v915
        %3220 = vmatmul.mubr.bf16.gmra.mrb[0].mxu0 %v914
        %v3221 = vpop.f32.mrb[0].mxu0
        %v3222 = vadd.f32 %v3029, %v3221
        %v3223 = vpop.f32.mrb[0].mxu0
        %v3224 = vadd.f32 %v3031, %v3223
        %v3225 = vpop.f32.mrb[0].mxu0
        %v3226 = vadd.f32 %v3033, %v3225
        %v3227 = vpop.f32.mrb[0].mxu0
        %v3228 = vadd.f32 %v3035, %v3227
        %3229 = vmatprep.mubr.bf16.mxu0 %v923
        %3230 = vmatmul.mubr.bf16.gmra.mrb[0].mxu0 %v922
        %v3231 = vpop.f32.mrb[0].mxu0
        %v3232 = vadd.f32 %v3039, %v3231
        %v3233 = vpop.f32.mrb[0].mxu0
        %v3234 = vadd.f32 %v3041, %v3233
        %v3235 = vpop.f32.mrb[0].mxu0
        %v3236 = vadd.f32 %v3043, %v3235
        %v3237 = vpop.f32.mrb[0].mxu0
        %v3238 = vadd.f32 %v3045, %v3237
        %3239 = vmatprep.mubr.bf16.mxu0 %v931
        %3240 = vmatmul.mubr.bf16.gmra.mrb[0].mxu0 %v930
        %v3241 = vpop.f32.mrb[0].mxu0
        %v3242 = vadd.f32 %v3049, %v3241
        %v3243 = vpop.f32.mrb[0].mxu0
        %v3244 = vadd.f32 %v3051, %v3243
        %v3245 = vpop.f32.mrb[0].mxu0
        %v3246 = vadd.f32 %v3053, %v3245
        %v3247 = vpop.f32.mrb[0].mxu0
        %v3248 = vadd.f32 %v3055, %v3247
        %3249 = vmatprep.mubr.bf16.mxu0 %v939
        %3250 = vmatmul.mubr.bf16.gmra.mrb[0].mxu0 %v938
        %v3251 = vpop.f32.mrb[0].mxu0
        %v3252 = vadd.f32 %v3059, %v3251
        %v3253 = vpop.f32.mrb[0].mxu0
        %v3254 = vadd.f32 %v3061, %v3253
        %v3255 = vpop.f32.mrb[0].mxu0
        %v3256 = vadd.f32 %v3063, %v3255
        %v3257 = vpop.f32.mrb[0].mxu0
        %v3258 = vadd.f32 %v3065, %v3257
        %3259 = vmatprep.mubr.bf16.mxu0 %v947
        %3260 = vmatmul.mubr.bf16.gmra.mrb[0].mxu0 %v946
        %v3261 = vpop.f32.mrb[0].mxu0
        %v3262 = vadd.f32 %v3069, %v3261
        %v3263 = vpop.f32.mrb[0].mxu0
        %v3264 = vadd.f32 %v3071, %v3263
        %v3265 = vpop.f32.mrb[0].mxu0
        %v3266 = vadd.f32 %v3073, %v3265
        %v3267 = vpop.f32.mrb[0].mxu0
        %v3268 = vadd.f32 %v3075, %v3267
        %3269 = vmatprep.mubr.bf16.mxu0 %v955
        %3270 = vmatmul.mubr.bf16.gmra.mrb[0].mxu0 %v954
        %v3271 = vpop.f32.mrb[0].mxu0
        %v3272 = vadd.f32 %v3079, %v3271
        %v3273 = vpop.f32.mrb[0].mxu0
        %v3274 = vadd.f32 %v3081, %v3273
        %v3275 = vpop.f32.mrb[0].mxu0
        %v3276 = vadd.f32 %v3083, %v3275
        %v3277 = vpop.f32.mrb[0].mxu0
        %v3278 = vadd.f32 %v3085, %v3277
        %3279 = vmatprep.mubr.bf16.mxu0 %v963
        %3280 = vmatmul.mubr.bf16.gmra.mrb[0].mxu0 %v962
        %v3281 = vpop.f32.mrb[0].mxu0
        %v3282 = vadd.f32 %v3089, %v3281
        %v3283 = vpop.f32.mrb[0].mxu0
        %v3284 = vadd.f32 %v3091, %v3283
        %v3285 = vpop.f32.mrb[0].mxu0
        %v3286 = vadd.f32 %v3093, %v3285
        %v3287 = vpop.f32.mrb[0].mxu0
        %v3288 = vadd.f32 %v3095, %v3287
        %3289 = vmatprep.mubr.bf16.mxu0 %v971
        %3290 = vmatmul.mubr.bf16.gmra.mrb[0].mxu0 %v970
        %v3291 = vpop.f32.mrb[0].mxu0
        %v3292 = vadd.f32 %v3099, %v3291
        %v3293 = vpop.f32.mrb[0].mxu0
        %v3294 = vadd.f32 %v3101, %v3293
        %v3295 = vpop.f32.mrb[0].mxu0
        %v3296 = vadd.f32 %v3103, %v3295
        %v3297 = vpop.f32.mrb[0].mxu0
        %v3298 = vadd.f32 %v3105, %v3297
        %3299 = vmatprep.mubr.bf16.mxu0 %v979
        %3300 = vmatmul.mubr.bf16.gmra.mrb[0].mxu0 %v978
        %v3301 = vpop.f32.mrb[0].mxu0
        %v3302 = vadd.f32 %v3109, %v3301
        %v3303 = vpop.f32.mrb[0].mxu0
        %v3304 = vadd.f32 %v3111, %v3303
        %v3305 = vpop.f32.mrb[0].mxu0
        %v3306 = vadd.f32 %v3113, %v3305
        %v3307 = vpop.f32.mrb[0].mxu0
        %v3308 = vadd.f32 %v3115, %v3307
        %3309 = vdwg.mxu0
        %3310 = vmatprep.subr.bf16.mxu0 %v2029
        %3311 = vmatpush1.bf16.msra.mxu0 %v2028
        %3312 = vmatprep.subr.bf16.mxu0 %v2033
        %3313 = vmatpush1.bf16.msra.mxu0 %v2032
        %3314 = vmatprep.subr.bf16.mxu0 %v2037
        %3315 = vmatpush1.bf16.msra.mxu0 %v2036
        %3316 = vmatprep.subr.bf16.mxu0 %v2041
        %3317 = vmatpush1.bf16.msra.mxu0 %v2040
        %3318 = vmatprep.subr.bf16.mxu0 %v2045
        %3319 = vmatpush1.bf16.msra.mxu0 %v2044
        %3320 = vmatprep.subr.bf16.mxu0 %v2049
        %3321 = vmatpush1.bf16.msra.mxu0 %v2048
        %3322 = vmatprep.subr.bf16.mxu0 %v2053
        %3323 = vmatpush1.bf16.msra.mxu0 %v2052
        %3324 = vmatprep.subr.bf16.mxu0 %v2057
        %3325 = vmatpush1.bf16.msra.mxu0 %v2056
        %3326 = vmatprep.subr.bf16.mxu0 %v2061
        %3327 = vmatpush1.bf16.msra.mxu0 %v2060
        %3328 = vmatprep.subr.bf16.mxu0 %v2065
        %3329 = vmatpush1.bf16.msra.mxu0 %v2064
        %3330 = vmatprep.subr.bf16.mxu0 %v2069
        %3331 = vmatpush1.bf16.msra.mxu0 %v2068
        %3332 = vmatprep.subr.bf16.mxu0 %v2073
        %3333 = vmatpush1.bf16.msra.mxu0 %v2072
        %3334 = vmatprep.subr.bf16.mxu0 %v2077
        %3335 = vmatpush1.bf16.msra.mxu0 %v2076
        %3336 = vmatprep.subr.bf16.mxu0 %v2081
        %3337 = vmatpush1.bf16.msra.mxu0 %v2080
        %3338 = vmatprep.subr.bf16.mxu0 %v2085
        %3339 = vmatpush1.bf16.msra.mxu0 %v2084
        %3340 = vmatprep.subr.bf16.mxu0 %v2089
        %3341 = vmatpush1.bf16.msra.mxu0 %v2088
        %3342 = vmatprep.mubr.bf16.mxu0 %v853
        %3343 = vmatmul.mubr.bf16.gmra.mrb[0].mxu0 %v852
        %v3344 = vpop.f32.mrb[0].mxu0
        %v3345 = vadd.f32 %v1249, %v3344
        %v3346 = vpop.f32.mrb[0].mxu0
        %v3347 = vadd.f32 %v1253, %v3346
        %v3348 = vpop.f32.mrb[0].mxu0
        %v3349 = vadd.f32 %v1249, %v3348
        %v3350 = vpop.f32.mrb[0].mxu0
        %v3351 = vadd.f32 %v1253, %v3350
        %3352 = vmatprep.mubr.bf16.mxu0 %v861
        %3353 = vmatmul.mubr.bf16.gmra.mrb[0].mxu0 %v860
        %v3354 = vpop.f32.mrb[0].mxu0
        %v3355 = vadd.f32 %v1249, %v3354
        %v3356 = vpop.f32.mrb[0].mxu0
        %v3357 = vadd.f32 %v1253, %v3356
        %v3358 = vpop.f32.mrb[0].mxu0
        %v3359 = vadd.f32 %v1249, %v3358
        %v3360 = vpop.f32.mrb[0].mxu0
        %v3361 = vadd.f32 %v1253, %v3360
        %3362 = vmatprep.mubr.bf16.mxu0 %v869
        %3363 = vmatmul.mubr.bf16.gmra.mrb[0].mxu0 %v868
        %v3364 = vpop.f32.mrb[0].mxu0
        %v3365 = vadd.f32 %v1249, %v3364
        %v3366 = vpop.f32.mrb[0].mxu0
        %v3367 = vadd.f32 %v1253, %v3366
        %v3368 = vpop.f32.mrb[0].mxu0
        %v3369 = vadd.f32 %v1249, %v3368
        %v3370 = vpop.f32.mrb[0].mxu0
        %v3371 = vadd.f32 %v1253, %v3370
        %3372 = vmatprep.mubr.bf16.mxu0 %v877
        %3373 = vmatmul.mubr.bf16.gmra.mrb[0].mxu0 %v876
        %v3374 = vpop.f32.mrb[0].mxu0
        %v3375 = vadd.f32 %v1249, %v3374
        %v3376 = vpop.f32.mrb[0].mxu0
        %v3377 = vadd.f32 %v1253, %v3376
        %v3378 = vpop.f32.mrb[0].mxu0
        %v3379 = vadd.f32 %v1249, %v3378
        %v3380 = vpop.f32.mrb[0].mxu0
        %v3381 = vadd.f32 %v1253, %v3380
        %3382 = vmatprep.mubr.bf16.mxu0 %v885
        %3383 = vmatmul.mubr.bf16.gmra.mrb[0].mxu0 %v884
        %v3384 = vpop.f32.mrb[0].mxu0
        %v3385 = vadd.f32 %v1249, %v3384
        %v3386 = vpop.f32.mrb[0].mxu0
        %v3387 = vadd.f32 %v1253, %v3386
        %v3388 = vpop.f32.mrb[0].mxu0
        %v3389 = vadd.f32 %v1249, %v3388
        %v3390 = vpop.f32.mrb[0].mxu0
        %v3391 = vadd.f32 %v1253, %v3390
        %3392 = vmatprep.mubr.bf16.mxu0 %v893
        %3393 = vmatmul.mubr.bf16.gmra.mrb[0].mxu0 %v892
        %v3394 = vpop.f32.mrb[0].mxu0
        %v3395 = vadd.f32 %v1249, %v3394
        %v3396 = vpop.f32.mrb[0].mxu0
        %v3397 = vadd.f32 %v1253, %v3396
        %v3398 = vpop.f32.mrb[0].mxu0
        %v3399 = vadd.f32 %v1249, %v3398
        %v3400 = vpop.f32.mrb[0].mxu0
        %v3401 = vadd.f32 %v1253, %v3400
        %3402 = vmatprep.mubr.bf16.mxu0 %v901
        %3403 = vmatmul.mubr.bf16.gmra.mrb[0].mxu0 %v900
        %v3404 = vpop.f32.mrb[0].mxu0
        %v3405 = vadd.f32 %v1249, %v3404
        %v3406 = vpop.f32.mrb[0].mxu0
        %v3407 = vadd.f32 %v1253, %v3406
        %v3408 = vpop.f32.mrb[0].mxu0
        %v3409 = vadd.f32 %v1249, %v3408
        %v3410 = vpop.f32.mrb[0].mxu0
        %v3411 = vadd.f32 %v1253, %v3410
        %3412 = vmatprep.mubr.bf16.mxu0 %v909
        %3413 = vmatmul.mubr.bf16.gmra.mrb[0].mxu0 %v908
        %v3414 = vpop.f32.mrb[0].mxu0
        %v3415 = vadd.f32 %v1249, %v3414
        %v3416 = vpop.f32.mrb[0].mxu0
        %v3417 = vadd.f32 %v1253, %v3416
        %v3418 = vpop.f32.mrb[0].mxu0
        %v3419 = vadd.f32 %v1249, %v3418
        %v3420 = vpop.f32.mrb[0].mxu0
        %v3421 = vadd.f32 %v1253, %v3420
        %3422 = vmatprep.mubr.bf16.mxu0 %v917
        %3423 = vmatmul.mubr.bf16.gmra.mrb[0].mxu0 %v916
        %v3424 = vpop.f32.mrb[0].mxu0
        %v3425 = vadd.f32 %v1249, %v3424
        %v3426 = vpop.f32.mrb[0].mxu0
        %v3427 = vadd.f32 %v1253, %v3426
        %v3428 = vpop.f32.mrb[0].mxu0
        %v3429 = vadd.f32 %v1249, %v3428
        %v3430 = vpop.f32.mrb[0].mxu0
        %v3431 = vadd.f32 %v1253, %v3430
        %3432 = vmatprep.mubr.bf16.mxu0 %v925
        %3433 = vmatmul.mubr.bf16.gmra.mrb[0].mxu0 %v924
        %v3434 = vpop.f32.mrb[0].mxu0
        %v3435 = vadd.f32 %v1249, %v3434
        %v3436 = vpop.f32.mrb[0].mxu0
        %v3437 = vadd.f32 %v1253, %v3436
        %v3438 = vpop.f32.mrb[0].mxu0
        %v3439 = vadd.f32 %v1249, %v3438
        %v3440 = vpop.f32.mrb[0].mxu0
        %v3441 = vadd.f32 %v1253, %v3440
        %3442 = vmatprep.mubr.bf16.mxu0 %v933
        %3443 = vmatmul.mubr.bf16.gmra.mrb[0].mxu0 %v932
        %v3444 = vpop.f32.mrb[0].mxu0
        %v3445 = vadd.f32 %v1249, %v3444
        %v3446 = vpop.f32.mrb[0].mxu0
        %v3447 = vadd.f32 %v1253, %v3446
        %v3448 = vpop.f32.mrb[0].mxu0
        %v3449 = vadd.f32 %v1249, %v3448
        %v3450 = vpop.f32.mrb[0].mxu0
        %v3451 = vadd.f32 %v1253, %v3450
        %3452 = vmatprep.mubr.bf16.mxu0 %v941
        %3453 = vmatmul.mubr.bf16.gmra.mrb[0].mxu0 %v940
        %v3454 = vpop.f32.mrb[0].mxu0
        %v3455 = vadd.f32 %v1249, %v3454
        %v3456 = vpop.f32.mrb[0].mxu0
        %v3457 = vadd.f32 %v1253, %v3456
        %v3458 = vpop.f32.mrb[0].mxu0
        %v3459 = vadd.f32 %v1249, %v3458
        %v3460 = vpop.f32.mrb[0].mxu0
        %v3461 = vadd.f32 %v1253, %v3460
        %3462 = vmatprep.mubr.bf16.mxu0 %v949
        %3463 = vmatmul.mubr.bf16.gmra.mrb[0].mxu0 %v948
        %v3464 = vpop.f32.mrb[0].mxu0
        %v3465 = vadd.f32 %v1249, %v3464
        %v3466 = vpop.f32.mrb[0].mxu0
        %v3467 = vadd.f32 %v1253, %v3466
        %v3468 = vpop.f32.mrb[0].mxu0
        %v3469 = vadd.f32 %v1249, %v3468
        %v3470 = vpop.f32.mrb[0].mxu0
        %v3471 = vadd.f32 %v1253, %v3470
        %3472 = vmatprep.mubr.bf16.mxu0 %v957
        %3473 = vmatmul.mubr.bf16.gmra.mrb[0].mxu0 %v956
        %v3474 = vpop.f32.mrb[0].mxu0
        %v3475 = vadd.f32 %v1249, %v3474
        %v3476 = vpop.f32.mrb[0].mxu0
        %v3477 = vadd.f32 %v1253, %v3476
        %v3478 = vpop.f32.mrb[0].mxu0
        %v3479 = vadd.f32 %v1249, %v3478
        %v3480 = vpop.f32.mrb[0].mxu0
        %v3481 = vadd.f32 %v1253, %v3480
        %3482 = vmatprep.mubr.bf16.mxu0 %v965
        %3483 = vmatmul.mubr.bf16.gmra.mrb[0].mxu0 %v964
        %v3484 = vpop.f32.mrb[0].mxu0
        %v3485 = vadd.f32 %v1249, %v3484
        %v3486 = vpop.f32.mrb[0].mxu0
        %v3487 = vadd.f32 %v1253, %v3486
        %v3488 = vpop.f32.mrb[0].mxu0
        %v3489 = vadd.f32 %v1249, %v3488
        %v3490 = vpop.f32.mrb[0].mxu0
        %v3491 = vadd.f32 %v1253, %v3490
        %3492 = vmatprep.mubr.bf16.mxu0 %v973
        %3493 = vmatmul.mubr.bf16.gmra.mrb[0].mxu0 %v972
        %v3494 = vpop.f32.mrb[0].mxu0
        %v3495 = vadd.f32 %v1249, %v3494
        %v3496 = vpop.f32.mrb[0].mxu0
        %v3497 = vadd.f32 %v1253, %v3496
        %v3498 = vpop.f32.mrb[0].mxu0
        %v3499 = vadd.f32 %v1249, %v3498
        %v3500 = vpop.f32.mrb[0].mxu0
        %v3501 = vadd.f32 %v1253, %v3500
        %3502 = vdwg.mxu0
        %3503 = vmatprep.subr.bf16.mxu0 %v2093
        %3504 = vmatpush1.bf16.msra.mxu0 %v2092
        %3505 = vmatprep.subr.bf16.mxu0 %v2097
        %3506 = vmatpush1.bf16.msra.mxu0 %v2096
        %3507 = vmatprep.subr.bf16.mxu0 %v2101
        %3508 = vmatpush1.bf16.msra.mxu0 %v2100
        %3509 = vmatprep.subr.bf16.mxu0 %v2105
        %3510 = vmatpush1.bf16.msra.mxu0 %v2104
        %3511 = vmatprep.subr.bf16.mxu0 %v2109
        %3512 = vmatpush1.bf16.msra.mxu0 %v2108
        %3513 = vmatprep.subr.bf16.mxu0 %v2113
        %3514 = vmatpush1.bf16.msra.mxu0 %v2112
        %3515 = vmatprep.subr.bf16.mxu0 %v2117
        %3516 = vmatpush1.bf16.msra.mxu0 %v2116
        %3517 = vmatprep.subr.bf16.mxu0 %v2121
        %3518 = vmatpush1.bf16.msra.mxu0 %v2120
        %3519 = vmatprep.subr.bf16.mxu0 %v2125
        %3520 = vmatpush1.bf16.msra.mxu0 %v2124
        %3521 = vmatprep.subr.bf16.mxu0 %v2129
        %3522 = vmatpush1.bf16.msra.mxu0 %v2128
        %3523 = vmatprep.subr.bf16.mxu0 %v2133
        %3524 = vmatpush1.bf16.msra.mxu0 %v2132
        %3525 = vmatprep.subr.bf16.mxu0 %v2137
        %3526 = vmatpush1.bf16.msra.mxu0 %v2136
        %3527 = vmatprep.subr.bf16.mxu0 %v2141
        %3528 = vmatpush1.bf16.msra.mxu0 %v2140
        %3529 = vmatprep.subr.bf16.mxu0 %v2145
        %3530 = vmatpush1.bf16.msra.mxu0 %v2144
        %3531 = vmatprep.subr.bf16.mxu0 %v2149
        %3532 = vmatpush1.bf16.msra.mxu0 %v2148
        %3533 = vmatprep.subr.bf16.mxu0 %v2153
        %3534 = vmatpush1.bf16.msra.mxu0 %v2152
        %3535 = vmatprep.mubr.bf16.mxu0 %v855
        %3536 = vmatmul.mubr.bf16.gmra.mrb[0].mxu0 %v854
        %v3537 = vpop.f32.mrb[0].mxu0
        %v3538 = vadd.f32 %v3345, %v3537
        %v3539 = vpop.f32.mrb[0].mxu0
        %v3540 = vadd.f32 %v3347, %v3539
        %v3541 = vpop.f32.mrb[0].mxu0
        %v3542 = vadd.f32 %v3349, %v3541
        %v3543 = vpop.f32.mrb[0].mxu0
        %v3544 = vadd.f32 %v3351, %v3543
        %3545 = vmatprep.mubr.bf16.mxu0 %v863
        %3546 = vmatmul.mubr.bf16.gmra.mrb[0].mxu0 %v862
        %v3547 = vpop.f32.mrb[0].mxu0
        %v3548 = vadd.f32 %v3355, %v3547
        %v3549 = vpop.f32.mrb[0].mxu0
        %v3550 = vadd.f32 %v3357, %v3549
        %v3551 = vpop.f32.mrb[0].mxu0
        %v3552 = vadd.f32 %v3359, %v3551
        %v3553 = vpop.f32.mrb[0].mxu0
        %v3554 = vadd.f32 %v3361, %v3553
        %3555 = vmatprep.mubr.bf16.mxu0 %v871
        %3556 = vmatmul.mubr.bf16.gmra.mrb[0].mxu0 %v870
        %v3557 = vpop.f32.mrb[0].mxu0
        %v3558 = vadd.f32 %v3365, %v3557
        %v3559 = vpop.f32.mrb[0].mxu0
        %v3560 = vadd.f32 %v3367, %v3559
        %v3561 = vpop.f32.mrb[0].mxu0
        %v3562 = vadd.f32 %v3369, %v3561
        %v3563 = vpop.f32.mrb[0].mxu0
        %v3564 = vadd.f32 %v3371, %v3563
        %3565 = vmatprep.mubr.bf16.mxu0 %v879
        %3566 = vmatmul.mubr.bf16.gmra.mrb[0].mxu0 %v878
        %v3567 = vpop.f32.mrb[0].mxu0
        %v3568 = vadd.f32 %v3375, %v3567
        %v3569 = vpop.f32.mrb[0].mxu0
        %v3570 = vadd.f32 %v3377, %v3569
        %v3571 = vpop.f32.mrb[0].mxu0
        %v3572 = vadd.f32 %v3379, %v3571
        %v3573 = vpop.f32.mrb[0].mxu0
        %v3574 = vadd.f32 %v3381, %v3573
        %3575 = vmatprep.mubr.bf16.mxu0 %v887
        %3576 = vmatmul.mubr.bf16.gmra.mrb[0].mxu0 %v886
        %v3577 = vpop.f32.mrb[0].mxu0
        %v3578 = vadd.f32 %v3385, %v3577
        %v3579 = vpop.f32.mrb[0].mxu0
        %v3580 = vadd.f32 %v3387, %v3579
        %v3581 = vpop.f32.mrb[0].mxu0
        %v3582 = vadd.f32 %v3389, %v3581
        %v3583 = vpop.f32.mrb[0].mxu0
        %v3584 = vadd.f32 %v3391, %v3583
        %3585 = vmatprep.mubr.bf16.mxu0 %v895
        %3586 = vmatmul.mubr.bf16.gmra.mrb[0].mxu0 %v894
        %v3587 = vpop.f32.mrb[0].mxu0
        %v3588 = vadd.f32 %v3395, %v3587
        %v3589 = vpop.f32.mrb[0].mxu0
        %v3590 = vadd.f32 %v3397, %v3589
        %v3591 = vpop.f32.mrb[0].mxu0
        %v3592 = vadd.f32 %v3399, %v3591
        %v3593 = vpop.f32.mrb[0].mxu0
        %v3594 = vadd.f32 %v3401, %v3593
        %3595 = vmatprep.mubr.bf16.mxu0 %v903
        %3596 = vmatmul.mubr.bf16.gmra.mrb[0].mxu0 %v902
        %v3597 = vpop.f32.mrb[0].mxu0
        %v3598 = vadd.f32 %v3405, %v3597
        %v3599 = vpop.f32.mrb[0].mxu0
        %v3600 = vadd.f32 %v3407, %v3599
        %v3601 = vpop.f32.mrb[0].mxu0
        %v3602 = vadd.f32 %v3409, %v3601
        %v3603 = vpop.f32.mrb[0].mxu0
        %v3604 = vadd.f32 %v3411, %v3603
        %3605 = vmatprep.mubr.bf16.mxu0 %v911
        %3606 = vmatmul.mubr.bf16.gmra.mrb[0].mxu0 %v910
        %v3607 = vpop.f32.mrb[0].mxu0
        %v3608 = vadd.f32 %v3415, %v3607
        %v3609 = vpop.f32.mrb[0].mxu0
        %v3610 = vadd.f32 %v3417, %v3609
        %v3611 = vpop.f32.mrb[0].mxu0
        %v3612 = vadd.f32 %v3419, %v3611
        %v3613 = vpop.f32.mrb[0].mxu0
        %v3614 = vadd.f32 %v3421, %v3613
        %3615 = vmatprep.mubr.bf16.mxu0 %v919
        %3616 = vmatmul.mubr.bf16.gmra.mrb[0].mxu0 %v918
        %v3617 = vpop.f32.mrb[0].mxu0
        %v3618 = vadd.f32 %v3425, %v3617
        %v3619 = vpop.f32.mrb[0].mxu0
        %v3620 = vadd.f32 %v3427, %v3619
        %v3621 = vpop.f32.mrb[0].mxu0
        %v3622 = vadd.f32 %v3429, %v3621
        %v3623 = vpop.f32.mrb[0].mxu0
        %v3624 = vadd.f32 %v3431, %v3623
        %3625 = vmatprep.mubr.bf16.mxu0 %v927
        %3626 = vmatmul.mubr.bf16.gmra.mrb[0].mxu0 %v926
        %v3627 = vpop.f32.mrb[0].mxu0
        %v3628 = vadd.f32 %v3435, %v3627
        %v3629 = vpop.f32.mrb[0].mxu0
        %v3630 = vadd.f32 %v3437, %v3629
        %v3631 = vpop.f32.mrb[0].mxu0
        %v3632 = vadd.f32 %v3439, %v3631
        %v3633 = vpop.f32.mrb[0].mxu0
        %v3634 = vadd.f32 %v3441, %v3633
        %3635 = vmatprep.mubr.bf16.mxu0 %v935
        %3636 = vmatmul.mubr.bf16.gmra.mrb[0].mxu0 %v934
        %v3637 = vpop.f32.mrb[0].mxu0
        %v3638 = vadd.f32 %v3445, %v3637
        %v3639 = vpop.f32.mrb[0].mxu0
        %v3640 = vadd.f32 %v3447, %v3639
        %v3641 = vpop.f32.mrb[0].mxu0
        %v3642 = vadd.f32 %v3449, %v3641
        %v3643 = vpop.f32.mrb[0].mxu0
        %v3644 = vadd.f32 %v3451, %v3643
        %3645 = vmatprep.mubr.bf16.mxu0 %v943
        %3646 = vmatmul.mubr.bf16.gmra.mrb[0].mxu0 %v942
        %v3647 = vpop.f32.mrb[0].mxu0
        %v3648 = vadd.f32 %v3455, %v3647
        %v3649 = vpop.f32.mrb[0].mxu0
        %v3650 = vadd.f32 %v3457, %v3649
        %v3651 = vpop.f32.mrb[0].mxu0
        %v3652 = vadd.f32 %v3459, %v3651
        %v3653 = vpop.f32.mrb[0].mxu0
        %v3654 = vadd.f32 %v3461, %v3653
        %3655 = vmatprep.mubr.bf16.mxu0 %v951
        %3656 = vmatmul.mubr.bf16.gmra.mrb[0].mxu0 %v950
        %v3657 = vpop.f32.mrb[0].mxu0
        %v3658 = vadd.f32 %v3465, %v3657
        %v3659 = vpop.f32.mrb[0].mxu0
        %v3660 = vadd.f32 %v3467, %v3659
        %v3661 = vpop.f32.mrb[0].mxu0
        %v3662 = vadd.f32 %v3469, %v3661
        %v3663 = vpop.f32.mrb[0].mxu0
        %v3664 = vadd.f32 %v3471, %v3663
        %3665 = vmatprep.mubr.bf16.mxu0 %v959
        %3666 = vmatmul.mubr.bf16.gmra.mrb[0].mxu0 %v958
        %v3667 = vpop.f32.mrb[0].mxu0
        %v3668 = vadd.f32 %v3475, %v3667
        %v3669 = vpop.f32.mrb[0].mxu0
        %v3670 = vadd.f32 %v3477, %v3669
        %v3671 = vpop.f32.mrb[0].mxu0
        %v3672 = vadd.f32 %v3479, %v3671
        %v3673 = vpop.f32.mrb[0].mxu0
        %v3674 = vadd.f32 %v3481, %v3673
        %3675 = vmatprep.mubr.bf16.mxu0 %v967
        %3676 = vmatmul.mubr.bf16.gmra.mrb[0].mxu0 %v966
        %v3677 = vpop.f32.mrb[0].mxu0
        %v3678 = vadd.f32 %v3485, %v3677
        %v3679 = vpop.f32.mrb[0].mxu0
        %v3680 = vadd.f32 %v3487, %v3679
        %v3681 = vpop.f32.mrb[0].mxu0
        %v3682 = vadd.f32 %v3489, %v3681
        %v3683 = vpop.f32.mrb[0].mxu0
        %v3684 = vadd.f32 %v3491, %v3683
        %3685 = vmatprep.mubr.bf16.mxu0 %v975
        %3686 = vmatmul.mubr.bf16.gmra.mrb[0].mxu0 %v974
        %v3687 = vpop.f32.mrb[0].mxu0
        %v3688 = vadd.f32 %v3495, %v3687
        %v3689 = vpop.f32.mrb[0].mxu0
        %v3690 = vadd.f32 %v3497, %v3689
        %v3691 = vpop.f32.mrb[0].mxu0
        %v3692 = vadd.f32 %v3499, %v3691
        %v3693 = vpop.f32.mrb[0].mxu0
        %v3694 = vadd.f32 %v3501, %v3693
        %3695 = vdwg.mxu0
        %3696 = vmatprep.subr.bf16.mxu0 %v2157
        %3697 = vmatpush1.bf16.msra.mxu0 %v2156
        %3698 = vmatprep.subr.bf16.mxu0 %v2161
        %3699 = vmatpush1.bf16.msra.mxu0 %v2160
        %3700 = vmatprep.subr.bf16.mxu0 %v2165
        %3701 = vmatpush1.bf16.msra.mxu0 %v2164
        %3702 = vmatprep.subr.bf16.mxu0 %v2169
        %3703 = vmatpush1.bf16.msra.mxu0 %v2168
        %3704 = vmatprep.subr.bf16.mxu0 %v2173
        %3705 = vmatpush1.bf16.msra.mxu0 %v2172
        %3706 = vmatprep.subr.bf16.mxu0 %v2177
        %3707 = vmatpush1.bf16.msra.mxu0 %v2176
        %3708 = vmatprep.subr.bf16.mxu0 %v2181
        %3709 = vmatpush1.bf16.msra.mxu0 %v2180
        %3710 = vmatprep.subr.bf16.mxu0 %v2185
        %3711 = vmatpush1.bf16.msra.mxu0 %v2184
        %3712 = vmatprep.subr.bf16.mxu0 %v2189
        %3713 = vmatpush1.bf16.msra.mxu0 %v2188
        %3714 = vmatprep.subr.bf16.mxu0 %v2193
        %3715 = vmatpush1.bf16.msra.mxu0 %v2192
        %3716 = vmatprep.subr.bf16.mxu0 %v2197
        %3717 = vmatpush1.bf16.msra.mxu0 %v2196
        %3718 = vmatprep.subr.bf16.mxu0 %v2201
        %3719 = vmatpush1.bf16.msra.mxu0 %v2200
        %3720 = vmatprep.subr.bf16.mxu0 %v2205
        %3721 = vmatpush1.bf16.msra.mxu0 %v2204
        %3722 = vmatprep.subr.bf16.mxu0 %v2209
        %3723 = vmatpush1.bf16.msra.mxu0 %v2208
        %3724 = vmatprep.subr.bf16.mxu0 %v2213
        %3725 = vmatpush1.bf16.msra.mxu0 %v2212
        %3726 = vmatprep.subr.bf16.mxu0 %v2217
        %3727 = vmatpush1.bf16.msra.mxu0 %v2216
        %3728 = vmatprep.mubr.bf16.mxu0 %v857
        %3729 = vmatmul.mubr.bf16.gmra.mrb[0].mxu0 %v856
        %v3730 = vpop.f32.mrb[0].mxu0
        %v3731 = vadd.f32 %v3538, %v3730
        %v3732 = vpop.f32.mrb[0].mxu0
        %v3733 = vadd.f32 %v3540, %v3732
        %v3734 = vpop.f32.mrb[0].mxu0
        %v3735 = vadd.f32 %v3542, %v3734
        %v3736 = vpop.f32.mrb[0].mxu0
        %v3737 = vadd.f32 %v3544, %v3736
        %3738 = vmatprep.mubr.bf16.mxu0 %v865
        %3739 = vmatmul.mubr.bf16.gmra.mrb[0].mxu0 %v864
        %v3740 = vpop.f32.mrb[0].mxu0
        %v3741 = vadd.f32 %v3548, %v3740
        %v3742 = vpop.f32.mrb[0].mxu0
        %v3743 = vadd.f32 %v3550, %v3742
        %v3744 = vpop.f32.mrb[0].mxu0
        %v3745 = vadd.f32 %v3552, %v3744
        %v3746 = vpop.f32.mrb[0].mxu0
        %v3747 = vadd.f32 %v3554, %v3746
        %3748 = vmatprep.mubr.bf16.mxu0 %v873
        %3749 = vmatmul.mubr.bf16.gmra.mrb[0].mxu0 %v872
        %v3750 = vpop.f32.mrb[0].mxu0
        %v3751 = vadd.f32 %v3558, %v3750
        %v3752 = vpop.f32.mrb[0].mxu0
        %v3753 = vadd.f32 %v3560, %v3752
        %v3754 = vpop.f32.mrb[0].mxu0
        %v3755 = vadd.f32 %v3562, %v3754
        %v3756 = vpop.f32.mrb[0].mxu0
        %v3757 = vadd.f32 %v3564, %v3756
        %3758 = vmatprep.mubr.bf16.mxu0 %v881
        %3759 = vmatmul.mubr.bf16.gmra.mrb[0].mxu0 %v880
        %v3760 = vpop.f32.mrb[0].mxu0
        %v3761 = vadd.f32 %v3568, %v3760
        %v3762 = vpop.f32.mrb[0].mxu0
        %v3763 = vadd.f32 %v3570, %v3762
        %v3764 = vpop.f32.mrb[0].mxu0
        %v3765 = vadd.f32 %v3572, %v3764
        %v3766 = vpop.f32.mrb[0].mxu0
        %v3767 = vadd.f32 %v3574, %v3766
        %3768 = vmatprep.mubr.bf16.mxu0 %v889
        %3769 = vmatmul.mubr.bf16.gmra.mrb[0].mxu0 %v888
        %v3770 = vpop.f32.mrb[0].mxu0
        %v3771 = vadd.f32 %v3578, %v3770
        %v3772 = vpop.f32.mrb[0].mxu0
        %v3773 = vadd.f32 %v3580, %v3772
        %v3774 = vpop.f32.mrb[0].mxu0
        %v3775 = vadd.f32 %v3582, %v3774
        %v3776 = vpop.f32.mrb[0].mxu0
        %v3777 = vadd.f32 %v3584, %v3776
        %3778 = vmatprep.mubr.bf16.mxu0 %v897
        %3779 = vmatmul.mubr.bf16.gmra.mrb[0].mxu0 %v896
        %v3780 = vpop.f32.mrb[0].mxu0
        %v3781 = vadd.f32 %v3588, %v3780
        %v3782 = vpop.f32.mrb[0].mxu0
        %v3783 = vadd.f32 %v3590, %v3782
        %v3784 = vpop.f32.mrb[0].mxu0
        %v3785 = vadd.f32 %v3592, %v3784
        %v3786 = vpop.f32.mrb[0].mxu0
        %v3787 = vadd.f32 %v3594, %v3786
        %3788 = vmatprep.mubr.bf16.mxu0 %v905
        %3789 = vmatmul.mubr.bf16.gmra.mrb[0].mxu0 %v904
        %v3790 = vpop.f32.mrb[0].mxu0
        %v3791 = vadd.f32 %v3598, %v3790
        %v3792 = vpop.f32.mrb[0].mxu0
        %v3793 = vadd.f32 %v3600, %v3792
        %v3794 = vpop.f32.mrb[0].mxu0
        %v3795 = vadd.f32 %v3602, %v3794
        %v3796 = vpop.f32.mrb[0].mxu0
        %v3797 = vadd.f32 %v3604, %v3796
        %3798 = vmatprep.mubr.bf16.mxu0 %v913
        %3799 = vmatmul.mubr.bf16.gmra.mrb[0].mxu0 %v912
        %v3800 = vpop.f32.mrb[0].mxu0
        %v3801 = vadd.f32 %v3608, %v3800
        %v3802 = vpop.f32.mrb[0].mxu0
        %v3803 = vadd.f32 %v3610, %v3802
        %v3804 = vpop.f32.mrb[0].mxu0
        %v3805 = vadd.f32 %v3612, %v3804
        %v3806 = vpop.f32.mrb[0].mxu0
        %v3807 = vadd.f32 %v3614, %v3806
        %3808 = vmatprep.mubr.bf16.mxu0 %v921
        %3809 = vmatmul.mubr.bf16.gmra.mrb[0].mxu0 %v920
        %v3810 = vpop.f32.mrb[0].mxu0
        %v3811 = vadd.f32 %v3618, %v3810
        %v3812 = vpop.f32.mrb[0].mxu0
        %v3813 = vadd.f32 %v3620, %v3812
        %v3814 = vpop.f32.mrb[0].mxu0
        %v3815 = vadd.f32 %v3622, %v3814
        %v3816 = vpop.f32.mrb[0].mxu0
        %v3817 = vadd.f32 %v3624, %v3816
        %3818 = vmatprep.mubr.bf16.mxu0 %v929
        %3819 = vmatmul.mubr.bf16.gmra.mrb[0].mxu0 %v928
        %v3820 = vpop.f32.mrb[0].mxu0
        %v3821 = vadd.f32 %v3628, %v3820
        %v3822 = vpop.f32.mrb[0].mxu0
        %v3823 = vadd.f32 %v3630, %v3822
        %v3824 = vpop.f32.mrb[0].mxu0
        %v3825 = vadd.f32 %v3632, %v3824
        %v3826 = vpop.f32.mrb[0].mxu0
        %v3827 = vadd.f32 %v3634, %v3826
        %3828 = vmatprep.mubr.bf16.mxu0 %v937
        %3829 = vmatmul.mubr.bf16.gmra.mrb[0].mxu0 %v936
        %v3830 = vpop.f32.mrb[0].mxu0
        %v3831 = vadd.f32 %v3638, %v3830
        %v3832 = vpop.f32.mrb[0].mxu0
        %v3833 = vadd.f32 %v3640, %v3832
        %v3834 = vpop.f32.mrb[0].mxu0
        %v3835 = vadd.f32 %v3642, %v3834
        %v3836 = vpop.f32.mrb[0].mxu0
        %v3837 = vadd.f32 %v3644, %v3836
        %3838 = vmatprep.mubr.bf16.mxu0 %v945
        %3839 = vmatmul.mubr.bf16.gmra.mrb[0].mxu0 %v944
        %v3840 = vpop.f32.mrb[0].mxu0
        %v3841 = vadd.f32 %v3648, %v3840
        %v3842 = vpop.f32.mrb[0].mxu0
        %v3843 = vadd.f32 %v3650, %v3842
        %v3844 = vpop.f32.mrb[0].mxu0
        %v3845 = vadd.f32 %v3652, %v3844
        %v3846 = vpop.f32.mrb[0].mxu0
        %v3847 = vadd.f32 %v3654, %v3846
        %3848 = vmatprep.mubr.bf16.mxu0 %v953
        %3849 = vmatmul.mubr.bf16.gmra.mrb[0].mxu0 %v952
        %v3850 = vpop.f32.mrb[0].mxu0
        %v3851 = vadd.f32 %v3658, %v3850
        %v3852 = vpop.f32.mrb[0].mxu0
        %v3853 = vadd.f32 %v3660, %v3852
        %v3854 = vpop.f32.mrb[0].mxu0
        %v3855 = vadd.f32 %v3662, %v3854
        %v3856 = vpop.f32.mrb[0].mxu0
        %v3857 = vadd.f32 %v3664, %v3856
        %3858 = vmatprep.mubr.bf16.mxu0 %v961
        %3859 = vmatmul.mubr.bf16.gmra.mrb[0].mxu0 %v960
        %v3860 = vpop.f32.mrb[0].mxu0
        %v3861 = vadd.f32 %v3668, %v3860
        %v3862 = vpop.f32.mrb[0].mxu0
        %v3863 = vadd.f32 %v3670, %v3862
        %v3864 = vpop.f32.mrb[0].mxu0
        %v3865 = vadd.f32 %v3672, %v3864
        %v3866 = vpop.f32.mrb[0].mxu0
        %v3867 = vadd.f32 %v3674, %v3866
        %3868 = vmatprep.mubr.bf16.mxu0 %v969
        %3869 = vmatmul.mubr.bf16.gmra.mrb[0].mxu0 %v968
        %v3870 = vpop.f32.mrb[0].mxu0
        %v3871 = vadd.f32 %v3678, %v3870
        %v3872 = vpop.f32.mrb[0].mxu0
        %v3873 = vadd.f32 %v3680, %v3872
        %v3874 = vpop.f32.mrb[0].mxu0
        %v3875 = vadd.f32 %v3682, %v3874
        %v3876 = vpop.f32.mrb[0].mxu0
        %v3877 = vadd.f32 %v3684, %v3876
        %3878 = vmatprep.mubr.bf16.mxu0 %v977
        %3879 = vmatmul.mubr.bf16.gmra.mrb[0].mxu0 %v976
        %v3880 = vpop.f32.mrb[0].mxu0
        %v3881 = vadd.f32 %v3688, %v3880
        %v3882 = vpop.f32.mrb[0].mxu0
        %v3883 = vadd.f32 %v3690, %v3882
        %v3884 = vpop.f32.mrb[0].mxu0
        %v3885 = vadd.f32 %v3692, %v3884
        %v3886 = vpop.f32.mrb[0].mxu0
        %v3887 = vadd.f32 %v3694, %v3886
        %3888 = vdwg.mxu0
        %3889 = vmatprep.subr.bf16.mxu0 %v2221
        %3890 = vmatpush1.bf16.msra.mxu0 %v2220
        %3891 = vmatprep.subr.bf16.mxu0 %v2225
        %3892 = vmatpush1.bf16.msra.mxu0 %v2224
        %3893 = vmatprep.subr.bf16.mxu0 %v2229
        %3894 = vmatpush1.bf16.msra.mxu0 %v2228
        %3895 = vmatprep.subr.bf16.mxu0 %v2233
        %3896 = vmatpush1.bf16.msra.mxu0 %v2232
        %3897 = vmatprep.subr.bf16.mxu0 %v2237
        %3898 = vmatpush1.bf16.msra.mxu0 %v2236
        %3899 = vmatprep.subr.bf16.mxu0 %v2241
        %3900 = vmatpush1.bf16.msra.mxu0 %v2240
        %3901 = vmatprep.subr.bf16.mxu0 %v2245
        %3902 = vmatpush1.bf16.msra.mxu0 %v2244
        %3903 = vmatprep.subr.bf16.mxu0 %v2249
        %3904 = vmatpush1.bf16.msra.mxu0 %v2248
        %3905 = vmatprep.subr.bf16.mxu0 %v2253
        %3906 = vmatpush1.bf16.msra.mxu0 %v2252
        %3907 = vmatprep.subr.bf16.mxu0 %v2257
        %3908 = vmatpush1.bf16.msra.mxu0 %v2256
        %3909 = vmatprep.subr.bf16.mxu0 %v2261
        %3910 = vmatpush1.bf16.msra.mxu0 %v2260
        %3911 = vmatprep.subr.bf16.mxu0 %v2265
        %3912 = vmatpush1.bf16.msra.mxu0 %v2264
        %3913 = vmatprep.subr.bf16.mxu0 %v2269
        %3914 = vmatpush1.bf16.msra.mxu0 %v2268
        %3915 = vmatprep.subr.bf16.mxu0 %v2273
        %3916 = vmatpush1.bf16.msra.mxu0 %v2272
        %3917 = vmatprep.subr.bf16.mxu0 %v2277
        %3918 = vmatpush1.bf16.msra.mxu0 %v2276
        %3919 = vmatprep.subr.bf16.mxu0 %v2281
        %3920 = vmatpush1.bf16.msra.mxu0 %v2280
        %3921 = vmatprep.mubr.bf16.mxu0 %v859
        %3922 = vmatmul.mubr.bf16.gmra.mrb[0].mxu0 %v858
        %v3923 = vpop.f32.mrb[0].mxu0
        %v3924 = vadd.f32 %v3731, %v3923
        %v3925 = vpop.f32.mrb[0].mxu0
        %v3926 = vadd.f32 %v3733, %v3925
        %v3927 = vpop.f32.mrb[0].mxu0
        %v3928 = vadd.f32 %v3735, %v3927
        %v3929 = vpop.f32.mrb[0].mxu0
        %v3930 = vadd.f32 %v3737, %v3929
        %3931 = vmatprep.mubr.bf16.mxu0 %v867
        %3932 = vmatmul.mubr.bf16.gmra.mrb[0].mxu0 %v866
        %v3933 = vpop.f32.mrb[0].mxu0
        %v3934 = vadd.f32 %v3741, %v3933
        %v3935 = vpop.f32.mrb[0].mxu0
        %v3936 = vadd.f32 %v3743, %v3935
        %v3937 = vpop.f32.mrb[0].mxu0
        %v3938 = vadd.f32 %v3745, %v3937
        %v3939 = vpop.f32.mrb[0].mxu0
        %v3940 = vadd.f32 %v3747, %v3939
        %3941 = vmatprep.mubr.bf16.mxu0 %v875
        %3942 = vmatmul.mubr.bf16.gmra.mrb[0].mxu0 %v874
        %v3943 = vpop.f32.mrb[0].mxu0
        %v3944 = vadd.f32 %v3751, %v3943
        %v3945 = vpop.f32.mrb[0].mxu0
        %v3946 = vadd.f32 %v3753, %v3945
        %v3947 = vpop.f32.mrb[0].mxu0
        %v3948 = vadd.f32 %v3755, %v3947
        %v3949 = vpop.f32.mrb[0].mxu0
        %v3950 = vadd.f32 %v3757, %v3949
        %3951 = vmatprep.mubr.bf16.mxu0 %v883
        %3952 = vmatmul.mubr.bf16.gmra.mrb[0].mxu0 %v882
        %v3953 = vpop.f32.mrb[0].mxu0
        %v3954 = vadd.f32 %v3761, %v3953
        %v3955 = vpop.f32.mrb[0].mxu0
        %v3956 = vadd.f32 %v3763, %v3955
        %v3957 = vpop.f32.mrb[0].mxu0
        %v3958 = vadd.f32 %v3765, %v3957
        %v3959 = vpop.f32.mrb[0].mxu0
        %v3960 = vadd.f32 %v3767, %v3959
        %3961 = vmatprep.mubr.bf16.mxu0 %v891
        %3962 = vmatmul.mubr.bf16.gmra.mrb[0].mxu0 %v890
        %v3963 = vpop.f32.mrb[0].mxu0
        %v3964 = vadd.f32 %v3771, %v3963
        %v3965 = vpop.f32.mrb[0].mxu0
        %v3966 = vadd.f32 %v3773, %v3965
        %v3967 = vpop.f32.mrb[0].mxu0
        %v3968 = vadd.f32 %v3775, %v3967
        %v3969 = vpop.f32.mrb[0].mxu0
        %v3970 = vadd.f32 %v3777, %v3969
        %3971 = vmatprep.mubr.bf16.mxu0 %v899
        %3972 = vmatmul.mubr.bf16.gmra.mrb[0].mxu0 %v898
        %v3973 = vpop.f32.mrb[0].mxu0
        %v3974 = vadd.f32 %v3781, %v3973
        %v3975 = vpop.f32.mrb[0].mxu0
        %v3976 = vadd.f32 %v3783, %v3975
        %v3977 = vpop.f32.mrb[0].mxu0
        %v3978 = vadd.f32 %v3785, %v3977
        %v3979 = vpop.f32.mrb[0].mxu0
        %v3980 = vadd.f32 %v3787, %v3979
        %3981 = vmatprep.mubr.bf16.mxu0 %v907
        %3982 = vmatmul.mubr.bf16.gmra.mrb[0].mxu0 %v906
        %v3983 = vpop.f32.mrb[0].mxu0
        %v3984 = vadd.f32 %v3791, %v3983
        %v3985 = vpop.f32.mrb[0].mxu0
        %v3986 = vadd.f32 %v3793, %v3985
        %v3987 = vpop.f32.mrb[0].mxu0
        %v3988 = vadd.f32 %v3795, %v3987
        %v3989 = vpop.f32.mrb[0].mxu0
        %v3990 = vadd.f32 %v3797, %v3989
        %3991 = vmatprep.mubr.bf16.mxu0 %v915
        %3992 = vmatmul.mubr.bf16.gmra.mrb[0].mxu0 %v914
        %v3993 = vpop.f32.mrb[0].mxu0
        %v3994 = vadd.f32 %v3801, %v3993
        %v3995 = vpop.f32.mrb[0].mxu0
        %v3996 = vadd.f32 %v3803, %v3995
        %v3997 = vpop.f32.mrb[0].mxu0
        %v3998 = vadd.f32 %v3805, %v3997
        %v3999 = vpop.f32.mrb[0].mxu0
        %v4000 = vadd.f32 %v3807, %v3999
        %4001 = vmatprep.mubr.bf16.mxu0 %v923
        %4002 = vmatmul.mubr.bf16.gmra.mrb[0].mxu0 %v922
        %v4003 = vpop.f32.mrb[0].mxu0
        %v4004 = vadd.f32 %v3811, %v4003
        %v4005 = vpop.f32.mrb[0].mxu0
        %v4006 = vadd.f32 %v3813, %v4005
        %v4007 = vpop.f32.mrb[0].mxu0
        %v4008 = vadd.f32 %v3815, %v4007
        %v4009 = vpop.f32.mrb[0].mxu0
        %v4010 = vadd.f32 %v3817, %v4009
        %4011 = vmatprep.mubr.bf16.mxu0 %v931
        %4012 = vmatmul.mubr.bf16.gmra.mrb[0].mxu0 %v930
        %v4013 = vpop.f32.mrb[0].mxu0
        %v4014 = vadd.f32 %v3821, %v4013
        %v4015 = vpop.f32.mrb[0].mxu0
        %v4016 = vadd.f32 %v3823, %v4015
        %v4017 = vpop.f32.mrb[0].mxu0
        %v4018 = vadd.f32 %v3825, %v4017
        %v4019 = vpop.f32.mrb[0].mxu0
        %v4020 = vadd.f32 %v3827, %v4019
        %4021 = vmatprep.mubr.bf16.mxu0 %v939
        %4022 = vmatmul.mubr.bf16.gmra.mrb[0].mxu0 %v938
        %v4023 = vpop.f32.mrb[0].mxu0
        %v4024 = vadd.f32 %v3831, %v4023
        %v4025 = vpop.f32.mrb[0].mxu0
        %v4026 = vadd.f32 %v3833, %v4025
        %v4027 = vpop.f32.mrb[0].mxu0
        %v4028 = vadd.f32 %v3835, %v4027
        %v4029 = vpop.f32.mrb[0].mxu0
        %v4030 = vadd.f32 %v3837, %v4029
        %4031 = vmatprep.mubr.bf16.mxu0 %v947
        %4032 = vmatmul.mubr.bf16.gmra.mrb[0].mxu0 %v946
        %v4033 = vpop.f32.mrb[0].mxu0
        %v4034 = vadd.f32 %v3841, %v4033
        %v4035 = vpop.f32.mrb[0].mxu0
        %v4036 = vadd.f32 %v3843, %v4035
        %v4037 = vpop.f32.mrb[0].mxu0
        %v4038 = vadd.f32 %v3845, %v4037
        %v4039 = vpop.f32.mrb[0].mxu0
        %v4040 = vadd.f32 %v3847, %v4039
        %4041 = vmatprep.mubr.bf16.mxu0 %v955
        %4042 = vmatmul.mubr.bf16.gmra.mrb[0].mxu0 %v954
        %v4043 = vpop.f32.mrb[0].mxu0
        %v4044 = vadd.f32 %v3851, %v4043
        %v4045 = vpop.f32.mrb[0].mxu0
        %v4046 = vadd.f32 %v3853, %v4045
        %v4047 = vpop.f32.mrb[0].mxu0
        %v4048 = vadd.f32 %v3855, %v4047
        %v4049 = vpop.f32.mrb[0].mxu0
        %v4050 = vadd.f32 %v3857, %v4049
        %4051 = vmatprep.mubr.bf16.mxu0 %v963
        %4052 = vmatmul.mubr.bf16.gmra.mrb[0].mxu0 %v962
        %v4053 = vpop.f32.mrb[0].mxu0
        %v4054 = vadd.f32 %v3861, %v4053
        %v4055 = vpop.f32.mrb[0].mxu0
        %v4056 = vadd.f32 %v3863, %v4055
        %v4057 = vpop.f32.mrb[0].mxu0
        %v4058 = vadd.f32 %v3865, %v4057
        %v4059 = vpop.f32.mrb[0].mxu0
        %v4060 = vadd.f32 %v3867, %v4059
        %4061 = vmatprep.mubr.bf16.mxu0 %v971
        %4062 = vmatmul.mubr.bf16.gmra.mrb[0].mxu0 %v970
        %v4063 = vpop.f32.mrb[0].mxu0
        %v4064 = vadd.f32 %v3871, %v4063
        %v4065 = vpop.f32.mrb[0].mxu0
        %v4066 = vadd.f32 %v3873, %v4065
        %v4067 = vpop.f32.mrb[0].mxu0
        %v4068 = vadd.f32 %v3875, %v4067
        %v4069 = vpop.f32.mrb[0].mxu0
        %v4070 = vadd.f32 %v3877, %v4069
        %4071 = vmatprep.mubr.bf16.mxu0 %v979
        %4072 = vmatmul.mubr.bf16.gmra.mrb[0].mxu0 %v978
        %v4073 = vpop.f32.mrb[0].mxu0
        %v4074 = vadd.f32 %v3881, %v4073
        %v4075 = vpop.f32.mrb[0].mxu0
        %v4076 = vadd.f32 %v3883, %v4075
        %v4077 = vpop.f32.mrb[0].mxu0
        %v4078 = vadd.f32 %v3885, %v4077
        %v4079 = vpop.f32.mrb[0].mxu0
        %v4080 = vadd.f32 %v3887, %v4079
        %4081 = vdwg.mxu0
        %v4082 = vmax.f32 %v3152, 0.0
        %v4083 = vmax.f32 %v3154, 0.0
        %v4084 = vmax.f32 %v3924, 0.0
        %v4085 = vmax.f32 %v3926, 0.0
        %v4086 = vmax.f32 %v3156, 0.0
        %v4087 = vmax.f32 %v3158, 0.0
        %v4088 = vmax.f32 %v3928, 0.0
        %v4089 = vmax.f32 %v3930, 0.0
        %v4090 = vmax.f32 %v3162, 0.0
        %v4091 = vmax.f32 %v3164, 0.0
        %v4092 = vmax.f32 %v3934, 0.0
        %v4093 = vmax.f32 %v3936, 0.0
        %v4094 = vmax.f32 %v3166, 0.0
        %v4095 = vmax.f32 %v3168, 0.0
        %v4096 = vmax.f32 %v3938, 0.0
        %v4097 = vmax.f32 %v3940, 0.0
        %v4098 = vmax.f32 %v3172, 0.0
        %v4099 = vmax.f32 %v3174, 0.0
        %v4100 = vmax.f32 %v3944, 0.0
        %v4101 = vmax.f32 %v3946, 0.0
        %v4102 = vmax.f32 %v3176, 0.0
        %v4103 = vmax.f32 %v3178, 0.0
        %v4104 = vmax.f32 %v3948, 0.0
        %v4105 = vmax.f32 %v3950, 0.0
        %v4106 = vmax.f32 %v3182, 0.0
        %v4107 = vmax.f32 %v3184, 0.0
        %v4108 = vmax.f32 %v3954, 0.0
        %v4109 = vmax.f32 %v3956, 0.0
        %v4110 = vmax.f32 %v3186, 0.0
        %v4111 = vmax.f32 %v3188, 0.0
        %v4112 = vmax.f32 %v3958, 0.0
        %v4113 = vmax.f32 %v3960, 0.0
        %v4114 = vmax.f32 %v3192, 0.0
        %v4115 = vmax.f32 %v3194, 0.0
        %v4116 = vmax.f32 %v3964, 0.0
        %v4117 = vmax.f32 %v3966, 0.0
        %v4118 = vmax.f32 %v3196, 0.0
        %v4119 = vmax.f32 %v3198, 0.0
        %v4120 = vmax.f32 %v3968, 0.0
        %v4121 = vmax.f32 %v3970, 0.0
        %v4122 = vmax.f32 %v3202, 0.0
        %v4123 = vmax.f32 %v3204, 0.0
        %v4124 = vmax.f32 %v3974, 0.0
        %v4125 = vmax.f32 %v3976, 0.0
        %v4126 = vmax.f32 %v3206, 0.0
        %v4127 = vmax.f32 %v3208, 0.0
        %v4128 = vmax.f32 %v3978, 0.0
        %v4129 = vmax.f32 %v3980, 0.0
        %v4130 = vmax.f32 %v3212, 0.0
        %v4131 = vmax.f32 %v3214, 0.0
        %v4132 = vmax.f32 %v3984, 0.0
        %v4133 = vmax.f32 %v3986, 0.0
        %v4134 = vmax.f32 %v3216, 0.0
        %v4135 = vmax.f32 %v3218, 0.0
        %v4136 = vmax.f32 %v3988, 0.0
        %v4137 = vmax.f32 %v3990, 0.0
        %v4138 = vmax.f32 %v3222, 0.0
        %v4139 = vmax.f32 %v3224, 0.0
        %v4140 = vmax.f32 %v3994, 0.0
        %v4141 = vmax.f32 %v3996, 0.0
        %v4142 = vmax.f32 %v3226, 0.0
        %v4143 = vmax.f32 %v3228, 0.0
        %v4144 = vmax.f32 %v3998, 0.0
        %v4145 = vmax.f32 %v4000, 0.0
        %v4146 = vmax.f32 %v3232, 0.0
        %v4147 = vmax.f32 %v3234, 0.0
        %v4148 = vmax.f32 %v4004, 0.0
        %v4149 = vmax.f32 %v4006, 0.0
        %v4150 = vmax.f32 %v3236, 0.0
        %v4151 = vmax.f32 %v3238, 0.0
        %v4152 = vmax.f32 %v4008, 0.0
        %v4153 = vmax.f32 %v4010, 0.0
        %v4154 = vmax.f32 %v3242, 0.0
        %v4155 = vmax.f32 %v3244, 0.0
        %v4156 = vmax.f32 %v4014, 0.0
        %v4157 = vmax.f32 %v4016, 0.0
        %v4158 = vmax.f32 %v3246, 0.0
        %v4159 = vmax.f32 %v3248, 0.0
        %v4160 = vmax.f32 %v4018, 0.0
        %v4161 = vmax.f32 %v4020, 0.0
        %v4162 = vmax.f32 %v3252, 0.0
        %v4163 = vmax.f32 %v3254, 0.0
        %v4164 = vmax.f32 %v4024, 0.0
        %v4165 = vmax.f32 %v4026, 0.0
        %v4166 = vmax.f32 %v3256, 0.0
        %v4167 = vmax.f32 %v3258, 0.0
        %v4168 = vmax.f32 %v4028, 0.0
        %v4169 = vmax.f32 %v4030, 0.0
        %v4170 = vmax.f32 %v3262, 0.0
        %v4171 = vmax.f32 %v3264, 0.0
        %v4172 = vmax.f32 %v4034, 0.0
        %v4173 = vmax.f32 %v4036, 0.0
        %v4174 = vmax.f32 %v3266, 0.0
        %v4175 = vmax.f32 %v3268, 0.0
        %v4176 = vmax.f32 %v4038, 0.0
        %v4177 = vmax.f32 %v4040, 0.0
        %v4178 = vmax.f32 %v3272, 0.0
        %v4179 = vmax.f32 %v3274, 0.0
        %v4180 = vmax.f32 %v4044, 0.0
        %v4181 = vmax.f32 %v4046, 0.0
        %v4182 = vmax.f32 %v3276, 0.0
        %v4183 = vmax.f32 %v3278, 0.0
        %v4184 = vmax.f32 %v4048, 0.0
        %v4185 = vmax.f32 %v4050, 0.0
        %v4186 = vmax.f32 %v3282, 0.0
        %v4187 = vmax.f32 %v3284, 0.0
        %v4188 = vmax.f32 %v4054, 0.0
        %v4189 = vmax.f32 %v4056, 0.0
        %v4190 = vmax.f32 %v3286, 0.0
        %v4191 = vmax.f32 %v3288, 0.0
        %v4192 = vmax.f32 %v4058, 0.0
        %v4193 = vmax.f32 %v4060, 0.0
        %v4194 = vmax.f32 %v3292, 0.0
        %v4195 = vmax.f32 %v3294, 0.0
        %v4196 = vmax.f32 %v4064, 0.0
        %v4197 = vmax.f32 %v4066, 0.0
        %v4198 = vmax.f32 %v3296, 0.0
        %v4199 = vmax.f32 %v3298, 0.0
        %v4200 = vmax.f32 %v4068, 0.0
        %v4201 = vmax.f32 %v4070, 0.0
        %v4202 = vmax.f32 %v3302, 0.0
        %v4203 = vmax.f32 %v3304, 0.0
        %v4204 = vmax.f32 %v4074, 0.0
        %v4205 = vmax.f32 %v4076, 0.0
        %v4206 = vmax.f32 %v3306, 0.0
        %v4207 = vmax.f32 %v3308, 0.0
        %v4208 = vmax.f32 %v4078, 0.0
        %v4209 = vmax.f32 %v4080, 0.0
        %v4210 = vsel %vm564, 1, 0
        %v4211 = vsel %vm565, 1, 0
        %v4212 = vsel %vm566, 1, 0
        %v4213 = vsel %vm567, 1, 0
        %v4214 = vsel %vm568, 1, 0
        %v4215 = vsel %vm569, 1, 0
        %v4216 = vsel %vm570, 1, 0
        %v4217 = vsel %vm571, 1, 0
        %v4218 = vsel %vm572, 1, 0
        %v4219 = vsel %vm573, 1, 0
        %v4220 = vsel %vm574, 1, 0
        %v4221 = vsel %vm575, 1, 0
        %v4222 = vsel %vm576, 1, 0
        %v4223 = vsel %vm577, 1, 0
        %v4224 = vsel %vm578, 1, 0
        %v4225 = vsel %vm579, 1, 0
        %v4226 = vsel %vm580, 1, 0
        %v4227 = vsel %vm581, 1, 0
        %v4228 = vsel %vm582, 1, 0
        %v4229 = vsel %vm583, 1, 0
        %v4230 = vsel %vm584, 1, 0
        %v4231 = vsel %vm585, 1, 0
        %v4232 = vsel %vm586, 1, 0
        %v4233 = vsel %vm587, 1, 0
        %v4234 = vsel %vm588, 1, 0
        %v4235 = vsel %vm589, 1, 0
        %v4236 = vsel %vm590, 1, 0
        %v4237 = vsel %vm591, 1, 0
        %v4238 = vsel %vm592, 1, 0
        %v4239 = vsel %vm593, 1, 0
        %v4240 = vsel %vm594, 1, 0
        %v4241 = vsel %vm595, 1, 0
        %vm4242 = vcmp.eq.s32.totalorder %v4210, 1
        %vm4243 = vcmp.eq.s32.totalorder %v4211, 1
        %vm4244 = vcmp.eq.s32.totalorder %v4212, 1
        %vm4245 = vcmp.eq.s32.totalorder %v4213, 1
        %vm4246 = vcmp.eq.s32.totalorder %v4214, 1
        %vm4247 = vcmp.eq.s32.totalorder %v4215, 1
        %vm4248 = vcmp.eq.s32.totalorder %v4216, 1
        %vm4249 = vcmp.eq.s32.totalorder %v4217, 1
        %vm4250 = vcmp.eq.s32.totalorder %v4218, 1
        %vm4251 = vcmp.eq.s32.totalorder %v4219, 1
        %vm4252 = vcmp.eq.s32.totalorder %v4220, 1
        %vm4253 = vcmp.eq.s32.totalorder %v4221, 1
        %vm4254 = vcmp.eq.s32.totalorder %v4222, 1
        %vm4255 = vcmp.eq.s32.totalorder %v4223, 1
        %vm4256 = vcmp.eq.s32.totalorder %v4224, 1
        %vm4257 = vcmp.eq.s32.totalorder %v4225, 1
        %vm4258 = vcmp.eq.s32.totalorder %v4226, 1
        %vm4259 = vcmp.eq.s32.totalorder %v4227, 1
        %vm4260 = vcmp.eq.s32.totalorder %v4228, 1
        %vm4261 = vcmp.eq.s32.totalorder %v4229, 1
        %vm4262 = vcmp.eq.s32.totalorder %v4230, 1
        %vm4263 = vcmp.eq.s32.totalorder %v4231, 1
        %vm4264 = vcmp.eq.s32.totalorder %v4232, 1
        %vm4265 = vcmp.eq.s32.totalorder %v4233, 1
        %vm4266 = vcmp.eq.s32.totalorder %v4234, 1
        %vm4267 = vcmp.eq.s32.totalorder %v4235, 1
        %vm4268 = vcmp.eq.s32.totalorder %v4236, 1
        %vm4269 = vcmp.eq.s32.totalorder %v4237, 1
        %vm4270 = vcmp.eq.s32.totalorder %v4238, 1
        %vm4271 = vcmp.eq.s32.totalorder %v4239, 1
        %vm4272 = vcmp.eq.s32.totalorder %v4240, 1
        %vm4273 = vcmp.eq.s32.totalorder %v4241, 1
        %v4274 = vsel %vm4242, %v4082, 0.0
        %v4275 = vsel %vm4242, %v4083, 0.0
        %v4276 = vsel %vm4242, %v4084, 0.0
        %v4277 = vsel %vm4242, %v4085, 0.0
        %v4278 = vsel %vm4243, %v4086, 0.0
        %v4279 = vsel %vm4243, %v4087, 0.0
        %v4280 = vsel %vm4243, %v4088, 0.0
        %v4281 = vsel %vm4243, %v4089, 0.0
        %v4282 = vsel %vm4244, %v4090, 0.0
        %v4283 = vsel %vm4244, %v4091, 0.0
        %v4284 = vsel %vm4244, %v4092, 0.0
        %v4285 = vsel %vm4244, %v4093, 0.0
        %v4286 = vsel %vm4245, %v4094, 0.0
        %v4287 = vsel %vm4245, %v4095, 0.0
        %v4288 = vsel %vm4245, %v4096, 0.0
        %v4289 = vsel %vm4245, %v4097, 0.0
        %v4290 = vsel %vm4246, %v4098, 0.0
        %v4291 = vsel %vm4246, %v4099, 0.0
        %v4292 = vsel %vm4246, %v4100, 0.0
        %v4293 = vsel %vm4246, %v4101, 0.0
        %v4294 = vsel %vm4247, %v4102, 0.0
        %v4295 = vsel %vm4247, %v4103, 0.0
        %v4296 = vsel %vm4247, %v4104, 0.0
        %v4297 = vsel %vm4247, %v4105, 0.0
        %v4298 = vsel %vm4248, %v4106, 0.0
        %v4299 = vsel %vm4248, %v4107, 0.0
        %v4300 = vsel %vm4248, %v4108, 0.0
        %v4301 = vsel %vm4248, %v4109, 0.0
        %v4302 = vsel %vm4249, %v4110, 0.0
        %v4303 = vsel %vm4249, %v4111, 0.0
        %v4304 = vsel %vm4249, %v4112, 0.0
        %v4305 = vsel %vm4249, %v4113, 0.0
        %v4306 = vsel %vm4250, %v4114, 0.0
        %v4307 = vsel %vm4250, %v4115, 0.0
        %v4308 = vsel %vm4250, %v4116, 0.0
        %v4309 = vsel %vm4250, %v4117, 0.0
        %v4310 = vsel %vm4251, %v4118, 0.0
        %v4311 = vsel %vm4251, %v4119, 0.0
        %v4312 = vsel %vm4251, %v4120, 0.0
        %v4313 = vsel %vm4251, %v4121, 0.0
        %v4314 = vsel %vm4252, %v4122, 0.0
        %v4315 = vsel %vm4252, %v4123, 0.0
        %v4316 = vsel %vm4252, %v4124, 0.0
        %v4317 = vsel %vm4252, %v4125, 0.0
        %v4318 = vsel %vm4253, %v4126, 0.0
        %v4319 = vsel %vm4253, %v4127, 0.0
        %v4320 = vsel %vm4253, %v4128, 0.0
        %v4321 = vsel %vm4253, %v4129, 0.0
        %v4322 = vsel %vm4254, %v4130, 0.0
        %v4323 = vsel %vm4254, %v4131, 0.0
        %v4324 = vsel %vm4254, %v4132, 0.0
        %v4325 = vsel %vm4254, %v4133, 0.0
        %v4326 = vsel %vm4255, %v4134, 0.0
        %v4327 = vsel %vm4255, %v4135, 0.0
        %v4328 = vsel %vm4255, %v4136, 0.0
        %v4329 = vsel %vm4255, %v4137, 0.0
        %v4330 = vsel %vm4256, %v4138, 0.0
        %v4331 = vsel %vm4256, %v4139, 0.0
        %v4332 = vsel %vm4256, %v4140, 0.0
        %v4333 = vsel %vm4256, %v4141, 0.0
        %v4334 = vsel %vm4257, %v4142, 0.0
        %v4335 = vsel %vm4257, %v4143, 0.0
        %v4336 = vsel %vm4257, %v4144, 0.0
        %v4337 = vsel %vm4257, %v4145, 0.0
        %v4338 = vsel %vm4258, %v4146, 0.0
        %v4339 = vsel %vm4258, %v4147, 0.0
        %v4340 = vsel %vm4258, %v4148, 0.0
        %v4341 = vsel %vm4258, %v4149, 0.0
        %v4342 = vsel %vm4259, %v4150, 0.0
        %v4343 = vsel %vm4259, %v4151, 0.0
        %v4344 = vsel %vm4259, %v4152, 0.0
        %v4345 = vsel %vm4259, %v4153, 0.0
        %v4346 = vsel %vm4260, %v4154, 0.0
        %v4347 = vsel %vm4260, %v4155, 0.0
        %v4348 = vsel %vm4260, %v4156, 0.0
        %v4349 = vsel %vm4260, %v4157, 0.0
        %v4350 = vsel %vm4261, %v4158, 0.0
        %v4351 = vsel %vm4261, %v4159, 0.0
        %v4352 = vsel %vm4261, %v4160, 0.0
        %v4353 = vsel %vm4261, %v4161, 0.0
        %v4354 = vsel %vm4262, %v4162, 0.0
        %v4355 = vsel %vm4262, %v4163, 0.0
        %v4356 = vsel %vm4262, %v4164, 0.0
        %v4357 = vsel %vm4262, %v4165, 0.0
        %v4358 = vsel %vm4263, %v4166, 0.0
        %v4359 = vsel %vm4263, %v4167, 0.0
        %v4360 = vsel %vm4263, %v4168, 0.0
        %v4361 = vsel %vm4263, %v4169, 0.0
        %v4362 = vsel %vm4264, %v4170, 0.0
        %v4363 = vsel %vm4264, %v4171, 0.0
        %v4364 = vsel %vm4264, %v4172, 0.0
        %v4365 = vsel %vm4264, %v4173, 0.0
        %v4366 = vsel %vm4265, %v4174, 0.0
        %v4367 = vsel %vm4265, %v4175, 0.0
        %v4368 = vsel %vm4265, %v4176, 0.0
        %v4369 = vsel %vm4265, %v4177, 0.0
        %v4370 = vsel %vm4266, %v4178, 0.0
        %v4371 = vsel %vm4266, %v4179, 0.0
        %v4372 = vsel %vm4266, %v4180, 0.0
        %v4373 = vsel %vm4266, %v4181, 0.0
        %v4374 = vsel %vm4267, %v4182, 0.0
        %v4375 = vsel %vm4267, %v4183, 0.0
        %v4376 = vsel %vm4267, %v4184, 0.0
        %v4377 = vsel %vm4267, %v4185, 0.0
        %v4378 = vsel %vm4268, %v4186, 0.0
        %v4379 = vsel %vm4268, %v4187, 0.0
        %v4380 = vsel %vm4268, %v4188, 0.0
        %v4381 = vsel %vm4268, %v4189, 0.0
        %v4382 = vsel %vm4269, %v4190, 0.0
        %v4383 = vsel %vm4269, %v4191, 0.0
        %v4384 = vsel %vm4269, %v4192, 0.0
        %v4385 = vsel %vm4269, %v4193, 0.0
        %v4386 = vsel %vm4270, %v4194, 0.0
        %v4387 = vsel %vm4270, %v4195, 0.0
        %v4388 = vsel %vm4270, %v4196, 0.0
        %v4389 = vsel %vm4270, %v4197, 0.0
        %v4390 = vsel %vm4271, %v4198, 0.0
        %v4391 = vsel %vm4271, %v4199, 0.0
        %v4392 = vsel %vm4271, %v4200, 0.0
        %v4393 = vsel %vm4271, %v4201, 0.0
        %v4394 = vsel %vm4272, %v4202, 0.0
        %v4395 = vsel %vm4272, %v4203, 0.0
        %v4396 = vsel %vm4272, %v4204, 0.0
        %v4397 = vsel %vm4272, %v4205, 0.0
        %v4398 = vsel %vm4273, %v4206, 0.0
        %v4399 = vsel %vm4273, %v4207, 0.0
        %v4400 = vsel %vm4273, %v4208, 0.0
        %v4401 = vsel %vm4273, %v4209, 0.0
        %v4402 = vpack.c.bf16 %v4278, %v4274
        %v4403 = vpack.c.bf16 %v4279, %v4275
        %v4404 = vpack.c.bf16 %v4280, %v4276
        %v4405 = vpack.c.bf16 %v4281, %v4277
        %v4406 = vpack.c.bf16 %v4286, %v4282
        %v4407 = vpack.c.bf16 %v4287, %v4283
        %v4408 = vpack.c.bf16 %v4288, %v4284
        %v4409 = vpack.c.bf16 %v4289, %v4285
        %v4410 = vpack.c.bf16 %v4294, %v4290
        %v4411 = vpack.c.bf16 %v4295, %v4291
        %v4412 = vpack.c.bf16 %v4296, %v4292
        %v4413 = vpack.c.bf16 %v4297, %v4293
        %v4414 = vpack.c.bf16 %v4302, %v4298
        %v4415 = vpack.c.bf16 %v4303, %v4299
        %v4416 = vpack.c.bf16 %v4304, %v4300
        %v4417 = vpack.c.bf16 %v4305, %v4301
        %v4418 = vpack.c.bf16 %v4310, %v4306
        %v4419 = vpack.c.bf16 %v4311, %v4307
        %v4420 = vpack.c.bf16 %v4312, %v4308
        %v4421 = vpack.c.bf16 %v4313, %v4309
        %v4422 = vpack.c.bf16 %v4318, %v4314
        %v4423 = vpack.c.bf16 %v4319, %v4315
        %v4424 = vpack.c.bf16 %v4320, %v4316
        %v4425 = vpack.c.bf16 %v4321, %v4317
        %v4426 = vpack.c.bf16 %v4326, %v4322
        %v4427 = vpack.c.bf16 %v4327, %v4323
        %v4428 = vpack.c.bf16 %v4328, %v4324
        %v4429 = vpack.c.bf16 %v4329, %v4325
        %v4430 = vpack.c.bf16 %v4334, %v4330
        %v4431 = vpack.c.bf16 %v4335, %v4331
        %v4432 = vpack.c.bf16 %v4336, %v4332
        %v4433 = vpack.c.bf16 %v4337, %v4333
        %v4434 = vpack.c.bf16 %v4342, %v4338
        %v4435 = vpack.c.bf16 %v4343, %v4339
        %v4436 = vpack.c.bf16 %v4344, %v4340
        %v4437 = vpack.c.bf16 %v4345, %v4341
        %v4438 = vpack.c.bf16 %v4350, %v4346
        %v4439 = vpack.c.bf16 %v4351, %v4347
        %v4440 = vpack.c.bf16 %v4352, %v4348
        %v4441 = vpack.c.bf16 %v4353, %v4349
        %v4442 = vpack.c.bf16 %v4358, %v4354
        %v4443 = vpack.c.bf16 %v4359, %v4355
        %v4444 = vpack.c.bf16 %v4360, %v4356
        %v4445 = vpack.c.bf16 %v4361, %v4357
        %v4446 = vpack.c.bf16 %v4366, %v4362
        %v4447 = vpack.c.bf16 %v4367, %v4363
        %v4448 = vpack.c.bf16 %v4368, %v4364
        %v4449 = vpack.c.bf16 %v4369, %v4365
        %v4450 = vpack.c.bf16 %v4374, %v4370
        %v4451 = vpack.c.bf16 %v4375, %v4371
        %v4452 = vpack.c.bf16 %v4376, %v4372
        %v4453 = vpack.c.bf16 %v4377, %v4373
        %v4454 = vpack.c.bf16 %v4382, %v4378
        %v4455 = vpack.c.bf16 %v4383, %v4379
        %v4456 = vpack.c.bf16 %v4384, %v4380
        %v4457 = vpack.c.bf16 %v4385, %v4381
        %v4458 = vpack.c.bf16 %v4390, %v4386
        %v4459 = vpack.c.bf16 %v4391, %v4387
        %v4460 = vpack.c.bf16 %v4392, %v4388
        %v4461 = vpack.c.bf16 %v4393, %v4389
        %v4462 = vpack.c.bf16 %v4398, %v4394
        %v4463 = vpack.c.bf16 %v4399, %v4395
        %v4464 = vpack.c.bf16 %v4400, %v4396
        %v4465 = vpack.c.bf16 %v4401, %v4397
        %v4466 = vld [vmem:[#allocation13] sm:$0xff]
        %v4467 = vld [vmem:[#allocation13 + $0x8] sm:$0xff]
        %v4468 = vld [vmem:[#allocation13 + $0x10] sm:$0xff]
        %v4469 = vld [vmem:[#allocation13 + $0x18] sm:$0xff]
        %v4470 = vld [vmem:[#allocation13 + $0x20] sm:$0xff]
        %v4471 = vld [vmem:[#allocation13 + $0x28] sm:$0xff]
        %v4472 = vld [vmem:[#allocation13 + $0x30] sm:$0xff]
        %v4473 = vld [vmem:[#allocation13 + $0x38] sm:$0xff]
        %v4474 = vld [vmem:[#allocation13 + $0x40] sm:$0xff]
        %v4475 = vld [vmem:[#allocation13 + $0x48] sm:$0xff]
        %v4476 = vld [vmem:[#allocation13 + $0x50] sm:$0xff]
        %v4477 = vld [vmem:[#allocation13 + $0x58] sm:$0xff]
        %v4478 = vld [vmem:[#allocation13 + $0x60] sm:$0xff]
        %v4479 = vld [vmem:[#allocation13 + $0x68] sm:$0xff]
        %v4480 = vld [vmem:[#allocation13 + $0x70] sm:$0xff]
        %v4481 = vld [vmem:[#allocation13 + $0x78] sm:$0xff]
        %v4482 = vld [vmem:[#allocation13 + $0x80] sm:$0xff]
        %v4483 = vld [vmem:[#allocation13 + $0x88] sm:$0xff]
        %v4484 = vld [vmem:[#allocation13 + $0x90] sm:$0xff]
        %v4485 = vld [vmem:[#allocation13 + $0x98] sm:$0xff]
        %v4486 = vld [vmem:[#allocation13 + $0xa0] sm:$0xff]
        %v4487 = vld [vmem:[#allocation13 + $0xa8] sm:$0xff]
        %v4488 = vld [vmem:[#allocation13 + $0xb0] sm:$0xff]
        %v4489 = vld [vmem:[#allocation13 + $0xb8] sm:$0xff]
        %v4490 = vld [vmem:[#allocation13 + $0xc0] sm:$0xff]
        %v4491 = vld [vmem:[#allocation13 + $0xc8] sm:$0xff]
        %v4492 = vld [vmem:[#allocation13 + $0xd0] sm:$0xff]
        %v4493 = vld [vmem:[#allocation13 + $0xd8] sm:$0xff]
        %v4494 = vld [vmem:[#allocation13 + $0xe0] sm:$0xff]
        %v4495 = vld [vmem:[#allocation13 + $0xe8] sm:$0xff]
        %v4496 = vld [vmem:[#allocation13 + $0xf0] sm:$0xff]
        %v4497 = vld [vmem:[#allocation13 + $0xf8] sm:$0xff]
        %v4498 = vld [vmem:[#allocation13 + $0x100] sm:$0xff]
        %v4499 = vld [vmem:[#allocation13 + $0x108] sm:$0xff]
        %v4500 = vld [vmem:[#allocation13 + $0x110] sm:$0xff]
        %v4501 = vld [vmem:[#allocation13 + $0x118] sm:$0xff]
        %v4502 = vld [vmem:[#allocation13 + $0x120] sm:$0xff]
        %v4503 = vld [vmem:[#allocation13 + $0x128] sm:$0xff]
        %v4504 = vld [vmem:[#allocation13 + $0x130] sm:$0xff]
        %v4505 = vld [vmem:[#allocation13 + $0x138] sm:$0xff]
        %v4506 = vld [vmem:[#allocation13 + $0x140] sm:$0xff]
        %v4507 = vld [vmem:[#allocation13 + $0x148] sm:$0xff]
        %v4508 = vld [vmem:[#allocation13 + $0x150] sm:$0xff]
        %v4509 = vld [vmem:[#allocation13 + $0x158] sm:$0xff]
        %v4510 = vld [vmem:[#allocation13 + $0x160] sm:$0xff]
        %v4511 = vld [vmem:[#allocation13 + $0x168] sm:$0xff]
        %v4512 = vld [vmem:[#allocation13 + $0x170] sm:$0xff]
        %v4513 = vld [vmem:[#allocation13 + $0x178] sm:$0xff]
        %v4514 = vld [vmem:[#allocation13 + $0x180] sm:$0xff]
        %v4515 = vld [vmem:[#allocation13 + $0x188] sm:$0xff]
        %v4516 = vld [vmem:[#allocation13 + $0x190] sm:$0xff]
        %v4517 = vld [vmem:[#allocation13 + $0x198] sm:$0xff]
        %v4518 = vld [vmem:[#allocation13 + $0x1a0] sm:$0xff]
        %v4519 = vld [vmem:[#allocation13 + $0x1a8] sm:$0xff]
        %v4520 = vld [vmem:[#allocation13 + $0x1b0] sm:$0xff]
        %v4521 = vld [vmem:[#allocation13 + $0x1b8] sm:$0xff]
        %v4522 = vld [vmem:[#allocation13 + $0x1c0] sm:$0xff]
        %v4523 = vld [vmem:[#allocation13 + $0x1c8] sm:$0xff]
        %v4524 = vld [vmem:[#allocation13 + $0x1d0] sm:$0xff]
        %v4525 = vld [vmem:[#allocation13 + $0x1d8] sm:$0xff]
        %v4526 = vld [vmem:[#allocation13 + $0x1e0] sm:$0xff]
        %v4527 = vld [vmem:[#allocation13 + $0x1e8] sm:$0xff]
        %v4528 = vld [vmem:[#allocation13 + $0x1f0] sm:$0xff]
        %v4529 = vld [vmem:[#allocation13 + $0x1f8] sm:$0xff]
        %v4530 = vld [vmem:[#allocation13 + $0x200] sm:$0xff]
        %v4531 = vld [vmem:[#allocation13 + $0x208] sm:$0xff]
        %v4532 = vld [vmem:[#allocation13 + $0x210] sm:$0xff]
        %v4533 = vld [vmem:[#allocation13 + $0x218] sm:$0xff]
        %v4534 = vld [vmem:[#allocation13 + $0x220] sm:$0xff]
        %v4535 = vld [vmem:[#allocation13 + $0x228] sm:$0xff]
        %v4536 = vld [vmem:[#allocation13 + $0x230] sm:$0xff]
        %v4537 = vld [vmem:[#allocation13 + $0x238] sm:$0xff]
        %v4538 = vld [vmem:[#allocation13 + $0x240] sm:$0xff]
        %v4539 = vld [vmem:[#allocation13 + $0x248] sm:$0xff]
        %v4540 = vld [vmem:[#allocation13 + $0x250] sm:$0xff]
        %v4541 = vld [vmem:[#allocation13 + $0x258] sm:$0xff]
        %v4542 = vld [vmem:[#allocation13 + $0x260] sm:$0xff]
        %v4543 = vld [vmem:[#allocation13 + $0x268] sm:$0xff]
        %v4544 = vld [vmem:[#allocation13 + $0x270] sm:$0xff]
        %v4545 = vld [vmem:[#allocation13 + $0x278] sm:$0xff]
        %v4546 = vld [vmem:[#allocation13 + $0x280] sm:$0xff]
        %v4547 = vld [vmem:[#allocation13 + $0x288] sm:$0xff]
        %v4548 = vld [vmem:[#allocation13 + $0x290] sm:$0xff]
        %v4549 = vld [vmem:[#allocation13 + $0x298] sm:$0xff]
        %v4550 = vld [vmem:[#allocation13 + $0x2a0] sm:$0xff]
        %v4551 = vld [vmem:[#allocation13 + $0x2a8] sm:$0xff]
        %v4552 = vld [vmem:[#allocation13 + $0x2b0] sm:$0xff]
        %v4553 = vld [vmem:[#allocation13 + $0x2b8] sm:$0xff]
        %v4554 = vld [vmem:[#allocation13 + $0x2c0] sm:$0xff]
        %v4555 = vld [vmem:[#allocation13 + $0x2c8] sm:$0xff]
        %v4556 = vld [vmem:[#allocation13 + $0x2d0] sm:$0xff]
        %v4557 = vld [vmem:[#allocation13 + $0x2d8] sm:$0xff]
        %v4558 = vld [vmem:[#allocation13 + $0x2e0] sm:$0xff]
        %v4559 = vld [vmem:[#allocation13 + $0x2e8] sm:$0xff]
        %v4560 = vld [vmem:[#allocation13 + $0x2f0] sm:$0xff]
        %v4561 = vld [vmem:[#allocation13 + $0x2f8] sm:$0xff]
        %v4562 = vld [vmem:[#allocation13 + $0x300] sm:$0xff]
        %v4563 = vld [vmem:[#allocation13 + $0x308] sm:$0xff]
        %v4564 = vld [vmem:[#allocation13 + $0x310] sm:$0xff]
        %v4565 = vld [vmem:[#allocation13 + $0x318] sm:$0xff]
        %v4566 = vld [vmem:[#allocation13 + $0x320] sm:$0xff]
        %v4567 = vld [vmem:[#allocation13 + $0x328] sm:$0xff]
        %v4568 = vld [vmem:[#allocation13 + $0x330] sm:$0xff]
        %v4569 = vld [vmem:[#allocation13 + $0x338] sm:$0xff]
        %v4570 = vld [vmem:[#allocation13 + $0x340] sm:$0xff]
        %v4571 = vld [vmem:[#allocation13 + $0x348] sm:$0xff]
        %v4572 = vld [vmem:[#allocation13 + $0x350] sm:$0xff]
        %v4573 = vld [vmem:[#allocation13 + $0x358] sm:$0xff]
        %v4574 = vld [vmem:[#allocation13 + $0x360] sm:$0xff]
        %v4575 = vld [vmem:[#allocation13 + $0x368] sm:$0xff]
        %v4576 = vld [vmem:[#allocation13 + $0x370] sm:$0xff]
        %v4577 = vld [vmem:[#allocation13 + $0x378] sm:$0xff]
        %v4578 = vld [vmem:[#allocation13 + $0x380] sm:$0xff]
        %v4579 = vld [vmem:[#allocation13 + $0x388] sm:$0xff]
        %v4580 = vld [vmem:[#allocation13 + $0x390] sm:$0xff]
        %v4581 = vld [vmem:[#allocation13 + $0x398] sm:$0xff]
        %v4582 = vld [vmem:[#allocation13 + $0x3a0] sm:$0xff]
        %v4583 = vld [vmem:[#allocation13 + $0x3a8] sm:$0xff]
        %v4584 = vld [vmem:[#allocation13 + $0x3b0] sm:$0xff]
        %v4585 = vld [vmem:[#allocation13 + $0x3b8] sm:$0xff]
        %v4586 = vld [vmem:[#allocation13 + $0x3c0] sm:$0xff]
        %v4587 = vld [vmem:[#allocation13 + $0x3c8] sm:$0xff]
        %v4588 = vld [vmem:[#allocation13 + $0x3d0] sm:$0xff]
        %v4589 = vld [vmem:[#allocation13 + $0x3d8] sm:$0xff]
        %v4590 = vld [vmem:[#allocation13 + $0x3e0] sm:$0xff]
        %v4591 = vld [vmem:[#allocation13 + $0x3e8] sm:$0xff]
        %v4592 = vld [vmem:[#allocation13 + $0x3f0] sm:$0xff]
        %v4593 = vld [vmem:[#allocation13 + $0x3f8] sm:$0xff]
        %v4594 = vld [vmem:[#allocation15] sm:$0xf]
        %v4596 = vlaneseq
        %v4597 = vshrl.u32 %v4596, 7
        %v4598 = vsub.s32 0, %v4597
        %v4599 = vrot.slane %v4594, %v4598
        %v4600 = vlaneseq
        %v4601 = vshrl.u32 %v4600, 7
        %v4602 = vsub.s32 1, %v4601
        %v4603 = vrot.slane %v4594, %v4602
        %v4604 = vlaneseq
        %v4605 = vshrl.u32 %v4604, 7
        %v4606 = vsub.s32 2, %v4605
        %v4607 = vrot.slane %v4594, %v4606
        %v4608 = vlaneseq
        %v4609 = vshrl.u32 %v4608, 7
        %v4610 = vsub.s32 3, %v4609
        %v4611 = vrot.slane %v4594, %v4610
        %v4744 = vunpack.c.l.b16 %v4466
        %v4745 = vunpack.c.h.b16 %v4466
        %v4746 = vunpack.c.l.b16 %v4467
        %v4747 = vunpack.c.h.b16 %v4467
        %v4748 = vunpack.c.l.b16 %v4468
        %v4749 = vunpack.c.h.b16 %v4468
        %v4750 = vunpack.c.l.b16 %v4469
        %v4751 = vunpack.c.h.b16 %v4469
        %v4752 = vunpack.c.l.b16 %v4470
        %v4753 = vunpack.c.h.b16 %v4470
        %v4754 = vunpack.c.l.b16 %v4471
        %v4755 = vunpack.c.h.b16 %v4471
        %v4756 = vunpack.c.l.b16 %v4472
        %v4757 = vunpack.c.h.b16 %v4472
        %v4758 = vunpack.c.l.b16 %v4473
        %v4759 = vunpack.c.h.b16 %v4473
        %v4760 = vunpack.c.l.b16 %v4474
        %v4761 = vunpack.c.h.b16 %v4474
        %v4762 = vunpack.c.l.b16 %v4475
        %v4763 = vunpack.c.h.b16 %v4475
        %v4764 = vunpack.c.l.b16 %v4476
        %v4765 = vunpack.c.h.b16 %v4476
        %v4766 = vunpack.c.l.b16 %v4477
        %v4767 = vunpack.c.h.b16 %v4477
        %v4768 = vunpack.c.l.b16 %v4478
        %v4769 = vunpack.c.h.b16 %v4478
        %v4770 = vunpack.c.l.b16 %v4479
        %v4771 = vunpack.c.h.b16 %v4479
        %v4772 = vunpack.c.l.b16 %v4480
        %v4773 = vunpack.c.h.b16 %v4480
        %v4774 = vunpack.c.l.b16 %v4481
        %v4775 = vunpack.c.h.b16 %v4481
        %v4776 = vunpack.c.l.b16 %v4482
        %v4777 = vunpack.c.h.b16 %v4482
        %v4778 = vunpack.c.l.b16 %v4483
        %v4779 = vunpack.c.h.b16 %v4483
        %v4780 = vunpack.c.l.b16 %v4484
        %v4781 = vunpack.c.h.b16 %v4484
        %v4782 = vunpack.c.l.b16 %v4485
        %v4783 = vunpack.c.h.b16 %v4485
        %v4784 = vunpack.c.l.b16 %v4486
        %v4785 = vunpack.c.h.b16 %v4486
        %v4786 = vunpack.c.l.b16 %v4487
        %v4787 = vunpack.c.h.b16 %v4487
        %v4788 = vunpack.c.l.b16 %v4488
        %v4789 = vunpack.c.h.b16 %v4488
        %v4790 = vunpack.c.l.b16 %v4489
        %v4791 = vunpack.c.h.b16 %v4489
        %v4792 = vunpack.c.l.b16 %v4490
        %v4793 = vunpack.c.h.b16 %v4490
        %v4794 = vunpack.c.l.b16 %v4491
        %v4795 = vunpack.c.h.b16 %v4491
        %v4796 = vunpack.c.l.b16 %v4492
        %v4797 = vunpack.c.h.b16 %v4492
        %v4798 = vunpack.c.l.b16 %v4493
        %v4799 = vunpack.c.h.b16 %v4493
        %v4800 = vunpack.c.l.b16 %v4494
        %v4801 = vunpack.c.h.b16 %v4494
        %v4802 = vunpack.c.l.b16 %v4495
        %v4803 = vunpack.c.h.b16 %v4495
        %v4804 = vunpack.c.l.b16 %v4496
        %v4805 = vunpack.c.h.b16 %v4496
        %v4806 = vunpack.c.l.b16 %v4497
        %v4807 = vunpack.c.h.b16 %v4497
        %v4808 = vunpack.c.l.b16 %v4498
        %v4809 = vunpack.c.h.b16 %v4498
        %v4810 = vunpack.c.l.b16 %v4499
        %v4811 = vunpack.c.h.b16 %v4499
        %v4812 = vunpack.c.l.b16 %v4500
        %v4813 = vunpack.c.h.b16 %v4500
        %v4814 = vunpack.c.l.b16 %v4501
        %v4815 = vunpack.c.h.b16 %v4501
        %v4816 = vunpack.c.l.b16 %v4502
        %v4817 = vunpack.c.h.b16 %v4502
        %v4818 = vunpack.c.l.b16 %v4503
        %v4819 = vunpack.c.h.b16 %v4503
        %v4820 = vunpack.c.l.b16 %v4504
        %v4821 = vunpack.c.h.b16 %v4504
        %v4822 = vunpack.c.l.b16 %v4505
        %v4823 = vunpack.c.h.b16 %v4505
        %v4824 = vunpack.c.l.b16 %v4506
        %v4825 = vunpack.c.h.b16 %v4506
        %v4826 = vunpack.c.l.b16 %v4507
        %v4827 = vunpack.c.h.b16 %v4507
        %v4828 = vunpack.c.l.b16 %v4508
        %v4829 = vunpack.c.h.b16 %v4508
        %v4830 = vunpack.c.l.b16 %v4509
        %v4831 = vunpack.c.h.b16 %v4509
        %v4832 = vunpack.c.l.b16 %v4510
        %v4833 = vunpack.c.h.b16 %v4510
        %v4834 = vunpack.c.l.b16 %v4511
        %v4835 = vunpack.c.h.b16 %v4511
        %v4836 = vunpack.c.l.b16 %v4512
        %v4837 = vunpack.c.h.b16 %v4512
        %v4838 = vunpack.c.l.b16 %v4513
        %v4839 = vunpack.c.h.b16 %v4513
        %v4840 = vunpack.c.l.b16 %v4514
        %v4841 = vunpack.c.h.b16 %v4514
        %v4842 = vunpack.c.l.b16 %v4515
        %v4843 = vunpack.c.h.b16 %v4515
        %v4844 = vunpack.c.l.b16 %v4516
        %v4845 = vunpack.c.h.b16 %v4516
        %v4846 = vunpack.c.l.b16 %v4517
        %v4847 = vunpack.c.h.b16 %v4517
        %v4848 = vunpack.c.l.b16 %v4518
        %v4849 = vunpack.c.h.b16 %v4518
        %v4850 = vunpack.c.l.b16 %v4519
        %v4851 = vunpack.c.h.b16 %v4519
        %v4852 = vunpack.c.l.b16 %v4520
        %v4853 = vunpack.c.h.b16 %v4520
        %v4854 = vunpack.c.l.b16 %v4521
        %v4855 = vunpack.c.h.b16 %v4521
        %v4856 = vunpack.c.l.b16 %v4522
        %v4857 = vunpack.c.h.b16 %v4522
        %v4858 = vunpack.c.l.b16 %v4523
        %v4859 = vunpack.c.h.b16 %v4523
        %v4860 = vunpack.c.l.b16 %v4524
        %v4861 = vunpack.c.h.b16 %v4524
        %v4862 = vunpack.c.l.b16 %v4525
        %v4863 = vunpack.c.h.b16 %v4525
        %v4864 = vunpack.c.l.b16 %v4526
        %v4865 = vunpack.c.h.b16 %v4526
        %v4866 = vunpack.c.l.b16 %v4527
        %v4867 = vunpack.c.h.b16 %v4527
        %v4868 = vunpack.c.l.b16 %v4528
        %v4869 = vunpack.c.h.b16 %v4528
        %v4870 = vunpack.c.l.b16 %v4529
        %v4871 = vunpack.c.h.b16 %v4529
        %v4872 = vunpack.c.l.b16 %v4530
        %v4873 = vunpack.c.h.b16 %v4530
        %v4874 = vunpack.c.l.b16 %v4531
        %v4875 = vunpack.c.h.b16 %v4531
        %v4876 = vunpack.c.l.b16 %v4532
        %v4877 = vunpack.c.h.b16 %v4532
        %v4878 = vunpack.c.l.b16 %v4533
        %v4879 = vunpack.c.h.b16 %v4533
        %v4880 = vunpack.c.l.b16 %v4534
        %v4881 = vunpack.c.h.b16 %v4534
        %v4882 = vunpack.c.l.b16 %v4535
        %v4883 = vunpack.c.h.b16 %v4535
        %v4884 = vunpack.c.l.b16 %v4536
        %v4885 = vunpack.c.h.b16 %v4536
        %v4886 = vunpack.c.l.b16 %v4537
        %v4887 = vunpack.c.h.b16 %v4537
        %v4888 = vunpack.c.l.b16 %v4538
        %v4889 = vunpack.c.h.b16 %v4538
        %v4890 = vunpack.c.l.b16 %v4539
        %v4891 = vunpack.c.h.b16 %v4539
        %v4892 = vunpack.c.l.b16 %v4540
        %v4893 = vunpack.c.h.b16 %v4540
        %v4894 = vunpack.c.l.b16 %v4541
        %v4895 = vunpack.c.h.b16 %v4541
        %v4896 = vunpack.c.l.b16 %v4542
        %v4897 = vunpack.c.h.b16 %v4542
        %v4898 = vunpack.c.l.b16 %v4543
        %v4899 = vunpack.c.h.b16 %v4543
        %v4900 = vunpack.c.l.b16 %v4544
        %v4901 = vunpack.c.h.b16 %v4544
        %v4902 = vunpack.c.l.b16 %v4545
        %v4903 = vunpack.c.h.b16 %v4545
        %v4904 = vunpack.c.l.b16 %v4546
        %v4905 = vunpack.c.h.b16 %v4546
        %v4906 = vunpack.c.l.b16 %v4547
        %v4907 = vunpack.c.h.b16 %v4547
        %v4908 = vunpack.c.l.b16 %v4548
        %v4909 = vunpack.c.h.b16 %v4548
        %v4910 = vunpack.c.l.b16 %v4549
        %v4911 = vunpack.c.h.b16 %v4549
        %v4912 = vunpack.c.l.b16 %v4550
        %v4913 = vunpack.c.h.b16 %v4550
        %v4914 = vunpack.c.l.b16 %v4551
        %v4915 = vunpack.c.h.b16 %v4551
        %v4916 = vunpack.c.l.b16 %v4552
        %v4917 = vunpack.c.h.b16 %v4552
        %v4918 = vunpack.c.l.b16 %v4553
        %v4919 = vunpack.c.h.b16 %v4553
        %v4920 = vunpack.c.l.b16 %v4554
        %v4921 = vunpack.c.h.b16 %v4554
        %v4922 = vunpack.c.l.b16 %v4555
        %v4923 = vunpack.c.h.b16 %v4555
        %v4924 = vunpack.c.l.b16 %v4556
        %v4925 = vunpack.c.h.b16 %v4556
        %v4926 = vunpack.c.l.b16 %v4557
        %v4927 = vunpack.c.h.b16 %v4557
        %v4928 = vunpack.c.l.b16 %v4558
        %v4929 = vunpack.c.h.b16 %v4558
        %v4930 = vunpack.c.l.b16 %v4559
        %v4931 = vunpack.c.h.b16 %v4559
        %v4932 = vunpack.c.l.b16 %v4560
        %v4933 = vunpack.c.h.b16 %v4560
        %v4934 = vunpack.c.l.b16 %v4561
        %v4935 = vunpack.c.h.b16 %v4561
        %v4936 = vunpack.c.l.b16 %v4562
        %v4937 = vunpack.c.h.b16 %v4562
        %v4938 = vunpack.c.l.b16 %v4563
        %v4939 = vunpack.c.h.b16 %v4563
        %v4940 = vunpack.c.l.b16 %v4564
        %v4941 = vunpack.c.h.b16 %v4564
        %v4942 = vunpack.c.l.b16 %v4565
        %v4943 = vunpack.c.h.b16 %v4565
        %v4944 = vunpack.c.l.b16 %v4566
        %v4945 = vunpack.c.h.b16 %v4566
        %v4946 = vunpack.c.l.b16 %v4567
        %v4947 = vunpack.c.h.b16 %v4567
        %v4948 = vunpack.c.l.b16 %v4568
        %v4949 = vunpack.c.h.b16 %v4568
        %v4950 = vunpack.c.l.b16 %v4569
        %v4951 = vunpack.c.h.b16 %v4569
        %v4952 = vunpack.c.l.b16 %v4570
        %v4953 = vunpack.c.h.b16 %v4570
        %v4954 = vunpack.c.l.b16 %v4571
        %v4955 = vunpack.c.h.b16 %v4571
        %v4956 = vunpack.c.l.b16 %v4572
        %v4957 = vunpack.c.h.b16 %v4572
        %v4958 = vunpack.c.l.b16 %v4573
        %v4959 = vunpack.c.h.b16 %v4573
        %v4960 = vunpack.c.l.b16 %v4574
        %v4961 = vunpack.c.h.b16 %v4574
        %v4962 = vunpack.c.l.b16 %v4575
        %v4963 = vunpack.c.h.b16 %v4575
        %v4964 = vunpack.c.l.b16 %v4576
        %v4965 = vunpack.c.h.b16 %v4576
        %v4966 = vunpack.c.l.b16 %v4577
        %v4967 = vunpack.c.h.b16 %v4577
        %v4968 = vunpack.c.l.b16 %v4578
        %v4969 = vunpack.c.h.b16 %v4578
        %v4970 = vunpack.c.l.b16 %v4579
        %v4971 = vunpack.c.h.b16 %v4579
        %v4972 = vunpack.c.l.b16 %v4580
        %v4973 = vunpack.c.h.b16 %v4580
        %v4974 = vunpack.c.l.b16 %v4581
        %v4975 = vunpack.c.h.b16 %v4581
        %v4976 = vunpack.c.l.b16 %v4582
        %v4977 = vunpack.c.h.b16 %v4582
        %v4978 = vunpack.c.l.b16 %v4583
        %v4979 = vunpack.c.h.b16 %v4583
        %v4980 = vunpack.c.l.b16 %v4584
        %v4981 = vunpack.c.h.b16 %v4584
        %v4982 = vunpack.c.l.b16 %v4585
        %v4983 = vunpack.c.h.b16 %v4585
        %v4984 = vunpack.c.l.b16 %v4586
        %v4985 = vunpack.c.h.b16 %v4586
        %v4986 = vunpack.c.l.b16 %v4587
        %v4987 = vunpack.c.h.b16 %v4587
        %v4988 = vunpack.c.l.b16 %v4588
        %v4989 = vunpack.c.h.b16 %v4588
        %v4990 = vunpack.c.l.b16 %v4589
        %v4991 = vunpack.c.h.b16 %v4589
        %v4992 = vunpack.c.l.b16 %v4590
        %v4993 = vunpack.c.h.b16 %v4590
        %v4994 = vunpack.c.l.b16 %v4591
        %v4995 = vunpack.c.h.b16 %v4591
        %v4996 = vunpack.c.l.b16 %v4592
        %v4997 = vunpack.c.h.b16 %v4592
        %v4998 = vunpack.c.l.b16 %v4593
        %v4999 = vunpack.c.h.b16 %v4593
        %v5000 = vpack.c.b16 %v4748, %v4744
        %v5001 = vpack.c.b16 %v4749, %v4745
        %v5002 = vpack.c.b16 %v4750, %v4746
        %v5003 = vpack.c.b16 %v4751, %v4747
        %v5004 = vpack.c.b16 %v4756, %v4752
        %v5005 = vpack.c.b16 %v4757, %v4753
        %v5006 = vpack.c.b16 %v4758, %v4754
        %v5007 = vpack.c.b16 %v4759, %v4755
        %v5008 = vpack.c.b16 %v4764, %v4760
        %v5009 = vpack.c.b16 %v4765, %v4761
        %v5010 = vpack.c.b16 %v4766, %v4762
        %v5011 = vpack.c.b16 %v4767, %v4763
        %v5012 = vpack.c.b16 %v4772, %v4768
        %v5013 = vpack.c.b16 %v4773, %v4769
        %v5014 = vpack.c.b16 %v4774, %v4770
        %v5015 = vpack.c.b16 %v4775, %v4771
        %v5016 = vpack.c.b16 %v4780, %v4776
        %v5017 = vpack.c.b16 %v4781, %v4777
        %v5018 = vpack.c.b16 %v4782, %v4778
        %v5019 = vpack.c.b16 %v4783, %v4779
        %v5020 = vpack.c.b16 %v4788, %v4784
        %v5021 = vpack.c.b16 %v4789, %v4785
        %v5022 = vpack.c.b16 %v4790, %v4786
        %v5023 = vpack.c.b16 %v4791, %v4787
        %v5024 = vpack.c.b16 %v4796, %v4792
        %v5025 = vpack.c.b16 %v4797, %v4793
        %v5026 = vpack.c.b16 %v4798, %v4794
        %v5027 = vpack.c.b16 %v4799, %v4795
        %v5028 = vpack.c.b16 %v4804, %v4800
        %v5029 = vpack.c.b16 %v4805, %v4801
        %v5030 = vpack.c.b16 %v4806, %v4802
        %v5031 = vpack.c.b16 %v4807, %v4803
        %v5032 = vpack.c.b16 %v4812, %v4808
        %v5033 = vpack.c.b16 %v4813, %v4809
        %v5034 = vpack.c.b16 %v4814, %v4810
        %v5035 = vpack.c.b16 %v4815, %v4811
        %v5036 = vpack.c.b16 %v4820, %v4816
        %v5037 = vpack.c.b16 %v4821, %v4817
        %v5038 = vpack.c.b16 %v4822, %v4818
        %v5039 = vpack.c.b16 %v4823, %v4819
        %v5040 = vpack.c.b16 %v4828, %v4824
        %v5041 = vpack.c.b16 %v4829, %v4825
        %v5042 = vpack.c.b16 %v4830, %v4826
        %v5043 = vpack.c.b16 %v4831, %v4827
        %v5044 = vpack.c.b16 %v4836, %v4832
        %v5045 = vpack.c.b16 %v4837, %v4833
        %v5046 = vpack.c.b16 %v4838, %v4834
        %v5047 = vpack.c.b16 %v4839, %v4835
        %v5048 = vpack.c.b16 %v4844, %v4840
        %v5049 = vpack.c.b16 %v4845, %v4841
        %v5050 = vpack.c.b16 %v4846, %v4842
        %v5051 = vpack.c.b16 %v4847, %v4843
        %v5052 = vpack.c.b16 %v4852, %v4848
        %v5053 = vpack.c.b16 %v4853, %v4849
        %v5054 = vpack.c.b16 %v4854, %v4850
        %v5055 = vpack.c.b16 %v4855, %v4851
        %v5056 = vpack.c.b16 %v4860, %v4856
        %v5057 = vpack.c.b16 %v4861, %v4857
        %v5058 = vpack.c.b16 %v4862, %v4858
        %v5059 = vpack.c.b16 %v4863, %v4859
        %v5060 = vpack.c.b16 %v4868, %v4864
        %v5061 = vpack.c.b16 %v4869, %v4865
        %v5062 = vpack.c.b16 %v4870, %v4866
        %v5063 = vpack.c.b16 %v4871, %v4867
        %v5064 = vpack.c.b16 %v4876, %v4872
        %v5065 = vpack.c.b16 %v4877, %v4873
        %v5066 = vpack.c.b16 %v4878, %v4874
        %v5067 = vpack.c.b16 %v4879, %v4875
        %v5068 = vpack.c.b16 %v4884, %v4880
        %v5069 = vpack.c.b16 %v4885, %v4881
        %v5070 = vpack.c.b16 %v4886, %v4882
        %v5071 = vpack.c.b16 %v4887, %v4883
        %v5072 = vpack.c.b16 %v4892, %v4888
        %v5073 = vpack.c.b16 %v4893, %v4889
        %v5074 = vpack.c.b16 %v4894, %v4890
        %v5075 = vpack.c.b16 %v4895, %v4891
        %v5076 = vpack.c.b16 %v4900, %v4896
        %v5077 = vpack.c.b16 %v4901, %v4897
        %v5078 = vpack.c.b16 %v4902, %v4898
        %v5079 = vpack.c.b16 %v4903, %v4899
        %v5080 = vpack.c.b16 %v4908, %v4904
        %v5081 = vpack.c.b16 %v4909, %v4905
        %v5082 = vpack.c.b16 %v4910, %v4906
        %v5083 = vpack.c.b16 %v4911, %v4907
        %v5084 = vpack.c.b16 %v4916, %v4912
        %v5085 = vpack.c.b16 %v4917, %v4913
        %v5086 = vpack.c.b16 %v4918, %v4914
        %v5087 = vpack.c.b16 %v4919, %v4915
        %v5088 = vpack.c.b16 %v4924, %v4920
        %v5089 = vpack.c.b16 %v4925, %v4921
        %v5090 = vpack.c.b16 %v4926, %v4922
        %v5091 = vpack.c.b16 %v4927, %v4923
        %v5092 = vpack.c.b16 %v4932, %v4928
        %v5093 = vpack.c.b16 %v4933, %v4929
        %v5094 = vpack.c.b16 %v4934, %v4930
        %v5095 = vpack.c.b16 %v4935, %v4931
        %v5096 = vpack.c.b16 %v4940, %v4936
        %v5097 = vpack.c.b16 %v4941, %v4937
        %v5098 = vpack.c.b16 %v4942, %v4938
        %v5099 = vpack.c.b16 %v4943, %v4939
        %v5100 = vpack.c.b16 %v4948, %v4944
        %v5101 = vpack.c.b16 %v4949, %v4945
        %v5102 = vpack.c.b16 %v4950, %v4946
        %v5103 = vpack.c.b16 %v4951, %v4947
        %v5104 = vpack.c.b16 %v4956, %v4952
        %v5105 = vpack.c.b16 %v4957, %v4953
        %v5106 = vpack.c.b16 %v4958, %v4954
        %v5107 = vpack.c.b16 %v4959, %v4955
        %v5108 = vpack.c.b16 %v4964, %v4960
        %v5109 = vpack.c.b16 %v4965, %v4961
        %v5110 = vpack.c.b16 %v4966, %v4962
        %v5111 = vpack.c.b16 %v4967, %v4963
        %v5112 = vpack.c.b16 %v4972, %v4968
        %v5113 = vpack.c.b16 %v4973, %v4969
        %v5114 = vpack.c.b16 %v4974, %v4970
        %v5115 = vpack.c.b16 %v4975, %v4971
        %v5116 = vpack.c.b16 %v4980, %v4976
        %v5117 = vpack.c.b16 %v4981, %v4977
        %v5118 = vpack.c.b16 %v4982, %v4978
        %v5119 = vpack.c.b16 %v4983, %v4979
        %v5120 = vpack.c.b16 %v4988, %v4984
        %v5121 = vpack.c.b16 %v4989, %v4985
        %v5122 = vpack.c.b16 %v4990, %v4986
        %v5123 = vpack.c.b16 %v4991, %v4987
        %v5124 = vpack.c.b16 %v4996, %v4992
        %v5125 = vpack.c.b16 %v4997, %v4993
        %v5126 = vpack.c.b16 %v4998, %v4994
        %v5127 = vpack.c.b16 %v4999, %v4995
        %5256 = vmatprep.subr.bf16.mxu0 %v5001
        %5257 = vmatpush1.bf16.msra.mxu0 %v5000
        %5258 = vmatprep.subr.bf16.mxu0 %v5005
        %5259 = vmatpush1.bf16.msra.mxu0 %v5004
        %5260 = vmatprep.subr.bf16.mxu0 %v5009
        %5261 = vmatpush1.bf16.msra.mxu0 %v5008
        %5262 = vmatprep.subr.bf16.mxu0 %v5013
        %5263 = vmatpush1.bf16.msra.mxu0 %v5012
        %5264 = vmatprep.subr.bf16.mxu0 %v5017
        %5265 = vmatpush1.bf16.msra.mxu0 %v5016
        %5266 = vmatprep.subr.bf16.mxu0 %v5021
        %5267 = vmatpush1.bf16.msra.mxu0 %v5020
        %5268 = vmatprep.subr.bf16.mxu0 %v5025
        %5269 = vmatpush1.bf16.msra.mxu0 %v5024
        %5270 = vmatprep.subr.bf16.mxu0 %v5029
        %5271 = vmatpush1.bf16.msra.mxu0 %v5028
        %5272 = vmatprep.subr.bf16.mxu0 %v5033
        %5273 = vmatpush1.bf16.msra.mxu0 %v5032
        %5274 = vmatprep.subr.bf16.mxu0 %v5037
        %5275 = vmatpush1.bf16.msra.mxu0 %v5036
        %5276 = vmatprep.subr.bf16.mxu0 %v5041
        %5277 = vmatpush1.bf16.msra.mxu0 %v5040
        %5278 = vmatprep.subr.bf16.mxu0 %v5045
        %5279 = vmatpush1.bf16.msra.mxu0 %v5044
        %5280 = vmatprep.subr.bf16.mxu0 %v5049
        %5281 = vmatpush1.bf16.msra.mxu0 %v5048
        %5282 = vmatprep.subr.bf16.mxu0 %v5053
        %5283 = vmatpush1.bf16.msra.mxu0 %v5052
        %5284 = vmatprep.subr.bf16.mxu0 %v5057
        %5285 = vmatpush1.bf16.msra.mxu0 %v5056
        %5286 = vmatprep.subr.bf16.mxu0 %v5061
        %5287 = vmatpush1.bf16.msra.mxu0 %v5060
        %5288 = vmatprep.mubr.bf16.mxu0 %v4403
        %5289 = vmatmul.mubr.bf16.gmra.mrb[0].mxu0 %v4402
        %v5290 = vpop.f32.mrb[0].mxu0
        %v5291 = vadd.f32 %v4599, %v5290
        %v5292 = vpop.f32.mrb[0].mxu0
        %v5293 = vadd.f32 %v4603, %v5292
        %v5294 = vpop.f32.mrb[0].mxu0
        %v5295 = vadd.f32 %v4599, %v5294
        %v5296 = vpop.f32.mrb[0].mxu0
        %v5297 = vadd.f32 %v4603, %v5296
        %5298 = vmatprep.mubr.bf16.mxu0 %v4407
        %5299 = vmatmul.mubr.bf16.gmra.mrb[0].mxu0 %v4406
        %v5300 = vpop.f32.mrb[0].mxu0
        %v5301 = vadd.f32 %v4599, %v5300
        %v5302 = vpop.f32.mrb[0].mxu0
        %v5303 = vadd.f32 %v4603, %v5302
        %v5304 = vpop.f32.mrb[0].mxu0
        %v5305 = vadd.f32 %v4599, %v5304
        %v5306 = vpop.f32.mrb[0].mxu0
        %v5307 = vadd.f32 %v4603, %v5306
        %5308 = vmatprep.mubr.bf16.mxu0 %v4411
        %5309 = vmatmul.mubr.bf16.gmra.mrb[0].mxu0 %v4410
        %v5310 = vpop.f32.mrb[0].mxu0
        %v5311 = vadd.f32 %v4599, %v5310
        %v5312 = vpop.f32.mrb[0].mxu0
        %v5313 = vadd.f32 %v4603, %v5312
        %v5314 = vpop.f32.mrb[0].mxu0
        %v5315 = vadd.f32 %v4599, %v5314
        %v5316 = vpop.f32.mrb[0].mxu0
        %v5317 = vadd.f32 %v4603, %v5316
        %5318 = vmatprep.mubr.bf16.mxu0 %v4415
        %5319 = vmatmul.mubr.bf16.gmra.mrb[0].mxu0 %v4414
        %v5320 = vpop.f32.mrb[0].mxu0
        %v5321 = vadd.f32 %v4599, %v5320
        %v5322 = vpop.f32.mrb[0].mxu0
        %v5323 = vadd.f32 %v4603, %v5322
        %v5324 = vpop.f32.mrb[0].mxu0
        %v5325 = vadd.f32 %v4599, %v5324
        %v5326 = vpop.f32.mrb[0].mxu0
        %v5327 = vadd.f32 %v4603, %v5326
        %5328 = vmatprep.mubr.bf16.mxu0 %v4419
        %5329 = vmatmul.mubr.bf16.gmra.mrb[0].mxu0 %v4418
        %v5330 = vpop.f32.mrb[0].mxu0
        %v5331 = vadd.f32 %v4599, %v5330
        %v5332 = vpop.f32.mrb[0].mxu0
        %v5333 = vadd.f32 %v4603, %v5332
        %v5334 = vpop.f32.mrb[0].mxu0
        %v5335 = vadd.f32 %v4599, %v5334
        %v5336 = vpop.f32.mrb[0].mxu0
        %v5337 = vadd.f32 %v4603, %v5336
        %5338 = vmatprep.mubr.bf16.mxu0 %v4423
        %5339 = vmatmul.mubr.bf16.gmra.mrb[0].mxu0 %v4422
        %v5340 = vpop.f32.mrb[0].mxu0
        %v5341 = vadd.f32 %v4599, %v5340
        %v5342 = vpop.f32.mrb[0].mxu0
        %v5343 = vadd.f32 %v4603, %v5342
        %v5344 = vpop.f32.mrb[0].mxu0
        %v5345 = vadd.f32 %v4599, %v5344
        %v5346 = vpop.f32.mrb[0].mxu0
        %v5347 = vadd.f32 %v4603, %v5346
        %5348 = vmatprep.mubr.bf16.mxu0 %v4427
        %5349 = vmatmul.mubr.bf16.gmra.mrb[0].mxu0 %v4426
        %v5350 = vpop.f32.mrb[0].mxu0
        %v5351 = vadd.f32 %v4599, %v5350
        %v5352 = vpop.f32.mrb[0].mxu0
        %v5353 = vadd.f32 %v4603, %v5352
        %v5354 = vpop.f32.mrb[0].mxu0
        %v5355 = vadd.f32 %v4599, %v5354
        %v5356 = vpop.f32.mrb[0].mxu0
        %v5357 = vadd.f32 %v4603, %v5356
        %5358 = vmatprep.mubr.bf16.mxu0 %v4431
        %5359 = vmatmul.mubr.bf16.gmra.mrb[0].mxu0 %v4430
        %v5360 = vpop.f32.mrb[0].mxu0
        %v5361 = vadd.f32 %v4599, %v5360
        %v5362 = vpop.f32.mrb[0].mxu0
        %v5363 = vadd.f32 %v4603, %v5362
        %v5364 = vpop.f32.mrb[0].mxu0
        %v5365 = vadd.f32 %v4599, %v5364
        %v5366 = vpop.f32.mrb[0].mxu0
        %v5367 = vadd.f32 %v4603, %v5366
        %5368 = vmatprep.mubr.bf16.mxu0 %v4435
        %5369 = vmatmul.mubr.bf16.gmra.mrb[0].mxu0 %v4434
        %v5370 = vpop.f32.mrb[0].mxu0
        %v5371 = vadd.f32 %v4599, %v5370
        %v5372 = vpop.f32.mrb[0].mxu0
        %v5373 = vadd.f32 %v4603, %v5372
        %v5374 = vpop.f32.mrb[0].mxu0
        %v5375 = vadd.f32 %v4599, %v5374
        %v5376 = vpop.f32.mrb[0].mxu0
        %v5377 = vadd.f32 %v4603, %v5376
        %5378 = vmatprep.mubr.bf16.mxu0 %v4439
        %5379 = vmatmul.mubr.bf16.gmra.mrb[0].mxu0 %v4438
        %v5380 = vpop.f32.mrb[0].mxu0
        %v5381 = vadd.f32 %v4599, %v5380
        %v5382 = vpop.f32.mrb[0].mxu0
        %v5383 = vadd.f32 %v4603, %v5382
        %v5384 = vpop.f32.mrb[0].mxu0
        %v5385 = vadd.f32 %v4599, %v5384
        %v5386 = vpop.f32.mrb[0].mxu0
        %v5387 = vadd.f32 %v4603, %v5386
        %5388 = vmatprep.mubr.bf16.mxu0 %v4443
        %5389 = vmatmul.mubr.bf16.gmra.mrb[0].mxu0 %v4442
        %v5390 = vpop.f32.mrb[0].mxu0
        %v5391 = vadd.f32 %v4599, %v5390
        %v5392 = vpop.f32.mrb[0].mxu0
        %v5393 = vadd.f32 %v4603, %v5392
        %v5394 = vpop.f32.mrb[0].mxu0
        %v5395 = vadd.f32 %v4599, %v5394
        %v5396 = vpop.f32.mrb[0].mxu0
        %v5397 = vadd.f32 %v4603, %v5396
        %5398 = vmatprep.mubr.bf16.mxu0 %v4447
        %5399 = vmatmul.mubr.bf16.gmra.mrb[0].mxu0 %v4446
        %v5400 = vpop.f32.mrb[0].mxu0
        %v5401 = vadd.f32 %v4599, %v5400
        %v5402 = vpop.f32.mrb[0].mxu0
        %v5403 = vadd.f32 %v4603, %v5402
        %v5404 = vpop.f32.mrb[0].mxu0
        %v5405 = vadd.f32 %v4599, %v5404
        %v5406 = vpop.f32.mrb[0].mxu0
        %v5407 = vadd.f32 %v4603, %v5406
        %5408 = vmatprep.mubr.bf16.mxu0 %v4451
        %5409 = vmatmul.mubr.bf16.gmra.mrb[0].mxu0 %v4450
        %v5410 = vpop.f32.mrb[0].mxu0
        %v5411 = vadd.f32 %v4599, %v5410
        %v5412 = vpop.f32.mrb[0].mxu0
        %v5413 = vadd.f32 %v4603, %v5412
        %v5414 = vpop.f32.mrb[0].mxu0
        %v5415 = vadd.f32 %v4599, %v5414
        %v5416 = vpop.f32.mrb[0].mxu0
        %v5417 = vadd.f32 %v4603, %v5416
        %5418 = vmatprep.mubr.bf16.mxu0 %v4455
        %5419 = vmatmul.mubr.bf16.gmra.mrb[0].mxu0 %v4454
        %v5420 = vpop.f32.mrb[0].mxu0
        %v5421 = vadd.f32 %v4599, %v5420
        %v5422 = vpop.f32.mrb[0].mxu0
        %v5423 = vadd.f32 %v4603, %v5422
        %v5424 = vpop.f32.mrb[0].mxu0
        %v5425 = vadd.f32 %v4599, %v5424
        %v5426 = vpop.f32.mrb[0].mxu0
        %v5427 = vadd.f32 %v4603, %v5426
        %5428 = vmatprep.mubr.bf16.mxu0 %v4459
        %5429 = vmatmul.mubr.bf16.gmra.mrb[0].mxu0 %v4458
        %v5430 = vpop.f32.mrb[0].mxu0
        %v5431 = vadd.f32 %v4599, %v5430
        %v5432 = vpop.f32.mrb[0].mxu0
        %v5433 = vadd.f32 %v4603, %v5432
        %v5434 = vpop.f32.mrb[0].mxu0
        %v5435 = vadd.f32 %v4599, %v5434
        %v5436 = vpop.f32.mrb[0].mxu0
        %v5437 = vadd.f32 %v4603, %v5436
        %5438 = vmatprep.mubr.bf16.mxu0 %v4463
        %5439 = vmatmul.mubr.bf16.gmra.mrb[0].mxu0 %v4462
        %v5440 = vpop.f32.mrb[0].mxu0
        %v5441 = vadd.f32 %v4599, %v5440
        %v5442 = vpop.f32.mrb[0].mxu0
        %v5443 = vadd.f32 %v4603, %v5442
        %v5444 = vpop.f32.mrb[0].mxu0
        %v5445 = vadd.f32 %v4599, %v5444
        %v5446 = vpop.f32.mrb[0].mxu0
        %v5447 = vadd.f32 %v4603, %v5446
        %5448 = vdwg.mxu0
        %5449 = vmatprep.subr.bf16.mxu0 %v5065
        %5450 = vmatpush1.bf16.msra.mxu0 %v5064
        %5451 = vmatprep.subr.bf16.mxu0 %v5069
        %5452 = vmatpush1.bf16.msra.mxu0 %v5068
        %5453 = vmatprep.subr.bf16.mxu0 %v5073
        %5454 = vmatpush1.bf16.msra.mxu0 %v5072
        %5455 = vmatprep.subr.bf16.mxu0 %v5077
        %5456 = vmatpush1.bf16.msra.mxu0 %v5076
        %5457 = vmatprep.subr.bf16.mxu0 %v5081
        %5458 = vmatpush1.bf16.msra.mxu0 %v5080
        %5459 = vmatprep.subr.bf16.mxu0 %v5085
        %5460 = vmatpush1.bf16.msra.mxu0 %v5084
        %5461 = vmatprep.subr.bf16.mxu0 %v5089
        %5462 = vmatpush1.bf16.msra.mxu0 %v5088
        %5463 = vmatprep.subr.bf16.mxu0 %v5093
        %5464 = vmatpush1.bf16.msra.mxu0 %v5092
        %5465 = vmatprep.subr.bf16.mxu0 %v5097
        %5466 = vmatpush1.bf16.msra.mxu0 %v5096
        %5467 = vmatprep.subr.bf16.mxu0 %v5101
        %5468 = vmatpush1.bf16.msra.mxu0 %v5100
        %5469 = vmatprep.subr.bf16.mxu0 %v5105
        %5470 = vmatpush1.bf16.msra.mxu0 %v5104
        %5471 = vmatprep.subr.bf16.mxu0 %v5109
        %5472 = vmatpush1.bf16.msra.mxu0 %v5108
        %5473 = vmatprep.subr.bf16.mxu0 %v5113
        %5474 = vmatpush1.bf16.msra.mxu0 %v5112
        %5475 = vmatprep.subr.bf16.mxu0 %v5117
        %5476 = vmatpush1.bf16.msra.mxu0 %v5116
        %5477 = vmatprep.subr.bf16.mxu0 %v5121
        %5478 = vmatpush1.bf16.msra.mxu0 %v5120
        %5479 = vmatprep.subr.bf16.mxu0 %v5125
        %5480 = vmatpush1.bf16.msra.mxu0 %v5124
        %5481 = vmatprep.mubr.bf16.mxu0 %v4405
        %5482 = vmatmul.mubr.bf16.gmra.mrb[0].mxu0 %v4404
        %v5483 = vpop.f32.mrb[0].mxu0
        %v5484 = vadd.f32 %v5291, %v5483
        %v5485 = vpop.f32.mrb[0].mxu0
        %v5486 = vadd.f32 %v5293, %v5485
        %v5487 = vpop.f32.mrb[0].mxu0
        %v5488 = vadd.f32 %v5295, %v5487
        %v5489 = vpop.f32.mrb[0].mxu0
        %v5490 = vadd.f32 %v5297, %v5489
        %5491 = vmatprep.mubr.bf16.mxu0 %v4409
        %5492 = vmatmul.mubr.bf16.gmra.mrb[0].mxu0 %v4408
        %v5493 = vpop.f32.mrb[0].mxu0
        %v5494 = vadd.f32 %v5301, %v5493
        %v5495 = vpop.f32.mrb[0].mxu0
        %v5496 = vadd.f32 %v5303, %v5495
        %v5497 = vpop.f32.mrb[0].mxu0
        %v5498 = vadd.f32 %v5305, %v5497
        %v5499 = vpop.f32.mrb[0].mxu0
        %v5500 = vadd.f32 %v5307, %v5499
        %5501 = vmatprep.mubr.bf16.mxu0 %v4413
        %5502 = vmatmul.mubr.bf16.gmra.mrb[0].mxu0 %v4412
        %v5503 = vpop.f32.mrb[0].mxu0
        %v5504 = vadd.f32 %v5311, %v5503
        %v5505 = vpop.f32.mrb[0].mxu0
        %v5506 = vadd.f32 %v5313, %v5505
        %v5507 = vpop.f32.mrb[0].mxu0
        %v5508 = vadd.f32 %v5315, %v5507
        %v5509 = vpop.f32.mrb[0].mxu0
        %v5510 = vadd.f32 %v5317, %v5509
        %5511 = vmatprep.mubr.bf16.mxu0 %v4417
        %5512 = vmatmul.mubr.bf16.gmra.mrb[0].mxu0 %v4416
        %v5513 = vpop.f32.mrb[0].mxu0
        %v5514 = vadd.f32 %v5321, %v5513
        %v5515 = vpop.f32.mrb[0].mxu0
        %v5516 = vadd.f32 %v5323, %v5515
        %v5517 = vpop.f32.mrb[0].mxu0
        %v5518 = vadd.f32 %v5325, %v5517
        %v5519 = vpop.f32.mrb[0].mxu0
        %v5520 = vadd.f32 %v5327, %v5519
        %5521 = vmatprep.mubr.bf16.mxu0 %v4421
        %5522 = vmatmul.mubr.bf16.gmra.mrb[0].mxu0 %v4420
        %v5523 = vpop.f32.mrb[0].mxu0
        %v5524 = vadd.f32 %v5331, %v5523
        %v5525 = vpop.f32.mrb[0].mxu0
        %v5526 = vadd.f32 %v5333, %v5525
        %v5527 = vpop.f32.mrb[0].mxu0
        %v5528 = vadd.f32 %v5335, %v5527
        %v5529 = vpop.f32.mrb[0].mxu0
        %v5530 = vadd.f32 %v5337, %v5529
        %5531 = vmatprep.mubr.bf16.mxu0 %v4425
        %5532 = vmatmul.mubr.bf16.gmra.mrb[0].mxu0 %v4424
        %v5533 = vpop.f32.mrb[0].mxu0
        %v5534 = vadd.f32 %v5341, %v5533
        %v5535 = vpop.f32.mrb[0].mxu0
        %v5536 = vadd.f32 %v5343, %v5535
        %v5537 = vpop.f32.mrb[0].mxu0
        %v5538 = vadd.f32 %v5345, %v5537
        %v5539 = vpop.f32.mrb[0].mxu0
        %v5540 = vadd.f32 %v5347, %v5539
        %5541 = vmatprep.mubr.bf16.mxu0 %v4429
        %5542 = vmatmul.mubr.bf16.gmra.mrb[0].mxu0 %v4428
        %v5543 = vpop.f32.mrb[0].mxu0
        %v5544 = vadd.f32 %v5351, %v5543
        %v5545 = vpop.f32.mrb[0].mxu0
        %v5546 = vadd.f32 %v5353, %v5545
        %v5547 = vpop.f32.mrb[0].mxu0
        %v5548 = vadd.f32 %v5355, %v5547
        %v5549 = vpop.f32.mrb[0].mxu0
        %v5550 = vadd.f32 %v5357, %v5549
        %5551 = vmatprep.mubr.bf16.mxu0 %v4433
        %5552 = vmatmul.mubr.bf16.gmra.mrb[0].mxu0 %v4432
        %v5553 = vpop.f32.mrb[0].mxu0
        %v5554 = vadd.f32 %v5361, %v5553
        %v5555 = vpop.f32.mrb[0].mxu0
        %v5556 = vadd.f32 %v5363, %v5555
        %v5557 = vpop.f32.mrb[0].mxu0
        %v5558 = vadd.f32 %v5365, %v5557
        %v5559 = vpop.f32.mrb[0].mxu0
        %v5560 = vadd.f32 %v5367, %v5559
        %5561 = vmatprep.mubr.bf16.mxu0 %v4437
        %5562 = vmatmul.mubr.bf16.gmra.mrb[0].mxu0 %v4436
        %v5563 = vpop.f32.mrb[0].mxu0
        %v5564 = vadd.f32 %v5371, %v5563
        %v5565 = vpop.f32.mrb[0].mxu0
        %v5566 = vadd.f32 %v5373, %v5565
        %v5567 = vpop.f32.mrb[0].mxu0
        %v5568 = vadd.f32 %v5375, %v5567
        %v5569 = vpop.f32.mrb[0].mxu0
        %v5570 = vadd.f32 %v5377, %v5569
        %5571 = vmatprep.mubr.bf16.mxu0 %v4441
        %5572 = vmatmul.mubr.bf16.gmra.mrb[0].mxu0 %v4440
        %v5573 = vpop.f32.mrb[0].mxu0
        %v5574 = vadd.f32 %v5381, %v5573
        %v5575 = vpop.f32.mrb[0].mxu0
        %v5576 = vadd.f32 %v5383, %v5575
        %v5577 = vpop.f32.mrb[0].mxu0
        %v5578 = vadd.f32 %v5385, %v5577
        %v5579 = vpop.f32.mrb[0].mxu0
        %v5580 = vadd.f32 %v5387, %v5579
        %5581 = vmatprep.mubr.bf16.mxu0 %v4445
        %5582 = vmatmul.mubr.bf16.gmra.mrb[0].mxu0 %v4444
        %v5583 = vpop.f32.mrb[0].mxu0
        %v5584 = vadd.f32 %v5391, %v5583
        %v5585 = vpop.f32.mrb[0].mxu0
        %v5586 = vadd.f32 %v5393, %v5585
        %v5587 = vpop.f32.mrb[0].mxu0
        %v5588 = vadd.f32 %v5395, %v5587
        %v5589 = vpop.f32.mrb[0].mxu0
        %v5590 = vadd.f32 %v5397, %v5589
        %5591 = vmatprep.mubr.bf16.mxu0 %v4449
        %5592 = vmatmul.mubr.bf16.gmra.mrb[0].mxu0 %v4448
        %v5593 = vpop.f32.mrb[0].mxu0
        %v5594 = vadd.f32 %v5401, %v5593
        %v5595 = vpop.f32.mrb[0].mxu0
        %v5596 = vadd.f32 %v5403, %v5595
        %v5597 = vpop.f32.mrb[0].mxu0
        %v5598 = vadd.f32 %v5405, %v5597
        %v5599 = vpop.f32.mrb[0].mxu0
        %v5600 = vadd.f32 %v5407, %v5599
        %5601 = vmatprep.mubr.bf16.mxu0 %v4453
        %5602 = vmatmul.mubr.bf16.gmra.mrb[0].mxu0 %v4452
        %v5603 = vpop.f32.mrb[0].mxu0
        %v5604 = vadd.f32 %v5411, %v5603
        %v5605 = vpop.f32.mrb[0].mxu0
        %v5606 = vadd.f32 %v5413, %v5605
        %v5607 = vpop.f32.mrb[0].mxu0
        %v5608 = vadd.f32 %v5415, %v5607
        %v5609 = vpop.f32.mrb[0].mxu0
        %v5610 = vadd.f32 %v5417, %v5609
        %5611 = vmatprep.mubr.bf16.mxu0 %v4457
        %5612 = vmatmul.mubr.bf16.gmra.mrb[0].mxu0 %v4456
        %v5613 = vpop.f32.mrb[0].mxu0
        %v5614 = vadd.f32 %v5421, %v5613
        %v5615 = vpop.f32.mrb[0].mxu0
        %v5616 = vadd.f32 %v5423, %v5615
        %v5617 = vpop.f32.mrb[0].mxu0
        %v5618 = vadd.f32 %v5425, %v5617
        %v5619 = vpop.f32.mrb[0].mxu0
        %v5620 = vadd.f32 %v5427, %v5619
        %5621 = vmatprep.mubr.bf16.mxu0 %v4461
        %5622 = vmatmul.mubr.bf16.gmra.mrb[0].mxu0 %v4460
        %v5623 = vpop.f32.mrb[0].mxu0
        %v5624 = vadd.f32 %v5431, %v5623
        %v5625 = vpop.f32.mrb[0].mxu0
        %v5626 = vadd.f32 %v5433, %v5625
        %v5627 = vpop.f32.mrb[0].mxu0
        %v5628 = vadd.f32 %v5435, %v5627
        %v5629 = vpop.f32.mrb[0].mxu0
        %v5630 = vadd.f32 %v5437, %v5629
        %5631 = vmatprep.mubr.bf16.mxu0 %v4465
        %5632 = vmatmul.mubr.bf16.gmra.mrb[0].mxu0 %v4464
        %v5633 = vpop.f32.mrb[0].mxu0
        %v5634 = vadd.f32 %v5441, %v5633
        %v5635 = vpop.f32.mrb[0].mxu0
        %v5636 = vadd.f32 %v5443, %v5635
        %v5637 = vpop.f32.mrb[0].mxu0
        %v5638 = vadd.f32 %v5445, %v5637
        %v5639 = vpop.f32.mrb[0].mxu0
        %v5640 = vadd.f32 %v5447, %v5639
        %5641 = vdwg.mxu0
        %5642 = vmatprep.subr.bf16.mxu0 %v5003
        %5643 = vmatpush1.bf16.msra.mxu0 %v5002
        %5644 = vmatprep.subr.bf16.mxu0 %v5007
        %5645 = vmatpush1.bf16.msra.mxu0 %v5006
        %5646 = vmatprep.subr.bf16.mxu0 %v5011
        %5647 = vmatpush1.bf16.msra.mxu0 %v5010
        %5648 = vmatprep.subr.bf16.mxu0 %v5015
        %5649 = vmatpush1.bf16.msra.mxu0 %v5014
        %5650 = vmatprep.subr.bf16.mxu0 %v5019
        %5651 = vmatpush1.bf16.msra.mxu0 %v5018
        %5652 = vmatprep.subr.bf16.mxu0 %v5023
        %5653 = vmatpush1.bf16.msra.mxu0 %v5022
        %5654 = vmatprep.subr.bf16.mxu0 %v5027
        %5655 = vmatpush1.bf16.msra.mxu0 %v5026
        %5656 = vmatprep.subr.bf16.mxu0 %v5031
        %5657 = vmatpush1.bf16.msra.mxu0 %v5030
        %5658 = vmatprep.subr.bf16.mxu0 %v5035
        %5659 = vmatpush1.bf16.msra.mxu0 %v5034
        %5660 = vmatprep.subr.bf16.mxu0 %v5039
        %5661 = vmatpush1.bf16.msra.mxu0 %v5038
        %5662 = vmatprep.subr.bf16.mxu0 %v5043
        %5663 = vmatpush1.bf16.msra.mxu0 %v5042
        %5664 = vmatprep.subr.bf16.mxu0 %v5047
        %5665 = vmatpush1.bf16.msra.mxu0 %v5046
        %5666 = vmatprep.subr.bf16.mxu0 %v5051
        %5667 = vmatpush1.bf16.msra.mxu0 %v5050
        %5668 = vmatprep.subr.bf16.mxu0 %v5055
        %5669 = vmatpush1.bf16.msra.mxu0 %v5054
        %5670 = vmatprep.subr.bf16.mxu0 %v5059
        %5671 = vmatpush1.bf16.msra.mxu0 %v5058
        %5672 = vmatprep.subr.bf16.mxu0 %v5063
        %5673 = vmatpush1.bf16.msra.mxu0 %v5062
        %5674 = vmatprep.mubr.bf16.mxu0 %v4403
        %5675 = vmatmul.mubr.bf16.gmra.mrb[0].mxu0 %v4402
        %v5676 = vpop.f32.mrb[0].mxu0
        %v5677 = vadd.f32 %v4607, %v5676
        %v5678 = vpop.f32.mrb[0].mxu0
        %v5679 = vadd.f32 %v4611, %v5678
        %v5680 = vpop.f32.mrb[0].mxu0
        %v5681 = vadd.f32 %v4607, %v5680
        %v5682 = vpop.f32.mrb[0].mxu0
        %v5683 = vadd.f32 %v4611, %v5682
        %5684 = vmatprep.mubr.bf16.mxu0 %v4407
        %5685 = vmatmul.mubr.bf16.gmra.mrb[0].mxu0 %v4406
        %v5686 = vpop.f32.mrb[0].mxu0
        %v5687 = vadd.f32 %v4607, %v5686
        %v5688 = vpop.f32.mrb[0].mxu0
        %v5689 = vadd.f32 %v4611, %v5688
        %v5690 = vpop.f32.mrb[0].mxu0
        %v5691 = vadd.f32 %v4607, %v5690
        %v5692 = vpop.f32.mrb[0].mxu0
        %v5693 = vadd.f32 %v4611, %v5692
        %5694 = vmatprep.mubr.bf16.mxu0 %v4411
        %5695 = vmatmul.mubr.bf16.gmra.mrb[0].mxu0 %v4410
        %v5696 = vpop.f32.mrb[0].mxu0
        %v5697 = vadd.f32 %v4607, %v5696
        %v5698 = vpop.f32.mrb[0].mxu0
        %v5699 = vadd.f32 %v4611, %v5698
        %v5700 = vpop.f32.mrb[0].mxu0
        %v5701 = vadd.f32 %v4607, %v5700
        %v5702 = vpop.f32.mrb[0].mxu0
        %v5703 = vadd.f32 %v4611, %v5702
        %5704 = vmatprep.mubr.bf16.mxu0 %v4415
        %5705 = vmatmul.mubr.bf16.gmra.mrb[0].mxu0 %v4414
        %v5706 = vpop.f32.mrb[0].mxu0
        %v5707 = vadd.f32 %v4607, %v5706
        %v5708 = vpop.f32.mrb[0].mxu0
        %v5709 = vadd.f32 %v4611, %v5708
        %v5710 = vpop.f32.mrb[0].mxu0
        %v5711 = vadd.f32 %v4607, %v5710
        %v5712 = vpop.f32.mrb[0].mxu0
        %v5713 = vadd.f32 %v4611, %v5712
        %5714 = vmatprep.mubr.bf16.mxu0 %v4419
        %5715 = vmatmul.mubr.bf16.gmra.mrb[0].mxu0 %v4418
        %v5716 = vpop.f32.mrb[0].mxu0
        %v5717 = vadd.f32 %v4607, %v5716
        %v5718 = vpop.f32.mrb[0].mxu0
        %v5719 = vadd.f32 %v4611, %v5718
        %v5720 = vpop.f32.mrb[0].mxu0
        %v5721 = vadd.f32 %v4607, %v5720
        %v5722 = vpop.f32.mrb[0].mxu0
        %v5723 = vadd.f32 %v4611, %v5722
        %5724 = vmatprep.mubr.bf16.mxu0 %v4423
        %5725 = vmatmul.mubr.bf16.gmra.mrb[0].mxu0 %v4422
        %v5726 = vpop.f32.mrb[0].mxu0
        %v5727 = vadd.f32 %v4607, %v5726
        %v5728 = vpop.f32.mrb[0].mxu0
        %v5729 = vadd.f32 %v4611, %v5728
        %v5730 = vpop.f32.mrb[0].mxu0
        %v5731 = vadd.f32 %v4607, %v5730
        %v5732 = vpop.f32.mrb[0].mxu0
        %v5733 = vadd.f32 %v4611, %v5732
        %5734 = vmatprep.mubr.bf16.mxu0 %v4427
        %5735 = vmatmul.mubr.bf16.gmra.mrb[0].mxu0 %v4426
        %v5736 = vpop.f32.mrb[0].mxu0
        %v5737 = vadd.f32 %v4607, %v5736
        %v5738 = vpop.f32.mrb[0].mxu0
        %v5739 = vadd.f32 %v4611, %v5738
        %v5740 = vpop.f32.mrb[0].mxu0
        %v5741 = vadd.f32 %v4607, %v5740
        %v5742 = vpop.f32.mrb[0].mxu0
        %v5743 = vadd.f32 %v4611, %v5742
        %5744 = vmatprep.mubr.bf16.mxu0 %v4431
        %5745 = vmatmul.mubr.bf16.gmra.mrb[0].mxu0 %v4430
        %v5746 = vpop.f32.mrb[0].mxu0
        %v5747 = vadd.f32 %v4607, %v5746
        %v5748 = vpop.f32.mrb[0].mxu0
        %v5749 = vadd.f32 %v4611, %v5748
        %v5750 = vpop.f32.mrb[0].mxu0
        %v5751 = vadd.f32 %v4607, %v5750
        %v5752 = vpop.f32.mrb[0].mxu0
        %v5753 = vadd.f32 %v4611, %v5752
        %5754 = vmatprep.mubr.bf16.mxu0 %v4435
        %5755 = vmatmul.mubr.bf16.gmra.mrb[0].mxu0 %v4434
        %v5756 = vpop.f32.mrb[0].mxu0
        %v5757 = vadd.f32 %v4607, %v5756
        %v5758 = vpop.f32.mrb[0].mxu0
        %v5759 = vadd.f32 %v4611, %v5758
        %v5760 = vpop.f32.mrb[0].mxu0
        %v5761 = vadd.f32 %v4607, %v5760
        %v5762 = vpop.f32.mrb[0].mxu0
        %v5763 = vadd.f32 %v4611, %v5762
        %5764 = vmatprep.mubr.bf16.mxu0 %v4439
        %5765 = vmatmul.mubr.bf16.gmra.mrb[0].mxu0 %v4438
        %v5766 = vpop.f32.mrb[0].mxu0
        %v5767 = vadd.f32 %v4607, %v5766
        %v5768 = vpop.f32.mrb[0].mxu0
        %v5769 = vadd.f32 %v4611, %v5768
        %v5770 = vpop.f32.mrb[0].mxu0
        %v5771 = vadd.f32 %v4607, %v5770
        %v5772 = vpop.f32.mrb[0].mxu0
        %v5773 = vadd.f32 %v4611, %v5772
        %5774 = vmatprep.mubr.bf16.mxu0 %v4443
        %5775 = vmatmul.mubr.bf16.gmra.mrb[0].mxu0 %v4442
        %v5776 = vpop.f32.mrb[0].mxu0
        %v5777 = vadd.f32 %v4607, %v5776
        %v5778 = vpop.f32.mrb[0].mxu0
        %v5779 = vadd.f32 %v4611, %v5778
        %v5780 = vpop.f32.mrb[0].mxu0
        %v5781 = vadd.f32 %v4607, %v5780
        %v5782 = vpop.f32.mrb[0].mxu0
        %v5783 = vadd.f32 %v4611, %v5782
        %5784 = vmatprep.mubr.bf16.mxu0 %v4447
        %5785 = vmatmul.mubr.bf16.gmra.mrb[0].mxu0 %v4446
        %v5786 = vpop.f32.mrb[0].mxu0
        %v5787 = vadd.f32 %v4607, %v5786
        %v5788 = vpop.f32.mrb[0].mxu0
        %v5789 = vadd.f32 %v4611, %v5788
        %v5790 = vpop.f32.mrb[0].mxu0
        %v5791 = vadd.f32 %v4607, %v5790
        %v5792 = vpop.f32.mrb[0].mxu0
        %v5793 = vadd.f32 %v4611, %v5792
        %5794 = vmatprep.mubr.bf16.mxu0 %v4451
        %5795 = vmatmul.mubr.bf16.gmra.mrb[0].mxu0 %v4450
        %v5796 = vpop.f32.mrb[0].mxu0
        %v5797 = vadd.f32 %v4607, %v5796
        %v5798 = vpop.f32.mrb[0].mxu0
        %v5799 = vadd.f32 %v4611, %v5798
        %v5800 = vpop.f32.mrb[0].mxu0
        %v5801 = vadd.f32 %v4607, %v5800
        %v5802 = vpop.f32.mrb[0].mxu0
        %v5803 = vadd.f32 %v4611, %v5802
        %5804 = vmatprep.mubr.bf16.mxu0 %v4455
        %5805 = vmatmul.mubr.bf16.gmra.mrb[0].mxu0 %v4454
        %v5806 = vpop.f32.mrb[0].mxu0
        %v5807 = vadd.f32 %v4607, %v5806
        %v5808 = vpop.f32.mrb[0].mxu0
        %v5809 = vadd.f32 %v4611, %v5808
        %v5810 = vpop.f32.mrb[0].mxu0
        %v5811 = vadd.f32 %v4607, %v5810
        %v5812 = vpop.f32.mrb[0].mxu0
        %v5813 = vadd.f32 %v4611, %v5812
        %5814 = vmatprep.mubr.bf16.mxu0 %v4459
        %5815 = vmatmul.mubr.bf16.gmra.mrb[0].mxu0 %v4458
        %v5816 = vpop.f32.mrb[0].mxu0
        %v5817 = vadd.f32 %v4607, %v5816
        %v5818 = vpop.f32.mrb[0].mxu0
        %v5819 = vadd.f32 %v4611, %v5818
        %v5820 = vpop.f32.mrb[0].mxu0
        %v5821 = vadd.f32 %v4607, %v5820
        %v5822 = vpop.f32.mrb[0].mxu0
        %v5823 = vadd.f32 %v4611, %v5822
        %5824 = vmatprep.mubr.bf16.mxu0 %v4463
        %5825 = vmatmul.mubr.bf16.gmra.mrb[0].mxu0 %v4462
        %v5826 = vpop.f32.mrb[0].mxu0
        %v5827 = vadd.f32 %v4607, %v5826
        %v5828 = vpop.f32.mrb[0].mxu0
        %v5829 = vadd.f32 %v4611, %v5828
        %v5830 = vpop.f32.mrb[0].mxu0
        %v5831 = vadd.f32 %v4607, %v5830
        %v5832 = vpop.f32.mrb[0].mxu0
        %v5833 = vadd.f32 %v4611, %v5832
        %5834 = vdwg.mxu0
        %5835 = vmatprep.subr.bf16.mxu0 %v5067
        %5836 = vmatpush1.bf16.msra.mxu0 %v5066
        %5837 = vmatprep.subr.bf16.mxu0 %v5071
        %5838 = vmatpush1.bf16.msra.mxu0 %v5070
        %5839 = vmatprep.subr.bf16.mxu0 %v5075
        %5840 = vmatpush1.bf16.msra.mxu0 %v5074
        %5841 = vmatprep.subr.bf16.mxu0 %v5079
        %5842 = vmatpush1.bf16.msra.mxu0 %v5078
        %5843 = vmatprep.subr.bf16.mxu0 %v5083
        %5844 = vmatpush1.bf16.msra.mxu0 %v5082
        %5845 = vmatprep.subr.bf16.mxu0 %v5087
        %5846 = vmatpush1.bf16.msra.mxu0 %v5086
        %5847 = vmatprep.subr.bf16.mxu0 %v5091
        %5848 = vmatpush1.bf16.msra.mxu0 %v5090
        %5849 = vmatprep.subr.bf16.mxu0 %v5095
        %5850 = vmatpush1.bf16.msra.mxu0 %v5094
        %5851 = vmatprep.subr.bf16.mxu0 %v5099
        %5852 = vmatpush1.bf16.msra.mxu0 %v5098
        %5853 = vmatprep.subr.bf16.mxu0 %v5103
        %5854 = vmatpush1.bf16.msra.mxu0 %v5102
        %5855 = vmatprep.subr.bf16.mxu0 %v5107
        %5856 = vmatpush1.bf16.msra.mxu0 %v5106
        %5857 = vmatprep.subr.bf16.mxu0 %v5111
        %5858 = vmatpush1.bf16.msra.mxu0 %v5110
        %5859 = vmatprep.subr.bf16.mxu0 %v5115
        %5860 = vmatpush1.bf16.msra.mxu0 %v5114
        %5861 = vmatprep.subr.bf16.mxu0 %v5119
        %5862 = vmatpush1.bf16.msra.mxu0 %v5118
        %5863 = vmatprep.subr.bf16.mxu0 %v5123
        %5864 = vmatpush1.bf16.msra.mxu0 %v5122
        %5865 = vmatprep.subr.bf16.mxu0 %v5127
        %5866 = vmatpush1.bf16.msra.mxu0 %v5126
        %5867 = vmatprep.mubr.bf16.mxu0 %v4405
        %5868 = vmatmul.mubr.bf16.gmra.mrb[0].mxu0 %v4404
        %v5869 = vpop.f32.mrb[0].mxu0
        %v5870 = vadd.f32 %v5677, %v5869
        %v5871 = vpop.f32.mrb[0].mxu0
        %v5872 = vadd.f32 %v5679, %v5871
        %v5873 = vpop.f32.mrb[0].mxu0
        %v5874 = vadd.f32 %v5681, %v5873
        %v5875 = vpop.f32.mrb[0].mxu0
        %v5876 = vadd.f32 %v5683, %v5875
        %5877 = vmatprep.mubr.bf16.mxu0 %v4409
        %5878 = vmatmul.mubr.bf16.gmra.mrb[0].mxu0 %v4408
        %v5879 = vpop.f32.mrb[0].mxu0
        %v5880 = vadd.f32 %v5687, %v5879
        %v5881 = vpop.f32.mrb[0].mxu0
        %v5882 = vadd.f32 %v5689, %v5881
        %v5883 = vpop.f32.mrb[0].mxu0
        %v5884 = vadd.f32 %v5691, %v5883
        %v5885 = vpop.f32.mrb[0].mxu0
        %v5886 = vadd.f32 %v5693, %v5885
        %5887 = vmatprep.mubr.bf16.mxu0 %v4413
        %5888 = vmatmul.mubr.bf16.gmra.mrb[0].mxu0 %v4412
        %v5889 = vpop.f32.mrb[0].mxu0
        %v5890 = vadd.f32 %v5697, %v5889
        %v5891 = vpop.f32.mrb[0].mxu0
        %v5892 = vadd.f32 %v5699, %v5891
        %v5893 = vpop.f32.mrb[0].mxu0
        %v5894 = vadd.f32 %v5701, %v5893
        %v5895 = vpop.f32.mrb[0].mxu0
        %v5896 = vadd.f32 %v5703, %v5895
        %5897 = vmatprep.mubr.bf16.mxu0 %v4417
        %5898 = vmatmul.mubr.bf16.gmra.mrb[0].mxu0 %v4416
        %v5899 = vpop.f32.mrb[0].mxu0
        %v5900 = vadd.f32 %v5707, %v5899
        %v5901 = vpop.f32.mrb[0].mxu0
        %v5902 = vadd.f32 %v5709, %v5901
        %v5903 = vpop.f32.mrb[0].mxu0
        %v5904 = vadd.f32 %v5711, %v5903
        %v5905 = vpop.f32.mrb[0].mxu0
        %v5906 = vadd.f32 %v5713, %v5905
        %5907 = vmatprep.mubr.bf16.mxu0 %v4421
        %5908 = vmatmul.mubr.bf16.gmra.mrb[0].mxu0 %v4420
        %v5909 = vpop.f32.mrb[0].mxu0
        %v5910 = vadd.f32 %v5717, %v5909
        %v5911 = vpop.f32.mrb[0].mxu0
        %v5912 = vadd.f32 %v5719, %v5911
        %v5913 = vpop.f32.mrb[0].mxu0
        %v5914 = vadd.f32 %v5721, %v5913
        %v5915 = vpop.f32.mrb[0].mxu0
        %v5916 = vadd.f32 %v5723, %v5915
        %5917 = vmatprep.mubr.bf16.mxu0 %v4425
        %5918 = vmatmul.mubr.bf16.gmra.mrb[0].mxu0 %v4424
        %v5919 = vpop.f32.mrb[0].mxu0
        %v5920 = vadd.f32 %v5727, %v5919
        %v5921 = vpop.f32.mrb[0].mxu0
        %v5922 = vadd.f32 %v5729, %v5921
        %v5923 = vpop.f32.mrb[0].mxu0
        %v5924 = vadd.f32 %v5731, %v5923
        %v5925 = vpop.f32.mrb[0].mxu0
        %v5926 = vadd.f32 %v5733, %v5925
        %5927 = vmatprep.mubr.bf16.mxu0 %v4429
        %5928 = vmatmul.mubr.bf16.gmra.mrb[0].mxu0 %v4428
        %v5929 = vpop.f32.mrb[0].mxu0
        %v5930 = vadd.f32 %v5737, %v5929
        %v5931 = vpop.f32.mrb[0].mxu0
        %v5932 = vadd.f32 %v5739, %v5931
        %v5933 = vpop.f32.mrb[0].mxu0
        %v5934 = vadd.f32 %v5741, %v5933
        %v5935 = vpop.f32.mrb[0].mxu0
        %v5936 = vadd.f32 %v5743, %v5935
        %5937 = vmatprep.mubr.bf16.mxu0 %v4433
        %5938 = vmatmul.mubr.bf16.gmra.mrb[0].mxu0 %v4432
        %v5939 = vpop.f32.mrb[0].mxu0
        %v5940 = vadd.f32 %v5747, %v5939
        %v5941 = vpop.f32.mrb[0].mxu0
        %v5942 = vadd.f32 %v5749, %v5941
        %v5943 = vpop.f32.mrb[0].mxu0
        %v5944 = vadd.f32 %v5751, %v5943
        %v5945 = vpop.f32.mrb[0].mxu0
        %v5946 = vadd.f32 %v5753, %v5945
        %5947 = vmatprep.mubr.bf16.mxu0 %v4437
        %5948 = vmatmul.mubr.bf16.gmra.mrb[0].mxu0 %v4436
        %v5949 = vpop.f32.mrb[0].mxu0
        %v5950 = vadd.f32 %v5757, %v5949
        %v5951 = vpop.f32.mrb[0].mxu0
        %v5952 = vadd.f32 %v5759, %v5951
        %v5953 = vpop.f32.mrb[0].mxu0
        %v5954 = vadd.f32 %v5761, %v5953
        %v5955 = vpop.f32.mrb[0].mxu0
        %v5956 = vadd.f32 %v5763, %v5955
        %5957 = vmatprep.mubr.bf16.mxu0 %v4441
        %5958 = vmatmul.mubr.bf16.gmra.mrb[0].mxu0 %v4440
        %v5959 = vpop.f32.mrb[0].mxu0
        %v5960 = vadd.f32 %v5767, %v5959
        %v5961 = vpop.f32.mrb[0].mxu0
        %v5962 = vadd.f32 %v5769, %v5961
        %v5963 = vpop.f32.mrb[0].mxu0
        %v5964 = vadd.f32 %v5771, %v5963
        %v5965 = vpop.f32.mrb[0].mxu0
        %v5966 = vadd.f32 %v5773, %v5965
        %5967 = vmatprep.mubr.bf16.mxu0 %v4445
        %5968 = vmatmul.mubr.bf16.gmra.mrb[0].mxu0 %v4444
        %v5969 = vpop.f32.mrb[0].mxu0
        %v5970 = vadd.f32 %v5777, %v5969
        %v5971 = vpop.f32.mrb[0].mxu0
        %v5972 = vadd.f32 %v5779, %v5971
        %v5973 = vpop.f32.mrb[0].mxu0
        %v5974 = vadd.f32 %v5781, %v5973
        %v5975 = vpop.f32.mrb[0].mxu0
        %v5976 = vadd.f32 %v5783, %v5975
        %5977 = vmatprep.mubr.bf16.mxu0 %v4449
        %5978 = vmatmul.mubr.bf16.gmra.mrb[0].mxu0 %v4448
        %v5979 = vpop.f32.mrb[0].mxu0
        %v5980 = vadd.f32 %v5787, %v5979
        %v5981 = vpop.f32.mrb[0].mxu0
        %v5982 = vadd.f32 %v5789, %v5981
        %v5983 = vpop.f32.mrb[0].mxu0
        %v5984 = vadd.f32 %v5791, %v5983
        %v5985 = vpop.f32.mrb[0].mxu0
        %v5986 = vadd.f32 %v5793, %v5985
        %5987 = vmatprep.mubr.bf16.mxu0 %v4453
        %5988 = vmatmul.mubr.bf16.gmra.mrb[0].mxu0 %v4452
        %v5989 = vpop.f32.mrb[0].mxu0
        %v5990 = vadd.f32 %v5797, %v5989
        %v5991 = vpop.f32.mrb[0].mxu0
        %v5992 = vadd.f32 %v5799, %v5991
        %v5993 = vpop.f32.mrb[0].mxu0
        %v5994 = vadd.f32 %v5801, %v5993
        %v5995 = vpop.f32.mrb[0].mxu0
        %v5996 = vadd.f32 %v5803, %v5995
        %5997 = vmatprep.mubr.bf16.mxu0 %v4457
        %5998 = vmatmul.mubr.bf16.gmra.mrb[0].mxu0 %v4456
        %v5999 = vpop.f32.mrb[0].mxu0
        %v6000 = vadd.f32 %v5807, %v5999
        %v6001 = vpop.f32.mrb[0].mxu0
        %v6002 = vadd.f32 %v5809, %v6001
        %v6003 = vpop.f32.mrb[0].mxu0
        %v6004 = vadd.f32 %v5811, %v6003
        %v6005 = vpop.f32.mrb[0].mxu0
        %v6006 = vadd.f32 %v5813, %v6005
        %6007 = vmatprep.mubr.bf16.mxu0 %v4461
        %6008 = vmatmul.mubr.bf16.gmra.mrb[0].mxu0 %v4460
        %v6009 = vpop.f32.mrb[0].mxu0
        %v6010 = vadd.f32 %v5817, %v6009
        %v6011 = vpop.f32.mrb[0].mxu0
        %v6012 = vadd.f32 %v5819, %v6011
        %v6013 = vpop.f32.mrb[0].mxu0
        %v6014 = vadd.f32 %v5821, %v6013
        %v6015 = vpop.f32.mrb[0].mxu0
        %v6016 = vadd.f32 %v5823, %v6015
        %6017 = vmatprep.mubr.bf16.mxu0 %v4465
        %6018 = vmatmul.mubr.bf16.gmra.mrb[0].mxu0 %v4464
        %v6019 = vpop.f32.mrb[0].mxu0
        %v6020 = vadd.f32 %v5827, %v6019
        %v6021 = vpop.f32.mrb[0].mxu0
        %v6022 = vadd.f32 %v5829, %v6021
        %v6023 = vpop.f32.mrb[0].mxu0
        %v6024 = vadd.f32 %v5831, %v6023
        %v6025 = vpop.f32.mrb[0].mxu0
        %v6026 = vadd.f32 %v5833, %v6025
        %6027 = vdwg.mxu0
        %v6028 = vtanh.pop %v5484
        %v6029 = vtanh.pop %v5486
        %v6030 = vtanh.pop %v5488
        %v6031 = vtanh.pop %v5490
        %v6032 = vtanh.pop %v5494
        %v6033 = vtanh.pop %v5496
        %v6034 = vtanh.pop %v5498
        %v6035 = vtanh.pop %v5500
        %v6036 = vtanh.pop %v5504
        %v6037 = vtanh.pop %v5506
        %v6038 = vtanh.pop %v5508
        %v6039 = vtanh.pop %v5510
        %v6040 = vtanh.pop %v5514
        %v6041 = vtanh.pop %v5516
        %v6042 = vtanh.pop %v5518
        %v6043 = vtanh.pop %v5520
        %v6044 = vtanh.pop %v5524
        %v6045 = vtanh.pop %v5526
        %v6046 = vtanh.pop %v5528
        %v6047 = vtanh.pop %v5530
        %v6048 = vtanh.pop %v5534
        %v6049 = vtanh.pop %v5536
        %v6050 = vtanh.pop %v5538
        %v6051 = vtanh.pop %v5540
        %v6052 = vtanh.pop %v5544
        %v6053 = vtanh.pop %v5546
        %v6054 = vtanh.pop %v5548
        %v6055 = vtanh.pop %v5550
        %v6056 = vtanh.pop %v5554
        %v6057 = vtanh.pop %v5556
        %v6058 = vtanh.pop %v5558
        %v6059 = vtanh.pop %v5560
        %v6060 = vtanh.pop %v5564
        %v6061 = vtanh.pop %v5566
        %v6062 = vtanh.pop %v5568
        %v6063 = vtanh.pop %v5570
        %v6064 = vtanh.pop %v5574
        %v6065 = vtanh.pop %v5576
        %v6066 = vtanh.pop %v5578
        %v6067 = vtanh.pop %v5580
        %v6068 = vtanh.pop %v5584
        %v6069 = vtanh.pop %v5586
        %v6070 = vtanh.pop %v5588
        %v6071 = vtanh.pop %v5590
        %v6072 = vtanh.pop %v5594
        %v6073 = vtanh.pop %v5596
        %v6074 = vtanh.pop %v5598
        %v6075 = vtanh.pop %v5600
        %v6076 = vtanh.pop %v5604
        %v6077 = vtanh.pop %v5606
        %v6078 = vtanh.pop %v5608
        %v6079 = vtanh.pop %v5610
        %v6080 = vtanh.pop %v5614
        %v6081 = vtanh.pop %v5616
        %v6082 = vtanh.pop %v5618
        %v6083 = vtanh.pop %v5620
        %v6084 = vtanh.pop %v5624
        %v6085 = vtanh.pop %v5626
        %v6086 = vtanh.pop %v5628
        %v6087 = vtanh.pop %v5630
        %v6088 = vtanh.pop %v5634
        %v6089 = vtanh.pop %v5636
        %v6090 = vtanh.pop %v5638
        %v6091 = vtanh.pop %v5640
        %v6092 = vxor.u32 %v5870, 2147483648
        %v6093 = vxor.u32 %v5872, 2147483648
        %v6094 = vxor.u32 %v5874, 2147483648
        %v6095 = vxor.u32 %v5876, 2147483648
        %v6096 = vxor.u32 %v5880, 2147483648
        %v6097 = vxor.u32 %v5882, 2147483648
        %v6098 = vxor.u32 %v5884, 2147483648
        %v6099 = vxor.u32 %v5886, 2147483648
        %v6100 = vxor.u32 %v5890, 2147483648
        %v6101 = vxor.u32 %v5892, 2147483648
        %v6102 = vxor.u32 %v5894, 2147483648
        %v6103 = vxor.u32 %v5896, 2147483648
        %v6104 = vxor.u32 %v5900, 2147483648
        %v6105 = vxor.u32 %v5902, 2147483648
        %v6106 = vxor.u32 %v5904, 2147483648
        %v6107 = vxor.u32 %v5906, 2147483648
        %v6108 = vxor.u32 %v5910, 2147483648
        %v6109 = vxor.u32 %v5912, 2147483648
        %v6110 = vxor.u32 %v5914, 2147483648
        %v6111 = vxor.u32 %v5916, 2147483648
        %v6112 = vxor.u32 %v5920, 2147483648
        %v6113 = vxor.u32 %v5922, 2147483648
        %v6114 = vxor.u32 %v5924, 2147483648
        %v6115 = vxor.u32 %v5926, 2147483648
        %v6116 = vxor.u32 %v5930, 2147483648
        %v6117 = vxor.u32 %v5932, 2147483648
        %v6118 = vxor.u32 %v5934, 2147483648
        %v6119 = vxor.u32 %v5936, 2147483648
        %v6120 = vxor.u32 %v5940, 2147483648
        %v6121 = vxor.u32 %v5942, 2147483648
        %v6122 = vxor.u32 %v5944, 2147483648
        %v6123 = vxor.u32 %v5946, 2147483648
        %v6124 = vxor.u32 %v5950, 2147483648
        %v6125 = vxor.u32 %v5952, 2147483648
        %v6126 = vxor.u32 %v5954, 2147483648
        %v6127 = vxor.u32 %v5956, 2147483648
        %v6128 = vxor.u32 %v5960, 2147483648
        %v6129 = vxor.u32 %v5962, 2147483648
        %v6130 = vxor.u32 %v5964, 2147483648
        %v6131 = vxor.u32 %v5966, 2147483648
        %v6132 = vxor.u32 %v5970, 2147483648
        %v6133 = vxor.u32 %v5972, 2147483648
        %v6134 = vxor.u32 %v5974, 2147483648
        %v6135 = vxor.u32 %v5976, 2147483648
        %v6136 = vxor.u32 %v5980, 2147483648
        %v6137 = vxor.u32 %v5982, 2147483648
        %v6138 = vxor.u32 %v5984, 2147483648
        %v6139 = vxor.u32 %v5986, 2147483648
        %v6140 = vxor.u32 %v5990, 2147483648
        %v6141 = vxor.u32 %v5992, 2147483648
        %v6142 = vxor.u32 %v5994, 2147483648
        %v6143 = vxor.u32 %v5996, 2147483648
        %v6144 = vxor.u32 %v6000, 2147483648
        %v6145 = vxor.u32 %v6002, 2147483648
        %v6146 = vxor.u32 %v6004, 2147483648
        %v6147 = vxor.u32 %v6006, 2147483648
        %v6148 = vxor.u32 %v6010, 2147483648
        %v6149 = vxor.u32 %v6012, 2147483648
        %v6150 = vxor.u32 %v6014, 2147483648
        %v6151 = vxor.u32 %v6016, 2147483648
        %v6152 = vxor.u32 %v6020, 2147483648
        %v6153 = vxor.u32 %v6022, 2147483648
        %v6154 = vxor.u32 %v6024, 2147483648
        %v6155 = vxor.u32 %v6026, 2147483648
        %v6156 = vmul.f32 %v6092, 1.442695
        %v6157 = vpow.pop %v6156
        %v6158 = vmul.f32 %v6093, 1.442695
        %v6159 = vpow.pop %v6158
        %v6160 = vmul.f32 %v6094, 1.442695
        %v6161 = vpow.pop %v6160
        %v6162 = vmul.f32 %v6095, 1.442695
        %v6163 = vpow.pop %v6162
        %v6164 = vmul.f32 %v6096, 1.442695
        %v6165 = vpow.pop %v6164
        %v6166 = vmul.f32 %v6097, 1.442695
        %v6167 = vpow.pop %v6166
        %v6168 = vmul.f32 %v6098, 1.442695
        %v6169 = vpow.pop %v6168
        %v6170 = vmul.f32 %v6099, 1.442695
        %v6171 = vpow.pop %v6170
        %v6172 = vmul.f32 %v6100, 1.442695
        %v6173 = vpow.pop %v6172
        %v6174 = vmul.f32 %v6101, 1.442695
        %v6175 = vpow.pop %v6174
        %v6176 = vmul.f32 %v6102, 1.442695
        %v6177 = vpow.pop %v6176
        %v6178 = vmul.f32 %v6103, 1.442695
        %v6179 = vpow.pop %v6178
        %v6180 = vmul.f32 %v6104, 1.442695
        %v6181 = vpow.pop %v6180
        %v6182 = vmul.f32 %v6105, 1.442695
        %v6183 = vpow.pop %v6182
        %v6184 = vmul.f32 %v6106, 1.442695
        %v6185 = vpow.pop %v6184
        %v6186 = vmul.f32 %v6107, 1.442695
        %v6187 = vpow.pop %v6186
        %v6188 = vmul.f32 %v6108, 1.442695
        %v6189 = vpow.pop %v6188
        %v6190 = vmul.f32 %v6109, 1.442695
        %v6191 = vpow.pop %v6190
        %v6192 = vmul.f32 %v6110, 1.442695
        %v6193 = vpow.pop %v6192
        %v6194 = vmul.f32 %v6111, 1.442695
        %v6195 = vpow.pop %v6194
        %v6196 = vmul.f32 %v6112, 1.442695
        %v6197 = vpow.pop %v6196
        %v6198 = vmul.f32 %v6113, 1.442695
        %v6199 = vpow.pop %v6198
        %v6200 = vmul.f32 %v6114, 1.442695
        %v6201 = vpow.pop %v6200
        %v6202 = vmul.f32 %v6115, 1.442695
        %v6203 = vpow.pop %v6202
        %v6204 = vmul.f32 %v6116, 1.442695
        %v6205 = vpow.pop %v6204
        %v6206 = vmul.f32 %v6117, 1.442695
        %v6207 = vpow.pop %v6206
        %v6208 = vmul.f32 %v6118, 1.442695
        %v6209 = vpow.pop %v6208
        %v6210 = vmul.f32 %v6119, 1.442695
        %v6211 = vpow.pop %v6210
        %v6212 = vmul.f32 %v6120, 1.442695
        %v6213 = vpow.pop %v6212
        %v6214 = vmul.f32 %v6121, 1.442695
        %v6215 = vpow.pop %v6214
        %v6216 = vmul.f32 %v6122, 1.442695
        %v6217 = vpow.pop %v6216
        %v6218 = vmul.f32 %v6123, 1.442695
        %v6219 = vpow.pop %v6218
        %v6220 = vmul.f32 %v6124, 1.442695
        %v6221 = vpow.pop %v6220
        %v6222 = vmul.f32 %v6125, 1.442695
        %v6223 = vpow.pop %v6222
        %v6224 = vmul.f32 %v6126, 1.442695
        %v6225 = vpow.pop %v6224
        %v6226 = vmul.f32 %v6127, 1.442695
        %v6227 = vpow.pop %v6226
        %v6228 = vmul.f32 %v6128, 1.442695
        %v6229 = vpow.pop %v6228
        %v6230 = vmul.f32 %v6129, 1.442695
        %v6231 = vpow.pop %v6230
        %v6232 = vmul.f32 %v6130, 1.442695
        %v6233 = vpow.pop %v6232
        %v6234 = vmul.f32 %v6131, 1.442695
        %v6235 = vpow.pop %v6234
        %v6236 = vmul.f32 %v6132, 1.442695
        %v6237 = vpow.pop %v6236
        %v6238 = vmul.f32 %v6133, 1.442695
        %v6239 = vpow.pop %v6238
        %v6240 = vmul.f32 %v6134, 1.442695
        %v6241 = vpow.pop %v6240
        %v6242 = vmul.f32 %v6135, 1.442695
        %v6243 = vpow.pop %v6242
        %v6244 = vmul.f32 %v6136, 1.442695
        %v6245 = vpow.pop %v6244
        %v6246 = vmul.f32 %v6137, 1.442695
        %v6247 = vpow.pop %v6246
        %v6248 = vmul.f32 %v6138, 1.442695
        %v6249 = vpow.pop %v6248
        %v6250 = vmul.f32 %v6139, 1.442695
        %v6251 = vpow.pop %v6250
        %v6252 = vmul.f32 %v6140, 1.442695
        %v6253 = vpow.pop %v6252
        %v6254 = vmul.f32 %v6141, 1.442695
        %v6255 = vpow.pop %v6254
        %v6256 = vmul.f32 %v6142, 1.442695
        %v6257 = vpow.pop %v6256
        %v6258 = vmul.f32 %v6143, 1.442695
        %v6259 = vpow.pop %v6258
        %v6260 = vmul.f32 %v6144, 1.442695
        %v6261 = vpow.pop %v6260
        %v6262 = vmul.f32 %v6145, 1.442695
        %v6263 = vpow.pop %v6262
        %v6264 = vmul.f32 %v6146, 1.442695
        %v6265 = vpow.pop %v6264
        %v6266 = vmul.f32 %v6147, 1.442695
        %v6267 = vpow.pop %v6266
        %v6268 = vmul.f32 %v6148, 1.442695
        %v6269 = vpow.pop %v6268
        %v6270 = vmul.f32 %v6149, 1.442695
        %v6271 = vpow.pop %v6270
        %v6272 = vmul.f32 %v6150, 1.442695
        %v6273 = vpow.pop %v6272
        %v6274 = vmul.f32 %v6151, 1.442695
        %v6275 = vpow.pop %v6274
        %v6276 = vmul.f32 %v6152, 1.442695
        %v6277 = vpow.pop %v6276
        %v6278 = vmul.f32 %v6153, 1.442695
        %v6279 = vpow.pop %v6278
        %v6280 = vmul.f32 %v6154, 1.442695
        %v6281 = vpow.pop %v6280
        %v6282 = vmul.f32 %v6155, 1.442695
        %v6283 = vpow.pop %v6282
        %v6284 = vadd.f32 %v6157, 1.0
        %v6285 = vadd.f32 %v6159, 1.0
        %v6286 = vadd.f32 %v6161, 1.0
        %v6287 = vadd.f32 %v6163, 1.0
        %v6288 = vadd.f32 %v6165, 1.0
        %v6289 = vadd.f32 %v6167, 1.0
        %v6290 = vadd.f32 %v6169, 1.0
        %v6291 = vadd.f32 %v6171, 1.0
        %v6292 = vadd.f32 %v6173, 1.0
        %v6293 = vadd.f32 %v6175, 1.0
        %v6294 = vadd.f32 %v6177, 1.0
        %v6295 = vadd.f32 %v6179, 1.0
        %v6296 = vadd.f32 %v6181, 1.0
        %v6297 = vadd.f32 %v6183, 1.0
        %v6298 = vadd.f32 %v6185, 1.0
        %v6299 = vadd.f32 %v6187, 1.0
        %v6300 = vadd.f32 %v6189, 1.0
        %v6301 = vadd.f32 %v6191, 1.0
        %v6302 = vadd.f32 %v6193, 1.0
        %v6303 = vadd.f32 %v6195, 1.0
        %v6304 = vadd.f32 %v6197, 1.0
        %v6305 = vadd.f32 %v6199, 1.0
        %v6306 = vadd.f32 %v6201, 1.0
        %v6307 = vadd.f32 %v6203, 1.0
        %v6308 = vadd.f32 %v6205, 1.0
        %v6309 = vadd.f32 %v6207, 1.0
        %v6310 = vadd.f32 %v6209, 1.0
        %v6311 = vadd.f32 %v6211, 1.0
        %v6312 = vadd.f32 %v6213, 1.0
        %v6313 = vadd.f32 %v6215, 1.0
        %v6314 = vadd.f32 %v6217, 1.0
        %v6315 = vadd.f32 %v6219, 1.0
        %v6316 = vadd.f32 %v6221, 1.0
        %v6317 = vadd.f32 %v6223, 1.0
        %v6318 = vadd.f32 %v6225, 1.0
        %v6319 = vadd.f32 %v6227, 1.0
        %v6320 = vadd.f32 %v6229, 1.0
        %v6321 = vadd.f32 %v6231, 1.0
        %v6322 = vadd.f32 %v6233, 1.0
        %v6323 = vadd.f32 %v6235, 1.0
        %v6324 = vadd.f32 %v6237, 1.0
        %v6325 = vadd.f32 %v6239, 1.0
        %v6326 = vadd.f32 %v6241, 1.0
        %v6327 = vadd.f32 %v6243, 1.0
        %v6328 = vadd.f32 %v6245, 1.0
        %v6329 = vadd.f32 %v6247, 1.0
        %v6330 = vadd.f32 %v6249, 1.0
        %v6331 = vadd.f32 %v6251, 1.0
        %v6332 = vadd.f32 %v6253, 1.0
        %v6333 = vadd.f32 %v6255, 1.0
        %v6334 = vadd.f32 %v6257, 1.0
        %v6335 = vadd.f32 %v6259, 1.0
        %v6336 = vadd.f32 %v6261, 1.0
        %v6337 = vadd.f32 %v6263, 1.0
        %v6338 = vadd.f32 %v6265, 1.0
        %v6339 = vadd.f32 %v6267, 1.0
        %v6340 = vadd.f32 %v6269, 1.0
        %v6341 = vadd.f32 %v6271, 1.0
        %v6342 = vadd.f32 %v6273, 1.0
        %v6343 = vadd.f32 %v6275, 1.0
        %v6344 = vadd.f32 %v6277, 1.0
        %v6345 = vadd.f32 %v6279, 1.0
        %v6346 = vadd.f32 %v6281, 1.0
        %v6347 = vadd.f32 %v6283, 1.0
        %v6348 = vrcp.pop %v6284
        %v6349 = vmul.f32 1.0, %v6348
        %v6350 = vrcp.pop %v6285
        %v6351 = vmul.f32 1.0, %v6350
        %v6352 = vrcp.pop %v6286
        %v6353 = vmul.f32 1.0, %v6352
        %v6354 = vrcp.pop %v6287
        %v6355 = vmul.f32 1.0, %v6354
        %v6356 = vrcp.pop %v6288
        %v6357 = vmul.f32 1.0, %v6356
        %v6358 = vrcp.pop %v6289
        %v6359 = vmul.f32 1.0, %v6358
        %v6360 = vrcp.pop %v6290
        %v6361 = vmul.f32 1.0, %v6360
        %v6362 = vrcp.pop %v6291
        %v6363 = vmul.f32 1.0, %v6362
        %v6364 = vrcp.pop %v6292
        %v6365 = vmul.f32 1.0, %v6364
        %v6366 = vrcp.pop %v6293
        %v6367 = vmul.f32 1.0, %v6366
        %v6368 = vrcp.pop %v6294
        %v6369 = vmul.f32 1.0, %v6368
        %v6370 = vrcp.pop %v6295
        %v6371 = vmul.f32 1.0, %v6370
        %v6372 = vrcp.pop %v6296
        %v6373 = vmul.f32 1.0, %v6372
        %v6374 = vrcp.pop %v6297
        %v6375 = vmul.f32 1.0, %v6374
        %v6376 = vrcp.pop %v6298
        %v6377 = vmul.f32 1.0, %v6376
        %v6378 = vrcp.pop %v6299
        %v6379 = vmul.f32 1.0, %v6378
        %v6380 = vrcp.pop %v6300
        %v6381 = vmul.f32 1.0, %v6380
        %v6382 = vrcp.pop %v6301
        %v6383 = vmul.f32 1.0, %v6382
        %v6384 = vrcp.pop %v6302
        %v6385 = vmul.f32 1.0, %v6384
        %v6386 = vrcp.pop %v6303
        %v6387 = vmul.f32 1.0, %v6386
        %v6388 = vrcp.pop %v6304
        %v6389 = vmul.f32 1.0, %v6388
        %v6390 = vrcp.pop %v6305
        %v6391 = vmul.f32 1.0, %v6390
        %v6392 = vrcp.pop %v6306
        %v6393 = vmul.f32 1.0, %v6392
        %v6394 = vrcp.pop %v6307
        %v6395 = vmul.f32 1.0, %v6394
        %v6396 = vrcp.pop %v6308
        %v6397 = vmul.f32 1.0, %v6396
        %v6398 = vrcp.pop %v6309
        %v6399 = vmul.f32 1.0, %v6398
        %v6400 = vrcp.pop %v6310
        %v6401 = vmul.f32 1.0, %v6400
        %v6402 = vrcp.pop %v6311
        %v6403 = vmul.f32 1.0, %v6402
        %v6404 = vrcp.pop %v6312
        %v6405 = vmul.f32 1.0, %v6404
        %v6406 = vrcp.pop %v6313
        %v6407 = vmul.f32 1.0, %v6406
        %v6408 = vrcp.pop %v6314
        %v6409 = vmul.f32 1.0, %v6408
        %v6410 = vrcp.pop %v6315
        %v6411 = vmul.f32 1.0, %v6410
        %v6412 = vrcp.pop %v6316
        %v6413 = vmul.f32 1.0, %v6412
        %v6414 = vrcp.pop %v6317
        %v6415 = vmul.f32 1.0, %v6414
        %v6416 = vrcp.pop %v6318
        %v6417 = vmul.f32 1.0, %v6416
        %v6418 = vrcp.pop %v6319
        %v6419 = vmul.f32 1.0, %v6418
        %v6420 = vrcp.pop %v6320
        %v6421 = vmul.f32 1.0, %v6420
        %v6422 = vrcp.pop %v6321
        %v6423 = vmul.f32 1.0, %v6422
        %v6424 = vrcp.pop %v6322
        %v6425 = vmul.f32 1.0, %v6424
        %v6426 = vrcp.pop %v6323
        %v6427 = vmul.f32 1.0, %v6426
        %v6428 = vrcp.pop %v6324
        %v6429 = vmul.f32 1.0, %v6428
        %v6430 = vrcp.pop %v6325
        %v6431 = vmul.f32 1.0, %v6430
        %v6432 = vrcp.pop %v6326
        %v6433 = vmul.f32 1.0, %v6432
        %v6434 = vrcp.pop %v6327
        %v6435 = vmul.f32 1.0, %v6434
        %v6436 = vrcp.pop %v6328
        %v6437 = vmul.f32 1.0, %v6436
        %v6438 = vrcp.pop %v6329
        %v6439 = vmul.f32 1.0, %v6438
        %v6440 = vrcp.pop %v6330
        %v6441 = vmul.f32 1.0, %v6440
        %v6442 = vrcp.pop %v6331
        %v6443 = vmul.f32 1.0, %v6442
        %v6444 = vrcp.pop %v6332
        %v6445 = vmul.f32 1.0, %v6444
        %v6446 = vrcp.pop %v6333
        %v6447 = vmul.f32 1.0, %v6446
        %v6448 = vrcp.pop %v6334
        %v6449 = vmul.f32 1.0, %v6448
        %v6450 = vrcp.pop %v6335
        %v6451 = vmul.f32 1.0, %v6450
        %v6452 = vrcp.pop %v6336
        %v6453 = vmul.f32 1.0, %v6452
        %v6454 = vrcp.pop %v6337
        %v6455 = vmul.f32 1.0, %v6454
        %v6456 = vrcp.pop %v6338
        %v6457 = vmul.f32 1.0, %v6456
        %v6458 = vrcp.pop %v6339
        %v6459 = vmul.f32 1.0, %v6458
        %v6460 = vrcp.pop %v6340
        %v6461 = vmul.f32 1.0, %v6460
        %v6462 = vrcp.pop %v6341
        %v6463 = vmul.f32 1.0, %v6462
        %v6464 = vrcp.pop %v6342
        %v6465 = vmul.f32 1.0, %v6464
        %v6466 = vrcp.pop %v6343
        %v6467 = vmul.f32 1.0, %v6466
        %v6468 = vrcp.pop %v6344
        %v6469 = vmul.f32 1.0, %v6468
        %v6470 = vrcp.pop %v6345
        %v6471 = vmul.f32 1.0, %v6470
        %v6472 = vrcp.pop %v6346
        %v6473 = vmul.f32 1.0, %v6472
        %v6474 = vrcp.pop %v6347
        %v6475 = vmul.f32 1.0, %v6474
        %v6476 = vmul.f32 %v6028, %v6349
        %v6477 = vmul.f32 %v6029, %v6351
        %v6478 = vmul.f32 %v6030, %v6353
        %v6479 = vmul.f32 %v6031, %v6355
        %v6480 = vmul.f32 %v6032, %v6357
        %v6481 = vmul.f32 %v6033, %v6359
        %v6482 = vmul.f32 %v6034, %v6361
        %v6483 = vmul.f32 %v6035, %v6363
        %v6484 = vmul.f32 %v6036, %v6365
        %v6485 = vmul.f32 %v6037, %v6367
        %v6486 = vmul.f32 %v6038, %v6369
        %v6487 = vmul.f32 %v6039, %v6371
        %v6488 = vmul.f32 %v6040, %v6373
        %v6489 = vmul.f32 %v6041, %v6375
        %v6490 = vmul.f32 %v6042, %v6377
        %v6491 = vmul.f32 %v6043, %v6379
        %v6492 = vmul.f32 %v6044, %v6381
        %v6493 = vmul.f32 %v6045, %v6383
        %v6494 = vmul.f32 %v6046, %v6385
        %v6495 = vmul.f32 %v6047, %v6387
        %v6496 = vmul.f32 %v6048, %v6389
        %v6497 = vmul.f32 %v6049, %v6391
        %v6498 = vmul.f32 %v6050, %v6393
        %v6499 = vmul.f32 %v6051, %v6395
        %v6500 = vmul.f32 %v6052, %v6397
        %v6501 = vmul.f32 %v6053, %v6399
        %v6502 = vmul.f32 %v6054, %v6401
        %v6503 = vmul.f32 %v6055, %v6403
        %v6504 = vmul.f32 %v6056, %v6405
        %v6505 = vmul.f32 %v6057, %v6407
        %v6506 = vmul.f32 %v6058, %v6409
        %v6507 = vmul.f32 %v6059, %v6411
        %v6508 = vmul.f32 %v6060, %v6413
        %v6509 = vmul.f32 %v6061, %v6415
        %v6510 = vmul.f32 %v6062, %v6417
        %v6511 = vmul.f32 %v6063, %v6419
        %v6512 = vmul.f32 %v6064, %v6421
        %v6513 = vmul.f32 %v6065, %v6423
        %v6514 = vmul.f32 %v6066, %v6425
        %v6515 = vmul.f32 %v6067, %v6427
        %v6516 = vmul.f32 %v6068, %v6429
        %v6517 = vmul.f32 %v6069, %v6431
        %v6518 = vmul.f32 %v6070, %v6433
        %v6519 = vmul.f32 %v6071, %v6435
        %v6520 = vmul.f32 %v6072, %v6437
        %v6521 = vmul.f32 %v6073, %v6439
        %v6522 = vmul.f32 %v6074, %v6441
        %v6523 = vmul.f32 %v6075, %v6443
        %v6524 = vmul.f32 %v6076, %v6445
        %v6525 = vmul.f32 %v6077, %v6447
        %v6526 = vmul.f32 %v6078, %v6449
        %v6527 = vmul.f32 %v6079, %v6451
        %v6528 = vmul.f32 %v6080, %v6453
        %v6529 = vmul.f32 %v6081, %v6455
        %v6530 = vmul.f32 %v6082, %v6457
        %v6531 = vmul.f32 %v6083, %v6459
        %v6532 = vmul.f32 %v6084, %v6461
        %v6533 = vmul.f32 %v6085, %v6463
        %v6534 = vmul.f32 %v6086, %v6465
        %v6535 = vmul.f32 %v6087, %v6467
        %v6536 = vmul.f32 %v6088, %v6469
        %v6537 = vmul.f32 %v6089, %v6471
        %v6538 = vmul.f32 %v6090, %v6473
        %v6539 = vmul.f32 %v6091, %v6475
        %v6540 = vld [vmem:[#allocation16] sm:$0x3]
        %v6542 = vlaneseq
        %v6543 = vshrl.u32 %v6542, 7
        %v6544 = vsub.s32 0, %v6543
        %v6545 = vrot.slane %v6540, %v6544
        %v6546 = vlaneseq
        %v6547 = vshrl.u32 %v6546, 7
        %v6548 = vsub.s32 1, %v6547
        %v6549 = vrot.slane %v6540, %v6548
        %v6552 = vmul.f32 %v6476, %v6545
        %v6553 = vmul.f32 %v6477, %v6549
        %v6554 = vmul.f32 %v6478, %v6545
        %v6555 = vmul.f32 %v6479, %v6549
        %v6556 = vmul.f32 %v6480, %v6545
        %v6557 = vmul.f32 %v6481, %v6549
        %v6558 = vmul.f32 %v6482, %v6545
        %v6559 = vmul.f32 %v6483, %v6549
        %v6560 = vmul.f32 %v6484, %v6545
        %v6561 = vmul.f32 %v6485, %v6549
        %v6562 = vmul.f32 %v6486, %v6545
        %v6563 = vmul.f32 %v6487, %v6549
        %v6564 = vmul.f32 %v6488, %v6545
        %v6565 = vmul.f32 %v6489, %v6549
        %v6566 = vmul.f32 %v6490, %v6545
        %v6567 = vmul.f32 %v6491, %v6549
        %v6568 = vmul.f32 %v6492, %v6545
        %v6569 = vmul.f32 %v6493, %v6549
        %v6570 = vmul.f32 %v6494, %v6545
        %v6571 = vmul.f32 %v6495, %v6549
        %v6572 = vmul.f32 %v6496, %v6545
        %v6573 = vmul.f32 %v6497, %v6549
        %v6574 = vmul.f32 %v6498, %v6545
        %v6575 = vmul.f32 %v6499, %v6549
        %v6576 = vmul.f32 %v6500, %v6545
        %v6577 = vmul.f32 %v6501, %v6549
        %v6578 = vmul.f32 %v6502, %v6545
        %v6579 = vmul.f32 %v6503, %v6549
        %v6580 = vmul.f32 %v6504, %v6545
        %v6581 = vmul.f32 %v6505, %v6549
        %v6582 = vmul.f32 %v6506, %v6545
        %v6583 = vmul.f32 %v6507, %v6549
        %v6584 = vmul.f32 %v6508, %v6545
        %v6585 = vmul.f32 %v6509, %v6549
        %v6586 = vmul.f32 %v6510, %v6545
        %v6587 = vmul.f32 %v6511, %v6549
        %v6588 = vmul.f32 %v6512, %v6545
        %v6589 = vmul.f32 %v6513, %v6549
        %v6590 = vmul.f32 %v6514, %v6545
        %v6591 = vmul.f32 %v6515, %v6549
        %v6592 = vmul.f32 %v6516, %v6545
        %v6593 = vmul.f32 %v6517, %v6549
        %v6594 = vmul.f32 %v6518, %v6545
        %v6595 = vmul.f32 %v6519, %v6549
        %v6596 = vmul.f32 %v6520, %v6545
        %v6597 = vmul.f32 %v6521, %v6549
        %v6598 = vmul.f32 %v6522, %v6545
        %v6599 = vmul.f32 %v6523, %v6549
        %v6600 = vmul.f32 %v6524, %v6545
        %v6601 = vmul.f32 %v6525, %v6549
        %v6602 = vmul.f32 %v6526, %v6545
        %v6603 = vmul.f32 %v6527, %v6549
        %v6604 = vmul.f32 %v6528, %v6545
        %v6605 = vmul.f32 %v6529, %v6549
        %v6606 = vmul.f32 %v6530, %v6545
        %v6607 = vmul.f32 %v6531, %v6549
        %v6608 = vmul.f32 %v6532, %v6545
        %v6609 = vmul.f32 %v6533, %v6549
        %v6610 = vmul.f32 %v6534, %v6545
        %v6611 = vmul.f32 %v6535, %v6549
        %v6612 = vmul.f32 %v6536, %v6545
        %v6613 = vmul.f32 %v6537, %v6549
        %v6614 = vmul.f32 %v6538, %v6545
        %v6615 = vmul.f32 %v6539, %v6549
        %v6616 = vadd.f32 %v6552, %v6553
        %6617 = vadd.xlane.f32.xlu0 %v6616
        %v6618 = vpop.xlane.xlu0 %6617
        %v6619 = vadd.f32 %v6554, %v6555
        %6620 = vadd.xlane.f32.xlu0 %v6619
        %v6621 = vpop.xlane.xlu0 %6620
        %v6622 = vadd.f32 %v6556, %v6557
        %6623 = vadd.xlane.f32.xlu0 %v6622
        %v6624 = vpop.xlane.xlu0 %6623
        %v6625 = vadd.f32 %v6558, %v6559
        %6626 = vadd.xlane.f32.xlu0 %v6625
        %v6627 = vpop.xlane.xlu0 %6626
        %v6628 = vadd.f32 %v6560, %v6561
        %6629 = vadd.xlane.f32.xlu0 %v6628
        %v6630 = vpop.xlane.xlu0 %6629
        %v6631 = vadd.f32 %v6562, %v6563
        %6632 = vadd.xlane.f32.xlu0 %v6631
        %v6633 = vpop.xlane.xlu0 %6632
        %v6634 = vadd.f32 %v6564, %v6565
        %6635 = vadd.xlane.f32.xlu0 %v6634
        %v6636 = vpop.xlane.xlu0 %6635
        %v6637 = vadd.f32 %v6566, %v6567
        %6638 = vadd.xlane.f32.xlu0 %v6637
        %v6639 = vpop.xlane.xlu0 %6638
        %v6640 = vadd.f32 %v6568, %v6569
        %6641 = vadd.xlane.f32.xlu0 %v6640
        %v6642 = vpop.xlane.xlu0 %6641
        %v6643 = vadd.f32 %v6570, %v6571
        %6644 = vadd.xlane.f32.xlu0 %v6643
        %v6645 = vpop.xlane.xlu0 %6644
        %v6646 = vadd.f32 %v6572, %v6573
        %6647 = vadd.xlane.f32.xlu0 %v6646
        %v6648 = vpop.xlane.xlu0 %6647
        %v6649 = vadd.f32 %v6574, %v6575
        %6650 = vadd.xlane.f32.xlu0 %v6649
        %v6651 = vpop.xlane.xlu0 %6650
        %v6652 = vadd.f32 %v6576, %v6577
        %6653 = vadd.xlane.f32.xlu0 %v6652
        %v6654 = vpop.xlane.xlu0 %6653
        %v6655 = vadd.f32 %v6578, %v6579
        %6656 = vadd.xlane.f32.xlu0 %v6655
        %v6657 = vpop.xlane.xlu0 %6656
        %v6658 = vadd.f32 %v6580, %v6581
        %6659 = vadd.xlane.f32.xlu0 %v6658
        %v6660 = vpop.xlane.xlu0 %6659
        %v6661 = vadd.f32 %v6582, %v6583
        %6662 = vadd.xlane.f32.xlu0 %v6661
        %v6663 = vpop.xlane.xlu0 %6662
        %v6664 = vadd.f32 %v6584, %v6585
        %6665 = vadd.xlane.f32.xlu0 %v6664
        %v6666 = vpop.xlane.xlu0 %6665
        %v6667 = vadd.f32 %v6586, %v6587
        %6668 = vadd.xlane.f32.xlu0 %v6667
        %v6669 = vpop.xlane.xlu0 %6668
        %v6670 = vadd.f32 %v6588, %v6589
        %6671 = vadd.xlane.f32.xlu0 %v6670
        %v6672 = vpop.xlane.xlu0 %6671
        %v6673 = vadd.f32 %v6590, %v6591
        %6674 = vadd.xlane.f32.xlu0 %v6673
        %v6675 = vpop.xlane.xlu0 %6674
        %v6676 = vadd.f32 %v6592, %v6593
        %6677 = vadd.xlane.f32.xlu0 %v6676
        %v6678 = vpop.xlane.xlu0 %6677
        %v6679 = vadd.f32 %v6594, %v6595
        %6680 = vadd.xlane.f32.xlu0 %v6679
        %v6681 = vpop.xlane.xlu0 %6680
        %v6682 = vadd.f32 %v6596, %v6597
        %6683 = vadd.xlane.f32.xlu0 %v6682
        %v6684 = vpop.xlane.xlu0 %6683
        %v6685 = vadd.f32 %v6598, %v6599
        %6686 = vadd.xlane.f32.xlu0 %v6685
        %v6687 = vpop.xlane.xlu0 %6686
        %v6688 = vadd.f32 %v6600, %v6601
        %6689 = vadd.xlane.f32.xlu0 %v6688
        %v6690 = vpop.xlane.xlu0 %6689
        %v6691 = vadd.f32 %v6602, %v6603
        %6692 = vadd.xlane.f32.xlu0 %v6691
        %v6693 = vpop.xlane.xlu0 %6692
        %v6694 = vadd.f32 %v6604, %v6605
        %6695 = vadd.xlane.f32.xlu0 %v6694
        %v6696 = vpop.xlane.xlu0 %6695
        %v6697 = vadd.f32 %v6606, %v6607
        %6698 = vadd.xlane.f32.xlu0 %v6697
        %v6699 = vpop.xlane.xlu0 %6698
        %v6700 = vadd.f32 %v6608, %v6609
        %6701 = vadd.xlane.f32.xlu0 %v6700
        %v6702 = vpop.xlane.xlu0 %6701
        %v6703 = vadd.f32 %v6610, %v6611
        %6704 = vadd.xlane.f32.xlu0 %v6703
        %v6705 = vpop.xlane.xlu0 %6704
        %v6706 = vadd.f32 %v6612, %v6613
        %6707 = vadd.xlane.f32.xlu0 %v6706
        %v6708 = vpop.xlane.xlu0 %6707
        %v6709 = vadd.f32 %v6614, %v6615
        %6710 = vadd.xlane.f32.xlu0 %v6709
        %v6711 = vpop.xlane.xlu0 %6710
        %v6712 = vld [vmem:[#allocation7] sm:$0x1]
        %v6714 = vlaneseq
        %v6715 = vshrl.u32 %v6714, 7
        %v6716 = vsub.s32 0, %v6715
        %v6717 = vrot.slane %v6712, %v6716
        %v6719 = vadd.f32 %v6618, %v6717
        %v6720 = vadd.f32 %v6621, %v6717
        %v6721 = vadd.f32 %v6624, %v6717
        %v6722 = vadd.f32 %v6627, %v6717
        %v6723 = vadd.f32 %v6630, %v6717
        %v6724 = vadd.f32 %v6633, %v6717
        %v6725 = vadd.f32 %v6636, %v6717
        %v6726 = vadd.f32 %v6639, %v6717
        %v6727 = vadd.f32 %v6642, %v6717
        %v6728 = vadd.f32 %v6645, %v6717
        %v6729 = vadd.f32 %v6648, %v6717
        %v6730 = vadd.f32 %v6651, %v6717
        %v6731 = vadd.f32 %v6654, %v6717
        %v6732 = vadd.f32 %v6657, %v6717
        %v6733 = vadd.f32 %v6660, %v6717
        %v6734 = vadd.f32 %v6663, %v6717
        %v6735 = vadd.f32 %v6666, %v6717
        %v6736 = vadd.f32 %v6669, %v6717
        %v6737 = vadd.f32 %v6672, %v6717
        %v6738 = vadd.f32 %v6675, %v6717
        %v6739 = vadd.f32 %v6678, %v6717
        %v6740 = vadd.f32 %v6681, %v6717
        %v6741 = vadd.f32 %v6684, %v6717
        %v6742 = vadd.f32 %v6687, %v6717
        %v6743 = vadd.f32 %v6690, %v6717
        %v6744 = vadd.f32 %v6693, %v6717
        %v6745 = vadd.f32 %v6696, %v6717
        %v6746 = vadd.f32 %v6699, %v6717
        %v6747 = vadd.f32 %v6702, %v6717
        %v6748 = vadd.f32 %v6705, %v6717
        %v6749 = vadd.f32 %v6708, %v6717
        %v6750 = vadd.f32 %v6711, %v6717
        %v6751 = vsel %vm564, %v6719, -1e+30
        %v6752 = vsel %vm565, %v6720, -1e+30
        %v6753 = vsel %vm566, %v6721, -1e+30
        %v6754 = vsel %vm567, %v6722, -1e+30
        %v6755 = vsel %vm568, %v6723, -1e+30
        %v6756 = vsel %vm569, %v6724, -1e+30
        %v6757 = vsel %vm570, %v6725, -1e+30
        %v6758 = vsel %vm571, %v6726, -1e+30
        %v6759 = vsel %vm572, %v6727, -1e+30
        %v6760 = vsel %vm573, %v6728, -1e+30
        %v6761 = vsel %vm574, %v6729, -1e+30
        %v6762 = vsel %vm575, %v6730, -1e+30
        %v6763 = vsel %vm576, %v6731, -1e+30
        %v6764 = vsel %vm577, %v6732, -1e+30
        %v6765 = vsel %vm578, %v6733, -1e+30
        %v6766 = vsel %vm579, %v6734, -1e+30
        %v6767 = vsel %vm580, %v6735, -1e+30
        %v6768 = vsel %vm581, %v6736, -1e+30
        %v6769 = vsel %vm582, %v6737, -1e+30
        %v6770 = vsel %vm583, %v6738, -1e+30
        %v6771 = vsel %vm584, %v6739, -1e+30
        %v6772 = vsel %vm585, %v6740, -1e+30
        %v6773 = vsel %vm586, %v6741, -1e+30
        %v6774 = vsel %vm587, %v6742, -1e+30
        %v6775 = vsel %vm588, %v6743, -1e+30
        %v6776 = vsel %vm589, %v6744, -1e+30
        %v6777 = vsel %vm590, %v6745, -1e+30
        %v6778 = vsel %vm591, %v6746, -1e+30
        %v6779 = vsel %vm592, %v6747, -1e+30
        %v6780 = vsel %vm593, %v6748, -1e+30
        %v6781 = vsel %vm594, %v6749, -1e+30
        %v6782 = vsel %vm595, %v6750, -1e+30
        %v6783 = vld [vmem:[#allocation2] sm:$0x1]
        %vm6784 = vcmask 7168
        %v6785 = vsel %vm6784, %v6751, -inf
        %v6786 = vsel %vm6784, %v6752, -inf
        %v6787 = vsel %vm6784, %v6753, -inf
        %v6788 = vsel %vm6784, %v6754, -inf
        %v6789 = vsel %vm6784, %v6755, -inf
        %v6790 = vmax.f32 %v6785, %v6789
        %v6791 = vsel %vm6784, %v6756, -inf
        %v6792 = vmax.f32 %v6786, %v6791
        %v6793 = vsel %vm6784, %v6757, -inf
        %v6794 = vmax.f32 %v6787, %v6793
        %v6795 = vsel %vm6784, %v6758, -inf
        %v6796 = vmax.f32 %v6788, %v6795
        %v6797 = vsel %vm6784, %v6759, -inf
        %v6798 = vmax.f32 %v6790, %v6797
        %v6799 = vsel %vm6784, %v6760, -inf
        %v6800 = vmax.f32 %v6792, %v6799
        %v6801 = vsel %vm6784, %v6761, -inf
        %v6802 = vmax.f32 %v6794, %v6801
        %v6803 = vsel %vm6784, %v6762, -inf
        %v6804 = vmax.f32 %v6796, %v6803
        %v6805 = vsel %vm6784, %v6763, -inf
        %v6806 = vmax.f32 %v6798, %v6805
        %v6807 = vsel %vm6784, %v6764, -inf
        %v6808 = vmax.f32 %v6800, %v6807
        %v6809 = vsel %vm6784, %v6765, -inf
        %v6810 = vmax.f32 %v6802, %v6809
        %v6811 = vsel %vm6784, %v6766, -inf
        %v6812 = vmax.f32 %v6804, %v6811
        %v6813 = vsel %vm6784, %v6767, -inf
        %v6814 = vmax.f32 %v6806, %v6813
        %v6815 = vsel %vm6784, %v6768, -inf
        %v6816 = vmax.f32 %v6808, %v6815
        %v6817 = vsel %vm6784, %v6769, -inf
        %v6818 = vmax.f32 %v6810, %v6817
        %v6819 = vsel %vm6784, %v6770, -inf
        %v6820 = vmax.f32 %v6812, %v6819
        %v6821 = vsel %vm6784, %v6771, -inf
        %v6822 = vmax.f32 %v6814, %v6821
        %v6823 = vsel %vm6784, %v6772, -inf
        %v6824 = vmax.f32 %v6816, %v6823
        %v6825 = vsel %vm6784, %v6773, -inf
        %v6826 = vmax.f32 %v6818, %v6825
        %v6827 = vsel %vm6784, %v6774, -inf
        %v6828 = vmax.f32 %v6820, %v6827
        %v6829 = vsel %vm6784, %v6775, -inf
        %v6830 = vmax.f32 %v6822, %v6829
        %v6831 = vsel %vm6784, %v6776, -inf
        %v6832 = vmax.f32 %v6824, %v6831
        %v6833 = vsel %vm6784, %v6777, -inf
        %v6834 = vmax.f32 %v6826, %v6833
        %v6835 = vsel %vm6784, %v6778, -inf
        %v6836 = vmax.f32 %v6828, %v6835
        %v6837 = vsel %vm6784, %v6779, -inf
        %v6838 = vmax.f32 %v6830, %v6837
        %v6839 = vsel %vm6784, %v6780, -inf
        %v6840 = vmax.f32 %v6832, %v6839
        %v6841 = vsel %vm6784, %v6781, -inf
        %v6842 = vmax.f32 %v6834, %v6841
        %v6843 = vsel %vm6784, %v6782, -inf
        %v6844 = vmax.f32 %v6836, %v6843
        %v6845 = vmax.f32 %v6838, %v6840
        %v6846 = vmax.f32 %v6842, %v6844
        %v6847 = vmax.f32 %v6845, %v6846
        %v6848 = vrot.slane %v6847, 4
        %v6849 = vmax.f32 %v6847, %v6848
        %v6850 = vrot.slane %v6849, 2
        %v6851 = vmax.f32 %v6849, %v6850
        %v6852 = vrot.slane %v6851, 1
        %v6853 = vmax.f32 %v6851, %v6852
        %v6854 = vmax.f32 %v6783, %v6853
        %v6855 = vsub.f32 %v6783, %v6854
        %v6856 = vmul.f32 %v6855, 1.442695
        %v6857 = vpow.pop %v6856
        %v6859 = vlaneseq
        %v6860 = vshrl.u32 %v6859, 7
        %v6861 = vsub.s32 0, %v6860
        %v6862 = vrot.slane %v6854, %v6861
        %v6864 = vsub.f32 %v6751, %v6862
        %v6865 = vsub.f32 %v6752, %v6862
        %v6866 = vsub.f32 %v6753, %v6862
        %v6867 = vsub.f32 %v6754, %v6862
        %v6868 = vsub.f32 %v6755, %v6862
        %v6869 = vsub.f32 %v6756, %v6862
        %v6870 = vsub.f32 %v6757, %v6862
        %v6871 = vsub.f32 %v6758, %v6862
        %v6872 = vsub.f32 %v6759, %v6862
        %v6873 = vsub.f32 %v6760, %v6862
        %v6874 = vsub.f32 %v6761, %v6862
        %v6875 = vsub.f32 %v6762, %v6862
        %v6876 = vsub.f32 %v6763, %v6862
        %v6877 = vsub.f32 %v6764, %v6862
        %v6878 = vsub.f32 %v6765, %v6862
        %v6879 = vsub.f32 %v6766, %v6862
        %v6880 = vsub.f32 %v6767, %v6862
        %v6881 = vsub.f32 %v6768, %v6862
        %v6882 = vsub.f32 %v6769, %v6862
        %v6883 = vsub.f32 %v6770, %v6862
        %v6884 = vsub.f32 %v6771, %v6862
        %v6885 = vsub.f32 %v6772, %v6862
        %v6886 = vsub.f32 %v6773, %v6862
        %v6887 = vsub.f32 %v6774, %v6862
        %v6888 = vsub.f32 %v6775, %v6862
        %v6889 = vsub.f32 %v6776, %v6862
        %v6890 = vsub.f32 %v6777, %v6862
        %v6891 = vsub.f32 %v6778, %v6862
        %v6892 = vsub.f32 %v6779, %v6862
        %v6893 = vsub.f32 %v6780, %v6862
        %v6894 = vsub.f32 %v6781, %v6862
        %v6895 = vsub.f32 %v6782, %v6862
        %v6896 = vmul.f32 %v6864, 1.442695
        %v6897 = vpow.pop %v6896
        %v6898 = vmul.f32 %v6865, 1.442695
        %v6899 = vpow.pop %v6898
        %v6900 = vmul.f32 %v6866, 1.442695
        %v6901 = vpow.pop %v6900
        %v6902 = vmul.f32 %v6867, 1.442695
        %v6903 = vpow.pop %v6902
        %v6904 = vmul.f32 %v6868, 1.442695
        %v6905 = vpow.pop %v6904
        %v6906 = vmul.f32 %v6869, 1.442695
        %v6907 = vpow.pop %v6906
        %v6908 = vmul.f32 %v6870, 1.442695
        %v6909 = vpow.pop %v6908
        %v6910 = vmul.f32 %v6871, 1.442695
        %v6911 = vpow.pop %v6910
        %v6912 = vmul.f32 %v6872, 1.442695
        %v6913 = vpow.pop %v6912
        %v6914 = vmul.f32 %v6873, 1.442695
        %v6915 = vpow.pop %v6914
        %v6916 = vmul.f32 %v6874, 1.442695
        %v6917 = vpow.pop %v6916
        %v6918 = vmul.f32 %v6875, 1.442695
        %v6919 = vpow.pop %v6918
        %v6920 = vmul.f32 %v6876, 1.442695
        %v6921 = vpow.pop %v6920
        %v6922 = vmul.f32 %v6877, 1.442695
        %v6923 = vpow.pop %v6922
        %v6924 = vmul.f32 %v6878, 1.442695
        %v6925 = vpow.pop %v6924
        %v6926 = vmul.f32 %v6879, 1.442695
        %v6927 = vpow.pop %v6926
        %v6928 = vmul.f32 %v6880, 1.442695
        %v6929 = vpow.pop %v6928
        %v6930 = vmul.f32 %v6881, 1.442695
        %v6931 = vpow.pop %v6930
        %v6932 = vmul.f32 %v6882, 1.442695
        %v6933 = vpow.pop %v6932
        %v6934 = vmul.f32 %v6883, 1.442695
        %v6935 = vpow.pop %v6934
        %v6936 = vmul.f32 %v6884, 1.442695
        %v6937 = vpow.pop %v6936
        %v6938 = vmul.f32 %v6885, 1.442695
        %v6939 = vpow.pop %v6938
        %v6940 = vmul.f32 %v6886, 1.442695
        %v6941 = vpow.pop %v6940
        %v6942 = vmul.f32 %v6887, 1.442695
        %v6943 = vpow.pop %v6942
        %v6944 = vmul.f32 %v6888, 1.442695
        %v6945 = vpow.pop %v6944
        %v6946 = vmul.f32 %v6889, 1.442695
        %v6947 = vpow.pop %v6946
        %v6948 = vmul.f32 %v6890, 1.442695
        %v6949 = vpow.pop %v6948
        %v6950 = vmul.f32 %v6891, 1.442695
        %v6951 = vpow.pop %v6950
        %v6952 = vmul.f32 %v6892, 1.442695
        %v6953 = vpow.pop %v6952
        %v6954 = vmul.f32 %v6893, 1.442695
        %v6955 = vpow.pop %v6954
        %v6956 = vmul.f32 %v6894, 1.442695
        %v6957 = vpow.pop %v6956
        %v6958 = vmul.f32 %v6895, 1.442695
        %v6959 = vpow.pop %v6958
        %v6960 = vsel %vm564, %v6897, 0.0
        %v6961 = vsel %vm565, %v6899, 0.0
        %v6962 = vsel %vm566, %v6901, 0.0
        %v6963 = vsel %vm567, %v6903, 0.0
        %v6964 = vsel %vm568, %v6905, 0.0
        %v6965 = vsel %vm569, %v6907, 0.0
        %v6966 = vsel %vm570, %v6909, 0.0
        %v6967 = vsel %vm571, %v6911, 0.0
        %v6968 = vsel %vm572, %v6913, 0.0
        %v6969 = vsel %vm573, %v6915, 0.0
        %v6970 = vsel %vm574, %v6917, 0.0
        %v6971 = vsel %vm575, %v6919, 0.0
        %v6972 = vsel %vm576, %v6921, 0.0
        %v6973 = vsel %vm577, %v6923, 0.0
        %v6974 = vsel %vm578, %v6925, 0.0
        %v6975 = vsel %vm579, %v6927, 0.0
        %v6976 = vsel %vm580, %v6929, 0.0
        %v6977 = vsel %vm581, %v6931, 0.0
        %v6978 = vsel %vm582, %v6933, 0.0
        %v6979 = vsel %vm583, %v6935, 0.0
        %v6980 = vsel %vm584, %v6937, 0.0
        %v6981 = vsel %vm585, %v6939, 0.0
        %v6982 = vsel %vm586, %v6941, 0.0
        %v6983 = vsel %vm587, %v6943, 0.0
        %v6984 = vsel %vm588, %v6945, 0.0
        %v6985 = vsel %vm589, %v6947, 0.0
        %v6986 = vsel %vm590, %v6949, 0.0
        %v6987 = vsel %vm591, %v6951, 0.0
        %v6988 = vsel %vm592, %v6953, 0.0
        %v6989 = vsel %vm593, %v6955, 0.0
        %v6990 = vsel %vm594, %v6957, 0.0
        %v6991 = vsel %vm595, %v6959, 0.0
        %v6992 = vld [vmem:[#allocation3] sm:$0x1]
        %v6993 = vmul.f32 %v6857, %v6992
        %v6994 = vsel %vm6784, %v6960, 0.0
        %v6995 = vsel %vm6784, %v6961, 0.0
        %v6996 = vadd.f32 %v6994, %v6995
        %v6997 = vsel %vm6784, %v6962, 0.0
        %v6998 = vadd.f32 %v6996, %v6997
        %v6999 = vsel %vm6784, %v6963, 0.0
        %v7000 = vadd.f32 %v6998, %v6999
        %v7001 = vsel %vm6784, %v6964, 0.0
        %v7002 = vadd.f32 %v7000, %v7001
        %v7003 = vsel %vm6784, %v6965, 0.0
        %v7004 = vadd.f32 %v7002, %v7003
        %v7005 = vsel %vm6784, %v6966, 0.0
        %v7006 = vadd.f32 %v7004, %v7005
        %v7007 = vsel %vm6784, %v6967, 0.0
        %v7008 = vadd.f32 %v7006, %v7007
        %v7009 = vsel %vm6784, %v6968, 0.0
        %v7010 = vadd.f32 %v7008, %v7009
        %v7011 = vsel %vm6784, %v6969, 0.0
        %v7012 = vadd.f32 %v7010, %v7011
        %v7013 = vsel %vm6784, %v6970, 0.0
        %v7014 = vadd.f32 %v7012, %v7013
        %v7015 = vsel %vm6784, %v6971, 0.0
        %v7016 = vadd.f32 %v7014, %v7015
        %v7017 = vsel %vm6784, %v6972, 0.0
        %v7018 = vadd.f32 %v7016, %v7017
        %v7019 = vsel %vm6784, %v6973, 0.0
        %v7020 = vadd.f32 %v7018, %v7019
        %v7021 = vsel %vm6784, %v6974, 0.0
        %v7022 = vadd.f32 %v7020, %v7021
        %v7023 = vsel %vm6784, %v6975, 0.0
        %v7024 = vadd.f32 %v7022, %v7023
        %v7025 = vsel %vm6784, %v6976, 0.0
        %v7026 = vadd.f32 %v7024, %v7025
        %v7027 = vsel %vm6784, %v6977, 0.0
        %v7028 = vadd.f32 %v7026, %v7027
        %v7029 = vsel %vm6784, %v6978, 0.0
        %v7030 = vadd.f32 %v7028, %v7029
        %v7031 = vsel %vm6784, %v6979, 0.0
        %v7032 = vadd.f32 %v7030, %v7031
        %v7033 = vsel %vm6784, %v6980, 0.0
        %v7034 = vadd.f32 %v7032, %v7033
        %v7035 = vsel %vm6784, %v6981, 0.0
        %v7036 = vadd.f32 %v7034, %v7035
        %v7037 = vsel %vm6784, %v6982, 0.0
        %v7038 = vadd.f32 %v7036, %v7037
        %v7039 = vsel %vm6784, %v6983, 0.0
        %v7040 = vadd.f32 %v7038, %v7039
        %v7041 = vsel %vm6784, %v6984, 0.0
        %v7042 = vadd.f32 %v7040, %v7041
        %v7043 = vsel %vm6784, %v6985, 0.0
        %v7044 = vadd.f32 %v7042, %v7043
        %v7045 = vsel %vm6784, %v6986, 0.0
        %v7046 = vadd.f32 %v7044, %v7045
        %v7047 = vsel %vm6784, %v6987, 0.0
        %v7048 = vadd.f32 %v7046, %v7047
        %v7049 = vsel %vm6784, %v6988, 0.0
        %v7050 = vadd.f32 %v7048, %v7049
        %v7051 = vsel %vm6784, %v6989, 0.0
        %v7052 = vadd.f32 %v7050, %v7051
        %v7053 = vsel %vm6784, %v6990, 0.0
        %v7054 = vadd.f32 %v7052, %v7053
        %v7055 = vsel %vm6784, %v6991, 0.0
        %v7056 = vadd.f32 %v7054, %v7055
        %v7057 = vrot.slane %v7056, 4
        %v7058 = vadd.f32 %v7056, %v7057
        %v7059 = vrot.slane %v7058, 2
        %v7060 = vadd.f32 %v7058, %v7059
        %v7061 = vrot.slane %v7060, 1
        %v7062 = vadd.f32 %v7060, %v7061
        %v7063 = vadd.f32 %v6993, %v7062
        %vm7064 = vcmask 0
        %7065 = vst.msk [vmem:[#allocation3] sm:$0x1] %vm7064, %v7063
        %v7066 = vld [vmem:[#allocation4] sm:$0xf]
        %7068 = vset.pattern.permute.xlu0 0
        %7069 = vperm.xlu0 %7068, %v6857
        %v7070 = vpop.permute.xlu0 %7069
        %v7072 = vlaneseq
        %v7073 = vshrl.u32 %v7072, 7
        %v7074 = vsub.s32 0, %v7073
        %v7075 = vrot.slane %v7070, %v7074
        %v7076 = vmul.f32 %v7075, %v7066
        %7077 = vxpose.xlu0.b32.start [1/16] %v6960, 128
        %7078 = vxpose.xlu0.b32.cont [2/16] %v6961, 128
        %7079 = vxpose.xlu0.b32.cont [3/16] %v6962, 128
        %7080 = vxpose.xlu0.b32.cont [4/16] %v6963, 128
        %7081 = vxpose.xlu0.b32.cont [5/16] %v6964, 128
        %7082 = vxpose.xlu0.b32.cont [6/16] %v6965, 128
        %7083 = vxpose.xlu0.b32.cont [7/16] %v6966, 128
        %7084 = vxpose.xlu0.b32.cont [8/16] %v6967, 128
        %7085 = vxpose.xlu0.b32.cont [9/16] %v6968, 128
        %7086 = vxpose.xlu0.b32.cont [10/16] %v6969, 128
        %7087 = vxpose.xlu0.b32.cont [11/16] %v6970, 128
        %7088 = vxpose.xlu0.b32.cont [12/16] %v6971, 128
        %7089 = vxpose.xlu0.b32.cont [13/16] %v6972, 128
        %7090 = vxpose.xlu0.b32.cont [14/16] %v6973, 128
        %7091 = vxpose.xlu0.b32.cont [15/16] %v6974, 128
        %7092 = vxpose.xlu0.b32.end [16/16] %v6975, 128
        %v7093 = vpop.trf.xlu0
        %v7094 = vpop.trf.xlu0
        %v7095 = vpop.trf.xlu0
        %v7096 = vpop.trf.xlu0
        %v7097 = vpop.trf.xlu0
        %v7098 = vpop.trf.xlu0
        %v7099 = vpop.trf.xlu0
        %v7100 = vpop.trf.xlu0
        %v7101 = vpop.trf.xlu0
        %v7102 = vpop.trf.xlu0
        %v7103 = vpop.trf.xlu0
        %v7104 = vpop.trf.xlu0
        %v7105 = vpop.trf.xlu0
        %v7106 = vpop.trf.xlu0
        %v7107 = vpop.trf.xlu0
        %v7108 = vpop.trf.xlu0
        %7109 = vxpose.xlu0.b32.start [1/16] %v6976, 128
        %7110 = vxpose.xlu0.b32.cont [2/16] %v6977, 128
        %7111 = vxpose.xlu0.b32.cont [3/16] %v6978, 128
        %7112 = vxpose.xlu0.b32.cont [4/16] %v6979, 128
        %7113 = vxpose.xlu0.b32.cont [5/16] %v6980, 128
        %7114 = vxpose.xlu0.b32.cont [6/16] %v6981, 128
        %7115 = vxpose.xlu0.b32.cont [7/16] %v6982, 128
        %7116 = vxpose.xlu0.b32.cont [8/16] %v6983, 128
        %7117 = vxpose.xlu0.b32.cont [9/16] %v6984, 128
        %7118 = vxpose.xlu0.b32.cont [10/16] %v6985, 128
        %7119 = vxpose.xlu0.b32.cont [11/16] %v6986, 128
        %7120 = vxpose.xlu0.b32.cont [12/16] %v6987, 128
        %7121 = vxpose.xlu0.b32.cont [13/16] %v6988, 128
        %7122 = vxpose.xlu0.b32.cont [14/16] %v6989, 128
        %7123 = vxpose.xlu0.b32.cont [15/16] %v6990, 128
        %7124 = vxpose.xlu0.b32.end [16/16] %v6991, 128
        %v7125 = vpop.trf.xlu0
        %v7126 = vpop.trf.xlu0
        %v7127 = vpop.trf.xlu0
        %v7128 = vpop.trf.xlu0
        %v7129 = vpop.trf.xlu0
        %v7130 = vpop.trf.xlu0
        %v7131 = vpop.trf.xlu0
        %v7132 = vpop.trf.xlu0
        %v7133 = vpop.trf.xlu0
        %v7134 = vpop.trf.xlu0
        %v7135 = vpop.trf.xlu0
        %v7136 = vpop.trf.xlu0
        %v7137 = vpop.trf.xlu0
        %v7138 = vpop.trf.xlu0
        %v7139 = vpop.trf.xlu0
        %v7140 = vpop.trf.xlu0
        %7141 = vmatprep.subr.mxu0 %v4275
        %7142 = vmatpush1.msra.mxu0 %v4274
        %7143 = vmatprep.subr.mxu0 %v4279
        %7144 = vmatpush1.msra.mxu0 %v4278
        %7145 = vmatprep.subr.mxu0 %v4283
        %7146 = vmatpush1.msra.mxu0 %v4282
        %7147 = vmatprep.subr.mxu0 %v4287
        %7148 = vmatpush1.msra.mxu0 %v4286
        %7149 = vmatprep.subr.mxu0 %v4291
        %7150 = vmatpush1.msra.mxu0 %v4290
        %7151 = vmatprep.subr.mxu0 %v4295
        %7152 = vmatpush1.msra.mxu0 %v4294
        %7153 = vmatprep.subr.mxu0 %v4299
        %7154 = vmatpush1.msra.mxu0 %v4298
        %7155 = vmatprep.subr.mxu0 %v4303
        %7156 = vmatpush1.msra.mxu0 %v4302
        %7157 = vmatprep.subr.mxu0 %v4307
        %7158 = vmatpush1.msra.mxu0 %v4306
        %7159 = vmatprep.subr.mxu0 %v4311
        %7160 = vmatpush1.msra.mxu0 %v4310
        %7161 = vmatprep.subr.mxu0 %v4315
        %7162 = vmatpush1.msra.mxu0 %v4314
        %7163 = vmatprep.subr.mxu0 %v4319
        %7164 = vmatpush1.msra.mxu0 %v4318
        %7165 = vmatprep.subr.mxu0 %v4323
        %7166 = vmatpush1.msra.mxu0 %v4322
        %7167 = vmatprep.subr.mxu0 %v4327
        %7168 = vmatpush1.msra.mxu0 %v4326
        %7169 = vmatprep.subr.mxu0 %v4331
        %7170 = vmatpush1.msra.mxu0 %v4330
        %7171 = vmatprep.subr.mxu0 %v4335
        %7172 = vmatpush1.msra.mxu0 %v4334
        %7173 = vmatprep.subr.mxu0 %v4339
        %7174 = vmatpush1.msra.mxu0 %v4338
        %7175 = vmatprep.subr.mxu0 %v4343
        %7176 = vmatpush1.msra.mxu0 %v4342
        %7177 = vmatprep.subr.mxu0 %v4347
        %7178 = vmatpush1.msra.mxu0 %v4346
        %7179 = vmatprep.subr.mxu0 %v4351
        %7180 = vmatpush1.msra.mxu0 %v4350
        %7181 = vmatprep.subr.mxu0 %v4355
        %7182 = vmatpush1.msra.mxu0 %v4354
        %7183 = vmatprep.subr.mxu0 %v4359
        %7184 = vmatpush1.msra.mxu0 %v4358
        %7185 = vmatprep.subr.mxu0 %v4363
        %7186 = vmatpush1.msra.mxu0 %v4362
        %7187 = vmatprep.subr.mxu0 %v4367
        %7188 = vmatpush1.msra.mxu0 %v4366
        %7189 = vmatprep.subr.mxu0 %v4371
        %7190 = vmatpush1.msra.mxu0 %v4370
        %7191 = vmatprep.subr.mxu0 %v4375
        %7192 = vmatpush1.msra.mxu0 %v4374
        %7193 = vmatprep.subr.mxu0 %v4379
        %7194 = vmatpush1.msra.mxu0 %v4378
        %7195 = vmatprep.subr.mxu0 %v4383
        %7196 = vmatpush1.msra.mxu0 %v4382
        %7197 = vmatprep.subr.mxu0 %v4387
        %7198 = vmatpush1.msra.mxu0 %v4386
        %7199 = vmatprep.subr.mxu0 %v4391
        %7200 = vmatpush1.msra.mxu0 %v4390
        %7201 = vmatprep.subr.mxu0 %v4395
        %7202 = vmatpush1.msra.mxu0 %v4394
        %7203 = vmatprep.subr.mxu0 %v4399
        %7204 = vmatpush1.msra.mxu0 %v4398
        %7205 = vmatprep.mubr.f32.mxu0 %v7125
        %7206 = vmatmul.mubr.f32.gmra.mrb[0].mxu0 %v7093
        %v7207 = vpop.f32.mrb[0].mxu0
        %v7208 = vadd.f32 0.0, %v7207
        %v7209 = vpop.f32.mrb[0].mxu0
        %v7210 = vadd.f32 0.0, %v7209
        %7211 = vdwg.mxu0
        %7212 = vmatprep.subr.mxu0 %v4277
        %7213 = vmatpush1.msra.mxu0 %v4276
        %7214 = vmatprep.subr.mxu0 %v4281
        %7215 = vmatpush1.msra.mxu0 %v4280
        %7216 = vmatprep.subr.mxu0 %v4285
        %7217 = vmatpush1.msra.mxu0 %v4284
        %7218 = vmatprep.subr.mxu0 %v4289
        %7219 = vmatpush1.msra.mxu0 %v4288
        %7220 = vmatprep.subr.mxu0 %v4293
        %7221 = vmatpush1.msra.mxu0 %v4292
        %7222 = vmatprep.subr.mxu0 %v4297
        %7223 = vmatpush1.msra.mxu0 %v4296
        %7224 = vmatprep.subr.mxu0 %v4301
        %7225 = vmatpush1.msra.mxu0 %v4300
        %7226 = vmatprep.subr.mxu0 %v4305
        %7227 = vmatpush1.msra.mxu0 %v4304
        %7228 = vmatprep.subr.mxu0 %v4309
        %7229 = vmatpush1.msra.mxu0 %v4308
        %7230 = vmatprep.subr.mxu0 %v4313
        %7231 = vmatpush1.msra.mxu0 %v4312
        %7232 = vmatprep.subr.mxu0 %v4317
        %7233 = vmatpush1.msra.mxu0 %v4316
        %7234 = vmatprep.subr.mxu0 %v4321
        %7235 = vmatpush1.msra.mxu0 %v4320
        %7236 = vmatprep.subr.mxu0 %v4325
        %7237 = vmatpush1.msra.mxu0 %v4324
        %7238 = vmatprep.subr.mxu0 %v4329
        %7239 = vmatpush1.msra.mxu0 %v4328
        %7240 = vmatprep.subr.mxu0 %v4333
        %7241 = vmatpush1.msra.mxu0 %v4332
        %7242 = vmatprep.subr.mxu0 %v4337
        %7243 = vmatpush1.msra.mxu0 %v4336
        %7244 = vmatprep.subr.mxu0 %v4341
        %7245 = vmatpush1.msra.mxu0 %v4340
        %7246 = vmatprep.subr.mxu0 %v4345
        %7247 = vmatpush1.msra.mxu0 %v4344
        %7248 = vmatprep.subr.mxu0 %v4349
        %7249 = vmatpush1.msra.mxu0 %v4348
        %7250 = vmatprep.subr.mxu0 %v4353
        %7251 = vmatpush1.msra.mxu0 %v4352
        %7252 = vmatprep.subr.mxu0 %v4357
        %7253 = vmatpush1.msra.mxu0 %v4356
        %7254 = vmatprep.subr.mxu0 %v4361
        %7255 = vmatpush1.msra.mxu0 %v4360
        %7256 = vmatprep.subr.mxu0 %v4365
        %7257 = vmatpush1.msra.mxu0 %v4364
        %7258 = vmatprep.subr.mxu0 %v4369
        %7259 = vmatpush1.msra.mxu0 %v4368
        %7260 = vmatprep.subr.mxu0 %v4373
        %7261 = vmatpush1.msra.mxu0 %v4372
        %7262 = vmatprep.subr.mxu0 %v4377
        %7263 = vmatpush1.msra.mxu0 %v4376
        %7264 = vmatprep.subr.mxu0 %v4381
        %7265 = vmatpush1.msra.mxu0 %v4380
        %7266 = vmatprep.subr.mxu0 %v4385
        %7267 = vmatpush1.msra.mxu0 %v4384
        %7268 = vmatprep.subr.mxu0 %v4389
        %7269 = vmatpush1.msra.mxu0 %v4388
        %7270 = vmatprep.subr.mxu0 %v4393
        %7271 = vmatpush1.msra.mxu0 %v4392
        %7272 = vmatprep.subr.mxu0 %v4397
        %7273 = vmatpush1.msra.mxu0 %v4396
        %7274 = vmatprep.subr.mxu0 %v4401
        %7275 = vmatpush1.msra.mxu0 %v4400
        %7276 = vmatprep.mubr.f32.mxu0 %v7125
        %7277 = vmatmul.mubr.f32.gmra.mrb[0].mxu0 %v7093
        %v7278 = vpop.f32.mrb[0].mxu0
        %v7279 = vadd.f32 0.0, %v7278
        %v7280 = vpop.f32.mrb[0].mxu0
        %v7281 = vadd.f32 0.0, %v7280
        %7282 = vdwg.mxu0
        %v7287 = vcombine.low %v7208, %v7210
        %v7288 = vcombine.low %v7279, %v7281
        %v7290 = vunpack.c.l.s4 1966171168
        %v7291 = vunpack.c.0.s8 %v7290
        %v7292 = vlaneseq
        %v7293 = vshrl.u32 %v7292, 7
        %v7294 = vsub.s32 %v7291, %v7293
        %v7295 = vrot.slane %v7287, %v7294
        %v7297 = vunpack.c.l.s4 1966171168
        %v7298 = vunpack.c.0.s8 %v7297
        %v7299 = vlaneseq
        %v7300 = vshrl.u32 %v7299, 7
        %v7301 = vsub.s32 %v7298, %v7300
        %v7302 = vrot.slane %v7288, %v7301
        %v7303 = vcombine.low %v7295, %v7302
        %v7305 = vunpack.c.l.s4 1966171168
        %v7306 = vunpack.c.0.s8 %v7305
        %v7307 = vlaneseq
        %v7308 = vshrl.u32 %v7307, 7
        %v7309 = vsub.s32 %v7306, %v7308
        %v7310 = vrot.slane %v7303, %v7309
        %v7312 = vadd.f32 %v7076, %v7310
        %v7313 = vlaneseq
        %vm7314 = vcmp.ge.s32.totalorder %v7313, 0
        %vm7315 = vcmp.lt.s32.totalorder %v7313, 512
        %vm7316 = vmand %vm7314, %vm7315
        %7317 = vst.msk [vmem:[#allocation4] sm:$0xf] %vm7316, %v7312
        %7318 = vst.msk [vmem:[#allocation2] sm:$0x1] %vm7064, %v6854
        %p7319 = scmp.eq.s32.totalorder %s36, 1
        // Predicated region
        $region77: #{porpoise_amil_forward.1} parent=47 // pred_check
          %p7320 = pneg %p7319
        $region78: #{porpoise_amil_forward.1} parent=47 // pred_check_branch
          %7322 = sbr.rel (%p7320) target = $region80
        $region79: #{porpoise_amil_forward.1} parent=47 // pred_region
          %v7323 = vld [vmem:[#allocation2] sm:$0x1]
          %7324 = vst.msk [vmem:[%s473] sm:$0x1] %vm7064, %v7323
          %v7325 = vld [vmem:[#allocation3] sm:$0x1]
          %7326 = vst.msk [vmem:[%s476] sm:$0x1] %vm7064, %v7325
          %v7327 = vld [vmem:[#allocation4] sm:$0xf]
          %7328 = vst.msk [vmem:[%s480] sm:$0xf] %vm7316, %v7327
        $region80: #{porpoise_amil_forward.1} parent=47 // pred_fallthru
          _
        %p7329 = scmp.lt.s32.totalorder %s35, 1
        %s7330 = scalar_select %p7329, %s35, 1
        %s7331 = scalar_lea.vmem %s8, %s7330
        %p7332 = scmp.lt.s32.totalorder %s35, 1
        %s7333 = scalar_select %p7332, %s35, 1
        %s7334 = scalar_lea.vmem %s9, %s7333
        %p7335 = scmp.lt.s32.totalorder %s35, 1
        %s7336 = scalar_select %p7335, %s35, 1
        %s7337 = smul.addr %s7336, 4
        %s7338 = scalar_lea.vmem %s10, %s7337
        // Predicated region
        $region81: #{porpoise_amil_forward.1} parent=47 // pred_check
          %p7339 = pneg %p221
        $region82: #{porpoise_amil_forward.1} parent=47 // pred_check_branch
          %7341 = sbr.rel (%p7339) target = $region84
        $region83: #{porpoise_amil_forward.1} parent=47 // pred_region
          _
        $region84: #{porpoise_amil_forward.1} parent=47 // pred_fallthru
          _
        // Predicated region
        $region85: #{porpoise_amil_forward.1} parent=47 // pred_check
          %p7342 = pneg %p247
        $region86: #{porpoise_amil_forward.1} parent=47 // pred_check_branch
          %7344 = sbr.rel (%p7342) target = $region88
        $region87: #{porpoise_amil_forward.1} parent=47 // pred_region
          _
        $region88: #{porpoise_amil_forward.1} parent=47 // pred_fallthru
          _
        // Predicated region
        $region89: #{porpoise_amil_forward.1} parent=47 // pred_check
          %p7345 = pneg %p273
        $region90: #{porpoise_amil_forward.1} parent=47 // pred_check_branch
          %7347 = sbr.rel (%p7345) target = $region92
        $region91: #{porpoise_amil_forward.1} parent=47 // pred_region
          _
        $region92: #{porpoise_amil_forward.1} parent=47 // pred_fallthru
          _
      $region48: #{porpoise_amil_forward.1} parent=5 // pred_fallthru
        _
      %p7348 = scmp.le.s32.totalorder 2, %s26
      // Predicated region
      $region93: #{porpoise_amil_forward.1} parent=5 // pred_check
        %p7349 = pneg %p7348
      $region94: #{porpoise_amil_forward.1} parent=5 // pred_check_branch
        %7351 = sbr.rel (%p7349) target = $region96
      $region95: #{porpoise_amil_forward.1} parent=5 // pred_region
        %s7352 = ssub.s32 %s26, 2
        // Predicated region
        $region97: #{porpoise_amil_forward.1} parent=95 // pred_check
          %p7353 = pneg %p227
        $region98: #{porpoise_amil_forward.1} parent=95 // pred_check_branch
          %7355 = sbr.rel (%p7353) target = $region100
        $region99: #{porpoise_amil_forward.1} parent=95 // pred_region
          %p7356 = scmp.lt.s32.totalorder %s37, 1
          %s7357 = scalar_select %p7356, %s37, 1
          %s7358 = scalar_lea.vmem %s8, %s7357
        $region100: #{porpoise_amil_forward.1} parent=95 // pred_fallthru
          _
        // Predicated region
        $region101: #{porpoise_amil_forward.1} parent=95 // pred_check
          %p7359 = pneg %p253
        $region102: #{porpoise_amil_forward.1} parent=95 // pred_check_branch
          %7361 = sbr.rel (%p7359) target = $region104
        $region103: #{porpoise_amil_forward.1} parent=95 // pred_region
          %p7362 = scmp.lt.s32.totalorder %s37, 1
          %s7363 = scalar_select %p7362, %s37, 1
          %s7364 = scalar_lea.vmem %s9, %s7363
        $region104: #{porpoise_amil_forward.1} parent=95 // pred_fallthru
          _
        // Predicated region
        $region105: #{porpoise_amil_forward.1} parent=95 // pred_check
          %p7365 = pneg %p279
        $region106: #{porpoise_amil_forward.1} parent=95 // pred_check_branch
          %7367 = sbr.rel (%p7365) target = $region108
        $region107: #{porpoise_amil_forward.1} parent=95 // pred_region
          %p7368 = scmp.lt.s32.totalorder %s37, 1
          %s7369 = scalar_select %p7368, %s37, 1
          %s7370 = smul.addr %s7369, 4
          %s7371 = scalar_lea.vmem %s10, %s7370
        $region108: #{porpoise_amil_forward.1} parent=95 // pred_fallthru
          _
      $region96: #{porpoise_amil_forward.1} parent=5 // pred_fallthru
        _
    $region6: #{porpoise_amil_forward.1} parent=1 // loop_footer
      %s30 = sadd.s32 1, %s26
    $region7: #{porpoise_amil_forward.1} parent=1 // loop_footer_branch
      %25 = sbr.rel target = $region3
    $region8: #{porpoise_amil_forward.1} parent=1 // loop_exit
      _
    %7372 = vsyncpa [#allocation9], 1
    %s7373 = scalar_lea.sflag [#allocation9], 1
    %7374 = vsyncpa %s7373, 1
    %7375 = vsyncpa [#allocation11], 1
    %7376 = vsyncpa [#allocation14], 1
    %7377 = vsyncpa [#allocation17], 1

</llo_original>
